<compile_context>
chip_gen: v5e
topology: v5e:2x2
jax: 0.10.0
libtpu: 0.0.40
codegen_flags: <defaults>
</compile_context>

<pallas_src>
import functools

import jax
import jax.numpy as jnp
import numpy as np
from jax.experimental import pallas as pl
from jax.experimental.pallas import tpu as pltpu


# ----------------------------------------------------------------------------
# Fused kernel: conv1 -> pool1 -> conv2 -> pool2 -> fc1 -> ReLU -> fc2
# for one block of B images per grid step.
# ----------------------------------------------------------------------------
def _caffelenet_kernel(x_ref, w1e_ref, w1o_ref, b1_ref, w2_ref, b2_ref,
                       wf1_ref, bf1_ref, wf2_ref, bf2_ref, o_ref):
    f32 = jnp.float32
    bf16 = jnp.bfloat16
    B = x_ref.shape[1]                                   # images per grid step

    # ---- conv1 (1->20, 5x5) as a banded matmul over the 5 row taps --------
    # x layout is (H=28, B, W=28): rows of the matmul are (y, b) pairs.
    x = x_ref[...].astype(bf16)                                        # (28,B,28)
    xpat = jnp.concatenate([x[ki:ki + 24] for ki in range(5)], axis=2)  # (24,B,140)
    xpat = xpat.reshape(24 * B, 140)                     # free: B % 8 == 0
    c1e = jnp.dot(xpat, w1e_ref[...], preferred_element_type=f32)  # even cols
    c1o = jnp.dot(xpat, w1o_ref[...], preferred_element_type=f32)  # odd  cols
    # pool1-W (even/odd column max) + bias; then pool1-H as a max of the
    # even/odd conv1 row planes (row index = y*B + b -> adjacent B-row blocks).
    m13 = (jnp.maximum(c1e, c1o) + b1_ref[...]).astype(bf16).reshape(12, 2 * B, 256)
    p1 = jnp.maximum(m13[:, :B, :], m13[:, B:, :])       # (12, B, 256) pooled

    # ---- conv2 (20->50, 5x5): 5 accumulating matmuls over the row taps ----
    # pool2-W is folded into the weight columns (even block 0:256, odd 256:512).
    acc = None
    for ki in range(5):
        slab = p1[ki:ki + 8].reshape(8 * B, 256)         # pool1 rows ki..ki+7
        d = jnp.dot(slab, w2_ref[ki], preferred_element_type=f32)
        acc = d if acc is None else acc + d              # (8B, 512) f32
    c2 = (jnp.maximum(acc[:, :256], acc[:, 256:]) + b2_ref[...]).astype(bf16)

    # ---- pool2-H + fc1 (+ReLU) + fc2 ---------------------------------------
    c23 = c2.reshape(4, 2 * B, 256)                      # (y3, parity*B, lanes)
    h = None
    for y3 in range(4):
        row = jnp.maximum(c23[y3, :B, :], c23[y3, B:, :])           # (B, 256)
        d = jnp.dot(row, wf1_ref[y3], preferred_element_type=f32)
        h = d if h is None else h + d                                # (B, 512)
    h = jnp.maximum(h + bf1_ref[...], 0.0)
    z = jnp.dot(h.astype(bf16), wf2_ref[...], preferred_element_type=f32)
    o_ref[...] = z + bf2_ref[...]                                    # (B, 128)


# ----------------------------------------------------------------------------
# One-time parameter re-layout (init time, NOT inside the forward)
# ----------------------------------------------------------------------------
def prepare_params(p):
    w1 = np.asarray(p["conv1_w"], np.float32)    # (20, 1, 5, 5)  OIHW
    b1 = np.asarray(p["conv1_b"], np.float32)
    w2 = np.asarray(p["conv2_w"], np.float32)    # (50, 20, 5, 5)
    b2 = np.asarray(p["conv2_b"], np.float32)
    fw1 = np.asarray(p["fc1_w"], np.float32)     # (500, 800)
    fb1 = np.asarray(p["fc1_b"], np.float32)
    fw2 = np.asarray(p["fc2_w"], np.float32)     # (10, 500)
    fb2 = np.asarray(p["fc2_b"], np.float32)

    # conv1: banded weight, rows = ki*28 + input col, cols = x1*20 + c (pad 240->256),
    # split by output-column parity so pool1-W is a plain elementwise max.
    W1e = np.zeros((140, 256), np.float32)
    W1o = np.zeros((140, 256), np.float32)
    for ki in range(5):
        for kj in range(5):
            for x1 in range(12):
                W1e[ki * 28 + 2 * x1 + kj, x1 * 20:(x1 + 1) * 20] = w1[:, 0, ki, kj]
                W1o[ki * 28 + 2 * x1 + 1 + kj, x1 * 20:(x1 + 1) * 20] = w1[:, 0, ki, kj]
    b1row = np.zeros((1, 256), np.float32)
    for x1 in range(12):
        b1row[0, x1 * 20:(x1 + 1) * 20] = b1

    # conv2: one (256, 512) weight per row tap ki; rows = x1*20 + c (pool1 lanes),
    # cols = x3*64 + o for even x2 (lanes 0:256) and 256 + x3*64 + o for odd x2.
    W2 = np.zeros((5, 256, 512), np.float32)
    for ki in range(5):
        for kj in range(5):
            w_t = w2[:, :, ki, kj].T                     # (c, o)
            for x3 in range(4):
                x1e = 2 * x3 + kj
                W2[ki, x1e * 20:(x1e + 1) * 20, x3 * 64:x3 * 64 + 50] = w_t
                x1o = 2 * x3 + 1 + kj
                W2[ki, x1o * 20:(x1o + 1) * 20, 256 + x3 * 64:256 + x3 * 64 + 50] = w_t
    b2row = np.zeros((1, 256), np.float32)
    for x3 in range(4):
        b2row[0, x3 * 64:x3 * 64 + 50] = b2

    # fc1: one (256, 512) block per pooled row y3; PyTorch NCHW flatten order
    # (index = o*16 + y3*4 + x3) is folded in here.
    Wfc1 = np.zeros((4, 256, 512), np.float32)
    f3 = fw1.reshape(500, 50, 4, 4)                      # (u, o, y3, x3)
    for y3 in range(4):
        for x3 in range(4):
            Wfc1[y3, x3 * 64:x3 * 64 + 50, :500] = f3[:, :, y3, x3].T
    bf1row = np.zeros((1, 512), np.float32)
    bf1row[0, :500] = fb1

    # fc2: pre-transposed, zero-padded to a lane-dense 128-wide output.
    Wfc2 = np.zeros((512, 128), np.float32)
    Wfc2[:500, :10] = fw2.T
    bf2row = np.zeros((1, 128), np.float32)
    bf2row[0, :10] = fb2

    bf16 = jnp.bfloat16
    return {
        "W1e": jnp.asarray(W1e, bf16), "W1o": jnp.asarray(W1o, bf16),
        "b1": jnp.asarray(b1row), "W2": jnp.asarray(W2, bf16),
        "b2": jnp.asarray(b2row), "Wfc1": jnp.asarray(Wfc1, bf16),
        "bf1": jnp.asarray(bf1row), "Wfc2": jnp.asarray(Wfc2, bf16),
        "bf2": jnp.asarray(bf2row),
    }


# ----------------------------------------------------------------------------
# Forward pass: a single batched, gridded pallas_call
# ----------------------------------------------------------------------------
@functools.partial(jax.jit, static_argnames=("block_b",))
def caffelenet_forward(x_nchw, prep, block_b=32):
    N = x_nchw.shape[0]
    assert x_nchw.shape[1:] == (1, 28, 28)
    B = block_b if N >= block_b else max(8, ((N + 7) // 8) * 8)
    n_pad = ((N + B - 1) // B) * B

    x = x_nchw.reshape(N, 28, 28).astype(jnp.float32)
    if n_pad != N:
        x = jnp.concatenate(
            [x, jnp.zeros((n_pad - N, 28, 28), jnp.float32)], axis=0)
    xt = jnp.transpose(x, (1, 0, 2))                     # (28, n_pad, 28) batch-minor

    def const(shape):
        return pl.BlockSpec(shape, lambda i: (0,) * len(shape))

    out = pl.pallas_call(
        _caffelenet_kernel,
        out_shape=jax.ShapeDtypeStruct((n_pad, 128), jnp.float32),
        grid=(n_pad // B,),
        in_specs=[
            pl.BlockSpec((28, B, 28), lambda i: (0, i, 0)),        # image block
            const((140, 256)), const((140, 256)), const((1, 256)),  # conv1
            const((5, 256, 512)), const((1, 256)),                  # conv2
            const((4, 256, 512)), const((1, 512)),                  # fc1
            const((512, 128)), const((1, 128)),                     # fc2
        ],
        out_specs=pl.BlockSpec((B, 128), lambda i: (i, 0)),
        compiler_params=pltpu.CompilerParams(
            dimension_semantics=("parallel",),
            vmem_limit_bytes=32 * 1024 * 1024),
        cost_estimate=pl.CostEstimate(
            flops=15_200_000 * n_pad, transcendentals=0,
            bytes_accessed=2_700_000 + n_pad * 3_700),
    )(xt, prep["W1e"], prep["W1o"], prep["b1"], prep["W2"], prep["b2"],
      prep["Wfc1"], prep["bf1"], prep["Wfc2"], prep["bf2"])

    return out[:N, :10]


# ----------------------------------------------------------------------------
# Parameters (deterministic, synthetic) -- same layout as the PyTorch module
# ----------------------------------------------------------------------------
def init_params(key):
    ks = jax.random.split(key, 8)
    s = 0.05
    return {
        "conv1_w": s * jax.random.normal(ks[0], (20, 1, 5, 5), jnp.float32),
        "conv1_b": s * jax.random.normal(ks[1], (20,), jnp.float32),
        "conv2_w": s * jax.random.normal(ks[2], (50, 20, 5, 5), jnp.float32),
        "conv2_b": s * jax.random.normal(ks[3], (50,), jnp.float32),
        "fc1_w":   s * jax.random.normal(ks[4], (500, 800), jnp.float32),
        "fc1_b":   s * jax.random.normal(ks[5], (500,), jnp.float32),
        "fc2_w":   s * jax.random.normal(ks[6], (10, 500), jnp.float32),
        "fc2_b":   s * jax.random.normal(ks[7], (10,), jnp.float32),
    }


# ----------------------------------------------------------------------------
# Pure-JAX f32 reference (correctness check only)
# ----------------------------------------------------------------------------
def reference_forward(x, p):
    hi = jax.lax.Precision.HIGHEST
    y = jax.lax.conv_general_dilated(
        x, p["conv1_w"], (1, 1), "VALID",
        dimension_numbers=("NCHW", "OIHW", "NCHW"), precision=hi)
    y = y + p["conv1_b"][None, :, None, None]
    y = jax.lax.reduce_window(y, -jnp.inf, jax.lax.max,
                              (1, 1, 2, 2), (1, 1, 2, 2), "VALID")
    y = jax.lax.conv_general_dilated(
        y, p["conv2_w"], (1, 1), "VALID",
        dimension_numbers=("NCHW", "OIHW", "NCHW"), precision=hi)
    y = y + p["conv2_b"][None, :, None, None]
    y = jax.lax.reduce_window(y, -jnp.inf, jax.lax.max,
                              (1, 1, 2, 2), (1, 1, 2, 2), "VALID")
    y = y.reshape(y.shape[0], -1)
    y = jnp.maximum(jnp.dot(y, p["fc1_w"].T, precision=hi) + p["fc1_b"], 0.0)
    y = jnp.dot(y, p["fc2_w"].T, precision=hi) + p["fc2_b"]
    return y


if __name__ == "__main__":
    key = jax.random.PRNGKey(0)
    pkey, xkey = jax.random.split(key)
    params = init_params(pkey)
    prep = prepare_params(params)          # one-time weight re-layout

    # MNIST-shaped input (the 50*4*4 flatten in the module implies 28x28).
    x = jax.random.normal(xkey, (2, 1, 28, 28), jnp.float32)

    out = jax.block_until_ready(caffelenet_forward(x, prep))
    assert out.shape == (2, 10), out.shape

    ref = jax.block_until_ready(reference_forward(x, params))
    err = float(jnp.max(jnp.abs(out - ref)))
    # bf16 matmul inputs with f32 accumulation: allow ~1% of the logit scale.
    assert jnp.allclose(out, ref, atol=3e-2, rtol=3e-2), ("mismatch vs ref", err)

    print("KERNEL_OK")
</pallas_src>

<mosaic_0001>
module attributes {stable_mosaic.version = 11 : i64} {
  func.func @_caffelenet_kernel(%arg0: i32, %arg1: memref<28x8x28xf32, #tpu.memory_space<vmem>>, %arg2: memref<140x256xbf16, #tpu.memory_space<vmem>>, %arg3: memref<140x256xbf16, #tpu.memory_space<vmem>>, %arg4: memref<1x256xf32, #tpu.memory_space<vmem>>, %arg5: memref<5x256x512xbf16, #tpu.memory_space<vmem>>, %arg6: memref<1x256xf32, #tpu.memory_space<vmem>>, %arg7: memref<4x256x512xbf16, #tpu.memory_space<vmem>>, %arg8: memref<1x512xf32, #tpu.memory_space<vmem>>, %arg9: memref<512x128xbf16, #tpu.memory_space<vmem>>, %arg10: memref<1x128xf32, #tpu.memory_space<vmem>>, %arg11: memref<8x128xf32, #tpu.memory_space<vmem>>) attributes {dimension_semantics = [#tpu.dimension_semantics<parallel>], iteration_bounds = array<i64: 1>, scalar_prefetch = 0 : i64, scratch_operands = 0 : i64, tpu.core_type = #tpu.core_type<tc>, window_params = [{transform_indices = @transform_0, window_bounds = array<i64: 28, 8, 28>}, {pipeline_mode = #tpu.pipeline_mode<synchronous>, transform_indices = @transform_1, window_bounds = array<i64: 140, 256>}, {pipeline_mode = #tpu.pipeline_mode<synchronous>, transform_indices = @transform_2, window_bounds = array<i64: 140, 256>}, {pipeline_mode = #tpu.pipeline_mode<synchronous>, transform_indices = @transform_3, window_bounds = array<i64: 1, 256>}, {pipeline_mode = #tpu.pipeline_mode<synchronous>, transform_indices = @transform_4, window_bounds = array<i64: 5, 256, 512>}, {pipeline_mode = #tpu.pipeline_mode<synchronous>, transform_indices = @transform_5, window_bounds = array<i64: 1, 256>}, {pipeline_mode = #tpu.pipeline_mode<synchronous>, transform_indices = @transform_6, window_bounds = array<i64: 4, 256, 512>}, {pipeline_mode = #tpu.pipeline_mode<synchronous>, transform_indices = @transform_7, window_bounds = array<i64: 1, 512>}, {pipeline_mode = #tpu.pipeline_mode<synchronous>, transform_indices = @transform_8, window_bounds = array<i64: 512, 128>}, {pipeline_mode = #tpu.pipeline_mode<synchronous>, transform_indices = @transform_9, window_bounds = array<i64: 1, 128>}, {transform_indices = @transform_10, window_bounds = array<i64: 8, 128>}]} {
    %c0 = arith.constant 0 : index
    %c0_0 = arith.constant 0 : index
    %c0_1 = arith.constant 0 : index
    %0 = vector.load %arg1[%c0, %c0_0, %c0_1] : memref<28x8x28xf32, #tpu.memory_space<vmem>>, vector<28x8x28xf32>
    %1 = arith.truncf %0 : vector<28x8x28xf32> to vector<28x8x28xbf16>
    %2 = vector.extract_strided_slice %1 {offsets = [0, 0, 0], sizes = [24, 8, 28], strides = [1, 1, 1]} : vector<28x8x28xbf16> to vector<24x8x28xbf16>
    %3 = vector.extract_strided_slice %1 {offsets = [1, 0, 0], sizes = [24, 8, 28], strides = [1, 1, 1]} : vector<28x8x28xbf16> to vector<24x8x28xbf16>
    %4 = vector.extract_strided_slice %1 {offsets = [2, 0, 0], sizes = [24, 8, 28], strides = [1, 1, 1]} : vector<28x8x28xbf16> to vector<24x8x28xbf16>
    %5 = vector.extract_strided_slice %1 {offsets = [3, 0, 0], sizes = [24, 8, 28], strides = [1, 1, 1]} : vector<28x8x28xbf16> to vector<24x8x28xbf16>
    %6 = vector.extract_strided_slice %1 {offsets = [4, 0, 0], sizes = [24, 8, 28], strides = [1, 1, 1]} : vector<28x8x28xbf16> to vector<24x8x28xbf16>
    %7 = tpu.concatenate %2, %3, %4, %5, %6 in 2 : vector<24x8x28xbf16>, vector<24x8x28xbf16>, vector<24x8x28xbf16>, vector<24x8x28xbf16>, vector<24x8x28xbf16> -> vector<24x8x140xbf16>
    %8 = vector.shape_cast %7 : vector<24x8x140xbf16> to vector<192x140xbf16>
    %c0_2 = arith.constant 0 : index
    %c0_3 = arith.constant 0 : index
    %9 = vector.load %arg2[%c0_2, %c0_3] : memref<140x256xbf16, #tpu.memory_space<vmem>>, vector<140x256xbf16>
    %cst = arith.constant dense<0.000000e+00> : vector<192x256xf32>
    %10 = tpu.matmul %8, %9, %cst {dimension_numbers = #tpu.dot_dimension_numbers<[1], [0], [0], [1], [0, 0, 1, 1], [], []>} : vector<192x140xbf16>, vector<140x256xbf16>, vector<192x256xf32> -> vector<192x256xf32>
    %c0_4 = arith.constant 0 : index
    %c0_5 = arith.constant 0 : index
    %11 = vector.load %arg3[%c0_4, %c0_5] : memref<140x256xbf16, #tpu.memory_space<vmem>>, vector<140x256xbf16>
    %cst_6 = arith.constant dense<0.000000e+00> : vector<192x256xf32>
    %12 = tpu.matmul %8, %11, %cst_6 {dimension_numbers = #tpu.dot_dimension_numbers<[1], [0], [0], [1], [0, 0, 1, 1], [], []>} : vector<192x140xbf16>, vector<140x256xbf16>, vector<192x256xf32> -> vector<192x256xf32>
    %13 = arith.maximumf %10, %12 : vector<192x256xf32>
    %c0_7 = arith.constant 0 : index
    %c0_8 = arith.constant 0 : index
    %14 = vector.load %arg4[%c0_7, %c0_8] : memref<1x256xf32, #tpu.memory_space<vmem>>, vector<1x256xf32>
    %15 = vector.broadcast %14 : vector<1x256xf32> to vector<192x256xf32>
    %16 = arith.addf %13, %15 : vector<192x256xf32>
    %17 = arith.truncf %16 : vector<192x256xf32> to vector<192x256xbf16>
    %18 = vector.shape_cast %17 : vector<192x256xbf16> to vector<12x16x256xbf16>
    %19 = vector.extract_strided_slice %18 {offsets = [0, 0, 0], sizes = [12, 8, 256], strides = [1, 1, 1]} : vector<12x16x256xbf16> to vector<12x8x256xbf16>
    %20 = vector.extract_strided_slice %18 {offsets = [0, 8, 0], sizes = [12, 8, 256], strides = [1, 1, 1]} : vector<12x16x256xbf16> to vector<12x8x256xbf16>
    %21 = arith.maximumf %19, %20 : vector<12x8x256xbf16>
    %22 = vector.extract_strided_slice %21 {offsets = [0, 0, 0], sizes = [8, 8, 256], strides = [1, 1, 1]} : vector<12x8x256xbf16> to vector<8x8x256xbf16>
    %23 = vector.shape_cast %22 : vector<8x8x256xbf16> to vector<64x256xbf16>
    %c0_9 = arith.constant 0 : index
    %c0_10 = arith.constant 0 : index
    %c0_11 = arith.constant 0 : index
    %24 = vector.load %arg5[%c0_9, %c0_10, %c0_11] : memref<5x256x512xbf16, #tpu.memory_space<vmem>>, vector<1x256x512xbf16>
    %25 = vector.shape_cast %24 : vector<1x256x512xbf16> to vector<256x512xbf16>
    %cst_12 = arith.constant dense<0.000000e+00> : vector<64x512xf32>
    %26 = tpu.matmul %23, %25, %cst_12 {dimension_numbers = #tpu.dot_dimension_numbers<[1], [0], [0], [1], [0, 0, 1, 1], [], []>} : vector<64x256xbf16>, vector<256x512xbf16>, vector<64x512xf32> -> vector<64x512xf32>
    %27 = vector.extract_strided_slice %21 {offsets = [1, 0, 0], sizes = [8, 8, 256], strides = [1, 1, 1]} : vector<12x8x256xbf16> to vector<8x8x256xbf16>
    %28 = vector.shape_cast %27 : vector<8x8x256xbf16> to vector<64x256xbf16>
    %c1 = arith.constant 1 : index
    %c0_13 = arith.constant 0 : index
    %c0_14 = arith.constant 0 : index
    %29 = vector.load %arg5[%c1, %c0_13, %c0_14] : memref<5x256x512xbf16, #tpu.memory_space<vmem>>, vector<1x256x512xbf16>
    %30 = vector.shape_cast %29 : vector<1x256x512xbf16> to vector<256x512xbf16>
    %cst_15 = arith.constant dense<0.000000e+00> : vector<64x512xf32>
    %31 = tpu.matmul %28, %30, %cst_15 {dimension_numbers = #tpu.dot_dimension_numbers<[1], [0], [0], [1], [0, 0, 1, 1], [], []>} : vector<64x256xbf16>, vector<256x512xbf16>, vector<64x512xf32> -> vector<64x512xf32>
    %32 = arith.addf %26, %31 : vector<64x512xf32>
    %33 = vector.extract_strided_slice %21 {offsets = [2, 0, 0], sizes = [8, 8, 256], strides = [1, 1, 1]} : vector<12x8x256xbf16> to vector<8x8x256xbf16>
    %34 = vector.shape_cast %33 : vector<8x8x256xbf16> to vector<64x256xbf16>
    %c2 = arith.constant 2 : index
    %c0_16 = arith.constant 0 : index
    %c0_17 = arith.constant 0 : index
    %35 = vector.load %arg5[%c2, %c0_16, %c0_17] : memref<5x256x512xbf16, #tpu.memory_space<vmem>>, vector<1x256x512xbf16>
    %36 = vector.shape_cast %35 : vector<1x256x512xbf16> to vector<256x512xbf16>
    %cst_18 = arith.constant dense<0.000000e+00> : vector<64x512xf32>
    %37 = tpu.matmul %34, %36, %cst_18 {dimension_numbers = #tpu.dot_dimension_numbers<[1], [0], [0], [1], [0, 0, 1, 1], [], []>} : vector<64x256xbf16>, vector<256x512xbf16>, vector<64x512xf32> -> vector<64x512xf32>
    %38 = arith.addf %32, %37 : vector<64x512xf32>
    %39 = vector.extract_strided_slice %21 {offsets = [3, 0, 0], sizes = [8, 8, 256], strides = [1, 1, 1]} : vector<12x8x256xbf16> to vector<8x8x256xbf16>
    %40 = vector.shape_cast %39 : vector<8x8x256xbf16> to vector<64x256xbf16>
    %c3 = arith.constant 3 : index
    %c0_19 = arith.constant 0 : index
    %c0_20 = arith.constant 0 : index
    %41 = vector.load %arg5[%c3, %c0_19, %c0_20] : memref<5x256x512xbf16, #tpu.memory_space<vmem>>, vector<1x256x512xbf16>
    %42 = vector.shape_cast %41 : vector<1x256x512xbf16> to vector<256x512xbf16>
    %cst_21 = arith.constant dense<0.000000e+00> : vector<64x512xf32>
    %43 = tpu.matmul %40, %42, %cst_21 {dimension_numbers = #tpu.dot_dimension_numbers<[1], [0], [0], [1], [0, 0, 1, 1], [], []>} : vector<64x256xbf16>, vector<256x512xbf16>, vector<64x512xf32> -> vector<64x512xf32>
    %44 = arith.addf %38, %43 : vector<64x512xf32>
    %45 = vector.extract_strided_slice %21 {offsets = [4, 0, 0], sizes = [8, 8, 256], strides = [1, 1, 1]} : vector<12x8x256xbf16> to vector<8x8x256xbf16>
    %46 = vector.shape_cast %45 : vector<8x8x256xbf16> to vector<64x256xbf16>
    %c4 = arith.constant 4 : index
    %c0_22 = arith.constant 0 : index
    %c0_23 = arith.constant 0 : index
    %47 = vector.load %arg5[%c4, %c0_22, %c0_23] : memref<5x256x512xbf16, #tpu.memory_space<vmem>>, vector<1x256x512xbf16>
    %48 = vector.shape_cast %47 : vector<1x256x512xbf16> to vector<256x512xbf16>
    %cst_24 = arith.constant dense<0.000000e+00> : vector<64x512xf32>
    %49 = tpu.matmul %46, %48, %cst_24 {dimension_numbers = #tpu.dot_dimension_numbers<[1], [0], [0], [1], [0, 0, 1, 1], [], []>} : vector<64x256xbf16>, vector<256x512xbf16>, vector<64x512xf32> -> vector<64x512xf32>
    %50 = arith.addf %44, %49 : vector<64x512xf32>
    %51 = vector.extract_strided_slice %50 {offsets = [0, 0], sizes = [64, 256], strides = [1, 1]} : vector<64x512xf32> to vector<64x256xf32>
    %52 = vector.extract_strided_slice %50 {offsets = [0, 256], sizes = [64, 256], strides = [1, 1]} : vector<64x512xf32> to vector<64x256xf32>
    %53 = arith.maximumf %51, %52 : vector<64x256xf32>
    %c0_25 = arith.constant 0 : index
    %c0_26 = arith.constant 0 : index
    %54 = vector.load %arg6[%c0_25, %c0_26] : memref<1x256xf32, #tpu.memory_space<vmem>>, vector<1x256xf32>
    %55 = vector.broadcast %54 : vector<1x256xf32> to vector<64x256xf32>
    %56 = arith.addf %53, %55 : vector<64x256xf32>
    %57 = arith.truncf %56 : vector<64x256xf32> to vector<64x256xbf16>
    %58 = vector.shape_cast %57 : vector<64x256xbf16> to vector<4x16x256xbf16>
    %59 = vector.extract_strided_slice %58 {offsets = [0, 0, 0], sizes = [1, 8, 256], strides = [1, 1, 1]} : vector<4x16x256xbf16> to vector<1x8x256xbf16>
    %60 = vector.shape_cast %59 : vector<1x8x256xbf16> to vector<8x256xbf16>
    %61 = vector.extract_strided_slice %58 {offsets = [0, 8, 0], sizes = [1, 8, 256], strides = [1, 1, 1]} : vector<4x16x256xbf16> to vector<1x8x256xbf16>
    %62 = vector.shape_cast %61 : vector<1x8x256xbf16> to vector<8x256xbf16>
    %63 = arith.maximumf %60, %62 : vector<8x256xbf16>
    %c0_27 = arith.constant 0 : index
    %c0_28 = arith.constant 0 : index
    %c0_29 = arith.constant 0 : index
    %64 = vector.load %arg7[%c0_27, %c0_28, %c0_29] : memref<4x256x512xbf16, #tpu.memory_space<vmem>>, vector<1x256x512xbf16>
    %65 = vector.shape_cast %64 : vector<1x256x512xbf16> to vector<256x512xbf16>
    %cst_30 = arith.constant dense<0.000000e+00> : vector<8x512xf32>
    %66 = tpu.matmul %63, %65, %cst_30 {dimension_numbers = #tpu.dot_dimension_numbers<[1], [0], [0], [1], [0, 0, 1, 1], [], []>} : vector<8x256xbf16>, vector<256x512xbf16>, vector<8x512xf32> -> vector<8x512xf32>
    %67 = vector.extract_strided_slice %58 {offsets = [1, 0, 0], sizes = [1, 8, 256], strides = [1, 1, 1]} : vector<4x16x256xbf16> to vector<1x8x256xbf16>
    %68 = vector.shape_cast %67 : vector<1x8x256xbf16> to vector<8x256xbf16>
    %69 = vector.extract_strided_slice %58 {offsets = [1, 8, 0], sizes = [1, 8, 256], strides = [1, 1, 1]} : vector<4x16x256xbf16> to vector<1x8x256xbf16>
    %70 = vector.shape_cast %69 : vector<1x8x256xbf16> to vector<8x256xbf16>
    %71 = arith.maximumf %68, %70 : vector<8x256xbf16>
    %c1_31 = arith.constant 1 : index
    %c0_32 = arith.constant 0 : index
    %c0_33 = arith.constant 0 : index
    %72 = vector.load %arg7[%c1_31, %c0_32, %c0_33] : memref<4x256x512xbf16, #tpu.memory_space<vmem>>, vector<1x256x512xbf16>
    %73 = vector.shape_cast %72 : vector<1x256x512xbf16> to vector<256x512xbf16>
    %cst_34 = arith.constant dense<0.000000e+00> : vector<8x512xf32>
    %74 = tpu.matmul %71, %73, %cst_34 {dimension_numbers = #tpu.dot_dimension_numbers<[1], [0], [0], [1], [0, 0, 1, 1], [], []>} : vector<8x256xbf16>, vector<256x512xbf16>, vector<8x512xf32> -> vector<8x512xf32>
    %75 = arith.addf %66, %74 : vector<8x512xf32>
    %76 = vector.extract_strided_slice %58 {offsets = [2, 0, 0], sizes = [1, 8, 256], strides = [1, 1, 1]} : vector<4x16x256xbf16> to vector<1x8x256xbf16>
    %77 = vector.shape_cast %76 : vector<1x8x256xbf16> to vector<8x256xbf16>
    %78 = vector.extract_strided_slice %58 {offsets = [2, 8, 0], sizes = [1, 8, 256], strides = [1, 1, 1]} : vector<4x16x256xbf16> to vector<1x8x256xbf16>
    %79 = vector.shape_cast %78 : vector<1x8x256xbf16> to vector<8x256xbf16>
    %80 = arith.maximumf %77, %79 : vector<8x256xbf16>
    %c2_35 = arith.constant 2 : index
    %c0_36 = arith.constant 0 : index
    %c0_37 = arith.constant 0 : index
    %81 = vector.load %arg7[%c2_35, %c0_36, %c0_37] : memref<4x256x512xbf16, #tpu.memory_space<vmem>>, vector<1x256x512xbf16>
    %82 = vector.shape_cast %81 : vector<1x256x512xbf16> to vector<256x512xbf16>
    %cst_38 = arith.constant dense<0.000000e+00> : vector<8x512xf32>
    %83 = tpu.matmul %80, %82, %cst_38 {dimension_numbers = #tpu.dot_dimension_numbers<[1], [0], [0], [1], [0, 0, 1, 1], [], []>} : vector<8x256xbf16>, vector<256x512xbf16>, vector<8x512xf32> -> vector<8x512xf32>
    %84 = arith.addf %75, %83 : vector<8x512xf32>
    %85 = vector.extract_strided_slice %58 {offsets = [3, 0, 0], sizes = [1, 8, 256], strides = [1, 1, 1]} : vector<4x16x256xbf16> to vector<1x8x256xbf16>
    %86 = vector.shape_cast %85 : vector<1x8x256xbf16> to vector<8x256xbf16>
    %87 = vector.extract_strided_slice %58 {offsets = [3, 8, 0], sizes = [1, 8, 256], strides = [1, 1, 1]} : vector<4x16x256xbf16> to vector<1x8x256xbf16>
    %88 = vector.shape_cast %87 : vector<1x8x256xbf16> to vector<8x256xbf16>
    %89 = arith.maximumf %86, %88 : vector<8x256xbf16>
    %c3_39 = arith.constant 3 : index
    %c0_40 = arith.constant 0 : index
    %c0_41 = arith.constant 0 : index
    %90 = vector.load %arg7[%c3_39, %c0_40, %c0_41] : memref<4x256x512xbf16, #tpu.memory_space<vmem>>, vector<1x256x512xbf16>
    %91 = vector.shape_cast %90 : vector<1x256x512xbf16> to vector<256x512xbf16>
    %cst_42 = arith.constant dense<0.000000e+00> : vector<8x512xf32>
    %92 = tpu.matmul %89, %91, %cst_42 {dimension_numbers = #tpu.dot_dimension_numbers<[1], [0], [0], [1], [0, 0, 1, 1], [], []>} : vector<8x256xbf16>, vector<256x512xbf16>, vector<8x512xf32> -> vector<8x512xf32>
    %93 = arith.addf %84, %92 : vector<8x512xf32>
    %c0_43 = arith.constant 0 : index
    %c0_44 = arith.constant 0 : index
    %94 = vector.load %arg8[%c0_43, %c0_44] : memref<1x512xf32, #tpu.memory_space<vmem>>, vector<1x512xf32>
    %95 = vector.broadcast %94 : vector<1x512xf32> to vector<8x512xf32>
    %96 = arith.addf %93, %95 : vector<8x512xf32>
    %cst_45 = arith.constant 0.000000e+00 : f32
    %97 = vector.broadcast %cst_45 : f32 to vector<8x512xf32>
    %98 = arith.maximumf %96, %97 : vector<8x512xf32>
    %99 = arith.truncf %98 : vector<8x512xf32> to vector<8x512xbf16>
    %c0_46 = arith.constant 0 : index
    %c0_47 = arith.constant 0 : index
    %100 = vector.load %arg9[%c0_46, %c0_47] : memref<512x128xbf16, #tpu.memory_space<vmem>>, vector<512x128xbf16>
    %cst_48 = arith.constant dense<0.000000e+00> : vector<8x128xf32>
    %101 = tpu.matmul %99, %100, %cst_48 {dimension_numbers = #tpu.dot_dimension_numbers<[1], [0], [0], [1], [0, 0, 1, 1], [], []>} : vector<8x512xbf16>, vector<512x128xbf16>, vector<8x128xf32> -> vector<8x128xf32>
    %c0_49 = arith.constant 0 : index
    %c0_50 = arith.constant 0 : index
    %102 = vector.load %arg10[%c0_49, %c0_50] : memref<1x128xf32, #tpu.memory_space<vmem>>, vector<1x128xf32>
    %103 = vector.broadcast %102 : vector<1x128xf32> to vector<8x128xf32>
    %104 = arith.addf %101, %103 : vector<8x128xf32>
    %c0_51 = arith.constant 0 : index
    %c0_52 = arith.constant 0 : index
    %105 = vector.load %arg11[%c0_51, %c0_52] : memref<8x128xf32, #tpu.memory_space<vmem>>, vector<8x128xf32>
    tpu.vector_store %arg11[%c0_51, %c0_52], %104 {strides = array<i32>} : memref<8x128xf32, #tpu.memory_space<vmem>>, vector<8x128xf32>,
    return
  }
  func.func @transform_0(%arg0: i32) -> (i32, i32, i32) {
    %c0_i32 = arith.constant 0 : i32
    %c0_i32_0 = arith.constant 0 : i32
    %c0_i32_1 = arith.constant 0 : i32
    return %c0_i32, %arg0, %c0_i32_0 : i32, i32, i32
  }
  func.func @transform_1(%arg0: i32) -> (i32, i32) {
    %c0_i32 = arith.constant 0 : i32
    %c0_i32_0 = arith.constant 0 : i32
    %c0_i32_1 = arith.constant 0 : i32
    return %c0_i32, %c0_i32_0 : i32, i32
  }
  func.func @transform_2(%arg0: i32) -> (i32, i32) {
    %c0_i32 = arith.constant 0 : i32
    %c0_i32_0 = arith.constant 0 : i32
    %c0_i32_1 = arith.constant 0 : i32
    return %c0_i32, %c0_i32_0 : i32, i32
  }
  func.func @transform_3(%arg0: i32) -> (i32, i32) {
    %c0_i32 = arith.constant 0 : i32
    %c0_i32_0 = arith.constant 0 : i32
    %c0_i32_1 = arith.constant 0 : i32
    return %c0_i32, %c0_i32_0 : i32, i32
  }
  func.func @transform_4(%arg0: i32) -> (i32, i32, i32) {
    %c0_i32 = arith.constant 0 : i32
    %c0_i32_0 = arith.constant 0 : i32
    %c0_i32_1 = arith.constant 0 : i32
    %c0_i32_2 = arith.constant 0 : i32
    return %c0_i32, %c0_i32_0, %c0_i32_1 : i32, i32, i32
  }
  func.func @transform_5(%arg0: i32) -> (i32, i32) {
    %c0_i32 = arith.constant 0 : i32
    %c0_i32_0 = arith.constant 0 : i32
    %c0_i32_1 = arith.constant 0 : i32
    return %c0_i32, %c0_i32_0 : i32, i32
  }
  func.func @transform_6(%arg0: i32) -> (i32, i32, i32) {
    %c0_i32 = arith.constant 0 : i32
    %c0_i32_0 = arith.constant 0 : i32
    %c0_i32_1 = arith.constant 0 : i32
    %c0_i32_2 = arith.constant 0 : i32
    return %c0_i32, %c0_i32_0, %c0_i32_1 : i32, i32, i32
  }
  func.func @transform_7(%arg0: i32) -> (i32, i32) {
    %c0_i32 = arith.constant 0 : i32
    %c0_i32_0 = arith.constant 0 : i32
    %c0_i32_1 = arith.constant 0 : i32
    return %c0_i32, %c0_i32_0 : i32, i32
  }
  func.func @transform_8(%arg0: i32) -> (i32, i32) {
    %c0_i32 = arith.constant 0 : i32
    %c0_i32_0 = arith.constant 0 : i32
    %c0_i32_1 = arith.constant 0 : i32
    return %c0_i32, %c0_i32_0 : i32, i32
  }
  func.func @transform_9(%arg0: i32) -> (i32, i32) {
    %c0_i32 = arith.constant 0 : i32
    %c0_i32_0 = arith.constant 0 : i32
    %c0_i32_1 = arith.constant 0 : i32
    return %c0_i32, %c0_i32_0 : i32, i32
  }
  func.func @transform_10(%arg0: i32) -> (i32, i32) {
    %c0_i32 = arith.constant 0 : i32
    %c0_i32_0 = arith.constant 0 : i32
    return %arg0, %c0_i32 : i32, i32
  }
}

</mosaic_0001>

<llo_original>
// kernel: caffelenet_forward.1
$region0: #{caffelenet_forward.1}
  #allocation0 [shape = 'u32[]', space=smem, size = 0x4, offset = 0x4, fixed_abs, tag = 'smem constant byte address 0x4 - core index']
  #allocation1 [shape = 'u32[72,128]{1,0:T(1,128)}', space=vmem, size = 0x9000, scoped, tag = 'internal scratch']
  %s0 = inlined_call_operand.vmem [shape: f32[28,8,28], index: 0, kind: input, shape index: {}]
  %s1 = inlined_call_operand.hbm [shape: bf16[140,256], index: 1, kind: input, shape index: {}]
  %s2 = inlined_call_operand.hbm [shape: bf16[140,256], index: 2, kind: input, shape index: {}]
  %s3 = inlined_call_operand.hbm [shape: f32[1,256], index: 3, kind: input, shape index: {}]
  %s4 = inlined_call_operand.hbm [shape: bf16[5,256,512], index: 4, kind: input, shape index: {}]
  %s5 = inlined_call_operand.hbm [shape: f32[1,256], index: 5, kind: input, shape index: {}]
  %s6 = inlined_call_operand.hbm [shape: bf16[4,256,512], index: 6, kind: input, shape index: {}]
  %s7 = inlined_call_operand.hbm [shape: f32[1,512], index: 7, kind: input, shape index: {}]
  %s8 = inlined_call_operand.hbm [shape: bf16[512,128], index: 8, kind: input, shape index: {}]
  %s9 = inlined_call_operand.hbm [shape: f32[1,128], index: 9, kind: input, shape index: {}]
  %s10 = inlined_call_operand.vmem [shape: f32[8,128], index: 10, kind: output, shape index: {}]
  %s11 = sld [smem:[#allocation0]]
  $region86: #{caffelenet_forward.1} parent=0
    _
  %s13 = ssub.s32 1, %s11
  %s14 = scalar_select 0, %s13, %s11
  $region1: #{caffelenet_forward.1} parent=0
    #allocation2 [shape = 'u8[73728]{0}', space=vmem, size = 0x12000, scoped, tag = 'input window, operand 1, single buffered']
    #allocation3 [shape = 's32[1]{0}', space=sflag, size = 0x4, scoped, tag = 'scoped memory for caffelenet_forward.1']
    #allocation4 [shape = 'u8[73728]{0}', space=vmem, size = 0x12000, scoped, tag = 'input window, operand 2, single buffered']
    #allocation5 [shape = 's32[1]{0}', space=sflag, size = 0x4, scoped, tag = 'scoped memory for caffelenet_forward.1']
    #allocation6 [shape = 'u8[1024]{0}', space=vmem, size = 0x400, scoped, tag = 'input window, operand 3, single buffered']
    #allocation7 [shape = 'u8[1310720]{0}', space=vmem, size = 0x140000, scoped, tag = 'input window, operand 4, single buffered']
    #allocation8 [shape = 's32[1]{0}', space=sflag, size = 0x4, scoped, tag = 'scoped memory for caffelenet_forward.1']
    #allocation9 [shape = 'u8[1024]{0}', space=vmem, size = 0x400, scoped, tag = 'input window, operand 5, single buffered']
    #allocation10 [shape = 'u8[1048576]{0}', space=vmem, size = 0x100000, scoped, tag = 'input window, operand 6, single buffered']
    #allocation11 [shape = 's32[1]{0}', space=sflag, size = 0x4, scoped, tag = 'scoped memory for caffelenet_forward.1']
    #allocation12 [shape = 'u8[2048]{0}', space=vmem, size = 0x800, scoped, tag = 'input window, operand 7, single buffered']
    #allocation13 [shape = 'u8[131072]{0}', space=vmem, size = 0x20000, scoped, tag = 'input window, operand 8, single buffered']
    #allocation14 [shape = 's32[1]{0}', space=sflag, size = 0x4, scoped, tag = 'scoped memory for caffelenet_forward.1']
    #allocation15 [shape = 'u8[512]{0}', space=vmem, size = 0x400, scoped, tag = 'input window, operand 9, single buffered']
    %15 = vsyncpa [#allocation3], 0
    %16 = vsyncpa [#allocation5], 0
    %17 = vsyncpa [#allocation8], 0
    %18 = vsyncpa [#allocation11], 0
    %19 = vsyncpa [#allocation14], 0
    // Predicated region
    $region2: #{caffelenet_forward.1} parent=1 // pred_check
      _
    $region3: #{caffelenet_forward.1} parent=1 // pred_check_branch
      %21 = sbr.rel (0) target = $region5
    $region4: #{caffelenet_forward.1} parent=1 // pred_region
      _
    $region5: #{caffelenet_forward.1} parent=1 // pred_fallthru
      _
    // Predicated region
    $region6: #{caffelenet_forward.1} parent=1 // pred_check
      _
    $region7: #{caffelenet_forward.1} parent=1 // pred_check_branch
      %23 = sbr.rel (0) target = $region9
    $region8: #{caffelenet_forward.1} parent=1 // pred_region
      %25 = vsyncadd [#allocation3], 0
      %s26 = sshll.u32 %s1, 4
      %s27 = int_to_ptr.hbm [resolvable:$true] %s26
      %s28 = sshll.u32 [#allocation2], 4
      %s29 = int_to_ptr.vmem [resolvable:$true] %s28
      %34 = dma.hbm_to_vmem [thread:$0]  %s27, 2304, %s29, [#allocation3], 128, 128, 8
    $region9: #{caffelenet_forward.1} parent=1 // pred_fallthru
      _
    // Predicated region
    $region10: #{caffelenet_forward.1} parent=1 // pred_check
      _
    $region11: #{caffelenet_forward.1} parent=1 // pred_check_branch
      %36 = sbr.rel (0) target = $region13
    $region12: #{caffelenet_forward.1} parent=1 // pred_region
      %38 = vsyncadd [#allocation5], 0
      %s39 = sshll.u32 %s2, 4
      %s40 = int_to_ptr.hbm [resolvable:$true] %s39
      %s41 = sshll.u32 [#allocation4], 4
      %s42 = int_to_ptr.vmem [resolvable:$true] %s41
      %47 = dma.hbm_to_vmem [thread:$0]  %s40, 2304, %s42, [#allocation5], 128, 128, 8
    $region13: #{caffelenet_forward.1} parent=1 // pred_fallthru
      _
    // Predicated region
    $region14: #{caffelenet_forward.1} parent=1 // pred_check
      _
    $region15: #{caffelenet_forward.1} parent=1 // pred_check_branch
      %49 = sbr.rel (0) target = $region17
    $region16: #{caffelenet_forward.1} parent=1 // pred_region
      %51 = vsyncadd [#allocation5], 0
      %s53 = sshll.u32 %s3, 4
      %s54 = int_to_ptr.hbm [resolvable:$true] %s53
      %s55 = sshll.u32 [#allocation6], 4
      %s56 = int_to_ptr.vmem [resolvable:$true] %s55
      %58 = dma.hbm_to_vmem [thread:$0]  %s54, 32, %s56, [#allocation5]
    $region17: #{caffelenet_forward.1} parent=1 // pred_fallthru
      _
    // Predicated region
    $region18: #{caffelenet_forward.1} parent=1 // pred_check
      _
    $region19: #{caffelenet_forward.1} parent=1 // pred_check_branch
      %60 = sbr.rel (0) target = $region21
    $region20: #{caffelenet_forward.1} parent=1 // pred_region
      %62 = vsyncadd [#allocation8], 0
      %s63 = sshll.u32 %s4, 4
      %s64 = int_to_ptr.hbm [resolvable:$true] %s63
      %s65 = sshll.u32 [#allocation7], 4
      %s66 = int_to_ptr.vmem [resolvable:$true] %s65
      %71 = dma.hbm_to_vmem [thread:$0]  %s64, 40960, %s66, [#allocation8], 256, 256, 16
    $region21: #{caffelenet_forward.1} parent=1 // pred_fallthru
      _
    // Predicated region
    $region22: #{caffelenet_forward.1} parent=1 // pred_check
      _
    $region23: #{caffelenet_forward.1} parent=1 // pred_check_branch
      %73 = sbr.rel (0) target = $region25
    $region24: #{caffelenet_forward.1} parent=1 // pred_region
      %75 = vsyncadd [#allocation8], 0
      %s77 = sshll.u32 %s5, 4
      %s78 = int_to_ptr.hbm [resolvable:$true] %s77
      %s79 = sshll.u32 [#allocation9], 4
      %s80 = int_to_ptr.vmem [resolvable:$true] %s79
      %82 = dma.hbm_to_vmem [thread:$0]  %s78, 32, %s80, [#allocation8]
    $region25: #{caffelenet_forward.1} parent=1 // pred_fallthru
      _
    // Predicated region
    $region26: #{caffelenet_forward.1} parent=1 // pred_check
      _
    $region27: #{caffelenet_forward.1} parent=1 // pred_check_branch
      %84 = sbr.rel (0) target = $region29
    $region28: #{caffelenet_forward.1} parent=1 // pred_region
      %86 = vsyncadd [#allocation11], 0
      %s87 = sshll.u32 %s6, 4
      %s88 = int_to_ptr.hbm [resolvable:$true] %s87
      %s89 = sshll.u32 [#allocation10], 4
      %s90 = int_to_ptr.vmem [resolvable:$true] %s89
      %95 = dma.hbm_to_vmem [thread:$0]  %s88, 32768, %s90, [#allocation11], 256, 256, 16
    $region29: #{caffelenet_forward.1} parent=1 // pred_fallthru
      _
    // Predicated region
    $region30: #{caffelenet_forward.1} parent=1 // pred_check
      _
    $region31: #{caffelenet_forward.1} parent=1 // pred_check_branch
      %97 = sbr.rel (0) target = $region33
    $region32: #{caffelenet_forward.1} parent=1 // pred_region
      %99 = vsyncadd [#allocation11], 0
      %s101 = sshll.u32 %s7, 4
      %s102 = int_to_ptr.hbm [resolvable:$true] %s101
      %s103 = sshll.u32 [#allocation12], 4
      %s104 = int_to_ptr.vmem [resolvable:$true] %s103
      %106 = dma.hbm_to_vmem [thread:$0]  %s102, 64, %s104, [#allocation11]
    $region33: #{caffelenet_forward.1} parent=1 // pred_fallthru
      _
    // Predicated region
    $region34: #{caffelenet_forward.1} parent=1 // pred_check
      _
    $region35: #{caffelenet_forward.1} parent=1 // pred_check_branch
      %108 = sbr.rel (0) target = $region37
    $region36: #{caffelenet_forward.1} parent=1 // pred_region
      %110 = vsyncadd [#allocation14], 0
      %s111 = sshll.u32 %s8, 4
      %s112 = int_to_ptr.hbm [resolvable:$true] %s111
      %s113 = sshll.u32 [#allocation13], 4
      %s114 = int_to_ptr.vmem [resolvable:$true] %s113
      %119 = dma.hbm_to_vmem [thread:$0]  %s112, 4096, %s114, [#allocation14], 64, 64, 4
    $region37: #{caffelenet_forward.1} parent=1 // pred_fallthru
      _
    // Predicated region
    $region38: #{caffelenet_forward.1} parent=1 // pred_check
      _
    $region39: #{caffelenet_forward.1} parent=1 // pred_check_branch
      %121 = sbr.rel (0) target = $region41
    $region40: #{caffelenet_forward.1} parent=1 // pred_region
      %123 = vsyncadd [#allocation14], 0
      %s125 = sshll.u32 %s9, 4
      %s126 = int_to_ptr.hbm [resolvable:$true] %s125
      %s127 = sshll.u32 [#allocation15], 4
      %s128 = int_to_ptr.vmem [resolvable:$true] %s127
      %130 = dma.hbm_to_vmem [thread:$0]  %s126, 16, %s128, [#allocation14]
    $region41: #{caffelenet_forward.1} parent=1 // pred_fallthru
      _
    // Predicated region
    $region42: #{caffelenet_forward.1} parent=1 // pred_check
      _
    $region43: #{caffelenet_forward.1} parent=1 // pred_check_branch
      %132 = sbr.rel (0) target = $region45
    $region44: #{caffelenet_forward.1} parent=1 // pred_region
      %134 = dma.done [#allocation3], 2304
    $region45: #{caffelenet_forward.1} parent=1 // pred_fallthru
      _
    // Predicated region
    $region46: #{caffelenet_forward.1} parent=1 // pred_check
      _
    $region47: #{caffelenet_forward.1} parent=1 // pred_check_branch
      %136 = sbr.rel (0) target = $region49
    $region48: #{caffelenet_forward.1} parent=1 // pred_region
      %138 = dma.done [#allocation5], 2304
    $region49: #{caffelenet_forward.1} parent=1 // pred_fallthru
      _
    // Predicated region
    $region50: #{caffelenet_forward.1} parent=1 // pred_check
      _
    $region51: #{caffelenet_forward.1} parent=1 // pred_check_branch
      %140 = sbr.rel (0) target = $region53
    $region52: #{caffelenet_forward.1} parent=1 // pred_region
      %142 = dma.done [#allocation5], 32
    $region53: #{caffelenet_forward.1} parent=1 // pred_fallthru
      _
    // Predicated region
    $region54: #{caffelenet_forward.1} parent=1 // pred_check
      _
    $region55: #{caffelenet_forward.1} parent=1 // pred_check_branch
      %144 = sbr.rel (0) target = $region57
    $region56: #{caffelenet_forward.1} parent=1 // pred_region
      %146 = dma.done [#allocation8], 40960
    $region57: #{caffelenet_forward.1} parent=1 // pred_fallthru
      _
    // Predicated region
    $region58: #{caffelenet_forward.1} parent=1 // pred_check
      _
    $region59: #{caffelenet_forward.1} parent=1 // pred_check_branch
      %148 = sbr.rel (0) target = $region61
    $region60: #{caffelenet_forward.1} parent=1 // pred_region
      %150 = dma.done [#allocation8], 32
    $region61: #{caffelenet_forward.1} parent=1 // pred_fallthru
      _
    // Predicated region
    $region62: #{caffelenet_forward.1} parent=1 // pred_check
      _
    $region63: #{caffelenet_forward.1} parent=1 // pred_check_branch
      %152 = sbr.rel (0) target = $region65
    $region64: #{caffelenet_forward.1} parent=1 // pred_region
      %154 = dma.done [#allocation11], 32768
    $region65: #{caffelenet_forward.1} parent=1 // pred_fallthru
      _
    // Predicated region
    $region66: #{caffelenet_forward.1} parent=1 // pred_check
      _
    $region67: #{caffelenet_forward.1} parent=1 // pred_check_branch
      %156 = sbr.rel (0) target = $region69
    $region68: #{caffelenet_forward.1} parent=1 // pred_region
      %158 = dma.done [#allocation11], 64
    $region69: #{caffelenet_forward.1} parent=1 // pred_fallthru
      _
    // Predicated region
    $region70: #{caffelenet_forward.1} parent=1 // pred_check
      _
    $region71: #{caffelenet_forward.1} parent=1 // pred_check_branch
      %160 = sbr.rel (0) target = $region73
    $region72: #{caffelenet_forward.1} parent=1 // pred_region
      %162 = dma.done [#allocation14], 4096
    $region73: #{caffelenet_forward.1} parent=1 // pred_fallthru
      _
    // Predicated region
    $region74: #{caffelenet_forward.1} parent=1 // pred_check
      _
    $region75: #{caffelenet_forward.1} parent=1 // pred_check_branch
      %164 = sbr.rel (0) target = $region77
    $region76: #{caffelenet_forward.1} parent=1 // pred_region
      %166 = dma.done [#allocation14], 16
    $region77: #{caffelenet_forward.1} parent=1 // pred_fallthru
      _
    %v168 = vld [vmem:[%s0] sm:$0xff]
    %v169 = vld [vmem:[%s0 + $0x8] sm:$0xff]
    %v170 = vld [vmem:[%s0 + $0x10] sm:$0xff]
    %v171 = vld [vmem:[%s0 + $0x18] sm:$0xff]
    %v172 = vld [vmem:[%s0 + $0x20] sm:$0xff]
    %v173 = vld [vmem:[%s0 + $0x28] sm:$0xff]
    %v174 = vld [vmem:[%s0 + $0x30] sm:$0xff]
    %v175 = vld [vmem:[%s0 + $0x38] sm:$0xff]
    %v176 = vld [vmem:[%s0 + $0x40] sm:$0xff]
    %v177 = vld [vmem:[%s0 + $0x48] sm:$0xff]
    %v178 = vld [vmem:[%s0 + $0x50] sm:$0xff]
    %v179 = vld [vmem:[%s0 + $0x58] sm:$0xff]
    %v180 = vld [vmem:[%s0 + $0x60] sm:$0xff]
    %v181 = vld [vmem:[%s0 + $0x68] sm:$0xff]
    %v182 = vld [vmem:[%s0 + $0x70] sm:$0xff]
    %v183 = vld [vmem:[%s0 + $0x78] sm:$0xff]
    %v184 = vld [vmem:[%s0 + $0x80] sm:$0xff]
    %v185 = vld [vmem:[%s0 + $0x88] sm:$0xff]
    %v186 = vld [vmem:[%s0 + $0x90] sm:$0xff]
    %v187 = vld [vmem:[%s0 + $0x98] sm:$0xff]
    %v188 = vld [vmem:[%s0 + $0xa0] sm:$0xff]
    %v189 = vld [vmem:[%s0 + $0xa8] sm:$0xff]
    %v190 = vld [vmem:[%s0 + $0xb0] sm:$0xff]
    %v191 = vld [vmem:[%s0 + $0xb8] sm:$0xff]
    %v192 = vld [vmem:[%s0 + $0xc0] sm:$0xff]
    %v193 = vld [vmem:[%s0 + $0xc8] sm:$0xff]
    %v194 = vld [vmem:[%s0 + $0xd0] sm:$0xff]
    %v195 = vld [vmem:[%s0 + $0xd8] sm:$0xff]
    %v196 = vpack.c.bf16 %v168, %v168
    %v197 = vpack.c.bf16 %v169, %v169
    %v198 = vpack.c.bf16 %v170, %v170
    %v199 = vpack.c.bf16 %v171, %v171
    %v200 = vpack.c.bf16 %v172, %v172
    %v201 = vpack.c.bf16 %v173, %v173
    %v202 = vpack.c.bf16 %v174, %v174
    %v203 = vpack.c.bf16 %v175, %v175
    %v204 = vpack.c.bf16 %v176, %v176
    %v205 = vpack.c.bf16 %v177, %v177
    %v206 = vpack.c.bf16 %v178, %v178
    %v207 = vpack.c.bf16 %v179, %v179
    %v208 = vpack.c.bf16 %v180, %v180
    %v209 = vpack.c.bf16 %v181, %v181
    %v210 = vpack.c.bf16 %v182, %v182
    %v211 = vpack.c.bf16 %v183, %v183
    %v212 = vpack.c.bf16 %v184, %v184
    %v213 = vpack.c.bf16 %v185, %v185
    %v214 = vpack.c.bf16 %v186, %v186
    %v215 = vpack.c.bf16 %v187, %v187
    %v216 = vpack.c.bf16 %v188, %v188
    %v217 = vpack.c.bf16 %v189, %v189
    %v218 = vpack.c.bf16 %v190, %v190
    %v219 = vpack.c.bf16 %v191, %v191
    %v220 = vpack.c.bf16 %v192, %v192
    %v221 = vpack.c.bf16 %v193, %v193
    %v222 = vpack.c.bf16 %v194, %v194
    %v223 = vpack.c.bf16 %v195, %v195
    %v248 = vunpack.c.l.b16 %v197
    %v249 = vunpack.c.l.b16 %v198
    %v250 = vunpack.c.l.b16 %v199
    %v251 = vunpack.c.l.b16 %v200
    %v252 = vunpack.c.l.b16 %v201
    %v253 = vunpack.c.l.b16 %v202
    %v254 = vunpack.c.l.b16 %v203
    %v255 = vunpack.c.l.b16 %v204
    %v256 = vunpack.c.l.b16 %v205
    %v257 = vunpack.c.l.b16 %v206
    %v258 = vunpack.c.l.b16 %v207
    %v259 = vunpack.c.l.b16 %v208
    %v260 = vunpack.c.l.b16 %v209
    %v261 = vunpack.c.l.b16 %v210
    %v262 = vunpack.c.l.b16 %v211
    %v263 = vunpack.c.l.b16 %v212
    %v264 = vunpack.c.l.b16 %v213
    %v265 = vunpack.c.l.b16 %v214
    %v266 = vunpack.c.l.b16 %v215
    %v267 = vunpack.c.l.b16 %v216
    %v268 = vunpack.c.l.b16 %v217
    %v269 = vunpack.c.l.b16 %v218
    %v270 = vunpack.c.l.b16 %v219
    %v271 = vunpack.c.l.b16 %v220
    %v272 = vpack.c.b16 %v248, %v248
    %v273 = vpack.c.b16 %v249, %v249
    %v274 = vpack.c.b16 %v250, %v250
    %v275 = vpack.c.b16 %v251, %v251
    %v276 = vpack.c.b16 %v252, %v252
    %v277 = vpack.c.b16 %v253, %v253
    %v278 = vpack.c.b16 %v254, %v254
    %v279 = vpack.c.b16 %v255, %v255
    %v280 = vpack.c.b16 %v256, %v256
    %v281 = vpack.c.b16 %v257, %v257
    %v282 = vpack.c.b16 %v258, %v258
    %v283 = vpack.c.b16 %v259, %v259
    %v284 = vpack.c.b16 %v260, %v260
    %v285 = vpack.c.b16 %v261, %v261
    %v286 = vpack.c.b16 %v262, %v262
    %v287 = vpack.c.b16 %v263, %v263
    %v288 = vpack.c.b16 %v264, %v264
    %v289 = vpack.c.b16 %v265, %v265
    %v290 = vpack.c.b16 %v266, %v266
    %v291 = vpack.c.b16 %v267, %v267
    %v292 = vpack.c.b16 %v268, %v268
    %v293 = vpack.c.b16 %v269, %v269
    %v294 = vpack.c.b16 %v270, %v270
    %v295 = vpack.c.b16 %v271, %v271
    %296 = vrot.lane.b32.xlu0 %v272, 28
    %v297 = vpop.permute.xlu0 %296
    %298 = vrot.lane.b32.xlu0 %v273, 28
    %v299 = vpop.permute.xlu0 %298
    %300 = vrot.lane.b32.xlu0 %v274, 28
    %v301 = vpop.permute.xlu0 %300
    %302 = vrot.lane.b32.xlu0 %v275, 28
    %v303 = vpop.permute.xlu0 %302
    %304 = vrot.lane.b32.xlu0 %v276, 28
    %v305 = vpop.permute.xlu0 %304
    %306 = vrot.lane.b32.xlu0 %v277, 28
    %v307 = vpop.permute.xlu0 %306
    %308 = vrot.lane.b32.xlu0 %v278, 28
    %v309 = vpop.permute.xlu0 %308
    %310 = vrot.lane.b32.xlu0 %v279, 28
    %v311 = vpop.permute.xlu0 %310
    %312 = vrot.lane.b32.xlu0 %v280, 28
    %v313 = vpop.permute.xlu0 %312
    %314 = vrot.lane.b32.xlu0 %v281, 28
    %v315 = vpop.permute.xlu0 %314
    %316 = vrot.lane.b32.xlu0 %v282, 28
    %v317 = vpop.permute.xlu0 %316
    %318 = vrot.lane.b32.xlu0 %v283, 28
    %v319 = vpop.permute.xlu0 %318
    %320 = vrot.lane.b32.xlu0 %v284, 28
    %v321 = vpop.permute.xlu0 %320
    %322 = vrot.lane.b32.xlu0 %v285, 28
    %v323 = vpop.permute.xlu0 %322
    %324 = vrot.lane.b32.xlu0 %v286, 28
    %v325 = vpop.permute.xlu0 %324
    %326 = vrot.lane.b32.xlu0 %v287, 28
    %v327 = vpop.permute.xlu0 %326
    %328 = vrot.lane.b32.xlu0 %v288, 28
    %v329 = vpop.permute.xlu0 %328
    %330 = vrot.lane.b32.xlu0 %v289, 28
    %v331 = vpop.permute.xlu0 %330
    %332 = vrot.lane.b32.xlu0 %v290, 28
    %v333 = vpop.permute.xlu0 %332
    %334 = vrot.lane.b32.xlu0 %v291, 28
    %v335 = vpop.permute.xlu0 %334
    %336 = vrot.lane.b32.xlu0 %v292, 28
    %v337 = vpop.permute.xlu0 %336
    %338 = vrot.lane.b32.xlu0 %v293, 28
    %v339 = vpop.permute.xlu0 %338
    %340 = vrot.lane.b32.xlu0 %v294, 28
    %v341 = vpop.permute.xlu0 %340
    %342 = vrot.lane.b32.xlu0 %v295, 28
    %v343 = vpop.permute.xlu0 %342
    %v345 = vunpack.c.l.b16 %v221
    %v346 = vpack.c.b16 %v345, %v345
    %347 = vrot.lane.b32.xlu0 %v273, 56
    %v348 = vpop.permute.xlu0 %347
    %349 = vrot.lane.b32.xlu0 %v274, 56
    %v350 = vpop.permute.xlu0 %349
    %351 = vrot.lane.b32.xlu0 %v275, 56
    %v352 = vpop.permute.xlu0 %351
    %353 = vrot.lane.b32.xlu0 %v276, 56
    %v354 = vpop.permute.xlu0 %353
    %355 = vrot.lane.b32.xlu0 %v277, 56
    %v356 = vpop.permute.xlu0 %355
    %357 = vrot.lane.b32.xlu0 %v278, 56
    %v358 = vpop.permute.xlu0 %357
    %359 = vrot.lane.b32.xlu0 %v279, 56
    %v360 = vpop.permute.xlu0 %359
    %361 = vrot.lane.b32.xlu0 %v280, 56
    %v362 = vpop.permute.xlu0 %361
    %363 = vrot.lane.b32.xlu0 %v281, 56
    %v364 = vpop.permute.xlu0 %363
    %365 = vrot.lane.b32.xlu0 %v282, 56
    %v366 = vpop.permute.xlu0 %365
    %367 = vrot.lane.b32.xlu0 %v283, 56
    %v368 = vpop.permute.xlu0 %367
    %369 = vrot.lane.b32.xlu0 %v284, 56
    %v370 = vpop.permute.xlu0 %369
    %371 = vrot.lane.b32.xlu0 %v285, 56
    %v372 = vpop.permute.xlu0 %371
    %373 = vrot.lane.b32.xlu0 %v286, 56
    %v374 = vpop.permute.xlu0 %373
    %375 = vrot.lane.b32.xlu0 %v287, 56
    %v376 = vpop.permute.xlu0 %375
    %377 = vrot.lane.b32.xlu0 %v288, 56
    %v378 = vpop.permute.xlu0 %377
    %379 = vrot.lane.b32.xlu0 %v289, 56
    %v380 = vpop.permute.xlu0 %379
    %381 = vrot.lane.b32.xlu0 %v290, 56
    %v382 = vpop.permute.xlu0 %381
    %383 = vrot.lane.b32.xlu0 %v291, 56
    %v384 = vpop.permute.xlu0 %383
    %385 = vrot.lane.b32.xlu0 %v292, 56
    %v386 = vpop.permute.xlu0 %385
    %387 = vrot.lane.b32.xlu0 %v293, 56
    %v388 = vpop.permute.xlu0 %387
    %389 = vrot.lane.b32.xlu0 %v294, 56
    %v390 = vpop.permute.xlu0 %389
    %391 = vrot.lane.b32.xlu0 %v295, 56
    %v392 = vpop.permute.xlu0 %391
    %393 = vrot.lane.b32.xlu0 %v346, 56
    %v394 = vpop.permute.xlu0 %393
    %v396 = vunpack.c.l.b16 %v222
    %v397 = vpack.c.b16 %v396, %v396
    %398 = vrot.lane.b32.xlu0 %v274, 84
    %v399 = vpop.permute.xlu0 %398
    %400 = vrot.lane.b32.xlu0 %v275, 84
    %v401 = vpop.permute.xlu0 %400
    %402 = vrot.lane.b32.xlu0 %v276, 84
    %v403 = vpop.permute.xlu0 %402
    %404 = vrot.lane.b32.xlu0 %v277, 84
    %v405 = vpop.permute.xlu0 %404
    %406 = vrot.lane.b32.xlu0 %v278, 84
    %v407 = vpop.permute.xlu0 %406
    %408 = vrot.lane.b32.xlu0 %v279, 84
    %v409 = vpop.permute.xlu0 %408
    %410 = vrot.lane.b32.xlu0 %v280, 84
    %v411 = vpop.permute.xlu0 %410
    %412 = vrot.lane.b32.xlu0 %v281, 84
    %v413 = vpop.permute.xlu0 %412
    %414 = vrot.lane.b32.xlu0 %v282, 84
    %v415 = vpop.permute.xlu0 %414
    %416 = vrot.lane.b32.xlu0 %v283, 84
    %v417 = vpop.permute.xlu0 %416
    %418 = vrot.lane.b32.xlu0 %v284, 84
    %v419 = vpop.permute.xlu0 %418
    %420 = vrot.lane.b32.xlu0 %v285, 84
    %v421 = vpop.permute.xlu0 %420
    %422 = vrot.lane.b32.xlu0 %v286, 84
    %v423 = vpop.permute.xlu0 %422
    %424 = vrot.lane.b32.xlu0 %v287, 84
    %v425 = vpop.permute.xlu0 %424
    %426 = vrot.lane.b32.xlu0 %v288, 84
    %v427 = vpop.permute.xlu0 %426
    %428 = vrot.lane.b32.xlu0 %v289, 84
    %v429 = vpop.permute.xlu0 %428
    %430 = vrot.lane.b32.xlu0 %v290, 84
    %v431 = vpop.permute.xlu0 %430
    %432 = vrot.lane.b32.xlu0 %v291, 84
    %v433 = vpop.permute.xlu0 %432
    %434 = vrot.lane.b32.xlu0 %v292, 84
    %v435 = vpop.permute.xlu0 %434
    %436 = vrot.lane.b32.xlu0 %v293, 84
    %v437 = vpop.permute.xlu0 %436
    %438 = vrot.lane.b32.xlu0 %v294, 84
    %v439 = vpop.permute.xlu0 %438
    %440 = vrot.lane.b32.xlu0 %v295, 84
    %v441 = vpop.permute.xlu0 %440
    %442 = vrot.lane.b32.xlu0 %v346, 84
    %v443 = vpop.permute.xlu0 %442
    %444 = vrot.lane.b32.xlu0 %v397, 84
    %v445 = vpop.permute.xlu0 %444
    %v447 = vunpack.c.l.b16 %v223
    %v448 = vpack.c.b16 %v447, %v447
    %449 = vrot.lane.b32.xlu0 %v275, 112
    %v450 = vpop.permute.xlu0 %449
    %451 = vrot.lane.b32.xlu0 %v276, 112
    %v452 = vpop.permute.xlu0 %451
    %453 = vrot.lane.b32.xlu0 %v277, 112
    %v454 = vpop.permute.xlu0 %453
    %455 = vrot.lane.b32.xlu0 %v278, 112
    %v456 = vpop.permute.xlu0 %455
    %457 = vrot.lane.b32.xlu0 %v279, 112
    %v458 = vpop.permute.xlu0 %457
    %459 = vrot.lane.b32.xlu0 %v280, 112
    %v460 = vpop.permute.xlu0 %459
    %461 = vrot.lane.b32.xlu0 %v281, 112
    %v462 = vpop.permute.xlu0 %461
    %463 = vrot.lane.b32.xlu0 %v282, 112
    %v464 = vpop.permute.xlu0 %463
    %465 = vrot.lane.b32.xlu0 %v283, 112
    %v466 = vpop.permute.xlu0 %465
    %467 = vrot.lane.b32.xlu0 %v284, 112
    %v468 = vpop.permute.xlu0 %467
    %469 = vrot.lane.b32.xlu0 %v285, 112
    %v470 = vpop.permute.xlu0 %469
    %471 = vrot.lane.b32.xlu0 %v286, 112
    %v472 = vpop.permute.xlu0 %471
    %473 = vrot.lane.b32.xlu0 %v287, 112
    %v474 = vpop.permute.xlu0 %473
    %475 = vrot.lane.b32.xlu0 %v288, 112
    %v476 = vpop.permute.xlu0 %475
    %477 = vrot.lane.b32.xlu0 %v289, 112
    %v478 = vpop.permute.xlu0 %477
    %479 = vrot.lane.b32.xlu0 %v290, 112
    %v480 = vpop.permute.xlu0 %479
    %481 = vrot.lane.b32.xlu0 %v291, 112
    %v482 = vpop.permute.xlu0 %481
    %483 = vrot.lane.b32.xlu0 %v292, 112
    %v484 = vpop.permute.xlu0 %483
    %485 = vrot.lane.b32.xlu0 %v293, 112
    %v486 = vpop.permute.xlu0 %485
    %487 = vrot.lane.b32.xlu0 %v294, 112
    %v488 = vpop.permute.xlu0 %487
    %489 = vrot.lane.b32.xlu0 %v295, 112
    %v490 = vpop.permute.xlu0 %489
    %491 = vrot.lane.b32.xlu0 %v346, 112
    %v492 = vpop.permute.xlu0 %491
    %493 = vrot.lane.b32.xlu0 %v397, 112
    %v494 = vpop.permute.xlu0 %493
    %495 = vrot.lane.b32.xlu0 %v448, 112
    %v496 = vpop.permute.xlu0 %495
    %vm497 = vcmask 228352
    %v500 = vsel %vm497, %v196, %v297
    %v503 = vsel %vm497, %v197, %v299
    %v506 = vsel %vm497, %v198, %v301
    %v509 = vsel %vm497, %v199, %v303
    %v512 = vsel %vm497, %v200, %v305
    %v515 = vsel %vm497, %v201, %v307
    %v518 = vsel %vm497, %v202, %v309
    %v521 = vsel %vm497, %v203, %v311
    %v524 = vsel %vm497, %v204, %v313
    %v527 = vsel %vm497, %v205, %v315
    %v530 = vsel %vm497, %v206, %v317
    %v533 = vsel %vm497, %v207, %v319
    %v536 = vsel %vm497, %v208, %v321
    %v539 = vsel %vm497, %v209, %v323
    %v542 = vsel %vm497, %v210, %v325
    %v545 = vsel %vm497, %v211, %v327
    %v548 = vsel %vm497, %v212, %v329
    %v551 = vsel %vm497, %v213, %v331
    %v554 = vsel %vm497, %v214, %v333
    %v557 = vsel %vm497, %v215, %v335
    %v560 = vsel %vm497, %v216, %v337
    %v563 = vsel %vm497, %v217, %v339
    %v566 = vsel %vm497, %v218, %v341
    %v569 = vsel %vm497, %v219, %v343
    %vm570 = vcmask 457728
    %v572 = vsel %vm570, %v500, %v348
    %v574 = vsel %vm570, %v503, %v350
    %v576 = vsel %vm570, %v506, %v352
    %v578 = vsel %vm570, %v509, %v354
    %v580 = vsel %vm570, %v512, %v356
    %v582 = vsel %vm570, %v515, %v358
    %v584 = vsel %vm570, %v518, %v360
    %v586 = vsel %vm570, %v521, %v362
    %v588 = vsel %vm570, %v524, %v364
    %v590 = vsel %vm570, %v527, %v366
    %v592 = vsel %vm570, %v530, %v368
    %v594 = vsel %vm570, %v533, %v370
    %v596 = vsel %vm570, %v536, %v372
    %v598 = vsel %vm570, %v539, %v374
    %v600 = vsel %vm570, %v542, %v376
    %v602 = vsel %vm570, %v545, %v378
    %v604 = vsel %vm570, %v548, %v380
    %v606 = vsel %vm570, %v551, %v382
    %v608 = vsel %vm570, %v554, %v384
    %v610 = vsel %vm570, %v557, %v386
    %v612 = vsel %vm570, %v560, %v388
    %v614 = vsel %vm570, %v563, %v390
    %v616 = vsel %vm570, %v566, %v392
    %v618 = vsel %vm570, %v569, %v394
    %vm619 = vcmask 687104
    %v621 = vsel %vm619, %v572, %v399
    %v623 = vsel %vm619, %v574, %v401
    %v625 = vsel %vm619, %v576, %v403
    %v627 = vsel %vm619, %v578, %v405
    %v629 = vsel %vm619, %v580, %v407
    %v631 = vsel %vm619, %v582, %v409
    %v633 = vsel %vm619, %v584, %v411
    %v635 = vsel %vm619, %v586, %v413
    %v637 = vsel %vm619, %v588, %v415
    %v639 = vsel %vm619, %v590, %v417
    %v641 = vsel %vm619, %v592, %v419
    %v643 = vsel %vm619, %v594, %v421
    %v645 = vsel %vm619, %v596, %v423
    %v647 = vsel %vm619, %v598, %v425
    %v649 = vsel %vm619, %v600, %v427
    %v651 = vsel %vm619, %v602, %v429
    %v653 = vsel %vm619, %v604, %v431
    %v655 = vsel %vm619, %v606, %v433
    %v657 = vsel %vm619, %v608, %v435
    %v659 = vsel %vm619, %v610, %v437
    %v661 = vsel %vm619, %v612, %v439
    %v663 = vsel %vm619, %v614, %v441
    %v665 = vsel %vm619, %v616, %v443
    %v667 = vsel %vm619, %v618, %v445
    %vm668 = vcmask 916480
    %v670 = vsel %vm668, %v621, %v450
    %v672 = vsel %vm668, %v623, %v452
    %v674 = vsel %vm668, %v625, %v454
    %v676 = vsel %vm668, %v627, %v456
    %v678 = vsel %vm668, %v629, %v458
    %v680 = vsel %vm668, %v631, %v460
    %v682 = vsel %vm668, %v633, %v462
    %v684 = vsel %vm668, %v635, %v464
    %v686 = vsel %vm668, %v637, %v466
    %v688 = vsel %vm668, %v639, %v468
    %v690 = vsel %vm668, %v641, %v470
    %v692 = vsel %vm668, %v643, %v472
    %v694 = vsel %vm668, %v645, %v474
    %v696 = vsel %vm668, %v647, %v476
    %v698 = vsel %vm668, %v649, %v478
    %v700 = vsel %vm668, %v651, %v480
    %v702 = vsel %vm668, %v653, %v482
    %v704 = vsel %vm668, %v655, %v484
    %v706 = vsel %vm668, %v657, %v486
    %v708 = vsel %vm668, %v659, %v488
    %v710 = vsel %vm668, %v661, %v490
    %v712 = vsel %vm668, %v663, %v492
    %v714 = vsel %vm668, %v665, %v494
    %v716 = vsel %vm668, %v667, %v496
    %v741 = vunpack.c.l.b16 %v670
    %v742 = vunpack.c.l.b16 %v450
    %v743 = vunpack.c.l.b16 %v672
    %v744 = vunpack.c.l.b16 %v452
    %v745 = vunpack.c.l.b16 %v674
    %v746 = vunpack.c.l.b16 %v454
    %v747 = vunpack.c.l.b16 %v676
    %v748 = vunpack.c.l.b16 %v456
    %v749 = vunpack.c.l.b16 %v678
    %v750 = vunpack.c.l.b16 %v458
    %v751 = vunpack.c.l.b16 %v680
    %v752 = vunpack.c.l.b16 %v460
    %v753 = vunpack.c.l.b16 %v682
    %v754 = vunpack.c.l.b16 %v462
    %v755 = vunpack.c.l.b16 %v684
    %v756 = vunpack.c.l.b16 %v464
    %v757 = vunpack.c.l.b16 %v686
    %v758 = vunpack.c.l.b16 %v466
    %v759 = vunpack.c.l.b16 %v688
    %v760 = vunpack.c.l.b16 %v468
    %v761 = vunpack.c.l.b16 %v690
    %v762 = vunpack.c.l.b16 %v470
    %v763 = vunpack.c.l.b16 %v692
    %v764 = vunpack.c.l.b16 %v472
    %v765 = vunpack.c.l.b16 %v694
    %v766 = vunpack.c.l.b16 %v474
    %v767 = vunpack.c.l.b16 %v696
    %v768 = vunpack.c.l.b16 %v476
    %v769 = vunpack.c.l.b16 %v698
    %v770 = vunpack.c.l.b16 %v478
    %v771 = vunpack.c.l.b16 %v700
    %v772 = vunpack.c.l.b16 %v480
    %v773 = vunpack.c.l.b16 %v702
    %v774 = vunpack.c.l.b16 %v482
    %v775 = vunpack.c.l.b16 %v704
    %v776 = vunpack.c.l.b16 %v484
    %v777 = vunpack.c.l.b16 %v706
    %v778 = vunpack.c.l.b16 %v486
    %v779 = vunpack.c.l.b16 %v708
    %v780 = vunpack.c.l.b16 %v488
    %v781 = vunpack.c.l.b16 %v710
    %v782 = vunpack.c.l.b16 %v490
    %v783 = vunpack.c.l.b16 %v712
    %v784 = vunpack.c.l.b16 %v492
    %v785 = vunpack.c.l.b16 %v714
    %v786 = vunpack.c.l.b16 %v494
    %v787 = vunpack.c.l.b16 %v716
    %v788 = vunpack.c.l.b16 %v496
    %v789 = vld [vmem:[#allocation2] sm:$0xff]
    %v790 = vld [vmem:[#allocation2 + $0x8] sm:$0xff]
    %v791 = vld [vmem:[#allocation2 + $0x10] sm:$0xff]
    %v792 = vld [vmem:[#allocation2 + $0x18] sm:$0xff]
    %v793 = vld [vmem:[#allocation2 + $0x20] sm:$0xff]
    %v794 = vld [vmem:[#allocation2 + $0x28] sm:$0xff]
    %v795 = vld [vmem:[#allocation2 + $0x30] sm:$0xff]
    %v796 = vld [vmem:[#allocation2 + $0x38] sm:$0xff]
    %v797 = vld [vmem:[#allocation2 + $0x40] sm:$0xff]
    %v798 = vld [vmem:[#allocation2 + $0x48] sm:$0xff]
    %v799 = vld [vmem:[#allocation2 + $0x50] sm:$0xff]
    %v800 = vld [vmem:[#allocation2 + $0x58] sm:$0xff]
    %v801 = vld [vmem:[#allocation2 + $0x60] sm:$0xff]
    %v802 = vld [vmem:[#allocation2 + $0x68] sm:$0xff]
    %v803 = vld [vmem:[#allocation2 + $0x70] sm:$0xff]
    %v804 = vld [vmem:[#allocation2 + $0x78] sm:$0xff]
    %v805 = vld [vmem:[#allocation2 + $0x80] sm:$0xff]
    %v806 = vld [vmem:[#allocation2 + $0x88] sm:$0x33]
    %v807 = vpack.c.b16 %v743, %v741
    %v808 = vpack.c.b16 %v744, %v742
    %v809 = vpack.c.b16 %v747, %v745
    %v810 = vpack.c.b16 %v748, %v746
    %v811 = vpack.c.b16 %v751, %v749
    %v812 = vpack.c.b16 %v752, %v750
    %v813 = vpack.c.b16 %v755, %v753
    %v814 = vpack.c.b16 %v756, %v754
    %v815 = vpack.c.b16 %v759, %v757
    %v816 = vpack.c.b16 %v760, %v758
    %v817 = vpack.c.b16 %v763, %v761
    %v818 = vpack.c.b16 %v764, %v762
    %v819 = vpack.c.b16 %v767, %v765
    %v820 = vpack.c.b16 %v768, %v766
    %v821 = vpack.c.b16 %v771, %v769
    %v822 = vpack.c.b16 %v772, %v770
    %v823 = vpack.c.b16 %v775, %v773
    %v824 = vpack.c.b16 %v776, %v774
    %v825 = vpack.c.b16 %v779, %v777
    %v826 = vpack.c.b16 %v780, %v778
    %v827 = vpack.c.b16 %v783, %v781
    %v828 = vpack.c.b16 %v784, %v782
    %v829 = vpack.c.b16 %v787, %v785
    %v830 = vpack.c.b16 %v788, %v786
    %v861 = vunpack.c.l.b16 %v789
    %v862 = vunpack.c.h.b16 %v789
    %v863 = vunpack.c.l.b16 %v790
    %v864 = vunpack.c.h.b16 %v790
    %v865 = vunpack.c.l.b16 %v791
    %v866 = vunpack.c.h.b16 %v791
    %v867 = vunpack.c.l.b16 %v792
    %v868 = vunpack.c.h.b16 %v792
    %v869 = vunpack.c.l.b16 %v793
    %v870 = vunpack.c.h.b16 %v793
    %v871 = vunpack.c.l.b16 %v794
    %v872 = vunpack.c.h.b16 %v794
    %v873 = vunpack.c.l.b16 %v795
    %v874 = vunpack.c.h.b16 %v795
    %v875 = vunpack.c.l.b16 %v796
    %v876 = vunpack.c.h.b16 %v796
    %v877 = vunpack.c.l.b16 %v797
    %v878 = vunpack.c.h.b16 %v797
    %v879 = vunpack.c.l.b16 %v798
    %v880 = vunpack.c.h.b16 %v798
    %v881 = vunpack.c.l.b16 %v799
    %v882 = vunpack.c.h.b16 %v799
    %v883 = vunpack.c.l.b16 %v800
    %v884 = vunpack.c.h.b16 %v800
    %v885 = vunpack.c.l.b16 %v801
    %v886 = vunpack.c.h.b16 %v801
    %v887 = vunpack.c.l.b16 %v802
    %v888 = vunpack.c.h.b16 %v802
    %v889 = vunpack.c.l.b16 %v803
    %v890 = vunpack.c.h.b16 %v803
    %v891 = vunpack.c.l.b16 %v804
    %v892 = vunpack.c.h.b16 %v804
    %v893 = vunpack.c.l.b16 %v805
    %v894 = vunpack.c.h.b16 %v805
    %v895 = vunpack.c.l.b16 %v806
    %v896 = vunpack.c.h.b16 %v806
    %v897 = vpack.c.b16 %v863, %v861
    %v898 = vpack.c.b16 %v864, %v862
    %v899 = vpack.c.b16 %v867, %v865
    %v900 = vpack.c.b16 %v868, %v866
    %v901 = vpack.c.b16 %v871, %v869
    %v902 = vpack.c.b16 %v872, %v870
    %v903 = vpack.c.b16 %v875, %v873
    %v904 = vpack.c.b16 %v876, %v874
    %v905 = vpack.c.b16 %v879, %v877
    %v906 = vpack.c.b16 %v880, %v878
    %v907 = vpack.c.b16 %v883, %v881
    %v908 = vpack.c.b16 %v884, %v882
    %v909 = vpack.c.b16 %v887, %v885
    %v910 = vpack.c.b16 %v888, %v886
    %v911 = vpack.c.b16 %v891, %v889
    %v912 = vpack.c.b16 %v892, %v890
    %v913 = vpack.c.b16 %v895, %v893
    %v914 = vpack.c.b16 %v896, %v894
    %vm931 = vcmask 97280
    %v933 = vsel %vm931, %v808, 0
    %v936 = vsel %vm931, %v810, 0
    %v939 = vsel %vm931, %v812, 0
    %v942 = vsel %vm931, %v814, 0
    %v945 = vsel %vm931, %v816, 0
    %v948 = vsel %vm931, %v818, 0
    %v951 = vsel %vm931, %v820, 0
    %v954 = vsel %vm931, %v822, 0
    %v957 = vsel %vm931, %v824, 0
    %v960 = vsel %vm931, %v826, 0
    %v963 = vsel %vm931, %v828, 0
    %v966 = vsel %vm931, %v830, 0
    %vm968 = vcmask 1045504
    %v970 = vsel %vm968, %v913, 0
    %v973 = vsel %vm968, %v914, 0
    %975 = vmatpush.bf16.msra.mxu0 %v911
    %976 = vmatpush.bf16.msra.mxu0 %v909
    %977 = vmatpush.bf16.msra.mxu0 %v907
    %978 = vmatpush.bf16.msra.mxu0 %v905
    %979 = vmatpush.bf16.msra.mxu0 %v903
    %980 = vmatpush.bf16.msra.mxu0 %v901
    %981 = vmatpush.bf16.msra.mxu0 %v899
    %982 = vmatpush.bf16.msra.mxu0 %v897
    %983 = vmatmul.bf16.gmra.mxu0 %v807
    %v984 = vpop.f32.mrf.mxu0
    %v985 = vadd.f32 0.0, %v984
    %v986 = vpop.f32.mrf.mxu0
    %v987 = vadd.f32 0.0, %v986
    %988 = vmatmul.bf16.gmra.mxu0 %v809
    %v989 = vpop.f32.mrf.mxu0
    %v990 = vadd.f32 0.0, %v989
    %v991 = vpop.f32.mrf.mxu0
    %v992 = vadd.f32 0.0, %v991
    %993 = vmatmul.bf16.gmra.mxu0 %v811
    %v994 = vpop.f32.mrf.mxu0
    %v995 = vadd.f32 0.0, %v994
    %v996 = vpop.f32.mrf.mxu0
    %v997 = vadd.f32 0.0, %v996
    %998 = vmatmul.bf16.gmra.mxu0 %v813
    %v999 = vpop.f32.mrf.mxu0
    %v1000 = vadd.f32 0.0, %v999
    %v1001 = vpop.f32.mrf.mxu0
    %v1002 = vadd.f32 0.0, %v1001
    %1003 = vmatmul.bf16.gmra.mxu0 %v815
    %v1004 = vpop.f32.mrf.mxu0
    %v1005 = vadd.f32 0.0, %v1004
    %v1006 = vpop.f32.mrf.mxu0
    %v1007 = vadd.f32 0.0, %v1006
    %1008 = vmatmul.bf16.gmra.mxu0 %v817
    %v1009 = vpop.f32.mrf.mxu0
    %v1010 = vadd.f32 0.0, %v1009
    %v1011 = vpop.f32.mrf.mxu0
    %v1012 = vadd.f32 0.0, %v1011
    %1013 = vmatmul.bf16.gmra.mxu0 %v819
    %v1014 = vpop.f32.mrf.mxu0
    %v1015 = vadd.f32 0.0, %v1014
    %v1016 = vpop.f32.mrf.mxu0
    %v1017 = vadd.f32 0.0, %v1016
    %1018 = vmatmul.bf16.gmra.mxu0 %v821
    %v1019 = vpop.f32.mrf.mxu0
    %v1020 = vadd.f32 0.0, %v1019
    %v1021 = vpop.f32.mrf.mxu0
    %v1022 = vadd.f32 0.0, %v1021
    %1023 = vmatmul.bf16.gmra.mxu0 %v823
    %v1024 = vpop.f32.mrf.mxu0
    %v1025 = vadd.f32 0.0, %v1024
    %v1026 = vpop.f32.mrf.mxu0
    %v1027 = vadd.f32 0.0, %v1026
    %1028 = vmatmul.bf16.gmra.mxu0 %v825
    %v1029 = vpop.f32.mrf.mxu0
    %v1030 = vadd.f32 0.0, %v1029
    %v1031 = vpop.f32.mrf.mxu0
    %v1032 = vadd.f32 0.0, %v1031
    %1033 = vmatmul.bf16.gmra.mxu0 %v827
    %v1034 = vpop.f32.mrf.mxu0
    %v1035 = vadd.f32 0.0, %v1034
    %v1036 = vpop.f32.mrf.mxu0
    %v1037 = vadd.f32 0.0, %v1036
    %1038 = vmatmul.bf16.gmra.mxu0 %v829
    %v1039 = vpop.f32.mrf.mxu0
    %v1040 = vadd.f32 0.0, %v1039
    %v1041 = vpop.f32.mrf.mxu0
    %v1042 = vadd.f32 0.0, %v1041
    %1043 = vdwg.mxu0
    %1044 = vmatpush.bf16.msra.mxu0 0
    %1045 = vmatpush.bf16.msra.mxu0 0
    %1046 = vmatpush.bf16.msra.mxu0 0
    %1047 = vmatpush.bf16.msra.mxu0 0
    %1048 = vmatpush.bf16.msra.mxu0 0
    %1049 = vmatpush.bf16.msra.mxu0 0
    %1050 = vmatpush.bf16.msra.mxu0 0
    %1051 = vmatpush.bf16.msra.mxu0 %v970
    %1052 = vmatmul.bf16.gmra.mxu0 %v933
    %v1053 = vpop.f32.mrf.mxu0
    %v1054 = vadd.f32 %v985, %v1053
    %v1055 = vpop.f32.mrf.mxu0
    %v1056 = vadd.f32 %v987, %v1055
    %1057 = vmatmul.bf16.gmra.mxu0 %v936
    %v1058 = vpop.f32.mrf.mxu0
    %v1059 = vadd.f32 %v990, %v1058
    %v1060 = vpop.f32.mrf.mxu0
    %v1061 = vadd.f32 %v992, %v1060
    %1062 = vmatmul.bf16.gmra.mxu0 %v939
    %v1063 = vpop.f32.mrf.mxu0
    %v1064 = vadd.f32 %v995, %v1063
    %v1065 = vpop.f32.mrf.mxu0
    %v1066 = vadd.f32 %v997, %v1065
    %1067 = vmatmul.bf16.gmra.mxu0 %v942
    %v1068 = vpop.f32.mrf.mxu0
    %v1069 = vadd.f32 %v1000, %v1068
    %v1070 = vpop.f32.mrf.mxu0
    %v1071 = vadd.f32 %v1002, %v1070
    %1072 = vmatmul.bf16.gmra.mxu0 %v945
    %v1073 = vpop.f32.mrf.mxu0
    %v1074 = vadd.f32 %v1005, %v1073
    %v1075 = vpop.f32.mrf.mxu0
    %v1076 = vadd.f32 %v1007, %v1075
    %1077 = vmatmul.bf16.gmra.mxu0 %v948
    %v1078 = vpop.f32.mrf.mxu0
    %v1079 = vadd.f32 %v1010, %v1078
    %v1080 = vpop.f32.mrf.mxu0
    %v1081 = vadd.f32 %v1012, %v1080
    %1082 = vmatmul.bf16.gmra.mxu0 %v951
    %v1083 = vpop.f32.mrf.mxu0
    %v1084 = vadd.f32 %v1015, %v1083
    %v1085 = vpop.f32.mrf.mxu0
    %v1086 = vadd.f32 %v1017, %v1085
    %1087 = vmatmul.bf16.gmra.mxu0 %v954
    %v1088 = vpop.f32.mrf.mxu0
    %v1089 = vadd.f32 %v1020, %v1088
    %v1090 = vpop.f32.mrf.mxu0
    %v1091 = vadd.f32 %v1022, %v1090
    %1092 = vmatmul.bf16.gmra.mxu0 %v957
    %v1093 = vpop.f32.mrf.mxu0
    %v1094 = vadd.f32 %v1025, %v1093
    %v1095 = vpop.f32.mrf.mxu0
    %v1096 = vadd.f32 %v1027, %v1095
    %1097 = vmatmul.bf16.gmra.mxu0 %v960
    %v1098 = vpop.f32.mrf.mxu0
    %v1099 = vadd.f32 %v1030, %v1098
    %v1100 = vpop.f32.mrf.mxu0
    %v1101 = vadd.f32 %v1032, %v1100
    %1102 = vmatmul.bf16.gmra.mxu0 %v963
    %v1103 = vpop.f32.mrf.mxu0
    %v1104 = vadd.f32 %v1035, %v1103
    %v1105 = vpop.f32.mrf.mxu0
    %v1106 = vadd.f32 %v1037, %v1105
    %1107 = vmatmul.bf16.gmra.mxu0 %v966
    %v1108 = vpop.f32.mrf.mxu0
    %v1109 = vadd.f32 %v1040, %v1108
    %v1110 = vpop.f32.mrf.mxu0
    %v1111 = vadd.f32 %v1042, %v1110
    %1112 = vdwg.mxu0
    %1113 = vmatpush.bf16.msra.mxu0 %v912
    %1114 = vmatpush.bf16.msra.mxu0 %v910
    %1115 = vmatpush.bf16.msra.mxu0 %v908
    %1116 = vmatpush.bf16.msra.mxu0 %v906
    %1117 = vmatpush.bf16.msra.mxu0 %v904
    %1118 = vmatpush.bf16.msra.mxu0 %v902
    %1119 = vmatpush.bf16.msra.mxu0 %v900
    %1120 = vmatpush.bf16.msra.mxu0 %v898
    %1121 = vmatmul.bf16.gmra.mxu0 %v807
    %v1122 = vpop.f32.mrf.mxu0
    %v1123 = vadd.f32 0.0, %v1122
    %v1124 = vpop.f32.mrf.mxu0
    %v1125 = vadd.f32 0.0, %v1124
    %1126 = vmatmul.bf16.gmra.mxu0 %v809
    %v1127 = vpop.f32.mrf.mxu0
    %v1128 = vadd.f32 0.0, %v1127
    %v1129 = vpop.f32.mrf.mxu0
    %v1130 = vadd.f32 0.0, %v1129
    %1131 = vmatmul.bf16.gmra.mxu0 %v811
    %v1132 = vpop.f32.mrf.mxu0
    %v1133 = vadd.f32 0.0, %v1132
    %v1134 = vpop.f32.mrf.mxu0
    %v1135 = vadd.f32 0.0, %v1134
    %1136 = vmatmul.bf16.gmra.mxu0 %v813
    %v1137 = vpop.f32.mrf.mxu0
    %v1138 = vadd.f32 0.0, %v1137
    %v1139 = vpop.f32.mrf.mxu0
    %v1140 = vadd.f32 0.0, %v1139
    %1141 = vmatmul.bf16.gmra.mxu0 %v815
    %v1142 = vpop.f32.mrf.mxu0
    %v1143 = vadd.f32 0.0, %v1142
    %v1144 = vpop.f32.mrf.mxu0
    %v1145 = vadd.f32 0.0, %v1144
    %1146 = vmatmul.bf16.gmra.mxu0 %v817
    %v1147 = vpop.f32.mrf.mxu0
    %v1148 = vadd.f32 0.0, %v1147
    %v1149 = vpop.f32.mrf.mxu0
    %v1150 = vadd.f32 0.0, %v1149
    %1151 = vmatmul.bf16.gmra.mxu0 %v819
    %v1152 = vpop.f32.mrf.mxu0
    %v1153 = vadd.f32 0.0, %v1152
    %v1154 = vpop.f32.mrf.mxu0
    %v1155 = vadd.f32 0.0, %v1154
    %1156 = vmatmul.bf16.gmra.mxu0 %v821
    %v1157 = vpop.f32.mrf.mxu0
    %v1158 = vadd.f32 0.0, %v1157
    %v1159 = vpop.f32.mrf.mxu0
    %v1160 = vadd.f32 0.0, %v1159
    %1161 = vmatmul.bf16.gmra.mxu0 %v823
    %v1162 = vpop.f32.mrf.mxu0
    %v1163 = vadd.f32 0.0, %v1162
    %v1164 = vpop.f32.mrf.mxu0
    %v1165 = vadd.f32 0.0, %v1164
    %1166 = vmatmul.bf16.gmra.mxu0 %v825
    %v1167 = vpop.f32.mrf.mxu0
    %v1168 = vadd.f32 0.0, %v1167
    %v1169 = vpop.f32.mrf.mxu0
    %v1170 = vadd.f32 0.0, %v1169
    %1171 = vmatmul.bf16.gmra.mxu0 %v827
    %v1172 = vpop.f32.mrf.mxu0
    %v1173 = vadd.f32 0.0, %v1172
    %v1174 = vpop.f32.mrf.mxu0
    %v1175 = vadd.f32 0.0, %v1174
    %1176 = vmatmul.bf16.gmra.mxu0 %v829
    %v1177 = vpop.f32.mrf.mxu0
    %v1178 = vadd.f32 0.0, %v1177
    %v1179 = vpop.f32.mrf.mxu0
    %v1180 = vadd.f32 0.0, %v1179
    %1181 = vdwg.mxu0
    %1182 = vmatpush.bf16.msra.mxu0 0
    %1183 = vmatpush.bf16.msra.mxu0 0
    %1184 = vmatpush.bf16.msra.mxu0 0
    %1185 = vmatpush.bf16.msra.mxu0 0
    %1186 = vmatpush.bf16.msra.mxu0 0
    %1187 = vmatpush.bf16.msra.mxu0 0
    %1188 = vmatpush.bf16.msra.mxu0 0
    %1189 = vmatpush.bf16.msra.mxu0 %v973
    %1190 = vmatmul.bf16.gmra.mxu0 %v933
    %v1191 = vpop.f32.mrf.mxu0
    %v1192 = vadd.f32 %v1123, %v1191
    %v1193 = vpop.f32.mrf.mxu0
    %v1194 = vadd.f32 %v1125, %v1193
    %1195 = vmatmul.bf16.gmra.mxu0 %v936
    %v1196 = vpop.f32.mrf.mxu0
    %v1197 = vadd.f32 %v1128, %v1196
    %v1198 = vpop.f32.mrf.mxu0
    %v1199 = vadd.f32 %v1130, %v1198
    %1200 = vmatmul.bf16.gmra.mxu0 %v939
    %v1201 = vpop.f32.mrf.mxu0
    %v1202 = vadd.f32 %v1133, %v1201
    %v1203 = vpop.f32.mrf.mxu0
    %v1204 = vadd.f32 %v1135, %v1203
    %1205 = vmatmul.bf16.gmra.mxu0 %v942
    %v1206 = vpop.f32.mrf.mxu0
    %v1207 = vadd.f32 %v1138, %v1206
    %v1208 = vpop.f32.mrf.mxu0
    %v1209 = vadd.f32 %v1140, %v1208
    %1210 = vmatmul.bf16.gmra.mxu0 %v945
    %v1211 = vpop.f32.mrf.mxu0
    %v1212 = vadd.f32 %v1143, %v1211
    %v1213 = vpop.f32.mrf.mxu0
    %v1214 = vadd.f32 %v1145, %v1213
    %1215 = vmatmul.bf16.gmra.mxu0 %v948
    %v1216 = vpop.f32.mrf.mxu0
    %v1217 = vadd.f32 %v1148, %v1216
    %v1218 = vpop.f32.mrf.mxu0
    %v1219 = vadd.f32 %v1150, %v1218
    %1220 = vmatmul.bf16.gmra.mxu0 %v951
    %v1221 = vpop.f32.mrf.mxu0
    %v1222 = vadd.f32 %v1153, %v1221
    %v1223 = vpop.f32.mrf.mxu0
    %v1224 = vadd.f32 %v1155, %v1223
    %1225 = vmatmul.bf16.gmra.mxu0 %v954
    %v1226 = vpop.f32.mrf.mxu0
    %v1227 = vadd.f32 %v1158, %v1226
    %v1228 = vpop.f32.mrf.mxu0
    %v1229 = vadd.f32 %v1160, %v1228
    %1230 = vmatmul.bf16.gmra.mxu0 %v957
    %v1231 = vpop.f32.mrf.mxu0
    %v1232 = vadd.f32 %v1163, %v1231
    %v1233 = vpop.f32.mrf.mxu0
    %v1234 = vadd.f32 %v1165, %v1233
    %1235 = vmatmul.bf16.gmra.mxu0 %v960
    %v1236 = vpop.f32.mrf.mxu0
    %v1237 = vadd.f32 %v1168, %v1236
    %v1238 = vpop.f32.mrf.mxu0
    %v1239 = vadd.f32 %v1170, %v1238
    %1240 = vmatmul.bf16.gmra.mxu0 %v963
    %v1241 = vpop.f32.mrf.mxu0
    %v1242 = vadd.f32 %v1173, %v1241
    %v1243 = vpop.f32.mrf.mxu0
    %v1244 = vadd.f32 %v1175, %v1243
    %1245 = vmatmul.bf16.gmra.mxu0 %v966
    %v1246 = vpop.f32.mrf.mxu0
    %v1247 = vadd.f32 %v1178, %v1246
    %v1248 = vpop.f32.mrf.mxu0
    %v1249 = vadd.f32 %v1180, %v1248
    %1250 = vdwg.mxu0
    %v1251 = vld [vmem:[#allocation4] sm:$0xff]
    %v1252 = vld [vmem:[#allocation4 + $0x8] sm:$0xff]
    %v1253 = vld [vmem:[#allocation4 + $0x10] sm:$0xff]
    %v1254 = vld [vmem:[#allocation4 + $0x18] sm:$0xff]
    %v1255 = vld [vmem:[#allocation4 + $0x20] sm:$0xff]
    %v1256 = vld [vmem:[#allocation4 + $0x28] sm:$0xff]
    %v1257 = vld [vmem:[#allocation4 + $0x30] sm:$0xff]
    %v1258 = vld [vmem:[#allocation4 + $0x38] sm:$0xff]
    %v1259 = vld [vmem:[#allocation4 + $0x40] sm:$0xff]
    %v1260 = vld [vmem:[#allocation4 + $0x48] sm:$0xff]
    %v1261 = vld [vmem:[#allocation4 + $0x50] sm:$0xff]
    %v1262 = vld [vmem:[#allocation4 + $0x58] sm:$0xff]
    %v1263 = vld [vmem:[#allocation4 + $0x60] sm:$0xff]
    %v1264 = vld [vmem:[#allocation4 + $0x68] sm:$0xff]
    %v1265 = vld [vmem:[#allocation4 + $0x70] sm:$0xff]
    %v1266 = vld [vmem:[#allocation4 + $0x78] sm:$0xff]
    %v1267 = vld [vmem:[#allocation4 + $0x80] sm:$0xff]
    %v1268 = vld [vmem:[#allocation4 + $0x88] sm:$0x33]
    %v1287 = vunpack.c.l.b16 %v1251
    %v1288 = vunpack.c.h.b16 %v1251
    %v1289 = vunpack.c.l.b16 %v1252
    %v1290 = vunpack.c.h.b16 %v1252
    %v1291 = vunpack.c.l.b16 %v1253
    %v1292 = vunpack.c.h.b16 %v1253
    %v1293 = vunpack.c.l.b16 %v1254
    %v1294 = vunpack.c.h.b16 %v1254
    %v1295 = vunpack.c.l.b16 %v1255
    %v1296 = vunpack.c.h.b16 %v1255
    %v1297 = vunpack.c.l.b16 %v1256
    %v1298 = vunpack.c.h.b16 %v1256
    %v1299 = vunpack.c.l.b16 %v1257
    %v1300 = vunpack.c.h.b16 %v1257
    %v1301 = vunpack.c.l.b16 %v1258
    %v1302 = vunpack.c.h.b16 %v1258
    %v1303 = vunpack.c.l.b16 %v1259
    %v1304 = vunpack.c.h.b16 %v1259
    %v1305 = vunpack.c.l.b16 %v1260
    %v1306 = vunpack.c.h.b16 %v1260
    %v1307 = vunpack.c.l.b16 %v1261
    %v1308 = vunpack.c.h.b16 %v1261
    %v1309 = vunpack.c.l.b16 %v1262
    %v1310 = vunpack.c.h.b16 %v1262
    %v1311 = vunpack.c.l.b16 %v1263
    %v1312 = vunpack.c.h.b16 %v1263
    %v1313 = vunpack.c.l.b16 %v1264
    %v1314 = vunpack.c.h.b16 %v1264
    %v1315 = vunpack.c.l.b16 %v1265
    %v1316 = vunpack.c.h.b16 %v1265
    %v1317 = vunpack.c.l.b16 %v1266
    %v1318 = vunpack.c.h.b16 %v1266
    %v1319 = vunpack.c.l.b16 %v1267
    %v1320 = vunpack.c.h.b16 %v1267
    %v1321 = vunpack.c.l.b16 %v1268
    %v1322 = vunpack.c.h.b16 %v1268
    %v1323 = vpack.c.b16 %v1289, %v1287
    %v1324 = vpack.c.b16 %v1290, %v1288
    %v1325 = vpack.c.b16 %v1293, %v1291
    %v1326 = vpack.c.b16 %v1294, %v1292
    %v1327 = vpack.c.b16 %v1297, %v1295
    %v1328 = vpack.c.b16 %v1298, %v1296
    %v1329 = vpack.c.b16 %v1301, %v1299
    %v1330 = vpack.c.b16 %v1302, %v1300
    %v1331 = vpack.c.b16 %v1305, %v1303
    %v1332 = vpack.c.b16 %v1306, %v1304
    %v1333 = vpack.c.b16 %v1309, %v1307
    %v1334 = vpack.c.b16 %v1310, %v1308
    %v1335 = vpack.c.b16 %v1313, %v1311
    %v1336 = vpack.c.b16 %v1314, %v1312
    %v1337 = vpack.c.b16 %v1317, %v1315
    %v1338 = vpack.c.b16 %v1318, %v1316
    %v1339 = vpack.c.b16 %v1321, %v1319
    %v1340 = vpack.c.b16 %v1322, %v1320
    %v1358 = vsel %vm968, %v1339, 0
    %v1361 = vsel %vm968, %v1340, 0
    %1363 = vmatpush.bf16.msra.mxu0 %v1337
    %1364 = vmatpush.bf16.msra.mxu0 %v1335
    %1365 = vmatpush.bf16.msra.mxu0 %v1333
    %1366 = vmatpush.bf16.msra.mxu0 %v1331
    %1367 = vmatpush.bf16.msra.mxu0 %v1329
    %1368 = vmatpush.bf16.msra.mxu0 %v1327
    %1369 = vmatpush.bf16.msra.mxu0 %v1325
    %1370 = vmatpush.bf16.msra.mxu0 %v1323
    %1371 = vmatmul.bf16.gmra.mxu0 %v807
    %v1372 = vpop.f32.mrf.mxu0
    %v1373 = vadd.f32 0.0, %v1372
    %v1374 = vpop.f32.mrf.mxu0
    %v1375 = vadd.f32 0.0, %v1374
    %1376 = vmatmul.bf16.gmra.mxu0 %v809
    %v1377 = vpop.f32.mrf.mxu0
    %v1378 = vadd.f32 0.0, %v1377
    %v1379 = vpop.f32.mrf.mxu0
    %v1380 = vadd.f32 0.0, %v1379
    %1381 = vmatmul.bf16.gmra.mxu0 %v811
    %v1382 = vpop.f32.mrf.mxu0
    %v1383 = vadd.f32 0.0, %v1382
    %v1384 = vpop.f32.mrf.mxu0
    %v1385 = vadd.f32 0.0, %v1384
    %1386 = vmatmul.bf16.gmra.mxu0 %v813
    %v1387 = vpop.f32.mrf.mxu0
    %v1388 = vadd.f32 0.0, %v1387
    %v1389 = vpop.f32.mrf.mxu0
    %v1390 = vadd.f32 0.0, %v1389
    %1391 = vmatmul.bf16.gmra.mxu0 %v815
    %v1392 = vpop.f32.mrf.mxu0
    %v1393 = vadd.f32 0.0, %v1392
    %v1394 = vpop.f32.mrf.mxu0
    %v1395 = vadd.f32 0.0, %v1394
    %1396 = vmatmul.bf16.gmra.mxu0 %v817
    %v1397 = vpop.f32.mrf.mxu0
    %v1398 = vadd.f32 0.0, %v1397
    %v1399 = vpop.f32.mrf.mxu0
    %v1400 = vadd.f32 0.0, %v1399
    %1401 = vmatmul.bf16.gmra.mxu0 %v819
    %v1402 = vpop.f32.mrf.mxu0
    %v1403 = vadd.f32 0.0, %v1402
    %v1404 = vpop.f32.mrf.mxu0
    %v1405 = vadd.f32 0.0, %v1404
    %1406 = vmatmul.bf16.gmra.mxu0 %v821
    %v1407 = vpop.f32.mrf.mxu0
    %v1408 = vadd.f32 0.0, %v1407
    %v1409 = vpop.f32.mrf.mxu0
    %v1410 = vadd.f32 0.0, %v1409
    %1411 = vmatmul.bf16.gmra.mxu0 %v823
    %v1412 = vpop.f32.mrf.mxu0
    %v1413 = vadd.f32 0.0, %v1412
    %v1414 = vpop.f32.mrf.mxu0
    %v1415 = vadd.f32 0.0, %v1414
    %1416 = vmatmul.bf16.gmra.mxu0 %v825
    %v1417 = vpop.f32.mrf.mxu0
    %v1418 = vadd.f32 0.0, %v1417
    %v1419 = vpop.f32.mrf.mxu0
    %v1420 = vadd.f32 0.0, %v1419
    %1421 = vmatmul.bf16.gmra.mxu0 %v827
    %v1422 = vpop.f32.mrf.mxu0
    %v1423 = vadd.f32 0.0, %v1422
    %v1424 = vpop.f32.mrf.mxu0
    %v1425 = vadd.f32 0.0, %v1424
    %1426 = vmatmul.bf16.gmra.mxu0 %v829
    %v1427 = vpop.f32.mrf.mxu0
    %v1428 = vadd.f32 0.0, %v1427
    %v1429 = vpop.f32.mrf.mxu0
    %v1430 = vadd.f32 0.0, %v1429
    %1431 = vdwg.mxu0
    %1432 = vmatpush.bf16.msra.mxu0 0
    %1433 = vmatpush.bf16.msra.mxu0 0
    %1434 = vmatpush.bf16.msra.mxu0 0
    %1435 = vmatpush.bf16.msra.mxu0 0
    %1436 = vmatpush.bf16.msra.mxu0 0
    %1437 = vmatpush.bf16.msra.mxu0 0
    %1438 = vmatpush.bf16.msra.mxu0 0
    %1439 = vmatpush.bf16.msra.mxu0 %v1358
    %1440 = vmatmul.bf16.gmra.mxu0 %v933
    %v1441 = vpop.f32.mrf.mxu0
    %v1442 = vadd.f32 %v1373, %v1441
    %v1443 = vpop.f32.mrf.mxu0
    %v1444 = vadd.f32 %v1375, %v1443
    %1445 = vmatmul.bf16.gmra.mxu0 %v936
    %v1446 = vpop.f32.mrf.mxu0
    %v1447 = vadd.f32 %v1378, %v1446
    %v1448 = vpop.f32.mrf.mxu0
    %v1449 = vadd.f32 %v1380, %v1448
    %1450 = vmatmul.bf16.gmra.mxu0 %v939
    %v1451 = vpop.f32.mrf.mxu0
    %v1452 = vadd.f32 %v1383, %v1451
    %v1453 = vpop.f32.mrf.mxu0
    %v1454 = vadd.f32 %v1385, %v1453
    %1455 = vmatmul.bf16.gmra.mxu0 %v942
    %v1456 = vpop.f32.mrf.mxu0
    %v1457 = vadd.f32 %v1388, %v1456
    %v1458 = vpop.f32.mrf.mxu0
    %v1459 = vadd.f32 %v1390, %v1458
    %1460 = vmatmul.bf16.gmra.mxu0 %v945
    %v1461 = vpop.f32.mrf.mxu0
    %v1462 = vadd.f32 %v1393, %v1461
    %v1463 = vpop.f32.mrf.mxu0
    %v1464 = vadd.f32 %v1395, %v1463
    %1465 = vmatmul.bf16.gmra.mxu0 %v948
    %v1466 = vpop.f32.mrf.mxu0
    %v1467 = vadd.f32 %v1398, %v1466
    %v1468 = vpop.f32.mrf.mxu0
    %v1469 = vadd.f32 %v1400, %v1468
    %1470 = vmatmul.bf16.gmra.mxu0 %v951
    %v1471 = vpop.f32.mrf.mxu0
    %v1472 = vadd.f32 %v1403, %v1471
    %v1473 = vpop.f32.mrf.mxu0
    %v1474 = vadd.f32 %v1405, %v1473
    %1475 = vmatmul.bf16.gmra.mxu0 %v954
    %v1476 = vpop.f32.mrf.mxu0
    %v1477 = vadd.f32 %v1408, %v1476
    %v1478 = vpop.f32.mrf.mxu0
    %v1479 = vadd.f32 %v1410, %v1478
    %1480 = vmatmul.bf16.gmra.mxu0 %v957
    %v1481 = vpop.f32.mrf.mxu0
    %v1482 = vadd.f32 %v1413, %v1481
    %v1483 = vpop.f32.mrf.mxu0
    %v1484 = vadd.f32 %v1415, %v1483
    %1485 = vmatmul.bf16.gmra.mxu0 %v960
    %v1486 = vpop.f32.mrf.mxu0
    %v1487 = vadd.f32 %v1418, %v1486
    %v1488 = vpop.f32.mrf.mxu0
    %v1489 = vadd.f32 %v1420, %v1488
    %1490 = vmatmul.bf16.gmra.mxu0 %v963
    %v1491 = vpop.f32.mrf.mxu0
    %v1492 = vadd.f32 %v1423, %v1491
    %v1493 = vpop.f32.mrf.mxu0
    %v1494 = vadd.f32 %v1425, %v1493
    %1495 = vmatmul.bf16.gmra.mxu0 %v966
    %v1496 = vpop.f32.mrf.mxu0
    %v1497 = vadd.f32 %v1428, %v1496
    %v1498 = vpop.f32.mrf.mxu0
    %v1499 = vadd.f32 %v1430, %v1498
    %1500 = vdwg.mxu0
    %1501 = vmatpush.bf16.msra.mxu0 %v1338
    %1502 = vmatpush.bf16.msra.mxu0 %v1336
    %1503 = vmatpush.bf16.msra.mxu0 %v1334
    %1504 = vmatpush.bf16.msra.mxu0 %v1332
    %1505 = vmatpush.bf16.msra.mxu0 %v1330
    %1506 = vmatpush.bf16.msra.mxu0 %v1328
    %1507 = vmatpush.bf16.msra.mxu0 %v1326
    %1508 = vmatpush.bf16.msra.mxu0 %v1324
    %1509 = vmatmul.bf16.gmra.mxu0 %v807
    %v1510 = vpop.f32.mrf.mxu0
    %v1511 = vadd.f32 0.0, %v1510
    %v1512 = vpop.f32.mrf.mxu0
    %v1513 = vadd.f32 0.0, %v1512
    %1514 = vmatmul.bf16.gmra.mxu0 %v809
    %v1515 = vpop.f32.mrf.mxu0
    %v1516 = vadd.f32 0.0, %v1515
    %v1517 = vpop.f32.mrf.mxu0
    %v1518 = vadd.f32 0.0, %v1517
    %1519 = vmatmul.bf16.gmra.mxu0 %v811
    %v1520 = vpop.f32.mrf.mxu0
    %v1521 = vadd.f32 0.0, %v1520
    %v1522 = vpop.f32.mrf.mxu0
    %v1523 = vadd.f32 0.0, %v1522
    %1524 = vmatmul.bf16.gmra.mxu0 %v813
    %v1525 = vpop.f32.mrf.mxu0
    %v1526 = vadd.f32 0.0, %v1525
    %v1527 = vpop.f32.mrf.mxu0
    %v1528 = vadd.f32 0.0, %v1527
    %1529 = vmatmul.bf16.gmra.mxu0 %v815
    %v1530 = vpop.f32.mrf.mxu0
    %v1531 = vadd.f32 0.0, %v1530
    %v1532 = vpop.f32.mrf.mxu0
    %v1533 = vadd.f32 0.0, %v1532
    %1534 = vmatmul.bf16.gmra.mxu0 %v817
    %v1535 = vpop.f32.mrf.mxu0
    %v1536 = vadd.f32 0.0, %v1535
    %v1537 = vpop.f32.mrf.mxu0
    %v1538 = vadd.f32 0.0, %v1537
    %1539 = vmatmul.bf16.gmra.mxu0 %v819
    %v1540 = vpop.f32.mrf.mxu0
    %v1541 = vadd.f32 0.0, %v1540
    %v1542 = vpop.f32.mrf.mxu0
    %v1543 = vadd.f32 0.0, %v1542
    %1544 = vmatmul.bf16.gmra.mxu0 %v821
    %v1545 = vpop.f32.mrf.mxu0
    %v1546 = vadd.f32 0.0, %v1545
    %v1547 = vpop.f32.mrf.mxu0
    %v1548 = vadd.f32 0.0, %v1547
    %1549 = vmatmul.bf16.gmra.mxu0 %v823
    %v1550 = vpop.f32.mrf.mxu0
    %v1551 = vadd.f32 0.0, %v1550
    %v1552 = vpop.f32.mrf.mxu0
    %v1553 = vadd.f32 0.0, %v1552
    %1554 = vmatmul.bf16.gmra.mxu0 %v825
    %v1555 = vpop.f32.mrf.mxu0
    %v1556 = vadd.f32 0.0, %v1555
    %v1557 = vpop.f32.mrf.mxu0
    %v1558 = vadd.f32 0.0, %v1557
    %1559 = vmatmul.bf16.gmra.mxu0 %v827
    %v1560 = vpop.f32.mrf.mxu0
    %v1561 = vadd.f32 0.0, %v1560
    %v1562 = vpop.f32.mrf.mxu0
    %v1563 = vadd.f32 0.0, %v1562
    %1564 = vmatmul.bf16.gmra.mxu0 %v829
    %v1565 = vpop.f32.mrf.mxu0
    %v1566 = vadd.f32 0.0, %v1565
    %v1567 = vpop.f32.mrf.mxu0
    %v1568 = vadd.f32 0.0, %v1567
    %1569 = vdwg.mxu0
    %1570 = vmatpush.bf16.msra.mxu0 0
    %1571 = vmatpush.bf16.msra.mxu0 0
    %1572 = vmatpush.bf16.msra.mxu0 0
    %1573 = vmatpush.bf16.msra.mxu0 0
    %1574 = vmatpush.bf16.msra.mxu0 0
    %1575 = vmatpush.bf16.msra.mxu0 0
    %1576 = vmatpush.bf16.msra.mxu0 0
    %1577 = vmatpush.bf16.msra.mxu0 %v1361
    %1578 = vmatmul.bf16.gmra.mxu0 %v933
    %v1579 = vpop.f32.mrf.mxu0
    %v1580 = vadd.f32 %v1511, %v1579
    %v1581 = vpop.f32.mrf.mxu0
    %v1582 = vadd.f32 %v1513, %v1581
    %1583 = vmatmul.bf16.gmra.mxu0 %v936
    %v1584 = vpop.f32.mrf.mxu0
    %v1585 = vadd.f32 %v1516, %v1584
    %v1586 = vpop.f32.mrf.mxu0
    %v1587 = vadd.f32 %v1518, %v1586
    %1588 = vmatmul.bf16.gmra.mxu0 %v939
    %v1589 = vpop.f32.mrf.mxu0
    %v1590 = vadd.f32 %v1521, %v1589
    %v1591 = vpop.f32.mrf.mxu0
    %v1592 = vadd.f32 %v1523, %v1591
    %1593 = vmatmul.bf16.gmra.mxu0 %v942
    %v1594 = vpop.f32.mrf.mxu0
    %v1595 = vadd.f32 %v1526, %v1594
    %v1596 = vpop.f32.mrf.mxu0
    %v1597 = vadd.f32 %v1528, %v1596
    %1598 = vmatmul.bf16.gmra.mxu0 %v945
    %v1599 = vpop.f32.mrf.mxu0
    %v1600 = vadd.f32 %v1531, %v1599
    %v1601 = vpop.f32.mrf.mxu0
    %v1602 = vadd.f32 %v1533, %v1601
    %1603 = vmatmul.bf16.gmra.mxu0 %v948
    %v1604 = vpop.f32.mrf.mxu0
    %v1605 = vadd.f32 %v1536, %v1604
    %v1606 = vpop.f32.mrf.mxu0
    %v1607 = vadd.f32 %v1538, %v1606
    %1608 = vmatmul.bf16.gmra.mxu0 %v951
    %v1609 = vpop.f32.mrf.mxu0
    %v1610 = vadd.f32 %v1541, %v1609
    %v1611 = vpop.f32.mrf.mxu0
    %v1612 = vadd.f32 %v1543, %v1611
    %1613 = vmatmul.bf16.gmra.mxu0 %v954
    %v1614 = vpop.f32.mrf.mxu0
    %v1615 = vadd.f32 %v1546, %v1614
    %v1616 = vpop.f32.mrf.mxu0
    %v1617 = vadd.f32 %v1548, %v1616
    %1618 = vmatmul.bf16.gmra.mxu0 %v957
    %v1619 = vpop.f32.mrf.mxu0
    %v1620 = vadd.f32 %v1551, %v1619
    %v1621 = vpop.f32.mrf.mxu0
    %v1622 = vadd.f32 %v1553, %v1621
    %1623 = vmatmul.bf16.gmra.mxu0 %v960
    %v1624 = vpop.f32.mrf.mxu0
    %v1625 = vadd.f32 %v1556, %v1624
    %v1626 = vpop.f32.mrf.mxu0
    %v1627 = vadd.f32 %v1558, %v1626
    %1628 = vmatmul.bf16.gmra.mxu0 %v963
    %v1629 = vpop.f32.mrf.mxu0
    %v1630 = vadd.f32 %v1561, %v1629
    %v1631 = vpop.f32.mrf.mxu0
    %v1632 = vadd.f32 %v1563, %v1631
    %1633 = vmatmul.bf16.gmra.mxu0 %v966
    %v1634 = vpop.f32.mrf.mxu0
    %v1635 = vadd.f32 %v1566, %v1634
    %v1636 = vpop.f32.mrf.mxu0
    %v1637 = vadd.f32 %v1568, %v1636
    %1638 = vdwg.mxu0
    %v1639 = vmax.f32 %v1054, %v1442
    %v1640 = vmax.f32 %v1192, %v1580
    %v1641 = vmax.f32 %v1056, %v1444
    %v1642 = vmax.f32 %v1194, %v1582
    %v1643 = vmax.f32 %v1059, %v1447
    %v1644 = vmax.f32 %v1197, %v1585
    %v1645 = vmax.f32 %v1061, %v1449
    %v1646 = vmax.f32 %v1199, %v1587
    %v1647 = vmax.f32 %v1064, %v1452
    %v1648 = vmax.f32 %v1202, %v1590
    %v1649 = vmax.f32 %v1066, %v1454
    %v1650 = vmax.f32 %v1204, %v1592
    %v1651 = vmax.f32 %v1069, %v1457
    %v1652 = vmax.f32 %v1207, %v1595
    %v1653 = vmax.f32 %v1071, %v1459
    %v1654 = vmax.f32 %v1209, %v1597
    %v1655 = vmax.f32 %v1074, %v1462
    %v1656 = vmax.f32 %v1212, %v1600
    %v1657 = vmax.f32 %v1076, %v1464
    %v1658 = vmax.f32 %v1214, %v1602
    %v1659 = vmax.f32 %v1079, %v1467
    %v1660 = vmax.f32 %v1217, %v1605
    %v1661 = vmax.f32 %v1081, %v1469
    %v1662 = vmax.f32 %v1219, %v1607
    %v1663 = vmax.f32 %v1084, %v1472
    %v1664 = vmax.f32 %v1222, %v1610
    %v1665 = vmax.f32 %v1086, %v1474
    %v1666 = vmax.f32 %v1224, %v1612
    %v1667 = vmax.f32 %v1089, %v1477
    %v1668 = vmax.f32 %v1227, %v1615
    %v1669 = vmax.f32 %v1091, %v1479
    %v1670 = vmax.f32 %v1229, %v1617
    %v1671 = vmax.f32 %v1094, %v1482
    %v1672 = vmax.f32 %v1232, %v1620
    %v1673 = vmax.f32 %v1096, %v1484
    %v1674 = vmax.f32 %v1234, %v1622
    %v1675 = vmax.f32 %v1099, %v1487
    %v1676 = vmax.f32 %v1237, %v1625
    %v1677 = vmax.f32 %v1101, %v1489
    %v1678 = vmax.f32 %v1239, %v1627
    %v1679 = vmax.f32 %v1104, %v1492
    %v1680 = vmax.f32 %v1242, %v1630
    %v1681 = vmax.f32 %v1106, %v1494
    %v1682 = vmax.f32 %v1244, %v1632
    %v1683 = vmax.f32 %v1109, %v1497
    %v1684 = vmax.f32 %v1247, %v1635
    %v1685 = vmax.f32 %v1111, %v1499
    %v1686 = vmax.f32 %v1249, %v1637
    %v1687 = vld [vmem:[#allocation6] sm:$0x3]
    %v1689 = vperm.slane %v1687, 0
    %v1690 = vperm.slane %v1687, 1
    %v1693 = vadd.f32 %v1639, %v1689
    %v1694 = vadd.f32 %v1640, %v1690
    %v1695 = vadd.f32 %v1641, %v1689
    %v1696 = vadd.f32 %v1642, %v1690
    %v1697 = vadd.f32 %v1643, %v1689
    %v1698 = vadd.f32 %v1644, %v1690
    %v1699 = vadd.f32 %v1645, %v1689
    %v1700 = vadd.f32 %v1646, %v1690
    %v1701 = vadd.f32 %v1647, %v1689
    %v1702 = vadd.f32 %v1648, %v1690
    %v1703 = vadd.f32 %v1649, %v1689
    %v1704 = vadd.f32 %v1650, %v1690
    %v1705 = vadd.f32 %v1651, %v1689
    %v1706 = vadd.f32 %v1652, %v1690
    %v1707 = vadd.f32 %v1653, %v1689
    %v1708 = vadd.f32 %v1654, %v1690
    %v1709 = vadd.f32 %v1655, %v1689
    %v1710 = vadd.f32 %v1656, %v1690
    %v1711 = vadd.f32 %v1657, %v1689
    %v1712 = vadd.f32 %v1658, %v1690
    %v1713 = vadd.f32 %v1659, %v1689
    %v1714 = vadd.f32 %v1660, %v1690
    %v1715 = vadd.f32 %v1661, %v1689
    %v1716 = vadd.f32 %v1662, %v1690
    %v1717 = vadd.f32 %v1663, %v1689
    %v1718 = vadd.f32 %v1664, %v1690
    %v1719 = vadd.f32 %v1665, %v1689
    %v1720 = vadd.f32 %v1666, %v1690
    %v1721 = vadd.f32 %v1667, %v1689
    %v1722 = vadd.f32 %v1668, %v1690
    %v1723 = vadd.f32 %v1669, %v1689
    %v1724 = vadd.f32 %v1670, %v1690
    %v1725 = vadd.f32 %v1671, %v1689
    %v1726 = vadd.f32 %v1672, %v1690
    %v1727 = vadd.f32 %v1673, %v1689
    %v1728 = vadd.f32 %v1674, %v1690
    %v1729 = vadd.f32 %v1675, %v1689
    %v1730 = vadd.f32 %v1676, %v1690
    %v1731 = vadd.f32 %v1677, %v1689
    %v1732 = vadd.f32 %v1678, %v1690
    %v1733 = vadd.f32 %v1679, %v1689
    %v1734 = vadd.f32 %v1680, %v1690
    %v1735 = vadd.f32 %v1681, %v1689
    %v1736 = vadd.f32 %v1682, %v1690
    %v1737 = vadd.f32 %v1683, %v1689
    %v1738 = vadd.f32 %v1684, %v1690
    %v1739 = vadd.f32 %v1685, %v1689
    %v1740 = vadd.f32 %v1686, %v1690
    %v1741 = vpack.c.bf16 %v1694, %v1693
    %v1742 = vpack.c.bf16 %v1696, %v1695
    %v1743 = vpack.c.bf16 %v1698, %v1697
    %v1744 = vpack.c.bf16 %v1700, %v1699
    %v1745 = vpack.c.bf16 %v1702, %v1701
    %v1746 = vpack.c.bf16 %v1704, %v1703
    %v1747 = vpack.c.bf16 %v1706, %v1705
    %v1748 = vpack.c.bf16 %v1708, %v1707
    %v1749 = vpack.c.bf16 %v1710, %v1709
    %v1750 = vpack.c.bf16 %v1712, %v1711
    %v1751 = vpack.c.bf16 %v1714, %v1713
    %v1752 = vpack.c.bf16 %v1716, %v1715
    %v1753 = vpack.c.bf16 %v1718, %v1717
    %v1754 = vpack.c.bf16 %v1720, %v1719
    %v1755 = vpack.c.bf16 %v1722, %v1721
    %v1756 = vpack.c.bf16 %v1724, %v1723
    %v1757 = vpack.c.bf16 %v1726, %v1725
    %v1758 = vpack.c.bf16 %v1728, %v1727
    %v1759 = vpack.c.bf16 %v1730, %v1729
    %v1760 = vpack.c.bf16 %v1732, %v1731
    %v1761 = vpack.c.bf16 %v1734, %v1733
    %v1762 = vpack.c.bf16 %v1736, %v1735
    %v1763 = vpack.c.bf16 %v1738, %v1737
    %v1764 = vpack.c.bf16 %v1740, %v1739
    %v1765 = vunpack.c.l.bf16 %v1741
    %v1766 = vunpack.c.h.bf16 %v1741
    %v1767 = vunpack.c.l.bf16 %v1743
    %v1768 = vunpack.c.h.bf16 %v1743
    %v1769 = vunpack.c.l.bf16 %v1745
    %v1770 = vunpack.c.h.bf16 %v1745
    %v1771 = vunpack.c.l.bf16 %v1747
    %v1772 = vunpack.c.h.bf16 %v1747
    %v1773 = vunpack.c.l.bf16 %v1749
    %v1774 = vunpack.c.h.bf16 %v1749
    %v1775 = vunpack.c.l.bf16 %v1751
    %v1776 = vunpack.c.h.bf16 %v1751
    %v1777 = vunpack.c.l.bf16 %v1753
    %v1778 = vunpack.c.h.bf16 %v1753
    %v1779 = vunpack.c.l.bf16 %v1755
    %v1780 = vunpack.c.h.bf16 %v1755
    %v1781 = vunpack.c.l.bf16 %v1757
    %v1782 = vunpack.c.h.bf16 %v1757
    %v1783 = vunpack.c.l.bf16 %v1759
    %v1784 = vunpack.c.h.bf16 %v1759
    %v1785 = vunpack.c.l.bf16 %v1761
    %v1786 = vunpack.c.h.bf16 %v1761
    %v1787 = vunpack.c.l.bf16 %v1763
    %v1788 = vunpack.c.h.bf16 %v1763
    %v1789 = vunpack.c.l.bf16 %v1742
    %v1790 = vunpack.c.h.bf16 %v1742
    %v1791 = vunpack.c.l.bf16 %v1744
    %v1792 = vunpack.c.h.bf16 %v1744
    %v1793 = vunpack.c.l.bf16 %v1746
    %v1794 = vunpack.c.h.bf16 %v1746
    %v1795 = vunpack.c.l.bf16 %v1748
    %v1796 = vunpack.c.h.bf16 %v1748
    %v1797 = vunpack.c.l.bf16 %v1750
    %v1798 = vunpack.c.h.bf16 %v1750
    %v1799 = vunpack.c.l.bf16 %v1752
    %v1800 = vunpack.c.h.bf16 %v1752
    %v1801 = vunpack.c.l.bf16 %v1754
    %v1802 = vunpack.c.h.bf16 %v1754
    %v1803 = vunpack.c.l.bf16 %v1756
    %v1804 = vunpack.c.h.bf16 %v1756
    %v1805 = vunpack.c.l.bf16 %v1758
    %v1806 = vunpack.c.h.bf16 %v1758
    %v1807 = vunpack.c.l.bf16 %v1760
    %v1808 = vunpack.c.h.bf16 %v1760
    %v1809 = vunpack.c.l.bf16 %v1762
    %v1810 = vunpack.c.h.bf16 %v1762
    %v1811 = vunpack.c.l.bf16 %v1764
    %v1812 = vunpack.c.h.bf16 %v1764
    %v1813 = vmax.f32 %v1765, %v1789
    %v1814 = vmax.f32 %v1766, %v1790
    %v1815 = vmax.f32 %v1767, %v1791
    %v1816 = vmax.f32 %v1768, %v1792
    %v1817 = vmax.f32 %v1769, %v1793
    %v1818 = vmax.f32 %v1770, %v1794
    %v1819 = vmax.f32 %v1771, %v1795
    %v1820 = vmax.f32 %v1772, %v1796
    %v1821 = vmax.f32 %v1773, %v1797
    %v1822 = vmax.f32 %v1774, %v1798
    %v1823 = vmax.f32 %v1775, %v1799
    %v1824 = vmax.f32 %v1776, %v1800
    %v1825 = vmax.f32 %v1777, %v1801
    %v1826 = vmax.f32 %v1778, %v1802
    %v1827 = vmax.f32 %v1779, %v1803
    %v1828 = vmax.f32 %v1780, %v1804
    %v1829 = vmax.f32 %v1781, %v1805
    %v1830 = vmax.f32 %v1782, %v1806
    %v1831 = vmax.f32 %v1783, %v1807
    %v1832 = vmax.f32 %v1784, %v1808
    %v1833 = vmax.f32 %v1785, %v1809
    %v1834 = vmax.f32 %v1786, %v1810
    %v1835 = vmax.f32 %v1787, %v1811
    %v1836 = vmax.f32 %v1788, %v1812
    %v1837 = vpack.c.bf16 %v1814, %v1813
    %v1838 = vpack.c.bf16 %v1816, %v1815
    %v1839 = vpack.c.bf16 %v1818, %v1817
    %v1840 = vpack.c.bf16 %v1820, %v1819
    %v1841 = vpack.c.bf16 %v1822, %v1821
    %v1842 = vpack.c.bf16 %v1824, %v1823
    %v1843 = vpack.c.bf16 %v1826, %v1825
    %v1844 = vpack.c.bf16 %v1828, %v1827
    %v1845 = vpack.c.bf16 %v1830, %v1829
    %v1846 = vpack.c.bf16 %v1832, %v1831
    %v1847 = vpack.c.bf16 %v1834, %v1833
    %v1848 = vpack.c.bf16 %v1836, %v1835
    %v1849 = vld [vmem:[#allocation7] sm:$0xff]
    %v1850 = vld [vmem:[#allocation7 + $0x8] sm:$0xff]
    %v1851 = vld [vmem:[#allocation7 + $0x10] sm:$0xff]
    %v1852 = vld [vmem:[#allocation7 + $0x18] sm:$0xff]
    %v1853 = vld [vmem:[#allocation7 + $0x20] sm:$0xff]
    %v1854 = vld [vmem:[#allocation7 + $0x28] sm:$0xff]
    %v1855 = vld [vmem:[#allocation7 + $0x30] sm:$0xff]
    %v1856 = vld [vmem:[#allocation7 + $0x38] sm:$0xff]
    %v1857 = vld [vmem:[#allocation7 + $0x40] sm:$0xff]
    %v1858 = vld [vmem:[#allocation7 + $0x48] sm:$0xff]
    %v1859 = vld [vmem:[#allocation7 + $0x50] sm:$0xff]
    %v1860 = vld [vmem:[#allocation7 + $0x58] sm:$0xff]
    %v1861 = vld [vmem:[#allocation7 + $0x60] sm:$0xff]
    %v1862 = vld [vmem:[#allocation7 + $0x68] sm:$0xff]
    %v1863 = vld [vmem:[#allocation7 + $0x70] sm:$0xff]
    %v1864 = vld [vmem:[#allocation7 + $0x78] sm:$0xff]
    %v1865 = vld [vmem:[#allocation7 + $0x80] sm:$0xff]
    %v1866 = vld [vmem:[#allocation7 + $0x88] sm:$0xff]
    %v1867 = vld [vmem:[#allocation7 + $0x90] sm:$0xff]
    %v1868 = vld [vmem:[#allocation7 + $0x98] sm:$0xff]
    %v1869 = vld [vmem:[#allocation7 + $0xa0] sm:$0xff]
    %v1870 = vld [vmem:[#allocation7 + $0xa8] sm:$0xff]
    %v1871 = vld [vmem:[#allocation7 + $0xb0] sm:$0xff]
    %v1872 = vld [vmem:[#allocation7 + $0xb8] sm:$0xff]
    %v1873 = vld [vmem:[#allocation7 + $0xc0] sm:$0xff]
    %v1874 = vld [vmem:[#allocation7 + $0xc8] sm:$0xff]
    %v1875 = vld [vmem:[#allocation7 + $0xd0] sm:$0xff]
    %v1876 = vld [vmem:[#allocation7 + $0xd8] sm:$0xff]
    %v1877 = vld [vmem:[#allocation7 + $0xe0] sm:$0xff]
    %v1878 = vld [vmem:[#allocation7 + $0xe8] sm:$0xff]
    %v1879 = vld [vmem:[#allocation7 + $0xf0] sm:$0xff]
    %v1880 = vld [vmem:[#allocation7 + $0xf8] sm:$0xff]
    %v1881 = vld [vmem:[#allocation7 + $0x100] sm:$0xff]
    %v1882 = vld [vmem:[#allocation7 + $0x108] sm:$0xff]
    %v1883 = vld [vmem:[#allocation7 + $0x110] sm:$0xff]
    %v1884 = vld [vmem:[#allocation7 + $0x118] sm:$0xff]
    %v1885 = vld [vmem:[#allocation7 + $0x120] sm:$0xff]
    %v1886 = vld [vmem:[#allocation7 + $0x128] sm:$0xff]
    %v1887 = vld [vmem:[#allocation7 + $0x130] sm:$0xff]
    %v1888 = vld [vmem:[#allocation7 + $0x138] sm:$0xff]
    %v1889 = vld [vmem:[#allocation7 + $0x140] sm:$0xff]
    %v1890 = vld [vmem:[#allocation7 + $0x148] sm:$0xff]
    %v1891 = vld [vmem:[#allocation7 + $0x150] sm:$0xff]
    %v1892 = vld [vmem:[#allocation7 + $0x158] sm:$0xff]
    %v1893 = vld [vmem:[#allocation7 + $0x160] sm:$0xff]
    %v1894 = vld [vmem:[#allocation7 + $0x168] sm:$0xff]
    %v1895 = vld [vmem:[#allocation7 + $0x170] sm:$0xff]
    %v1896 = vld [vmem:[#allocation7 + $0x178] sm:$0xff]
    %v1897 = vld [vmem:[#allocation7 + $0x180] sm:$0xff]
    %v1898 = vld [vmem:[#allocation7 + $0x188] sm:$0xff]
    %v1899 = vld [vmem:[#allocation7 + $0x190] sm:$0xff]
    %v1900 = vld [vmem:[#allocation7 + $0x198] sm:$0xff]
    %v1901 = vld [vmem:[#allocation7 + $0x1a0] sm:$0xff]
    %v1902 = vld [vmem:[#allocation7 + $0x1a8] sm:$0xff]
    %v1903 = vld [vmem:[#allocation7 + $0x1b0] sm:$0xff]
    %v1904 = vld [vmem:[#allocation7 + $0x1b8] sm:$0xff]
    %v1905 = vld [vmem:[#allocation7 + $0x1c0] sm:$0xff]
    %v1906 = vld [vmem:[#allocation7 + $0x1c8] sm:$0xff]
    %v1907 = vld [vmem:[#allocation7 + $0x1d0] sm:$0xff]
    %v1908 = vld [vmem:[#allocation7 + $0x1d8] sm:$0xff]
    %v1909 = vld [vmem:[#allocation7 + $0x1e0] sm:$0xff]
    %v1910 = vld [vmem:[#allocation7 + $0x1e8] sm:$0xff]
    %v1911 = vld [vmem:[#allocation7 + $0x1f0] sm:$0xff]
    %v1912 = vld [vmem:[#allocation7 + $0x1f8] sm:$0xff]
    %s1913 = scalar_lea.vmem [#allocation7], 512
    %v1914 = vld [vmem:[%s1913] sm:$0xff]
    %v1915 = vld [vmem:[%s1913 + $0x8] sm:$0xff]
    %v1916 = vld [vmem:[%s1913 + $0x10] sm:$0xff]
    %v1917 = vld [vmem:[%s1913 + $0x18] sm:$0xff]
    %v1918 = vld [vmem:[%s1913 + $0x20] sm:$0xff]
    %v1919 = vld [vmem:[%s1913 + $0x28] sm:$0xff]
    %v1920 = vld [vmem:[%s1913 + $0x30] sm:$0xff]
    %v1921 = vld [vmem:[%s1913 + $0x38] sm:$0xff]
    %v1922 = vld [vmem:[%s1913 + $0x40] sm:$0xff]
    %v1923 = vld [vmem:[%s1913 + $0x48] sm:$0xff]
    %v1924 = vld [vmem:[%s1913 + $0x50] sm:$0xff]
    %v1925 = vld [vmem:[%s1913 + $0x58] sm:$0xff]
    %v1926 = vld [vmem:[%s1913 + $0x60] sm:$0xff]
    %v1927 = vld [vmem:[%s1913 + $0x68] sm:$0xff]
    %v1928 = vld [vmem:[%s1913 + $0x70] sm:$0xff]
    %v1929 = vld [vmem:[%s1913 + $0x78] sm:$0xff]
    %v1930 = vld [vmem:[%s1913 + $0x80] sm:$0xff]
    %v1931 = vld [vmem:[%s1913 + $0x88] sm:$0xff]
    %v1932 = vld [vmem:[%s1913 + $0x90] sm:$0xff]
    %v1933 = vld [vmem:[%s1913 + $0x98] sm:$0xff]
    %v1934 = vld [vmem:[%s1913 + $0xa0] sm:$0xff]
    %v1935 = vld [vmem:[%s1913 + $0xa8] sm:$0xff]
    %v1936 = vld [vmem:[%s1913 + $0xb0] sm:$0xff]
    %v1937 = vld [vmem:[%s1913 + $0xb8] sm:$0xff]
    %v1938 = vld [vmem:[%s1913 + $0xc0] sm:$0xff]
    %v1939 = vld [vmem:[%s1913 + $0xc8] sm:$0xff]
    %v1940 = vld [vmem:[%s1913 + $0xd0] sm:$0xff]
    %v1941 = vld [vmem:[%s1913 + $0xd8] sm:$0xff]
    %v1942 = vld [vmem:[%s1913 + $0xe0] sm:$0xff]
    %v1943 = vld [vmem:[%s1913 + $0xe8] sm:$0xff]
    %v1944 = vld [vmem:[%s1913 + $0xf0] sm:$0xff]
    %v1945 = vld [vmem:[%s1913 + $0xf8] sm:$0xff]
    %v1946 = vld [vmem:[%s1913 + $0x100] sm:$0xff]
    %v1947 = vld [vmem:[%s1913 + $0x108] sm:$0xff]
    %v1948 = vld [vmem:[%s1913 + $0x110] sm:$0xff]
    %v1949 = vld [vmem:[%s1913 + $0x118] sm:$0xff]
    %v1950 = vld [vmem:[%s1913 + $0x120] sm:$0xff]
    %v1951 = vld [vmem:[%s1913 + $0x128] sm:$0xff]
    %v1952 = vld [vmem:[%s1913 + $0x130] sm:$0xff]
    %v1953 = vld [vmem:[%s1913 + $0x138] sm:$0xff]
    %v1954 = vld [vmem:[%s1913 + $0x140] sm:$0xff]
    %v1955 = vld [vmem:[%s1913 + $0x148] sm:$0xff]
    %v1956 = vld [vmem:[%s1913 + $0x150] sm:$0xff]
    %v1957 = vld [vmem:[%s1913 + $0x158] sm:$0xff]
    %v1958 = vld [vmem:[%s1913 + $0x160] sm:$0xff]
    %v1959 = vld [vmem:[%s1913 + $0x168] sm:$0xff]
    %v1960 = vld [vmem:[%s1913 + $0x170] sm:$0xff]
    %v1961 = vld [vmem:[%s1913 + $0x178] sm:$0xff]
    %v1962 = vld [vmem:[%s1913 + $0x180] sm:$0xff]
    %v1963 = vld [vmem:[%s1913 + $0x188] sm:$0xff]
    %v1964 = vld [vmem:[%s1913 + $0x190] sm:$0xff]
    %v1965 = vld [vmem:[%s1913 + $0x198] sm:$0xff]
    %v1966 = vld [vmem:[%s1913 + $0x1a0] sm:$0xff]
    %v1967 = vld [vmem:[%s1913 + $0x1a8] sm:$0xff]
    %v1968 = vld [vmem:[%s1913 + $0x1b0] sm:$0xff]
    %v1969 = vld [vmem:[%s1913 + $0x1b8] sm:$0xff]
    %v1970 = vld [vmem:[%s1913 + $0x1c0] sm:$0xff]
    %v1971 = vld [vmem:[%s1913 + $0x1c8] sm:$0xff]
    %v1972 = vld [vmem:[%s1913 + $0x1d0] sm:$0xff]
    %v1973 = vld [vmem:[%s1913 + $0x1d8] sm:$0xff]
    %v1974 = vld [vmem:[%s1913 + $0x1e0] sm:$0xff]
    %v1975 = vld [vmem:[%s1913 + $0x1e8] sm:$0xff]
    %v1976 = vld [vmem:[%s1913 + $0x1f0] sm:$0xff]
    %v1977 = vld [vmem:[%s1913 + $0x1f8] sm:$0xff]
    %v1986 = vunpack.c.l.b16 %v1838
    %v1987 = vunpack.c.h.b16 %v1838
    %v1988 = vunpack.c.l.b16 %v1839
    %v1989 = vunpack.c.h.b16 %v1839
    %v1990 = vunpack.c.l.b16 %v1840
    %v1991 = vunpack.c.h.b16 %v1840
    %v1992 = vunpack.c.l.b16 %v1841
    %v1993 = vunpack.c.h.b16 %v1841
    %v1994 = vunpack.c.l.b16 %v1842
    %v1995 = vunpack.c.h.b16 %v1842
    %v1996 = vunpack.c.l.b16 %v1843
    %v1997 = vunpack.c.h.b16 %v1843
    %v1998 = vunpack.c.l.b16 %v1844
    %v1999 = vunpack.c.h.b16 %v1844
    %v2000 = vunpack.c.l.b16 %v1845
    %v2001 = vunpack.c.h.b16 %v1845
    %v2002 = vpack.c.b16 %v1988, %v1986
    %v2003 = vpack.c.b16 %v1989, %v1987
    %v2004 = vpack.c.b16 %v1992, %v1990
    %v2005 = vpack.c.b16 %v1993, %v1991
    %v2006 = vpack.c.b16 %v1996, %v1994
    %v2007 = vpack.c.b16 %v1997, %v1995
    %v2008 = vpack.c.b16 %v2000, %v1998
    %v2009 = vpack.c.b16 %v2001, %v1999
    %v2082 = vunpack.c.l.b16 %v1914
    %v2083 = vunpack.c.h.b16 %v1914
    %v2084 = vunpack.c.l.b16 %v1915
    %v2085 = vunpack.c.h.b16 %v1915
    %v2086 = vunpack.c.l.b16 %v1916
    %v2087 = vunpack.c.h.b16 %v1916
    %v2088 = vunpack.c.l.b16 %v1917
    %v2089 = vunpack.c.h.b16 %v1917
    %v2090 = vunpack.c.l.b16 %v1918
    %v2091 = vunpack.c.h.b16 %v1918
    %v2092 = vunpack.c.l.b16 %v1919
    %v2093 = vunpack.c.h.b16 %v1919
    %v2094 = vunpack.c.l.b16 %v1920
    %v2095 = vunpack.c.h.b16 %v1920
    %v2096 = vunpack.c.l.b16 %v1921
    %v2097 = vunpack.c.h.b16 %v1921
    %v2098 = vunpack.c.l.b16 %v1922
    %v2099 = vunpack.c.h.b16 %v1922
    %v2100 = vunpack.c.l.b16 %v1923
    %v2101 = vunpack.c.h.b16 %v1923
    %v2102 = vunpack.c.l.b16 %v1924
    %v2103 = vunpack.c.h.b16 %v1924
    %v2104 = vunpack.c.l.b16 %v1925
    %v2105 = vunpack.c.h.b16 %v1925
    %v2106 = vunpack.c.l.b16 %v1926
    %v2107 = vunpack.c.h.b16 %v1926
    %v2108 = vunpack.c.l.b16 %v1927
    %v2109 = vunpack.c.h.b16 %v1927
    %v2110 = vunpack.c.l.b16 %v1928
    %v2111 = vunpack.c.h.b16 %v1928
    %v2112 = vunpack.c.l.b16 %v1929
    %v2113 = vunpack.c.h.b16 %v1929
    %v2114 = vunpack.c.l.b16 %v1930
    %v2115 = vunpack.c.h.b16 %v1930
    %v2116 = vunpack.c.l.b16 %v1931
    %v2117 = vunpack.c.h.b16 %v1931
    %v2118 = vunpack.c.l.b16 %v1932
    %v2119 = vunpack.c.h.b16 %v1932
    %v2120 = vunpack.c.l.b16 %v1933
    %v2121 = vunpack.c.h.b16 %v1933
    %v2122 = vunpack.c.l.b16 %v1934
    %v2123 = vunpack.c.h.b16 %v1934
    %v2124 = vunpack.c.l.b16 %v1935
    %v2125 = vunpack.c.h.b16 %v1935
    %v2126 = vunpack.c.l.b16 %v1936
    %v2127 = vunpack.c.h.b16 %v1936
    %v2128 = vunpack.c.l.b16 %v1937
    %v2129 = vunpack.c.h.b16 %v1937
    %v2130 = vunpack.c.l.b16 %v1938
    %v2131 = vunpack.c.h.b16 %v1938
    %v2132 = vunpack.c.l.b16 %v1939
    %v2133 = vunpack.c.h.b16 %v1939
    %v2134 = vunpack.c.l.b16 %v1940
    %v2135 = vunpack.c.h.b16 %v1940
    %v2136 = vunpack.c.l.b16 %v1941
    %v2137 = vunpack.c.h.b16 %v1941
    %v2138 = vunpack.c.l.b16 %v1942
    %v2139 = vunpack.c.h.b16 %v1942
    %v2140 = vunpack.c.l.b16 %v1943
    %v2141 = vunpack.c.h.b16 %v1943
    %v2142 = vunpack.c.l.b16 %v1944
    %v2143 = vunpack.c.h.b16 %v1944
    %v2144 = vunpack.c.l.b16 %v1945
    %v2145 = vunpack.c.h.b16 %v1945
    %v2146 = vunpack.c.l.b16 %v1946
    %v2147 = vunpack.c.h.b16 %v1946
    %v2148 = vunpack.c.l.b16 %v1947
    %v2149 = vunpack.c.h.b16 %v1947
    %v2150 = vunpack.c.l.b16 %v1948
    %v2151 = vunpack.c.h.b16 %v1948
    %v2152 = vunpack.c.l.b16 %v1949
    %v2153 = vunpack.c.h.b16 %v1949
    %v2154 = vunpack.c.l.b16 %v1950
    %v2155 = vunpack.c.h.b16 %v1950
    %v2156 = vunpack.c.l.b16 %v1951
    %v2157 = vunpack.c.h.b16 %v1951
    %v2158 = vunpack.c.l.b16 %v1952
    %v2159 = vunpack.c.h.b16 %v1952
    %v2160 = vunpack.c.l.b16 %v1953
    %v2161 = vunpack.c.h.b16 %v1953
    %v2162 = vunpack.c.l.b16 %v1954
    %v2163 = vunpack.c.h.b16 %v1954
    %v2164 = vunpack.c.l.b16 %v1955
    %v2165 = vunpack.c.h.b16 %v1955
    %v2166 = vunpack.c.l.b16 %v1956
    %v2167 = vunpack.c.h.b16 %v1956
    %v2168 = vunpack.c.l.b16 %v1957
    %v2169 = vunpack.c.h.b16 %v1957
    %v2170 = vunpack.c.l.b16 %v1958
    %v2171 = vunpack.c.h.b16 %v1958
    %v2172 = vunpack.c.l.b16 %v1959
    %v2173 = vunpack.c.h.b16 %v1959
    %v2174 = vunpack.c.l.b16 %v1960
    %v2175 = vunpack.c.h.b16 %v1960
    %v2176 = vunpack.c.l.b16 %v1961
    %v2177 = vunpack.c.h.b16 %v1961
    %v2178 = vunpack.c.l.b16 %v1962
    %v2179 = vunpack.c.h.b16 %v1962
    %v2180 = vunpack.c.l.b16 %v1963
    %v2181 = vunpack.c.h.b16 %v1963
    %v2182 = vunpack.c.l.b16 %v1964
    %v2183 = vunpack.c.h.b16 %v1964
    %v2184 = vunpack.c.l.b16 %v1965
    %v2185 = vunpack.c.h.b16 %v1965
    %v2186 = vunpack.c.l.b16 %v1966
    %v2187 = vunpack.c.h.b16 %v1966
    %v2188 = vunpack.c.l.b16 %v1967
    %v2189 = vunpack.c.h.b16 %v1967
    %v2190 = vunpack.c.l.b16 %v1968
    %v2191 = vunpack.c.h.b16 %v1968
    %v2192 = vunpack.c.l.b16 %v1969
    %v2193 = vunpack.c.h.b16 %v1969
    %v2194 = vunpack.c.l.b16 %v1970
    %v2195 = vunpack.c.h.b16 %v1970
    %v2196 = vunpack.c.l.b16 %v1971
    %v2197 = vunpack.c.h.b16 %v1971
    %v2198 = vunpack.c.l.b16 %v1972
    %v2199 = vunpack.c.h.b16 %v1972
    %v2200 = vunpack.c.l.b16 %v1973
    %v2201 = vunpack.c.h.b16 %v1973
    %v2202 = vunpack.c.l.b16 %v1974
    %v2203 = vunpack.c.h.b16 %v1974
    %v2204 = vunpack.c.l.b16 %v1975
    %v2205 = vunpack.c.h.b16 %v1975
    %v2206 = vunpack.c.l.b16 %v1976
    %v2207 = vunpack.c.h.b16 %v1976
    %v2208 = vunpack.c.l.b16 %v1977
    %v2209 = vunpack.c.h.b16 %v1977
    %v2210 = vpack.c.b16 %v2086, %v2082
    %v2211 = vpack.c.b16 %v2087, %v2083
    %v2212 = vpack.c.b16 %v2088, %v2084
    %v2213 = vpack.c.b16 %v2089, %v2085
    %v2214 = vpack.c.b16 %v2094, %v2090
    %v2215 = vpack.c.b16 %v2095, %v2091
    %v2216 = vpack.c.b16 %v2096, %v2092
    %v2217 = vpack.c.b16 %v2097, %v2093
    %v2218 = vpack.c.b16 %v2102, %v2098
    %v2219 = vpack.c.b16 %v2103, %v2099
    %v2220 = vpack.c.b16 %v2104, %v2100
    %v2221 = vpack.c.b16 %v2105, %v2101
    %v2222 = vpack.c.b16 %v2110, %v2106
    %v2223 = vpack.c.b16 %v2111, %v2107
    %v2224 = vpack.c.b16 %v2112, %v2108
    %v2225 = vpack.c.b16 %v2113, %v2109
    %v2226 = vpack.c.b16 %v2118, %v2114
    %v2227 = vpack.c.b16 %v2119, %v2115
    %v2228 = vpack.c.b16 %v2120, %v2116
    %v2229 = vpack.c.b16 %v2121, %v2117
    %v2230 = vpack.c.b16 %v2126, %v2122
    %v2231 = vpack.c.b16 %v2127, %v2123
    %v2232 = vpack.c.b16 %v2128, %v2124
    %v2233 = vpack.c.b16 %v2129, %v2125
    %v2234 = vpack.c.b16 %v2134, %v2130
    %v2235 = vpack.c.b16 %v2135, %v2131
    %v2236 = vpack.c.b16 %v2136, %v2132
    %v2237 = vpack.c.b16 %v2137, %v2133
    %v2238 = vpack.c.b16 %v2142, %v2138
    %v2239 = vpack.c.b16 %v2143, %v2139
    %v2240 = vpack.c.b16 %v2144, %v2140
    %v2241 = vpack.c.b16 %v2145, %v2141
    %v2242 = vpack.c.b16 %v2150, %v2146
    %v2243 = vpack.c.b16 %v2151, %v2147
    %v2244 = vpack.c.b16 %v2152, %v2148
    %v2245 = vpack.c.b16 %v2153, %v2149
    %v2246 = vpack.c.b16 %v2158, %v2154
    %v2247 = vpack.c.b16 %v2159, %v2155
    %v2248 = vpack.c.b16 %v2160, %v2156
    %v2249 = vpack.c.b16 %v2161, %v2157
    %v2250 = vpack.c.b16 %v2166, %v2162
    %v2251 = vpack.c.b16 %v2167, %v2163
    %v2252 = vpack.c.b16 %v2168, %v2164
    %v2253 = vpack.c.b16 %v2169, %v2165
    %v2254 = vpack.c.b16 %v2174, %v2170
    %v2255 = vpack.c.b16 %v2175, %v2171
    %v2256 = vpack.c.b16 %v2176, %v2172
    %v2257 = vpack.c.b16 %v2177, %v2173
    %v2258 = vpack.c.b16 %v2182, %v2178
    %v2259 = vpack.c.b16 %v2183, %v2179
    %v2260 = vpack.c.b16 %v2184, %v2180
    %v2261 = vpack.c.b16 %v2185, %v2181
    %v2262 = vpack.c.b16 %v2190, %v2186
    %v2263 = vpack.c.b16 %v2191, %v2187
    %v2264 = vpack.c.b16 %v2192, %v2188
    %v2265 = vpack.c.b16 %v2193, %v2189
    %v2266 = vpack.c.b16 %v2198, %v2194
    %v2267 = vpack.c.b16 %v2199, %v2195
    %v2268 = vpack.c.b16 %v2200, %v2196
    %v2269 = vpack.c.b16 %v2201, %v2197
    %v2270 = vpack.c.b16 %v2206, %v2202
    %v2271 = vpack.c.b16 %v2207, %v2203
    %v2272 = vpack.c.b16 %v2208, %v2204
    %v2273 = vpack.c.b16 %v2209, %v2205
    %2338 = vmatpush.bf16.msra.mxu0 %v2238
    %2339 = vmatpush.bf16.msra.mxu0 %v2234
    %2340 = vmatpush.bf16.msra.mxu0 %v2230
    %2341 = vmatpush.bf16.msra.mxu0 %v2226
    %2342 = vmatpush.bf16.msra.mxu0 %v2222
    %2343 = vmatpush.bf16.msra.mxu0 %v2218
    %2344 = vmatpush.bf16.msra.mxu0 %v2214
    %2345 = vmatpush.bf16.msra.mxu0 %v2210
    %2346 = vmatmul.bf16.gmra.mxu0 %v2002
    %v2347 = vpop.f32.mrf.mxu0
    %v2348 = vadd.f32 0.0, %v2347
    %v2349 = vpop.f32.mrf.mxu0
    %v2350 = vadd.f32 0.0, %v2349
    %2351 = vmatmul.bf16.gmra.mxu0 %v2004
    %v2352 = vpop.f32.mrf.mxu0
    %v2353 = vadd.f32 0.0, %v2352
    %v2354 = vpop.f32.mrf.mxu0
    %v2355 = vadd.f32 0.0, %v2354
    %2356 = vmatmul.bf16.gmra.mxu0 %v2006
    %v2357 = vpop.f32.mrf.mxu0
    %v2358 = vadd.f32 0.0, %v2357
    %v2359 = vpop.f32.mrf.mxu0
    %v2360 = vadd.f32 0.0, %v2359
    %2361 = vmatmul.bf16.gmra.mxu0 %v2008
    %v2362 = vpop.f32.mrf.mxu0
    %v2363 = vadd.f32 0.0, %v2362
    %v2364 = vpop.f32.mrf.mxu0
    %v2365 = vadd.f32 0.0, %v2364
    %2366 = vdwg.mxu0
    %2367 = vmatpush.bf16.msra.mxu0 %v2270
    %2368 = vmatpush.bf16.msra.mxu0 %v2266
    %2369 = vmatpush.bf16.msra.mxu0 %v2262
    %2370 = vmatpush.bf16.msra.mxu0 %v2258
    %2371 = vmatpush.bf16.msra.mxu0 %v2254
    %2372 = vmatpush.bf16.msra.mxu0 %v2250
    %2373 = vmatpush.bf16.msra.mxu0 %v2246
    %2374 = vmatpush.bf16.msra.mxu0 %v2242
    %2375 = vmatmul.bf16.gmra.mxu0 %v2003
    %v2376 = vpop.f32.mrf.mxu0
    %v2377 = vadd.f32 %v2348, %v2376
    %v2378 = vpop.f32.mrf.mxu0
    %v2379 = vadd.f32 %v2350, %v2378
    %2380 = vmatmul.bf16.gmra.mxu0 %v2005
    %v2381 = vpop.f32.mrf.mxu0
    %v2382 = vadd.f32 %v2353, %v2381
    %v2383 = vpop.f32.mrf.mxu0
    %v2384 = vadd.f32 %v2355, %v2383
    %2385 = vmatmul.bf16.gmra.mxu0 %v2007
    %v2386 = vpop.f32.mrf.mxu0
    %v2387 = vadd.f32 %v2358, %v2386
    %v2388 = vpop.f32.mrf.mxu0
    %v2389 = vadd.f32 %v2360, %v2388
    %2390 = vmatmul.bf16.gmra.mxu0 %v2009
    %v2391 = vpop.f32.mrf.mxu0
    %v2392 = vadd.f32 %v2363, %v2391
    %v2393 = vpop.f32.mrf.mxu0
    %v2394 = vadd.f32 %v2365, %v2393
    %2395 = vdwg.mxu0
    %2396 = vmatpush.bf16.msra.mxu0 %v2239
    %2397 = vmatpush.bf16.msra.mxu0 %v2235
    %2398 = vmatpush.bf16.msra.mxu0 %v2231
    %2399 = vmatpush.bf16.msra.mxu0 %v2227
    %2400 = vmatpush.bf16.msra.mxu0 %v2223
    %2401 = vmatpush.bf16.msra.mxu0 %v2219
    %2402 = vmatpush.bf16.msra.mxu0 %v2215
    %2403 = vmatpush.bf16.msra.mxu0 %v2211
    %2404 = vmatmul.bf16.gmra.mxu0 %v2002
    %v2405 = vpop.f32.mrf.mxu0
    %v2406 = vadd.f32 0.0, %v2405
    %v2407 = vpop.f32.mrf.mxu0
    %v2408 = vadd.f32 0.0, %v2407
    %2409 = vmatmul.bf16.gmra.mxu0 %v2004
    %v2410 = vpop.f32.mrf.mxu0
    %v2411 = vadd.f32 0.0, %v2410
    %v2412 = vpop.f32.mrf.mxu0
    %v2413 = vadd.f32 0.0, %v2412
    %2414 = vmatmul.bf16.gmra.mxu0 %v2006
    %v2415 = vpop.f32.mrf.mxu0
    %v2416 = vadd.f32 0.0, %v2415
    %v2417 = vpop.f32.mrf.mxu0
    %v2418 = vadd.f32 0.0, %v2417
    %2419 = vmatmul.bf16.gmra.mxu0 %v2008
    %v2420 = vpop.f32.mrf.mxu0
    %v2421 = vadd.f32 0.0, %v2420
    %v2422 = vpop.f32.mrf.mxu0
    %v2423 = vadd.f32 0.0, %v2422
    %2424 = vdwg.mxu0
    %2425 = vmatpush.bf16.msra.mxu0 %v2271
    %2426 = vmatpush.bf16.msra.mxu0 %v2267
    %2427 = vmatpush.bf16.msra.mxu0 %v2263
    %2428 = vmatpush.bf16.msra.mxu0 %v2259
    %2429 = vmatpush.bf16.msra.mxu0 %v2255
    %2430 = vmatpush.bf16.msra.mxu0 %v2251
    %2431 = vmatpush.bf16.msra.mxu0 %v2247
    %2432 = vmatpush.bf16.msra.mxu0 %v2243
    %2433 = vmatmul.bf16.gmra.mxu0 %v2003
    %v2434 = vpop.f32.mrf.mxu0
    %v2435 = vadd.f32 %v2406, %v2434
    %v2436 = vpop.f32.mrf.mxu0
    %v2437 = vadd.f32 %v2408, %v2436
    %2438 = vmatmul.bf16.gmra.mxu0 %v2005
    %v2439 = vpop.f32.mrf.mxu0
    %v2440 = vadd.f32 %v2411, %v2439
    %v2441 = vpop.f32.mrf.mxu0
    %v2442 = vadd.f32 %v2413, %v2441
    %2443 = vmatmul.bf16.gmra.mxu0 %v2007
    %v2444 = vpop.f32.mrf.mxu0
    %v2445 = vadd.f32 %v2416, %v2444
    %v2446 = vpop.f32.mrf.mxu0
    %v2447 = vadd.f32 %v2418, %v2446
    %2448 = vmatmul.bf16.gmra.mxu0 %v2009
    %v2449 = vpop.f32.mrf.mxu0
    %v2450 = vadd.f32 %v2421, %v2449
    %v2451 = vpop.f32.mrf.mxu0
    %v2452 = vadd.f32 %v2423, %v2451
    %2453 = vdwg.mxu0
    %2454 = vmatpush.bf16.msra.mxu0 %v2240
    %2455 = vmatpush.bf16.msra.mxu0 %v2236
    %2456 = vmatpush.bf16.msra.mxu0 %v2232
    %2457 = vmatpush.bf16.msra.mxu0 %v2228
    %2458 = vmatpush.bf16.msra.mxu0 %v2224
    %2459 = vmatpush.bf16.msra.mxu0 %v2220
    %2460 = vmatpush.bf16.msra.mxu0 %v2216
    %2461 = vmatpush.bf16.msra.mxu0 %v2212
    %2462 = vmatmul.bf16.gmra.mxu0 %v2002
    %v2463 = vpop.f32.mrf.mxu0
    %v2464 = vadd.f32 0.0, %v2463
    %v2465 = vpop.f32.mrf.mxu0
    %v2466 = vadd.f32 0.0, %v2465
    %2467 = vmatmul.bf16.gmra.mxu0 %v2004
    %v2468 = vpop.f32.mrf.mxu0
    %v2469 = vadd.f32 0.0, %v2468
    %v2470 = vpop.f32.mrf.mxu0
    %v2471 = vadd.f32 0.0, %v2470
    %2472 = vmatmul.bf16.gmra.mxu0 %v2006
    %v2473 = vpop.f32.mrf.mxu0
    %v2474 = vadd.f32 0.0, %v2473
    %v2475 = vpop.f32.mrf.mxu0
    %v2476 = vadd.f32 0.0, %v2475
    %2477 = vmatmul.bf16.gmra.mxu0 %v2008
    %v2478 = vpop.f32.mrf.mxu0
    %v2479 = vadd.f32 0.0, %v2478
    %v2480 = vpop.f32.mrf.mxu0
    %v2481 = vadd.f32 0.0, %v2480
    %2482 = vdwg.mxu0
    %2483 = vmatpush.bf16.msra.mxu0 %v2272
    %2484 = vmatpush.bf16.msra.mxu0 %v2268
    %2485 = vmatpush.bf16.msra.mxu0 %v2264
    %2486 = vmatpush.bf16.msra.mxu0 %v2260
    %2487 = vmatpush.bf16.msra.mxu0 %v2256
    %2488 = vmatpush.bf16.msra.mxu0 %v2252
    %2489 = vmatpush.bf16.msra.mxu0 %v2248
    %2490 = vmatpush.bf16.msra.mxu0 %v2244
    %2491 = vmatmul.bf16.gmra.mxu0 %v2003
    %v2492 = vpop.f32.mrf.mxu0
    %v2493 = vadd.f32 %v2464, %v2492
    %v2494 = vpop.f32.mrf.mxu0
    %v2495 = vadd.f32 %v2466, %v2494
    %2496 = vmatmul.bf16.gmra.mxu0 %v2005
    %v2497 = vpop.f32.mrf.mxu0
    %v2498 = vadd.f32 %v2469, %v2497
    %v2499 = vpop.f32.mrf.mxu0
    %v2500 = vadd.f32 %v2471, %v2499
    %2501 = vmatmul.bf16.gmra.mxu0 %v2007
    %v2502 = vpop.f32.mrf.mxu0
    %v2503 = vadd.f32 %v2474, %v2502
    %v2504 = vpop.f32.mrf.mxu0
    %v2505 = vadd.f32 %v2476, %v2504
    %2506 = vmatmul.bf16.gmra.mxu0 %v2009
    %v2507 = vpop.f32.mrf.mxu0
    %v2508 = vadd.f32 %v2479, %v2507
    %v2509 = vpop.f32.mrf.mxu0
    %v2510 = vadd.f32 %v2481, %v2509
    %2511 = vdwg.mxu0
    %2512 = vmatpush.bf16.msra.mxu0 %v2241
    %2513 = vmatpush.bf16.msra.mxu0 %v2237
    %2514 = vmatpush.bf16.msra.mxu0 %v2233
    %2515 = vmatpush.bf16.msra.mxu0 %v2229
    %2516 = vmatpush.bf16.msra.mxu0 %v2225
    %2517 = vmatpush.bf16.msra.mxu0 %v2221
    %2518 = vmatpush.bf16.msra.mxu0 %v2217
    %2519 = vmatpush.bf16.msra.mxu0 %v2213
    %2520 = vmatmul.bf16.gmra.mxu0 %v2002
    %v2521 = vpop.f32.mrf.mxu0
    %v2522 = vadd.f32 0.0, %v2521
    %v2523 = vpop.f32.mrf.mxu0
    %v2524 = vadd.f32 0.0, %v2523
    %2525 = vmatmul.bf16.gmra.mxu0 %v2004
    %v2526 = vpop.f32.mrf.mxu0
    %v2527 = vadd.f32 0.0, %v2526
    %v2528 = vpop.f32.mrf.mxu0
    %v2529 = vadd.f32 0.0, %v2528
    %2530 = vmatmul.bf16.gmra.mxu0 %v2006
    %v2531 = vpop.f32.mrf.mxu0
    %v2532 = vadd.f32 0.0, %v2531
    %v2533 = vpop.f32.mrf.mxu0
    %v2534 = vadd.f32 0.0, %v2533
    %2535 = vmatmul.bf16.gmra.mxu0 %v2008
    %v2536 = vpop.f32.mrf.mxu0
    %v2537 = vadd.f32 0.0, %v2536
    %v2538 = vpop.f32.mrf.mxu0
    %v2539 = vadd.f32 0.0, %v2538
    %2540 = vdwg.mxu0
    %2541 = vmatpush.bf16.msra.mxu0 %v2273
    %2542 = vmatpush.bf16.msra.mxu0 %v2269
    %2543 = vmatpush.bf16.msra.mxu0 %v2265
    %2544 = vmatpush.bf16.msra.mxu0 %v2261
    %2545 = vmatpush.bf16.msra.mxu0 %v2257
    %2546 = vmatpush.bf16.msra.mxu0 %v2253
    %2547 = vmatpush.bf16.msra.mxu0 %v2249
    %2548 = vmatpush.bf16.msra.mxu0 %v2245
    %2549 = vmatmul.bf16.gmra.mxu0 %v2003
    %v2550 = vpop.f32.mrf.mxu0
    %v2551 = vadd.f32 %v2522, %v2550
    %v2552 = vpop.f32.mrf.mxu0
    %v2553 = vadd.f32 %v2524, %v2552
    %2554 = vmatmul.bf16.gmra.mxu0 %v2005
    %v2555 = vpop.f32.mrf.mxu0
    %v2556 = vadd.f32 %v2527, %v2555
    %v2557 = vpop.f32.mrf.mxu0
    %v2558 = vadd.f32 %v2529, %v2557
    %2559 = vmatmul.bf16.gmra.mxu0 %v2007
    %v2560 = vpop.f32.mrf.mxu0
    %v2561 = vadd.f32 %v2532, %v2560
    %v2562 = vpop.f32.mrf.mxu0
    %v2563 = vadd.f32 %v2534, %v2562
    %2564 = vmatmul.bf16.gmra.mxu0 %v2009
    %v2565 = vpop.f32.mrf.mxu0
    %v2566 = vadd.f32 %v2537, %v2565
    %v2567 = vpop.f32.mrf.mxu0
    %v2568 = vadd.f32 %v2539, %v2567
    %2569 = vdwg.mxu0
    %v2571 = vunpack.c.l.b16 %v1837
    %v2572 = vunpack.c.h.b16 %v1837
    %v2573 = vpack.c.b16 %v1986, %v2571
    %v2574 = vpack.c.b16 %v1987, %v2572
    %v2575 = vpack.c.b16 %v1990, %v1988
    %v2576 = vpack.c.b16 %v1991, %v1989
    %v2577 = vpack.c.b16 %v1994, %v1992
    %v2578 = vpack.c.b16 %v1995, %v1993
    %v2579 = vpack.c.b16 %v1998, %v1996
    %v2580 = vpack.c.b16 %v1999, %v1997
    %v2653 = vunpack.c.l.b16 %v1849
    %v2654 = vunpack.c.h.b16 %v1849
    %v2655 = vunpack.c.l.b16 %v1850
    %v2656 = vunpack.c.h.b16 %v1850
    %v2657 = vunpack.c.l.b16 %v1851
    %v2658 = vunpack.c.h.b16 %v1851
    %v2659 = vunpack.c.l.b16 %v1852
    %v2660 = vunpack.c.h.b16 %v1852
    %v2661 = vunpack.c.l.b16 %v1853
    %v2662 = vunpack.c.h.b16 %v1853
    %v2663 = vunpack.c.l.b16 %v1854
    %v2664 = vunpack.c.h.b16 %v1854
    %v2665 = vunpack.c.l.b16 %v1855
    %v2666 = vunpack.c.h.b16 %v1855
    %v2667 = vunpack.c.l.b16 %v1856
    %v2668 = vunpack.c.h.b16 %v1856
    %v2669 = vunpack.c.l.b16 %v1857
    %v2670 = vunpack.c.h.b16 %v1857
    %v2671 = vunpack.c.l.b16 %v1858
    %v2672 = vunpack.c.h.b16 %v1858
    %v2673 = vunpack.c.l.b16 %v1859
    %v2674 = vunpack.c.h.b16 %v1859
    %v2675 = vunpack.c.l.b16 %v1860
    %v2676 = vunpack.c.h.b16 %v1860
    %v2677 = vunpack.c.l.b16 %v1861
    %v2678 = vunpack.c.h.b16 %v1861
    %v2679 = vunpack.c.l.b16 %v1862
    %v2680 = vunpack.c.h.b16 %v1862
    %v2681 = vunpack.c.l.b16 %v1863
    %v2682 = vunpack.c.h.b16 %v1863
    %v2683 = vunpack.c.l.b16 %v1864
    %v2684 = vunpack.c.h.b16 %v1864
    %v2685 = vunpack.c.l.b16 %v1865
    %v2686 = vunpack.c.h.b16 %v1865
    %v2687 = vunpack.c.l.b16 %v1866
    %v2688 = vunpack.c.h.b16 %v1866
    %v2689 = vunpack.c.l.b16 %v1867
    %v2690 = vunpack.c.h.b16 %v1867
    %v2691 = vunpack.c.l.b16 %v1868
    %v2692 = vunpack.c.h.b16 %v1868
    %v2693 = vunpack.c.l.b16 %v1869
    %v2694 = vunpack.c.h.b16 %v1869
    %v2695 = vunpack.c.l.b16 %v1870
    %v2696 = vunpack.c.h.b16 %v1870
    %v2697 = vunpack.c.l.b16 %v1871
    %v2698 = vunpack.c.h.b16 %v1871
    %v2699 = vunpack.c.l.b16 %v1872
    %v2700 = vunpack.c.h.b16 %v1872
    %v2701 = vunpack.c.l.b16 %v1873
    %v2702 = vunpack.c.h.b16 %v1873
    %v2703 = vunpack.c.l.b16 %v1874
    %v2704 = vunpack.c.h.b16 %v1874
    %v2705 = vunpack.c.l.b16 %v1875
    %v2706 = vunpack.c.h.b16 %v1875
    %v2707 = vunpack.c.l.b16 %v1876
    %v2708 = vunpack.c.h.b16 %v1876
    %v2709 = vunpack.c.l.b16 %v1877
    %v2710 = vunpack.c.h.b16 %v1877
    %v2711 = vunpack.c.l.b16 %v1878
    %v2712 = vunpack.c.h.b16 %v1878
    %v2713 = vunpack.c.l.b16 %v1879
    %v2714 = vunpack.c.h.b16 %v1879
    %v2715 = vunpack.c.l.b16 %v1880
    %v2716 = vunpack.c.h.b16 %v1880
    %v2717 = vunpack.c.l.b16 %v1881
    %v2718 = vunpack.c.h.b16 %v1881
    %v2719 = vunpack.c.l.b16 %v1882
    %v2720 = vunpack.c.h.b16 %v1882
    %v2721 = vunpack.c.l.b16 %v1883
    %v2722 = vunpack.c.h.b16 %v1883
    %v2723 = vunpack.c.l.b16 %v1884
    %v2724 = vunpack.c.h.b16 %v1884
    %v2725 = vunpack.c.l.b16 %v1885
    %v2726 = vunpack.c.h.b16 %v1885
    %v2727 = vunpack.c.l.b16 %v1886
    %v2728 = vunpack.c.h.b16 %v1886
    %v2729 = vunpack.c.l.b16 %v1887
    %v2730 = vunpack.c.h.b16 %v1887
    %v2731 = vunpack.c.l.b16 %v1888
    %v2732 = vunpack.c.h.b16 %v1888
    %v2733 = vunpack.c.l.b16 %v1889
    %v2734 = vunpack.c.h.b16 %v1889
    %v2735 = vunpack.c.l.b16 %v1890
    %v2736 = vunpack.c.h.b16 %v1890
    %v2737 = vunpack.c.l.b16 %v1891
    %v2738 = vunpack.c.h.b16 %v1891
    %v2739 = vunpack.c.l.b16 %v1892
    %v2740 = vunpack.c.h.b16 %v1892
    %v2741 = vunpack.c.l.b16 %v1893
    %v2742 = vunpack.c.h.b16 %v1893
    %v2743 = vunpack.c.l.b16 %v1894
    %v2744 = vunpack.c.h.b16 %v1894
    %v2745 = vunpack.c.l.b16 %v1895
    %v2746 = vunpack.c.h.b16 %v1895
    %v2747 = vunpack.c.l.b16 %v1896
    %v2748 = vunpack.c.h.b16 %v1896
    %v2749 = vunpack.c.l.b16 %v1897
    %v2750 = vunpack.c.h.b16 %v1897
    %v2751 = vunpack.c.l.b16 %v1898
    %v2752 = vunpack.c.h.b16 %v1898
    %v2753 = vunpack.c.l.b16 %v1899
    %v2754 = vunpack.c.h.b16 %v1899
    %v2755 = vunpack.c.l.b16 %v1900
    %v2756 = vunpack.c.h.b16 %v1900
    %v2757 = vunpack.c.l.b16 %v1901
    %v2758 = vunpack.c.h.b16 %v1901
    %v2759 = vunpack.c.l.b16 %v1902
    %v2760 = vunpack.c.h.b16 %v1902
    %v2761 = vunpack.c.l.b16 %v1903
    %v2762 = vunpack.c.h.b16 %v1903
    %v2763 = vunpack.c.l.b16 %v1904
    %v2764 = vunpack.c.h.b16 %v1904
    %v2765 = vunpack.c.l.b16 %v1905
    %v2766 = vunpack.c.h.b16 %v1905
    %v2767 = vunpack.c.l.b16 %v1906
    %v2768 = vunpack.c.h.b16 %v1906
    %v2769 = vunpack.c.l.b16 %v1907
    %v2770 = vunpack.c.h.b16 %v1907
    %v2771 = vunpack.c.l.b16 %v1908
    %v2772 = vunpack.c.h.b16 %v1908
    %v2773 = vunpack.c.l.b16 %v1909
    %v2774 = vunpack.c.h.b16 %v1909
    %v2775 = vunpack.c.l.b16 %v1910
    %v2776 = vunpack.c.h.b16 %v1910
    %v2777 = vunpack.c.l.b16 %v1911
    %v2778 = vunpack.c.h.b16 %v1911
    %v2779 = vunpack.c.l.b16 %v1912
    %v2780 = vunpack.c.h.b16 %v1912
    %v2781 = vpack.c.b16 %v2657, %v2653
    %v2782 = vpack.c.b16 %v2658, %v2654
    %v2783 = vpack.c.b16 %v2659, %v2655
    %v2784 = vpack.c.b16 %v2660, %v2656
    %v2785 = vpack.c.b16 %v2665, %v2661
    %v2786 = vpack.c.b16 %v2666, %v2662
    %v2787 = vpack.c.b16 %v2667, %v2663
    %v2788 = vpack.c.b16 %v2668, %v2664
    %v2789 = vpack.c.b16 %v2673, %v2669
    %v2790 = vpack.c.b16 %v2674, %v2670
    %v2791 = vpack.c.b16 %v2675, %v2671
    %v2792 = vpack.c.b16 %v2676, %v2672
    %v2793 = vpack.c.b16 %v2681, %v2677
    %v2794 = vpack.c.b16 %v2682, %v2678
    %v2795 = vpack.c.b16 %v2683, %v2679
    %v2796 = vpack.c.b16 %v2684, %v2680
    %v2797 = vpack.c.b16 %v2689, %v2685
    %v2798 = vpack.c.b16 %v2690, %v2686
    %v2799 = vpack.c.b16 %v2691, %v2687
    %v2800 = vpack.c.b16 %v2692, %v2688
    %v2801 = vpack.c.b16 %v2697, %v2693
    %v2802 = vpack.c.b16 %v2698, %v2694
    %v2803 = vpack.c.b16 %v2699, %v2695
    %v2804 = vpack.c.b16 %v2700, %v2696
    %v2805 = vpack.c.b16 %v2705, %v2701
    %v2806 = vpack.c.b16 %v2706, %v2702
    %v2807 = vpack.c.b16 %v2707, %v2703
    %v2808 = vpack.c.b16 %v2708, %v2704
    %v2809 = vpack.c.b16 %v2713, %v2709
    %v2810 = vpack.c.b16 %v2714, %v2710
    %v2811 = vpack.c.b16 %v2715, %v2711
    %v2812 = vpack.c.b16 %v2716, %v2712
    %v2813 = vpack.c.b16 %v2721, %v2717
    %v2814 = vpack.c.b16 %v2722, %v2718
    %v2815 = vpack.c.b16 %v2723, %v2719
    %v2816 = vpack.c.b16 %v2724, %v2720
    %v2817 = vpack.c.b16 %v2729, %v2725
    %v2818 = vpack.c.b16 %v2730, %v2726
    %v2819 = vpack.c.b16 %v2731, %v2727
    %v2820 = vpack.c.b16 %v2732, %v2728
    %v2821 = vpack.c.b16 %v2737, %v2733
    %v2822 = vpack.c.b16 %v2738, %v2734
    %v2823 = vpack.c.b16 %v2739, %v2735
    %v2824 = vpack.c.b16 %v2740, %v2736
    %v2825 = vpack.c.b16 %v2745, %v2741
    %v2826 = vpack.c.b16 %v2746, %v2742
    %v2827 = vpack.c.b16 %v2747, %v2743
    %v2828 = vpack.c.b16 %v2748, %v2744
    %v2829 = vpack.c.b16 %v2753, %v2749
    %v2830 = vpack.c.b16 %v2754, %v2750
    %v2831 = vpack.c.b16 %v2755, %v2751
    %v2832 = vpack.c.b16 %v2756, %v2752
    %v2833 = vpack.c.b16 %v2761, %v2757
    %v2834 = vpack.c.b16 %v2762, %v2758
    %v2835 = vpack.c.b16 %v2763, %v2759
    %v2836 = vpack.c.b16 %v2764, %v2760
    %v2837 = vpack.c.b16 %v2769, %v2765
    %v2838 = vpack.c.b16 %v2770, %v2766
    %v2839 = vpack.c.b16 %v2771, %v2767
    %v2840 = vpack.c.b16 %v2772, %v2768
    %v2841 = vpack.c.b16 %v2777, %v2773
    %v2842 = vpack.c.b16 %v2778, %v2774
    %v2843 = vpack.c.b16 %v2779, %v2775
    %v2844 = vpack.c.b16 %v2780, %v2776
    %2909 = vmatpush.bf16.msra.mxu0 %v2809
    %2910 = vmatpush.bf16.msra.mxu0 %v2805
    %2911 = vmatpush.bf16.msra.mxu0 %v2801
    %2912 = vmatpush.bf16.msra.mxu0 %v2797
    %2913 = vmatpush.bf16.msra.mxu0 %v2793
    %2914 = vmatpush.bf16.msra.mxu0 %v2789
    %2915 = vmatpush.bf16.msra.mxu0 %v2785
    %2916 = vmatpush.bf16.msra.mxu0 %v2781
    %2917 = vmatmul.bf16.gmra.mxu0 %v2573
    %v2918 = vpop.f32.mrf.mxu0
    %v2919 = vadd.f32 %v2377, %v2918
    %v2920 = vpop.f32.mrf.mxu0
    %v2921 = vadd.f32 %v2379, %v2920
    %2922 = vmatmul.bf16.gmra.mxu0 %v2575
    %v2923 = vpop.f32.mrf.mxu0
    %v2924 = vadd.f32 %v2382, %v2923
    %v2925 = vpop.f32.mrf.mxu0
    %v2926 = vadd.f32 %v2384, %v2925
    %2927 = vmatmul.bf16.gmra.mxu0 %v2577
    %v2928 = vpop.f32.mrf.mxu0
    %v2929 = vadd.f32 %v2387, %v2928
    %v2930 = vpop.f32.mrf.mxu0
    %v2931 = vadd.f32 %v2389, %v2930
    %2932 = vmatmul.bf16.gmra.mxu0 %v2579
    %v2933 = vpop.f32.mrf.mxu0
    %v2934 = vadd.f32 %v2392, %v2933
    %v2935 = vpop.f32.mrf.mxu0
    %v2936 = vadd.f32 %v2394, %v2935
    %2937 = vdwg.mxu0
    %2938 = vmatpush.bf16.msra.mxu0 %v2841
    %2939 = vmatpush.bf16.msra.mxu0 %v2837
    %2940 = vmatpush.bf16.msra.mxu0 %v2833
    %2941 = vmatpush.bf16.msra.mxu0 %v2829
    %2942 = vmatpush.bf16.msra.mxu0 %v2825
    %2943 = vmatpush.bf16.msra.mxu0 %v2821
    %2944 = vmatpush.bf16.msra.mxu0 %v2817
    %2945 = vmatpush.bf16.msra.mxu0 %v2813
    %2946 = vmatmul.bf16.gmra.mxu0 %v2574
    %v2947 = vpop.f32.mrf.mxu0
    %v2948 = vadd.f32 %v2919, %v2947
    %v2949 = vpop.f32.mrf.mxu0
    %v2950 = vadd.f32 %v2921, %v2949
    %2951 = vmatmul.bf16.gmra.mxu0 %v2576
    %v2952 = vpop.f32.mrf.mxu0
    %v2953 = vadd.f32 %v2924, %v2952
    %v2954 = vpop.f32.mrf.mxu0
    %v2955 = vadd.f32 %v2926, %v2954
    %2956 = vmatmul.bf16.gmra.mxu0 %v2578
    %v2957 = vpop.f32.mrf.mxu0
    %v2958 = vadd.f32 %v2929, %v2957
    %v2959 = vpop.f32.mrf.mxu0
    %v2960 = vadd.f32 %v2931, %v2959
    %2961 = vmatmul.bf16.gmra.mxu0 %v2580
    %v2962 = vpop.f32.mrf.mxu0
    %v2963 = vadd.f32 %v2934, %v2962
    %v2964 = vpop.f32.mrf.mxu0
    %v2965 = vadd.f32 %v2936, %v2964
    %2966 = vdwg.mxu0
    %2967 = vmatpush.bf16.msra.mxu0 %v2810
    %2968 = vmatpush.bf16.msra.mxu0 %v2806
    %2969 = vmatpush.bf16.msra.mxu0 %v2802
    %2970 = vmatpush.bf16.msra.mxu0 %v2798
    %2971 = vmatpush.bf16.msra.mxu0 %v2794
    %2972 = vmatpush.bf16.msra.mxu0 %v2790
    %2973 = vmatpush.bf16.msra.mxu0 %v2786
    %2974 = vmatpush.bf16.msra.mxu0 %v2782
    %2975 = vmatmul.bf16.gmra.mxu0 %v2573
    %v2976 = vpop.f32.mrf.mxu0
    %v2977 = vadd.f32 %v2435, %v2976
    %v2978 = vpop.f32.mrf.mxu0
    %v2979 = vadd.f32 %v2437, %v2978
    %2980 = vmatmul.bf16.gmra.mxu0 %v2575
    %v2981 = vpop.f32.mrf.mxu0
    %v2982 = vadd.f32 %v2440, %v2981
    %v2983 = vpop.f32.mrf.mxu0
    %v2984 = vadd.f32 %v2442, %v2983
    %2985 = vmatmul.bf16.gmra.mxu0 %v2577
    %v2986 = vpop.f32.mrf.mxu0
    %v2987 = vadd.f32 %v2445, %v2986
    %v2988 = vpop.f32.mrf.mxu0
    %v2989 = vadd.f32 %v2447, %v2988
    %2990 = vmatmul.bf16.gmra.mxu0 %v2579
    %v2991 = vpop.f32.mrf.mxu0
    %v2992 = vadd.f32 %v2450, %v2991
    %v2993 = vpop.f32.mrf.mxu0
    %v2994 = vadd.f32 %v2452, %v2993
    %2995 = vdwg.mxu0
    %2996 = vmatpush.bf16.msra.mxu0 %v2842
    %2997 = vmatpush.bf16.msra.mxu0 %v2838
    %2998 = vmatpush.bf16.msra.mxu0 %v2834
    %2999 = vmatpush.bf16.msra.mxu0 %v2830
    %3000 = vmatpush.bf16.msra.mxu0 %v2826
    %3001 = vmatpush.bf16.msra.mxu0 %v2822
    %3002 = vmatpush.bf16.msra.mxu0 %v2818
    %3003 = vmatpush.bf16.msra.mxu0 %v2814
    %3004 = vmatmul.bf16.gmra.mxu0 %v2574
    %v3005 = vpop.f32.mrf.mxu0
    %v3006 = vadd.f32 %v2977, %v3005
    %v3007 = vpop.f32.mrf.mxu0
    %v3008 = vadd.f32 %v2979, %v3007
    %3009 = vmatmul.bf16.gmra.mxu0 %v2576
    %v3010 = vpop.f32.mrf.mxu0
    %v3011 = vadd.f32 %v2982, %v3010
    %v3012 = vpop.f32.mrf.mxu0
    %v3013 = vadd.f32 %v2984, %v3012
    %3014 = vmatmul.bf16.gmra.mxu0 %v2578
    %v3015 = vpop.f32.mrf.mxu0
    %v3016 = vadd.f32 %v2987, %v3015
    %v3017 = vpop.f32.mrf.mxu0
    %v3018 = vadd.f32 %v2989, %v3017
    %3019 = vmatmul.bf16.gmra.mxu0 %v2580
    %v3020 = vpop.f32.mrf.mxu0
    %v3021 = vadd.f32 %v2992, %v3020
    %v3022 = vpop.f32.mrf.mxu0
    %v3023 = vadd.f32 %v2994, %v3022
    %3024 = vdwg.mxu0
    %3025 = vmatpush.bf16.msra.mxu0 %v2811
    %3026 = vmatpush.bf16.msra.mxu0 %v2807
    %3027 = vmatpush.bf16.msra.mxu0 %v2803
    %3028 = vmatpush.bf16.msra.mxu0 %v2799
    %3029 = vmatpush.bf16.msra.mxu0 %v2795
    %3030 = vmatpush.bf16.msra.mxu0 %v2791
    %3031 = vmatpush.bf16.msra.mxu0 %v2787
    %3032 = vmatpush.bf16.msra.mxu0 %v2783
    %3033 = vmatmul.bf16.gmra.mxu0 %v2573
    %v3034 = vpop.f32.mrf.mxu0
    %v3035 = vadd.f32 %v2493, %v3034
    %v3036 = vpop.f32.mrf.mxu0
    %v3037 = vadd.f32 %v2495, %v3036
    %3038 = vmatmul.bf16.gmra.mxu0 %v2575
    %v3039 = vpop.f32.mrf.mxu0
    %v3040 = vadd.f32 %v2498, %v3039
    %v3041 = vpop.f32.mrf.mxu0
    %v3042 = vadd.f32 %v2500, %v3041
    %3043 = vmatmul.bf16.gmra.mxu0 %v2577
    %v3044 = vpop.f32.mrf.mxu0
    %v3045 = vadd.f32 %v2503, %v3044
    %v3046 = vpop.f32.mrf.mxu0
    %v3047 = vadd.f32 %v2505, %v3046
    %3048 = vmatmul.bf16.gmra.mxu0 %v2579
    %v3049 = vpop.f32.mrf.mxu0
    %v3050 = vadd.f32 %v2508, %v3049
    %v3051 = vpop.f32.mrf.mxu0
    %v3052 = vadd.f32 %v2510, %v3051
    %3053 = vdwg.mxu0
    %3054 = vmatpush.bf16.msra.mxu0 %v2843
    %3055 = vmatpush.bf16.msra.mxu0 %v2839
    %3056 = vmatpush.bf16.msra.mxu0 %v2835
    %3057 = vmatpush.bf16.msra.mxu0 %v2831
    %3058 = vmatpush.bf16.msra.mxu0 %v2827
    %3059 = vmatpush.bf16.msra.mxu0 %v2823
    %3060 = vmatpush.bf16.msra.mxu0 %v2819
    %3061 = vmatpush.bf16.msra.mxu0 %v2815
    %3062 = vmatmul.bf16.gmra.mxu0 %v2574
    %v3063 = vpop.f32.mrf.mxu0
    %v3064 = vadd.f32 %v3035, %v3063
    %v3065 = vpop.f32.mrf.mxu0
    %v3066 = vadd.f32 %v3037, %v3065
    %3067 = vmatmul.bf16.gmra.mxu0 %v2576
    %v3068 = vpop.f32.mrf.mxu0
    %v3069 = vadd.f32 %v3040, %v3068
    %v3070 = vpop.f32.mrf.mxu0
    %v3071 = vadd.f32 %v3042, %v3070
    %3072 = vmatmul.bf16.gmra.mxu0 %v2578
    %v3073 = vpop.f32.mrf.mxu0
    %v3074 = vadd.f32 %v3045, %v3073
    %v3075 = vpop.f32.mrf.mxu0
    %v3076 = vadd.f32 %v3047, %v3075
    %3077 = vmatmul.bf16.gmra.mxu0 %v2580
    %v3078 = vpop.f32.mrf.mxu0
    %v3079 = vadd.f32 %v3050, %v3078
    %v3080 = vpop.f32.mrf.mxu0
    %v3081 = vadd.f32 %v3052, %v3080
    %3082 = vdwg.mxu0
    %3083 = vmatpush.bf16.msra.mxu0 %v2812
    %3084 = vmatpush.bf16.msra.mxu0 %v2808
    %3085 = vmatpush.bf16.msra.mxu0 %v2804
    %3086 = vmatpush.bf16.msra.mxu0 %v2800
    %3087 = vmatpush.bf16.msra.mxu0 %v2796
    %3088 = vmatpush.bf16.msra.mxu0 %v2792
    %3089 = vmatpush.bf16.msra.mxu0 %v2788
    %3090 = vmatpush.bf16.msra.mxu0 %v2784
    %3091 = vmatmul.bf16.gmra.mxu0 %v2573
    %v3092 = vpop.f32.mrf.mxu0
    %v3093 = vadd.f32 %v2551, %v3092
    %v3094 = vpop.f32.mrf.mxu0
    %v3095 = vadd.f32 %v2553, %v3094
    %3096 = vmatmul.bf16.gmra.mxu0 %v2575
    %v3097 = vpop.f32.mrf.mxu0
    %v3098 = vadd.f32 %v2556, %v3097
    %v3099 = vpop.f32.mrf.mxu0
    %v3100 = vadd.f32 %v2558, %v3099
    %3101 = vmatmul.bf16.gmra.mxu0 %v2577
    %v3102 = vpop.f32.mrf.mxu0
    %v3103 = vadd.f32 %v2561, %v3102
    %v3104 = vpop.f32.mrf.mxu0
    %v3105 = vadd.f32 %v2563, %v3104
    %3106 = vmatmul.bf16.gmra.mxu0 %v2579
    %v3107 = vpop.f32.mrf.mxu0
    %v3108 = vadd.f32 %v2566, %v3107
    %v3109 = vpop.f32.mrf.mxu0
    %v3110 = vadd.f32 %v2568, %v3109
    %3111 = vdwg.mxu0
    %3112 = vmatpush.bf16.msra.mxu0 %v2844
    %3113 = vmatpush.bf16.msra.mxu0 %v2840
    %3114 = vmatpush.bf16.msra.mxu0 %v2836
    %3115 = vmatpush.bf16.msra.mxu0 %v2832
    %3116 = vmatpush.bf16.msra.mxu0 %v2828
    %3117 = vmatpush.bf16.msra.mxu0 %v2824
    %3118 = vmatpush.bf16.msra.mxu0 %v2820
    %3119 = vmatpush.bf16.msra.mxu0 %v2816
    %3120 = vmatmul.bf16.gmra.mxu0 %v2574
    %v3121 = vpop.f32.mrf.mxu0
    %v3122 = vadd.f32 %v3093, %v3121
    %v3123 = vpop.f32.mrf.mxu0
    %v3124 = vadd.f32 %v3095, %v3123
    %3125 = vmatmul.bf16.gmra.mxu0 %v2576
    %v3126 = vpop.f32.mrf.mxu0
    %v3127 = vadd.f32 %v3098, %v3126
    %v3128 = vpop.f32.mrf.mxu0
    %v3129 = vadd.f32 %v3100, %v3128
    %3130 = vmatmul.bf16.gmra.mxu0 %v2578
    %v3131 = vpop.f32.mrf.mxu0
    %v3132 = vadd.f32 %v3103, %v3131
    %v3133 = vpop.f32.mrf.mxu0
    %v3134 = vadd.f32 %v3105, %v3133
    %3135 = vmatmul.bf16.gmra.mxu0 %v2580
    %v3136 = vpop.f32.mrf.mxu0
    %v3137 = vadd.f32 %v3108, %v3136
    %v3138 = vpop.f32.mrf.mxu0
    %v3139 = vadd.f32 %v3110, %v3138
    %3140 = vdwg.mxu0
    %s3141 = scalar_lea.vmem [#allocation7], 1024
    %v3142 = vld [vmem:[%s3141] sm:$0xff]
    %v3143 = vld [vmem:[%s3141 + $0x8] sm:$0xff]
    %v3144 = vld [vmem:[%s3141 + $0x10] sm:$0xff]
    %v3145 = vld [vmem:[%s3141 + $0x18] sm:$0xff]
    %v3146 = vld [vmem:[%s3141 + $0x20] sm:$0xff]
    %v3147 = vld [vmem:[%s3141 + $0x28] sm:$0xff]
    %v3148 = vld [vmem:[%s3141 + $0x30] sm:$0xff]
    %v3149 = vld [vmem:[%s3141 + $0x38] sm:$0xff]
    %v3150 = vld [vmem:[%s3141 + $0x40] sm:$0xff]
    %v3151 = vld [vmem:[%s3141 + $0x48] sm:$0xff]
    %v3152 = vld [vmem:[%s3141 + $0x50] sm:$0xff]
    %v3153 = vld [vmem:[%s3141 + $0x58] sm:$0xff]
    %v3154 = vld [vmem:[%s3141 + $0x60] sm:$0xff]
    %v3155 = vld [vmem:[%s3141 + $0x68] sm:$0xff]
    %v3156 = vld [vmem:[%s3141 + $0x70] sm:$0xff]
    %v3157 = vld [vmem:[%s3141 + $0x78] sm:$0xff]
    %v3158 = vld [vmem:[%s3141 + $0x80] sm:$0xff]
    %v3159 = vld [vmem:[%s3141 + $0x88] sm:$0xff]
    %v3160 = vld [vmem:[%s3141 + $0x90] sm:$0xff]
    %v3161 = vld [vmem:[%s3141 + $0x98] sm:$0xff]
    %v3162 = vld [vmem:[%s3141 + $0xa0] sm:$0xff]
    %v3163 = vld [vmem:[%s3141 + $0xa8] sm:$0xff]
    %v3164 = vld [vmem:[%s3141 + $0xb0] sm:$0xff]
    %v3165 = vld [vmem:[%s3141 + $0xb8] sm:$0xff]
    %v3166 = vld [vmem:[%s3141 + $0xc0] sm:$0xff]
    %v3167 = vld [vmem:[%s3141 + $0xc8] sm:$0xff]
    %v3168 = vld [vmem:[%s3141 + $0xd0] sm:$0xff]
    %v3169 = vld [vmem:[%s3141 + $0xd8] sm:$0xff]
    %v3170 = vld [vmem:[%s3141 + $0xe0] sm:$0xff]
    %v3171 = vld [vmem:[%s3141 + $0xe8] sm:$0xff]
    %v3172 = vld [vmem:[%s3141 + $0xf0] sm:$0xff]
    %v3173 = vld [vmem:[%s3141 + $0xf8] sm:$0xff]
    %v3174 = vld [vmem:[%s3141 + $0x100] sm:$0xff]
    %v3175 = vld [vmem:[%s3141 + $0x108] sm:$0xff]
    %v3176 = vld [vmem:[%s3141 + $0x110] sm:$0xff]
    %v3177 = vld [vmem:[%s3141 + $0x118] sm:$0xff]
    %v3178 = vld [vmem:[%s3141 + $0x120] sm:$0xff]
    %v3179 = vld [vmem:[%s3141 + $0x128] sm:$0xff]
    %v3180 = vld [vmem:[%s3141 + $0x130] sm:$0xff]
    %v3181 = vld [vmem:[%s3141 + $0x138] sm:$0xff]
    %v3182 = vld [vmem:[%s3141 + $0x140] sm:$0xff]
    %v3183 = vld [vmem:[%s3141 + $0x148] sm:$0xff]
    %v3184 = vld [vmem:[%s3141 + $0x150] sm:$0xff]
    %v3185 = vld [vmem:[%s3141 + $0x158] sm:$0xff]
    %v3186 = vld [vmem:[%s3141 + $0x160] sm:$0xff]
    %v3187 = vld [vmem:[%s3141 + $0x168] sm:$0xff]
    %v3188 = vld [vmem:[%s3141 + $0x170] sm:$0xff]
    %v3189 = vld [vmem:[%s3141 + $0x178] sm:$0xff]
    %v3190 = vld [vmem:[%s3141 + $0x180] sm:$0xff]
    %v3191 = vld [vmem:[%s3141 + $0x188] sm:$0xff]
    %v3192 = vld [vmem:[%s3141 + $0x190] sm:$0xff]
    %v3193 = vld [vmem:[%s3141 + $0x198] sm:$0xff]
    %v3194 = vld [vmem:[%s3141 + $0x1a0] sm:$0xff]
    %v3195 = vld [vmem:[%s3141 + $0x1a8] sm:$0xff]
    %v3196 = vld [vmem:[%s3141 + $0x1b0] sm:$0xff]
    %v3197 = vld [vmem:[%s3141 + $0x1b8] sm:$0xff]
    %v3198 = vld [vmem:[%s3141 + $0x1c0] sm:$0xff]
    %v3199 = vld [vmem:[%s3141 + $0x1c8] sm:$0xff]
    %v3200 = vld [vmem:[%s3141 + $0x1d0] sm:$0xff]
    %v3201 = vld [vmem:[%s3141 + $0x1d8] sm:$0xff]
    %v3202 = vld [vmem:[%s3141 + $0x1e0] sm:$0xff]
    %v3203 = vld [vmem:[%s3141 + $0x1e8] sm:$0xff]
    %v3204 = vld [vmem:[%s3141 + $0x1f0] sm:$0xff]
    %v3205 = vld [vmem:[%s3141 + $0x1f8] sm:$0xff]
    %v3207 = vunpack.c.l.b16 %v1846
    %v3208 = vunpack.c.h.b16 %v1846
    %v3209 = vpack.c.b16 %v3207, %v2000
    %v3210 = vpack.c.b16 %v3208, %v2001
    %v3277 = vunpack.c.l.b16 %v3142
    %v3278 = vunpack.c.h.b16 %v3142
    %v3279 = vunpack.c.l.b16 %v3143
    %v3280 = vunpack.c.h.b16 %v3143
    %v3281 = vunpack.c.l.b16 %v3144
    %v3282 = vunpack.c.h.b16 %v3144
    %v3283 = vunpack.c.l.b16 %v3145
    %v3284 = vunpack.c.h.b16 %v3145
    %v3285 = vunpack.c.l.b16 %v3146
    %v3286 = vunpack.c.h.b16 %v3146
    %v3287 = vunpack.c.l.b16 %v3147
    %v3288 = vunpack.c.h.b16 %v3147
    %v3289 = vunpack.c.l.b16 %v3148
    %v3290 = vunpack.c.h.b16 %v3148
    %v3291 = vunpack.c.l.b16 %v3149
    %v3292 = vunpack.c.h.b16 %v3149
    %v3293 = vunpack.c.l.b16 %v3150
    %v3294 = vunpack.c.h.b16 %v3150
    %v3295 = vunpack.c.l.b16 %v3151
    %v3296 = vunpack.c.h.b16 %v3151
    %v3297 = vunpack.c.l.b16 %v3152
    %v3298 = vunpack.c.h.b16 %v3152
    %v3299 = vunpack.c.l.b16 %v3153
    %v3300 = vunpack.c.h.b16 %v3153
    %v3301 = vunpack.c.l.b16 %v3154
    %v3302 = vunpack.c.h.b16 %v3154
    %v3303 = vunpack.c.l.b16 %v3155
    %v3304 = vunpack.c.h.b16 %v3155
    %v3305 = vunpack.c.l.b16 %v3156
    %v3306 = vunpack.c.h.b16 %v3156
    %v3307 = vunpack.c.l.b16 %v3157
    %v3308 = vunpack.c.h.b16 %v3157
    %v3309 = vunpack.c.l.b16 %v3158
    %v3310 = vunpack.c.h.b16 %v3158
    %v3311 = vunpack.c.l.b16 %v3159
    %v3312 = vunpack.c.h.b16 %v3159
    %v3313 = vunpack.c.l.b16 %v3160
    %v3314 = vunpack.c.h.b16 %v3160
    %v3315 = vunpack.c.l.b16 %v3161
    %v3316 = vunpack.c.h.b16 %v3161
    %v3317 = vunpack.c.l.b16 %v3162
    %v3318 = vunpack.c.h.b16 %v3162
    %v3319 = vunpack.c.l.b16 %v3163
    %v3320 = vunpack.c.h.b16 %v3163
    %v3321 = vunpack.c.l.b16 %v3164
    %v3322 = vunpack.c.h.b16 %v3164
    %v3323 = vunpack.c.l.b16 %v3165
    %v3324 = vunpack.c.h.b16 %v3165
    %v3325 = vunpack.c.l.b16 %v3166
    %v3326 = vunpack.c.h.b16 %v3166
    %v3327 = vunpack.c.l.b16 %v3167
    %v3328 = vunpack.c.h.b16 %v3167
    %v3329 = vunpack.c.l.b16 %v3168
    %v3330 = vunpack.c.h.b16 %v3168
    %v3331 = vunpack.c.l.b16 %v3169
    %v3332 = vunpack.c.h.b16 %v3169
    %v3333 = vunpack.c.l.b16 %v3170
    %v3334 = vunpack.c.h.b16 %v3170
    %v3335 = vunpack.c.l.b16 %v3171
    %v3336 = vunpack.c.h.b16 %v3171
    %v3337 = vunpack.c.l.b16 %v3172
    %v3338 = vunpack.c.h.b16 %v3172
    %v3339 = vunpack.c.l.b16 %v3173
    %v3340 = vunpack.c.h.b16 %v3173
    %v3341 = vunpack.c.l.b16 %v3174
    %v3342 = vunpack.c.h.b16 %v3174
    %v3343 = vunpack.c.l.b16 %v3175
    %v3344 = vunpack.c.h.b16 %v3175
    %v3345 = vunpack.c.l.b16 %v3176
    %v3346 = vunpack.c.h.b16 %v3176
    %v3347 = vunpack.c.l.b16 %v3177
    %v3348 = vunpack.c.h.b16 %v3177
    %v3349 = vunpack.c.l.b16 %v3178
    %v3350 = vunpack.c.h.b16 %v3178
    %v3351 = vunpack.c.l.b16 %v3179
    %v3352 = vunpack.c.h.b16 %v3179
    %v3353 = vunpack.c.l.b16 %v3180
    %v3354 = vunpack.c.h.b16 %v3180
    %v3355 = vunpack.c.l.b16 %v3181
    %v3356 = vunpack.c.h.b16 %v3181
    %v3357 = vunpack.c.l.b16 %v3182
    %v3358 = vunpack.c.h.b16 %v3182
    %v3359 = vunpack.c.l.b16 %v3183
    %v3360 = vunpack.c.h.b16 %v3183
    %v3361 = vunpack.c.l.b16 %v3184
    %v3362 = vunpack.c.h.b16 %v3184
    %v3363 = vunpack.c.l.b16 %v3185
    %v3364 = vunpack.c.h.b16 %v3185
    %v3365 = vunpack.c.l.b16 %v3186
    %v3366 = vunpack.c.h.b16 %v3186
    %v3367 = vunpack.c.l.b16 %v3187
    %v3368 = vunpack.c.h.b16 %v3187
    %v3369 = vunpack.c.l.b16 %v3188
    %v3370 = vunpack.c.h.b16 %v3188
    %v3371 = vunpack.c.l.b16 %v3189
    %v3372 = vunpack.c.h.b16 %v3189
    %v3373 = vunpack.c.l.b16 %v3190
    %v3374 = vunpack.c.h.b16 %v3190
    %v3375 = vunpack.c.l.b16 %v3191
    %v3376 = vunpack.c.h.b16 %v3191
    %v3377 = vunpack.c.l.b16 %v3192
    %v3378 = vunpack.c.h.b16 %v3192
    %v3379 = vunpack.c.l.b16 %v3193
    %v3380 = vunpack.c.h.b16 %v3193
    %v3381 = vunpack.c.l.b16 %v3194
    %v3382 = vunpack.c.h.b16 %v3194
    %v3383 = vunpack.c.l.b16 %v3195
    %v3384 = vunpack.c.h.b16 %v3195
    %v3385 = vunpack.c.l.b16 %v3196
    %v3386 = vunpack.c.h.b16 %v3196
    %v3387 = vunpack.c.l.b16 %v3197
    %v3388 = vunpack.c.h.b16 %v3197
    %v3389 = vunpack.c.l.b16 %v3198
    %v3390 = vunpack.c.h.b16 %v3198
    %v3391 = vunpack.c.l.b16 %v3199
    %v3392 = vunpack.c.h.b16 %v3199
    %v3393 = vunpack.c.l.b16 %v3200
    %v3394 = vunpack.c.h.b16 %v3200
    %v3395 = vunpack.c.l.b16 %v3201
    %v3396 = vunpack.c.h.b16 %v3201
    %v3397 = vunpack.c.l.b16 %v3202
    %v3398 = vunpack.c.h.b16 %v3202
    %v3399 = vunpack.c.l.b16 %v3203
    %v3400 = vunpack.c.h.b16 %v3203
    %v3401 = vunpack.c.l.b16 %v3204
    %v3402 = vunpack.c.h.b16 %v3204
    %v3403 = vunpack.c.l.b16 %v3205
    %v3404 = vunpack.c.h.b16 %v3205
    %v3405 = vpack.c.b16 %v3281, %v3277
    %v3406 = vpack.c.b16 %v3282, %v3278
    %v3407 = vpack.c.b16 %v3283, %v3279
    %v3408 = vpack.c.b16 %v3284, %v3280
    %v3409 = vpack.c.b16 %v3289, %v3285
    %v3410 = vpack.c.b16 %v3290, %v3286
    %v3411 = vpack.c.b16 %v3291, %v3287
    %v3412 = vpack.c.b16 %v3292, %v3288
    %v3413 = vpack.c.b16 %v3297, %v3293
    %v3414 = vpack.c.b16 %v3298, %v3294
    %v3415 = vpack.c.b16 %v3299, %v3295
    %v3416 = vpack.c.b16 %v3300, %v3296
    %v3417 = vpack.c.b16 %v3305, %v3301
    %v3418 = vpack.c.b16 %v3306, %v3302
    %v3419 = vpack.c.b16 %v3307, %v3303
    %v3420 = vpack.c.b16 %v3308, %v3304
    %v3421 = vpack.c.b16 %v3313, %v3309
    %v3422 = vpack.c.b16 %v3314, %v3310
    %v3423 = vpack.c.b16 %v3315, %v3311
    %v3424 = vpack.c.b16 %v3316, %v3312
    %v3425 = vpack.c.b16 %v3321, %v3317
    %v3426 = vpack.c.b16 %v3322, %v3318
    %v3427 = vpack.c.b16 %v3323, %v3319
    %v3428 = vpack.c.b16 %v3324, %v3320
    %v3429 = vpack.c.b16 %v3329, %v3325
    %v3430 = vpack.c.b16 %v3330, %v3326
    %v3431 = vpack.c.b16 %v3331, %v3327
    %v3432 = vpack.c.b16 %v3332, %v3328
    %v3433 = vpack.c.b16 %v3337, %v3333
    %v3434 = vpack.c.b16 %v3338, %v3334
    %v3435 = vpack.c.b16 %v3339, %v3335
    %v3436 = vpack.c.b16 %v3340, %v3336
    %v3437 = vpack.c.b16 %v3345, %v3341
    %v3438 = vpack.c.b16 %v3346, %v3342
    %v3439 = vpack.c.b16 %v3347, %v3343
    %v3440 = vpack.c.b16 %v3348, %v3344
    %v3441 = vpack.c.b16 %v3353, %v3349
    %v3442 = vpack.c.b16 %v3354, %v3350
    %v3443 = vpack.c.b16 %v3355, %v3351
    %v3444 = vpack.c.b16 %v3356, %v3352
    %v3445 = vpack.c.b16 %v3361, %v3357
    %v3446 = vpack.c.b16 %v3362, %v3358
    %v3447 = vpack.c.b16 %v3363, %v3359
    %v3448 = vpack.c.b16 %v3364, %v3360
    %v3449 = vpack.c.b16 %v3369, %v3365
    %v3450 = vpack.c.b16 %v3370, %v3366
    %v3451 = vpack.c.b16 %v3371, %v3367
    %v3452 = vpack.c.b16 %v3372, %v3368
    %v3453 = vpack.c.b16 %v3377, %v3373
    %v3454 = vpack.c.b16 %v3378, %v3374
    %v3455 = vpack.c.b16 %v3379, %v3375
    %v3456 = vpack.c.b16 %v3380, %v3376
    %v3457 = vpack.c.b16 %v3385, %v3381
    %v3458 = vpack.c.b16 %v3386, %v3382
    %v3459 = vpack.c.b16 %v3387, %v3383
    %v3460 = vpack.c.b16 %v3388, %v3384
    %v3461 = vpack.c.b16 %v3393, %v3389
    %v3462 = vpack.c.b16 %v3394, %v3390
    %v3463 = vpack.c.b16 %v3395, %v3391
    %v3464 = vpack.c.b16 %v3396, %v3392
    %v3465 = vpack.c.b16 %v3401, %v3397
    %v3466 = vpack.c.b16 %v3402, %v3398
    %v3467 = vpack.c.b16 %v3403, %v3399
    %v3468 = vpack.c.b16 %v3404, %v3400
    %3533 = vmatpush.bf16.msra.mxu0 %v3433
    %3534 = vmatpush.bf16.msra.mxu0 %v3429
    %3535 = vmatpush.bf16.msra.mxu0 %v3425
    %3536 = vmatpush.bf16.msra.mxu0 %v3421
    %3537 = vmatpush.bf16.msra.mxu0 %v3417
    %3538 = vmatpush.bf16.msra.mxu0 %v3413
    %3539 = vmatpush.bf16.msra.mxu0 %v3409
    %3540 = vmatpush.bf16.msra.mxu0 %v3405
    %3541 = vmatmul.bf16.gmra.mxu0 %v2575
    %v3542 = vpop.f32.mrf.mxu0
    %v3543 = vadd.f32 0.0, %v3542
    %v3544 = vpop.f32.mrf.mxu0
    %v3545 = vadd.f32 0.0, %v3544
    %3546 = vmatmul.bf16.gmra.mxu0 %v2577
    %v3547 = vpop.f32.mrf.mxu0
    %v3548 = vadd.f32 0.0, %v3547
    %v3549 = vpop.f32.mrf.mxu0
    %v3550 = vadd.f32 0.0, %v3549
    %3551 = vmatmul.bf16.gmra.mxu0 %v2579
    %v3552 = vpop.f32.mrf.mxu0
    %v3553 = vadd.f32 0.0, %v3552
    %v3554 = vpop.f32.mrf.mxu0
    %v3555 = vadd.f32 0.0, %v3554
    %3556 = vmatmul.bf16.gmra.mxu0 %v3209
    %v3557 = vpop.f32.mrf.mxu0
    %v3558 = vadd.f32 0.0, %v3557
    %v3559 = vpop.f32.mrf.mxu0
    %v3560 = vadd.f32 0.0, %v3559
    %3561 = vdwg.mxu0
    %3562 = vmatpush.bf16.msra.mxu0 %v3465
    %3563 = vmatpush.bf16.msra.mxu0 %v3461
    %3564 = vmatpush.bf16.msra.mxu0 %v3457
    %3565 = vmatpush.bf16.msra.mxu0 %v3453
    %3566 = vmatpush.bf16.msra.mxu0 %v3449
    %3567 = vmatpush.bf16.msra.mxu0 %v3445
    %3568 = vmatpush.bf16.msra.mxu0 %v3441
    %3569 = vmatpush.bf16.msra.mxu0 %v3437
    %3570 = vmatmul.bf16.gmra.mxu0 %v2576
    %v3571 = vpop.f32.mrf.mxu0
    %v3572 = vadd.f32 %v3543, %v3571
    %v3573 = vpop.f32.mrf.mxu0
    %v3574 = vadd.f32 %v3545, %v3573
    %3575 = vmatmul.bf16.gmra.mxu0 %v2578
    %v3576 = vpop.f32.mrf.mxu0
    %v3577 = vadd.f32 %v3548, %v3576
    %v3578 = vpop.f32.mrf.mxu0
    %v3579 = vadd.f32 %v3550, %v3578
    %3580 = vmatmul.bf16.gmra.mxu0 %v2580
    %v3581 = vpop.f32.mrf.mxu0
    %v3582 = vadd.f32 %v3553, %v3581
    %v3583 = vpop.f32.mrf.mxu0
    %v3584 = vadd.f32 %v3555, %v3583
    %3585 = vmatmul.bf16.gmra.mxu0 %v3210
    %v3586 = vpop.f32.mrf.mxu0
    %v3587 = vadd.f32 %v3558, %v3586
    %v3588 = vpop.f32.mrf.mxu0
    %v3589 = vadd.f32 %v3560, %v3588
    %3590 = vdwg.mxu0
    %3591 = vmatpush.bf16.msra.mxu0 %v3434
    %3592 = vmatpush.bf16.msra.mxu0 %v3430
    %3593 = vmatpush.bf16.msra.mxu0 %v3426
    %3594 = vmatpush.bf16.msra.mxu0 %v3422
    %3595 = vmatpush.bf16.msra.mxu0 %v3418
    %3596 = vmatpush.bf16.msra.mxu0 %v3414
    %3597 = vmatpush.bf16.msra.mxu0 %v3410
    %3598 = vmatpush.bf16.msra.mxu0 %v3406
    %3599 = vmatmul.bf16.gmra.mxu0 %v2575
    %v3600 = vpop.f32.mrf.mxu0
    %v3601 = vadd.f32 0.0, %v3600
    %v3602 = vpop.f32.mrf.mxu0
    %v3603 = vadd.f32 0.0, %v3602
    %3604 = vmatmul.bf16.gmra.mxu0 %v2577
    %v3605 = vpop.f32.mrf.mxu0
    %v3606 = vadd.f32 0.0, %v3605
    %v3607 = vpop.f32.mrf.mxu0
    %v3608 = vadd.f32 0.0, %v3607
    %3609 = vmatmul.bf16.gmra.mxu0 %v2579
    %v3610 = vpop.f32.mrf.mxu0
    %v3611 = vadd.f32 0.0, %v3610
    %v3612 = vpop.f32.mrf.mxu0
    %v3613 = vadd.f32 0.0, %v3612
    %3614 = vmatmul.bf16.gmra.mxu0 %v3209
    %v3615 = vpop.f32.mrf.mxu0
    %v3616 = vadd.f32 0.0, %v3615
    %v3617 = vpop.f32.mrf.mxu0
    %v3618 = vadd.f32 0.0, %v3617
    %3619 = vdwg.mxu0
    %3620 = vmatpush.bf16.msra.mxu0 %v3466
    %3621 = vmatpush.bf16.msra.mxu0 %v3462
    %3622 = vmatpush.bf16.msra.mxu0 %v3458
    %3623 = vmatpush.bf16.msra.mxu0 %v3454
    %3624 = vmatpush.bf16.msra.mxu0 %v3450
    %3625 = vmatpush.bf16.msra.mxu0 %v3446
    %3626 = vmatpush.bf16.msra.mxu0 %v3442
    %3627 = vmatpush.bf16.msra.mxu0 %v3438
    %3628 = vmatmul.bf16.gmra.mxu0 %v2576
    %v3629 = vpop.f32.mrf.mxu0
    %v3630 = vadd.f32 %v3601, %v3629
    %v3631 = vpop.f32.mrf.mxu0
    %v3632 = vadd.f32 %v3603, %v3631
    %3633 = vmatmul.bf16.gmra.mxu0 %v2578
    %v3634 = vpop.f32.mrf.mxu0
    %v3635 = vadd.f32 %v3606, %v3634
    %v3636 = vpop.f32.mrf.mxu0
    %v3637 = vadd.f32 %v3608, %v3636
    %3638 = vmatmul.bf16.gmra.mxu0 %v2580
    %v3639 = vpop.f32.mrf.mxu0
    %v3640 = vadd.f32 %v3611, %v3639
    %v3641 = vpop.f32.mrf.mxu0
    %v3642 = vadd.f32 %v3613, %v3641
    %3643 = vmatmul.bf16.gmra.mxu0 %v3210
    %v3644 = vpop.f32.mrf.mxu0
    %v3645 = vadd.f32 %v3616, %v3644
    %v3646 = vpop.f32.mrf.mxu0
    %v3647 = vadd.f32 %v3618, %v3646
    %3648 = vdwg.mxu0
    %3649 = vmatpush.bf16.msra.mxu0 %v3435
    %3650 = vmatpush.bf16.msra.mxu0 %v3431
    %3651 = vmatpush.bf16.msra.mxu0 %v3427
    %3652 = vmatpush.bf16.msra.mxu0 %v3423
    %3653 = vmatpush.bf16.msra.mxu0 %v3419
    %3654 = vmatpush.bf16.msra.mxu0 %v3415
    %3655 = vmatpush.bf16.msra.mxu0 %v3411
    %3656 = vmatpush.bf16.msra.mxu0 %v3407
    %3657 = vmatmul.bf16.gmra.mxu0 %v2575
    %v3658 = vpop.f32.mrf.mxu0
    %v3659 = vadd.f32 0.0, %v3658
    %v3660 = vpop.f32.mrf.mxu0
    %v3661 = vadd.f32 0.0, %v3660
    %3662 = vmatmul.bf16.gmra.mxu0 %v2577
    %v3663 = vpop.f32.mrf.mxu0
    %v3664 = vadd.f32 0.0, %v3663
    %v3665 = vpop.f32.mrf.mxu0
    %v3666 = vadd.f32 0.0, %v3665
    %3667 = vmatmul.bf16.gmra.mxu0 %v2579
    %v3668 = vpop.f32.mrf.mxu0
    %v3669 = vadd.f32 0.0, %v3668
    %v3670 = vpop.f32.mrf.mxu0
    %v3671 = vadd.f32 0.0, %v3670
    %3672 = vmatmul.bf16.gmra.mxu0 %v3209
    %v3673 = vpop.f32.mrf.mxu0
    %v3674 = vadd.f32 0.0, %v3673
    %v3675 = vpop.f32.mrf.mxu0
    %v3676 = vadd.f32 0.0, %v3675
    %3677 = vdwg.mxu0
    %3678 = vmatpush.bf16.msra.mxu0 %v3467
    %3679 = vmatpush.bf16.msra.mxu0 %v3463
    %3680 = vmatpush.bf16.msra.mxu0 %v3459
    %3681 = vmatpush.bf16.msra.mxu0 %v3455
    %3682 = vmatpush.bf16.msra.mxu0 %v3451
    %3683 = vmatpush.bf16.msra.mxu0 %v3447
    %3684 = vmatpush.bf16.msra.mxu0 %v3443
    %3685 = vmatpush.bf16.msra.mxu0 %v3439
    %3686 = vmatmul.bf16.gmra.mxu0 %v2576
    %v3687 = vpop.f32.mrf.mxu0
    %v3688 = vadd.f32 %v3659, %v3687
    %v3689 = vpop.f32.mrf.mxu0
    %v3690 = vadd.f32 %v3661, %v3689
    %3691 = vmatmul.bf16.gmra.mxu0 %v2578
    %v3692 = vpop.f32.mrf.mxu0
    %v3693 = vadd.f32 %v3664, %v3692
    %v3694 = vpop.f32.mrf.mxu0
    %v3695 = vadd.f32 %v3666, %v3694
    %3696 = vmatmul.bf16.gmra.mxu0 %v2580
    %v3697 = vpop.f32.mrf.mxu0
    %v3698 = vadd.f32 %v3669, %v3697
    %v3699 = vpop.f32.mrf.mxu0
    %v3700 = vadd.f32 %v3671, %v3699
    %3701 = vmatmul.bf16.gmra.mxu0 %v3210
    %v3702 = vpop.f32.mrf.mxu0
    %v3703 = vadd.f32 %v3674, %v3702
    %v3704 = vpop.f32.mrf.mxu0
    %v3705 = vadd.f32 %v3676, %v3704
    %3706 = vdwg.mxu0
    %3707 = vmatpush.bf16.msra.mxu0 %v3436
    %3708 = vmatpush.bf16.msra.mxu0 %v3432
    %3709 = vmatpush.bf16.msra.mxu0 %v3428
    %3710 = vmatpush.bf16.msra.mxu0 %v3424
    %3711 = vmatpush.bf16.msra.mxu0 %v3420
    %3712 = vmatpush.bf16.msra.mxu0 %v3416
    %3713 = vmatpush.bf16.msra.mxu0 %v3412
    %3714 = vmatpush.bf16.msra.mxu0 %v3408
    %3715 = vmatmul.bf16.gmra.mxu0 %v2575
    %v3716 = vpop.f32.mrf.mxu0
    %v3717 = vadd.f32 0.0, %v3716
    %v3718 = vpop.f32.mrf.mxu0
    %v3719 = vadd.f32 0.0, %v3718
    %3720 = vmatmul.bf16.gmra.mxu0 %v2577
    %v3721 = vpop.f32.mrf.mxu0
    %v3722 = vadd.f32 0.0, %v3721
    %v3723 = vpop.f32.mrf.mxu0
    %v3724 = vadd.f32 0.0, %v3723
    %3725 = vmatmul.bf16.gmra.mxu0 %v2579
    %v3726 = vpop.f32.mrf.mxu0
    %v3727 = vadd.f32 0.0, %v3726
    %v3728 = vpop.f32.mrf.mxu0
    %v3729 = vadd.f32 0.0, %v3728
    %3730 = vmatmul.bf16.gmra.mxu0 %v3209
    %v3731 = vpop.f32.mrf.mxu0
    %v3732 = vadd.f32 0.0, %v3731
    %v3733 = vpop.f32.mrf.mxu0
    %v3734 = vadd.f32 0.0, %v3733
    %3735 = vdwg.mxu0
    %3736 = vmatpush.bf16.msra.mxu0 %v3468
    %3737 = vmatpush.bf16.msra.mxu0 %v3464
    %3738 = vmatpush.bf16.msra.mxu0 %v3460
    %3739 = vmatpush.bf16.msra.mxu0 %v3456
    %3740 = vmatpush.bf16.msra.mxu0 %v3452
    %3741 = vmatpush.bf16.msra.mxu0 %v3448
    %3742 = vmatpush.bf16.msra.mxu0 %v3444
    %3743 = vmatpush.bf16.msra.mxu0 %v3440
    %3744 = vmatmul.bf16.gmra.mxu0 %v2576
    %v3745 = vpop.f32.mrf.mxu0
    %v3746 = vadd.f32 %v3717, %v3745
    %v3747 = vpop.f32.mrf.mxu0
    %v3748 = vadd.f32 %v3719, %v3747
    %3749 = vmatmul.bf16.gmra.mxu0 %v2578
    %v3750 = vpop.f32.mrf.mxu0
    %v3751 = vadd.f32 %v3722, %v3750
    %v3752 = vpop.f32.mrf.mxu0
    %v3753 = vadd.f32 %v3724, %v3752
    %3754 = vmatmul.bf16.gmra.mxu0 %v2580
    %v3755 = vpop.f32.mrf.mxu0
    %v3756 = vadd.f32 %v3727, %v3755
    %v3757 = vpop.f32.mrf.mxu0
    %v3758 = vadd.f32 %v3729, %v3757
    %3759 = vmatmul.bf16.gmra.mxu0 %v3210
    %v3760 = vpop.f32.mrf.mxu0
    %v3761 = vadd.f32 %v3732, %v3760
    %v3762 = vpop.f32.mrf.mxu0
    %v3763 = vadd.f32 %v3734, %v3762
    %3764 = vdwg.mxu0
    %v3765 = vadd.f32 %v2948, %v3572
    %v3766 = vadd.f32 %v3006, %v3630
    %v3767 = vadd.f32 %v3064, %v3688
    %v3768 = vadd.f32 %v3122, %v3746
    %v3769 = vadd.f32 %v2950, %v3574
    %v3770 = vadd.f32 %v3008, %v3632
    %v3771 = vadd.f32 %v3066, %v3690
    %v3772 = vadd.f32 %v3124, %v3748
    %v3773 = vadd.f32 %v2953, %v3577
    %v3774 = vadd.f32 %v3011, %v3635
    %v3775 = vadd.f32 %v3069, %v3693
    %v3776 = vadd.f32 %v3127, %v3751
    %v3777 = vadd.f32 %v2955, %v3579
    %v3778 = vadd.f32 %v3013, %v3637
    %v3779 = vadd.f32 %v3071, %v3695
    %v3780 = vadd.f32 %v3129, %v3753
    %v3781 = vadd.f32 %v2958, %v3582
    %v3782 = vadd.f32 %v3016, %v3640
    %v3783 = vadd.f32 %v3074, %v3698
    %v3784 = vadd.f32 %v3132, %v3756
    %v3785 = vadd.f32 %v2960, %v3584
    %v3786 = vadd.f32 %v3018, %v3642
    %v3787 = vadd.f32 %v3076, %v3700
    %v3788 = vadd.f32 %v3134, %v3758
    %v3789 = vadd.f32 %v2963, %v3587
    %v3790 = vadd.f32 %v3021, %v3645
    %v3791 = vadd.f32 %v3079, %v3703
    %v3792 = vadd.f32 %v3137, %v3761
    %v3793 = vadd.f32 %v2965, %v3589
    %v3794 = vadd.f32 %v3023, %v3647
    %v3795 = vadd.f32 %v3081, %v3705
    %v3796 = vadd.f32 %v3139, %v3763
    %s3797 = scalar_lea.vmem [#allocation7], 1536
    %v3798 = vld [vmem:[%s3797] sm:$0xff]
    %v3799 = vld [vmem:[%s3797 + $0x8] sm:$0xff]
    %v3800 = vld [vmem:[%s3797 + $0x10] sm:$0xff]
    %v3801 = vld [vmem:[%s3797 + $0x18] sm:$0xff]
    %v3802 = vld [vmem:[%s3797 + $0x20] sm:$0xff]
    %v3803 = vld [vmem:[%s3797 + $0x28] sm:$0xff]
    %v3804 = vld [vmem:[%s3797 + $0x30] sm:$0xff]
    %v3805 = vld [vmem:[%s3797 + $0x38] sm:$0xff]
    %v3806 = vld [vmem:[%s3797 + $0x40] sm:$0xff]
    %v3807 = vld [vmem:[%s3797 + $0x48] sm:$0xff]
    %v3808 = vld [vmem:[%s3797 + $0x50] sm:$0xff]
    %v3809 = vld [vmem:[%s3797 + $0x58] sm:$0xff]
    %v3810 = vld [vmem:[%s3797 + $0x60] sm:$0xff]
    %v3811 = vld [vmem:[%s3797 + $0x68] sm:$0xff]
    %v3812 = vld [vmem:[%s3797 + $0x70] sm:$0xff]
    %v3813 = vld [vmem:[%s3797 + $0x78] sm:$0xff]
    %v3814 = vld [vmem:[%s3797 + $0x80] sm:$0xff]
    %v3815 = vld [vmem:[%s3797 + $0x88] sm:$0xff]
    %v3816 = vld [vmem:[%s3797 + $0x90] sm:$0xff]
    %v3817 = vld [vmem:[%s3797 + $0x98] sm:$0xff]
    %v3818 = vld [vmem:[%s3797 + $0xa0] sm:$0xff]
    %v3819 = vld [vmem:[%s3797 + $0xa8] sm:$0xff]
    %v3820 = vld [vmem:[%s3797 + $0xb0] sm:$0xff]
    %v3821 = vld [vmem:[%s3797 + $0xb8] sm:$0xff]
    %v3822 = vld [vmem:[%s3797 + $0xc0] sm:$0xff]
    %v3823 = vld [vmem:[%s3797 + $0xc8] sm:$0xff]
    %v3824 = vld [vmem:[%s3797 + $0xd0] sm:$0xff]
    %v3825 = vld [vmem:[%s3797 + $0xd8] sm:$0xff]
    %v3826 = vld [vmem:[%s3797 + $0xe0] sm:$0xff]
    %v3827 = vld [vmem:[%s3797 + $0xe8] sm:$0xff]
    %v3828 = vld [vmem:[%s3797 + $0xf0] sm:$0xff]
    %v3829 = vld [vmem:[%s3797 + $0xf8] sm:$0xff]
    %v3830 = vld [vmem:[%s3797 + $0x100] sm:$0xff]
    %v3831 = vld [vmem:[%s3797 + $0x108] sm:$0xff]
    %v3832 = vld [vmem:[%s3797 + $0x110] sm:$0xff]
    %v3833 = vld [vmem:[%s3797 + $0x118] sm:$0xff]
    %v3834 = vld [vmem:[%s3797 + $0x120] sm:$0xff]
    %v3835 = vld [vmem:[%s3797 + $0x128] sm:$0xff]
    %v3836 = vld [vmem:[%s3797 + $0x130] sm:$0xff]
    %v3837 = vld [vmem:[%s3797 + $0x138] sm:$0xff]
    %v3838 = vld [vmem:[%s3797 + $0x140] sm:$0xff]
    %v3839 = vld [vmem:[%s3797 + $0x148] sm:$0xff]
    %v3840 = vld [vmem:[%s3797 + $0x150] sm:$0xff]
    %v3841 = vld [vmem:[%s3797 + $0x158] sm:$0xff]
    %v3842 = vld [vmem:[%s3797 + $0x160] sm:$0xff]
    %v3843 = vld [vmem:[%s3797 + $0x168] sm:$0xff]
    %v3844 = vld [vmem:[%s3797 + $0x170] sm:$0xff]
    %v3845 = vld [vmem:[%s3797 + $0x178] sm:$0xff]
    %v3846 = vld [vmem:[%s3797 + $0x180] sm:$0xff]
    %v3847 = vld [vmem:[%s3797 + $0x188] sm:$0xff]
    %v3848 = vld [vmem:[%s3797 + $0x190] sm:$0xff]
    %v3849 = vld [vmem:[%s3797 + $0x198] sm:$0xff]
    %v3850 = vld [vmem:[%s3797 + $0x1a0] sm:$0xff]
    %v3851 = vld [vmem:[%s3797 + $0x1a8] sm:$0xff]
    %v3852 = vld [vmem:[%s3797 + $0x1b0] sm:$0xff]
    %v3853 = vld [vmem:[%s3797 + $0x1b8] sm:$0xff]
    %v3854 = vld [vmem:[%s3797 + $0x1c0] sm:$0xff]
    %v3855 = vld [vmem:[%s3797 + $0x1c8] sm:$0xff]
    %v3856 = vld [vmem:[%s3797 + $0x1d0] sm:$0xff]
    %v3857 = vld [vmem:[%s3797 + $0x1d8] sm:$0xff]
    %v3858 = vld [vmem:[%s3797 + $0x1e0] sm:$0xff]
    %v3859 = vld [vmem:[%s3797 + $0x1e8] sm:$0xff]
    %v3860 = vld [vmem:[%s3797 + $0x1f0] sm:$0xff]
    %v3861 = vld [vmem:[%s3797 + $0x1f8] sm:$0xff]
    %v3863 = vunpack.c.l.b16 %v1847
    %v3864 = vunpack.c.h.b16 %v1847
    %v3865 = vpack.c.b16 %v3863, %v3207
    %v3866 = vpack.c.b16 %v3864, %v3208
    %v3933 = vunpack.c.l.b16 %v3798
    %v3934 = vunpack.c.h.b16 %v3798
    %v3935 = vunpack.c.l.b16 %v3799
    %v3936 = vunpack.c.h.b16 %v3799
    %v3937 = vunpack.c.l.b16 %v3800
    %v3938 = vunpack.c.h.b16 %v3800
    %v3939 = vunpack.c.l.b16 %v3801
    %v3940 = vunpack.c.h.b16 %v3801
    %v3941 = vunpack.c.l.b16 %v3802
    %v3942 = vunpack.c.h.b16 %v3802
    %v3943 = vunpack.c.l.b16 %v3803
    %v3944 = vunpack.c.h.b16 %v3803
    %v3945 = vunpack.c.l.b16 %v3804
    %v3946 = vunpack.c.h.b16 %v3804
    %v3947 = vunpack.c.l.b16 %v3805
    %v3948 = vunpack.c.h.b16 %v3805
    %v3949 = vunpack.c.l.b16 %v3806
    %v3950 = vunpack.c.h.b16 %v3806
    %v3951 = vunpack.c.l.b16 %v3807
    %v3952 = vunpack.c.h.b16 %v3807
    %v3953 = vunpack.c.l.b16 %v3808
    %v3954 = vunpack.c.h.b16 %v3808
    %v3955 = vunpack.c.l.b16 %v3809
    %v3956 = vunpack.c.h.b16 %v3809
    %v3957 = vunpack.c.l.b16 %v3810
    %v3958 = vunpack.c.h.b16 %v3810
    %v3959 = vunpack.c.l.b16 %v3811
    %v3960 = vunpack.c.h.b16 %v3811
    %v3961 = vunpack.c.l.b16 %v3812
    %v3962 = vunpack.c.h.b16 %v3812
    %v3963 = vunpack.c.l.b16 %v3813
    %v3964 = vunpack.c.h.b16 %v3813
    %v3965 = vunpack.c.l.b16 %v3814
    %v3966 = vunpack.c.h.b16 %v3814
    %v3967 = vunpack.c.l.b16 %v3815
    %v3968 = vunpack.c.h.b16 %v3815
    %v3969 = vunpack.c.l.b16 %v3816
    %v3970 = vunpack.c.h.b16 %v3816
    %v3971 = vunpack.c.l.b16 %v3817
    %v3972 = vunpack.c.h.b16 %v3817
    %v3973 = vunpack.c.l.b16 %v3818
    %v3974 = vunpack.c.h.b16 %v3818
    %v3975 = vunpack.c.l.b16 %v3819
    %v3976 = vunpack.c.h.b16 %v3819
    %v3977 = vunpack.c.l.b16 %v3820
    %v3978 = vunpack.c.h.b16 %v3820
    %v3979 = vunpack.c.l.b16 %v3821
    %v3980 = vunpack.c.h.b16 %v3821
    %v3981 = vunpack.c.l.b16 %v3822
    %v3982 = vunpack.c.h.b16 %v3822
    %v3983 = vunpack.c.l.b16 %v3823
    %v3984 = vunpack.c.h.b16 %v3823
    %v3985 = vunpack.c.l.b16 %v3824
    %v3986 = vunpack.c.h.b16 %v3824
    %v3987 = vunpack.c.l.b16 %v3825
    %v3988 = vunpack.c.h.b16 %v3825
    %v3989 = vunpack.c.l.b16 %v3826
    %v3990 = vunpack.c.h.b16 %v3826
    %v3991 = vunpack.c.l.b16 %v3827
    %v3992 = vunpack.c.h.b16 %v3827
    %v3993 = vunpack.c.l.b16 %v3828
    %v3994 = vunpack.c.h.b16 %v3828
    %v3995 = vunpack.c.l.b16 %v3829
    %v3996 = vunpack.c.h.b16 %v3829
    %v3997 = vunpack.c.l.b16 %v3830
    %v3998 = vunpack.c.h.b16 %v3830
    %v3999 = vunpack.c.l.b16 %v3831
    %v4000 = vunpack.c.h.b16 %v3831
    %v4001 = vunpack.c.l.b16 %v3832
    %v4002 = vunpack.c.h.b16 %v3832
    %v4003 = vunpack.c.l.b16 %v3833
    %v4004 = vunpack.c.h.b16 %v3833
    %v4005 = vunpack.c.l.b16 %v3834
    %v4006 = vunpack.c.h.b16 %v3834
    %v4007 = vunpack.c.l.b16 %v3835
    %v4008 = vunpack.c.h.b16 %v3835
    %v4009 = vunpack.c.l.b16 %v3836
    %v4010 = vunpack.c.h.b16 %v3836
    %v4011 = vunpack.c.l.b16 %v3837
    %v4012 = vunpack.c.h.b16 %v3837
    %v4013 = vunpack.c.l.b16 %v3838
    %v4014 = vunpack.c.h.b16 %v3838
    %v4015 = vunpack.c.l.b16 %v3839
    %v4016 = vunpack.c.h.b16 %v3839
    %v4017 = vunpack.c.l.b16 %v3840
    %v4018 = vunpack.c.h.b16 %v3840
    %v4019 = vunpack.c.l.b16 %v3841
    %v4020 = vunpack.c.h.b16 %v3841
    %v4021 = vunpack.c.l.b16 %v3842
    %v4022 = vunpack.c.h.b16 %v3842
    %v4023 = vunpack.c.l.b16 %v3843
    %v4024 = vunpack.c.h.b16 %v3843
    %v4025 = vunpack.c.l.b16 %v3844
    %v4026 = vunpack.c.h.b16 %v3844
    %v4027 = vunpack.c.l.b16 %v3845
    %v4028 = vunpack.c.h.b16 %v3845
    %v4029 = vunpack.c.l.b16 %v3846
    %v4030 = vunpack.c.h.b16 %v3846
    %v4031 = vunpack.c.l.b16 %v3847
    %v4032 = vunpack.c.h.b16 %v3847
    %v4033 = vunpack.c.l.b16 %v3848
    %v4034 = vunpack.c.h.b16 %v3848
    %v4035 = vunpack.c.l.b16 %v3849
    %v4036 = vunpack.c.h.b16 %v3849
    %v4037 = vunpack.c.l.b16 %v3850
    %v4038 = vunpack.c.h.b16 %v3850
    %v4039 = vunpack.c.l.b16 %v3851
    %v4040 = vunpack.c.h.b16 %v3851
    %v4041 = vunpack.c.l.b16 %v3852
    %v4042 = vunpack.c.h.b16 %v3852
    %v4043 = vunpack.c.l.b16 %v3853
    %v4044 = vunpack.c.h.b16 %v3853
    %v4045 = vunpack.c.l.b16 %v3854
    %v4046 = vunpack.c.h.b16 %v3854
    %v4047 = vunpack.c.l.b16 %v3855
    %v4048 = vunpack.c.h.b16 %v3855
    %v4049 = vunpack.c.l.b16 %v3856
    %v4050 = vunpack.c.h.b16 %v3856
    %v4051 = vunpack.c.l.b16 %v3857
    %v4052 = vunpack.c.h.b16 %v3857
    %v4053 = vunpack.c.l.b16 %v3858
    %v4054 = vunpack.c.h.b16 %v3858
    %v4055 = vunpack.c.l.b16 %v3859
    %v4056 = vunpack.c.h.b16 %v3859
    %v4057 = vunpack.c.l.b16 %v3860
    %v4058 = vunpack.c.h.b16 %v3860
    %v4059 = vunpack.c.l.b16 %v3861
    %v4060 = vunpack.c.h.b16 %v3861
    %v4061 = vpack.c.b16 %v3937, %v3933
    %v4062 = vpack.c.b16 %v3938, %v3934
    %v4063 = vpack.c.b16 %v3939, %v3935
    %v4064 = vpack.c.b16 %v3940, %v3936
    %v4065 = vpack.c.b16 %v3945, %v3941
    %v4066 = vpack.c.b16 %v3946, %v3942
    %v4067 = vpack.c.b16 %v3947, %v3943
    %v4068 = vpack.c.b16 %v3948, %v3944
    %v4069 = vpack.c.b16 %v3953, %v3949
    %v4070 = vpack.c.b16 %v3954, %v3950
    %v4071 = vpack.c.b16 %v3955, %v3951
    %v4072 = vpack.c.b16 %v3956, %v3952
    %v4073 = vpack.c.b16 %v3961, %v3957
    %v4074 = vpack.c.b16 %v3962, %v3958
    %v4075 = vpack.c.b16 %v3963, %v3959
    %v4076 = vpack.c.b16 %v3964, %v3960
    %v4077 = vpack.c.b16 %v3969, %v3965
    %v4078 = vpack.c.b16 %v3970, %v3966
    %v4079 = vpack.c.b16 %v3971, %v3967
    %v4080 = vpack.c.b16 %v3972, %v3968
    %v4081 = vpack.c.b16 %v3977, %v3973
    %v4082 = vpack.c.b16 %v3978, %v3974
    %v4083 = vpack.c.b16 %v3979, %v3975
    %v4084 = vpack.c.b16 %v3980, %v3976
    %v4085 = vpack.c.b16 %v3985, %v3981
    %v4086 = vpack.c.b16 %v3986, %v3982
    %v4087 = vpack.c.b16 %v3987, %v3983
    %v4088 = vpack.c.b16 %v3988, %v3984
    %v4089 = vpack.c.b16 %v3993, %v3989
    %v4090 = vpack.c.b16 %v3994, %v3990
    %v4091 = vpack.c.b16 %v3995, %v3991
    %v4092 = vpack.c.b16 %v3996, %v3992
    %v4093 = vpack.c.b16 %v4001, %v3997
    %v4094 = vpack.c.b16 %v4002, %v3998
    %v4095 = vpack.c.b16 %v4003, %v3999
    %v4096 = vpack.c.b16 %v4004, %v4000
    %v4097 = vpack.c.b16 %v4009, %v4005
    %v4098 = vpack.c.b16 %v4010, %v4006
    %v4099 = vpack.c.b16 %v4011, %v4007
    %v4100 = vpack.c.b16 %v4012, %v4008
    %v4101 = vpack.c.b16 %v4017, %v4013
    %v4102 = vpack.c.b16 %v4018, %v4014
    %v4103 = vpack.c.b16 %v4019, %v4015
    %v4104 = vpack.c.b16 %v4020, %v4016
    %v4105 = vpack.c.b16 %v4025, %v4021
    %v4106 = vpack.c.b16 %v4026, %v4022
    %v4107 = vpack.c.b16 %v4027, %v4023
    %v4108 = vpack.c.b16 %v4028, %v4024
    %v4109 = vpack.c.b16 %v4033, %v4029
    %v4110 = vpack.c.b16 %v4034, %v4030
    %v4111 = vpack.c.b16 %v4035, %v4031
    %v4112 = vpack.c.b16 %v4036, %v4032
    %v4113 = vpack.c.b16 %v4041, %v4037
    %v4114 = vpack.c.b16 %v4042, %v4038
    %v4115 = vpack.c.b16 %v4043, %v4039
    %v4116 = vpack.c.b16 %v4044, %v4040
    %v4117 = vpack.c.b16 %v4049, %v4045
    %v4118 = vpack.c.b16 %v4050, %v4046
    %v4119 = vpack.c.b16 %v4051, %v4047
    %v4120 = vpack.c.b16 %v4052, %v4048
    %v4121 = vpack.c.b16 %v4057, %v4053
    %v4122 = vpack.c.b16 %v4058, %v4054
    %v4123 = vpack.c.b16 %v4059, %v4055
    %v4124 = vpack.c.b16 %v4060, %v4056
    %4189 = vmatpush.bf16.msra.mxu0 %v4089
    %4190 = vmatpush.bf16.msra.mxu0 %v4085
    %4191 = vmatpush.bf16.msra.mxu0 %v4081
    %4192 = vmatpush.bf16.msra.mxu0 %v4077
    %4193 = vmatpush.bf16.msra.mxu0 %v4073
    %4194 = vmatpush.bf16.msra.mxu0 %v4069
    %4195 = vmatpush.bf16.msra.mxu0 %v4065
    %4196 = vmatpush.bf16.msra.mxu0 %v4061
    %4197 = vmatmul.bf16.gmra.mxu0 %v2004
    %v4198 = vpop.f32.mrf.mxu0
    %v4199 = vadd.f32 0.0, %v4198
    %v4200 = vpop.f32.mrf.mxu0
    %v4201 = vadd.f32 0.0, %v4200
    %4202 = vmatmul.bf16.gmra.mxu0 %v2006
    %v4203 = vpop.f32.mrf.mxu0
    %v4204 = vadd.f32 0.0, %v4203
    %v4205 = vpop.f32.mrf.mxu0
    %v4206 = vadd.f32 0.0, %v4205
    %4207 = vmatmul.bf16.gmra.mxu0 %v2008
    %v4208 = vpop.f32.mrf.mxu0
    %v4209 = vadd.f32 0.0, %v4208
    %v4210 = vpop.f32.mrf.mxu0
    %v4211 = vadd.f32 0.0, %v4210
    %4212 = vmatmul.bf16.gmra.mxu0 %v3865
    %v4213 = vpop.f32.mrf.mxu0
    %v4214 = vadd.f32 0.0, %v4213
    %v4215 = vpop.f32.mrf.mxu0
    %v4216 = vadd.f32 0.0, %v4215
    %4217 = vdwg.mxu0
    %4218 = vmatpush.bf16.msra.mxu0 %v4121
    %4219 = vmatpush.bf16.msra.mxu0 %v4117
    %4220 = vmatpush.bf16.msra.mxu0 %v4113
    %4221 = vmatpush.bf16.msra.mxu0 %v4109
    %4222 = vmatpush.bf16.msra.mxu0 %v4105
    %4223 = vmatpush.bf16.msra.mxu0 %v4101
    %4224 = vmatpush.bf16.msra.mxu0 %v4097
    %4225 = vmatpush.bf16.msra.mxu0 %v4093
    %4226 = vmatmul.bf16.gmra.mxu0 %v2005
    %v4227 = vpop.f32.mrf.mxu0
    %v4228 = vadd.f32 %v4199, %v4227
    %v4229 = vpop.f32.mrf.mxu0
    %v4230 = vadd.f32 %v4201, %v4229
    %4231 = vmatmul.bf16.gmra.mxu0 %v2007
    %v4232 = vpop.f32.mrf.mxu0
    %v4233 = vadd.f32 %v4204, %v4232
    %v4234 = vpop.f32.mrf.mxu0
    %v4235 = vadd.f32 %v4206, %v4234
    %4236 = vmatmul.bf16.gmra.mxu0 %v2009
    %v4237 = vpop.f32.mrf.mxu0
    %v4238 = vadd.f32 %v4209, %v4237
    %v4239 = vpop.f32.mrf.mxu0
    %v4240 = vadd.f32 %v4211, %v4239
    %4241 = vmatmul.bf16.gmra.mxu0 %v3866
    %v4242 = vpop.f32.mrf.mxu0
    %v4243 = vadd.f32 %v4214, %v4242
    %v4244 = vpop.f32.mrf.mxu0
    %v4245 = vadd.f32 %v4216, %v4244
    %4246 = vdwg.mxu0
    %4247 = vmatpush.bf16.msra.mxu0 %v4090
    %4248 = vmatpush.bf16.msra.mxu0 %v4086
    %4249 = vmatpush.bf16.msra.mxu0 %v4082
    %4250 = vmatpush.bf16.msra.mxu0 %v4078
    %4251 = vmatpush.bf16.msra.mxu0 %v4074
    %4252 = vmatpush.bf16.msra.mxu0 %v4070
    %4253 = vmatpush.bf16.msra.mxu0 %v4066
    %4254 = vmatpush.bf16.msra.mxu0 %v4062
    %4255 = vmatmul.bf16.gmra.mxu0 %v2004
    %v4256 = vpop.f32.mrf.mxu0
    %v4257 = vadd.f32 0.0, %v4256
    %v4258 = vpop.f32.mrf.mxu0
    %v4259 = vadd.f32 0.0, %v4258
    %4260 = vmatmul.bf16.gmra.mxu0 %v2006
    %v4261 = vpop.f32.mrf.mxu0
    %v4262 = vadd.f32 0.0, %v4261
    %v4263 = vpop.f32.mrf.mxu0
    %v4264 = vadd.f32 0.0, %v4263
    %4265 = vmatmul.bf16.gmra.mxu0 %v2008
    %v4266 = vpop.f32.mrf.mxu0
    %v4267 = vadd.f32 0.0, %v4266
    %v4268 = vpop.f32.mrf.mxu0
    %v4269 = vadd.f32 0.0, %v4268
    %4270 = vmatmul.bf16.gmra.mxu0 %v3865
    %v4271 = vpop.f32.mrf.mxu0
    %v4272 = vadd.f32 0.0, %v4271
    %v4273 = vpop.f32.mrf.mxu0
    %v4274 = vadd.f32 0.0, %v4273
    %4275 = vdwg.mxu0
    %4276 = vmatpush.bf16.msra.mxu0 %v4122
    %4277 = vmatpush.bf16.msra.mxu0 %v4118
    %4278 = vmatpush.bf16.msra.mxu0 %v4114
    %4279 = vmatpush.bf16.msra.mxu0 %v4110
    %4280 = vmatpush.bf16.msra.mxu0 %v4106
    %4281 = vmatpush.bf16.msra.mxu0 %v4102
    %4282 = vmatpush.bf16.msra.mxu0 %v4098
    %4283 = vmatpush.bf16.msra.mxu0 %v4094
    %4284 = vmatmul.bf16.gmra.mxu0 %v2005
    %v4285 = vpop.f32.mrf.mxu0
    %v4286 = vadd.f32 %v4257, %v4285
    %v4287 = vpop.f32.mrf.mxu0
    %v4288 = vadd.f32 %v4259, %v4287
    %4289 = vmatmul.bf16.gmra.mxu0 %v2007
    %v4290 = vpop.f32.mrf.mxu0
    %v4291 = vadd.f32 %v4262, %v4290
    %v4292 = vpop.f32.mrf.mxu0
    %v4293 = vadd.f32 %v4264, %v4292
    %4294 = vmatmul.bf16.gmra.mxu0 %v2009
    %v4295 = vpop.f32.mrf.mxu0
    %v4296 = vadd.f32 %v4267, %v4295
    %v4297 = vpop.f32.mrf.mxu0
    %v4298 = vadd.f32 %v4269, %v4297
    %4299 = vmatmul.bf16.gmra.mxu0 %v3866
    %v4300 = vpop.f32.mrf.mxu0
    %v4301 = vadd.f32 %v4272, %v4300
    %v4302 = vpop.f32.mrf.mxu0
    %v4303 = vadd.f32 %v4274, %v4302
    %4304 = vdwg.mxu0
    %4305 = vmatpush.bf16.msra.mxu0 %v4091
    %4306 = vmatpush.bf16.msra.mxu0 %v4087
    %4307 = vmatpush.bf16.msra.mxu0 %v4083
    %4308 = vmatpush.bf16.msra.mxu0 %v4079
    %4309 = vmatpush.bf16.msra.mxu0 %v4075
    %4310 = vmatpush.bf16.msra.mxu0 %v4071
    %4311 = vmatpush.bf16.msra.mxu0 %v4067
    %4312 = vmatpush.bf16.msra.mxu0 %v4063
    %4313 = vmatmul.bf16.gmra.mxu0 %v2004
    %v4314 = vpop.f32.mrf.mxu0
    %v4315 = vadd.f32 0.0, %v4314
    %v4316 = vpop.f32.mrf.mxu0
    %v4317 = vadd.f32 0.0, %v4316
    %4318 = vmatmul.bf16.gmra.mxu0 %v2006
    %v4319 = vpop.f32.mrf.mxu0
    %v4320 = vadd.f32 0.0, %v4319
    %v4321 = vpop.f32.mrf.mxu0
    %v4322 = vadd.f32 0.0, %v4321
    %4323 = vmatmul.bf16.gmra.mxu0 %v2008
    %v4324 = vpop.f32.mrf.mxu0
    %v4325 = vadd.f32 0.0, %v4324
    %v4326 = vpop.f32.mrf.mxu0
    %v4327 = vadd.f32 0.0, %v4326
    %4328 = vmatmul.bf16.gmra.mxu0 %v3865
    %v4329 = vpop.f32.mrf.mxu0
    %v4330 = vadd.f32 0.0, %v4329
    %v4331 = vpop.f32.mrf.mxu0
    %v4332 = vadd.f32 0.0, %v4331
    %4333 = vdwg.mxu0
    %4334 = vmatpush.bf16.msra.mxu0 %v4123
    %4335 = vmatpush.bf16.msra.mxu0 %v4119
    %4336 = vmatpush.bf16.msra.mxu0 %v4115
    %4337 = vmatpush.bf16.msra.mxu0 %v4111
    %4338 = vmatpush.bf16.msra.mxu0 %v4107
    %4339 = vmatpush.bf16.msra.mxu0 %v4103
    %4340 = vmatpush.bf16.msra.mxu0 %v4099
    %4341 = vmatpush.bf16.msra.mxu0 %v4095
    %4342 = vmatmul.bf16.gmra.mxu0 %v2005
    %v4343 = vpop.f32.mrf.mxu0
    %v4344 = vadd.f32 %v4315, %v4343
    %v4345 = vpop.f32.mrf.mxu0
    %v4346 = vadd.f32 %v4317, %v4345
    %4347 = vmatmul.bf16.gmra.mxu0 %v2007
    %v4348 = vpop.f32.mrf.mxu0
    %v4349 = vadd.f32 %v4320, %v4348
    %v4350 = vpop.f32.mrf.mxu0
    %v4351 = vadd.f32 %v4322, %v4350
    %4352 = vmatmul.bf16.gmra.mxu0 %v2009
    %v4353 = vpop.f32.mrf.mxu0
    %v4354 = vadd.f32 %v4325, %v4353
    %v4355 = vpop.f32.mrf.mxu0
    %v4356 = vadd.f32 %v4327, %v4355
    %4357 = vmatmul.bf16.gmra.mxu0 %v3866
    %v4358 = vpop.f32.mrf.mxu0
    %v4359 = vadd.f32 %v4330, %v4358
    %v4360 = vpop.f32.mrf.mxu0
    %v4361 = vadd.f32 %v4332, %v4360
    %4362 = vdwg.mxu0
    %4363 = vmatpush.bf16.msra.mxu0 %v4092
    %4364 = vmatpush.bf16.msra.mxu0 %v4088
    %4365 = vmatpush.bf16.msra.mxu0 %v4084
    %4366 = vmatpush.bf16.msra.mxu0 %v4080
    %4367 = vmatpush.bf16.msra.mxu0 %v4076
    %4368 = vmatpush.bf16.msra.mxu0 %v4072
    %4369 = vmatpush.bf16.msra.mxu0 %v4068
    %4370 = vmatpush.bf16.msra.mxu0 %v4064
    %4371 = vmatmul.bf16.gmra.mxu0 %v2004
    %v4372 = vpop.f32.mrf.mxu0
    %v4373 = vadd.f32 0.0, %v4372
    %v4374 = vpop.f32.mrf.mxu0
    %v4375 = vadd.f32 0.0, %v4374
    %4376 = vmatmul.bf16.gmra.mxu0 %v2006
    %v4377 = vpop.f32.mrf.mxu0
    %v4378 = vadd.f32 0.0, %v4377
    %v4379 = vpop.f32.mrf.mxu0
    %v4380 = vadd.f32 0.0, %v4379
    %4381 = vmatmul.bf16.gmra.mxu0 %v2008
    %v4382 = vpop.f32.mrf.mxu0
    %v4383 = vadd.f32 0.0, %v4382
    %v4384 = vpop.f32.mrf.mxu0
    %v4385 = vadd.f32 0.0, %v4384
    %4386 = vmatmul.bf16.gmra.mxu0 %v3865
    %v4387 = vpop.f32.mrf.mxu0
    %v4388 = vadd.f32 0.0, %v4387
    %v4389 = vpop.f32.mrf.mxu0
    %v4390 = vadd.f32 0.0, %v4389
    %4391 = vdwg.mxu0
    %4392 = vmatpush.bf16.msra.mxu0 %v4124
    %4393 = vmatpush.bf16.msra.mxu0 %v4120
    %4394 = vmatpush.bf16.msra.mxu0 %v4116
    %4395 = vmatpush.bf16.msra.mxu0 %v4112
    %4396 = vmatpush.bf16.msra.mxu0 %v4108
    %4397 = vmatpush.bf16.msra.mxu0 %v4104
    %4398 = vmatpush.bf16.msra.mxu0 %v4100
    %4399 = vmatpush.bf16.msra.mxu0 %v4096
    %4400 = vmatmul.bf16.gmra.mxu0 %v2005
    %v4401 = vpop.f32.mrf.mxu0
    %v4402 = vadd.f32 %v4373, %v4401
    %v4403 = vpop.f32.mrf.mxu0
    %v4404 = vadd.f32 %v4375, %v4403
    %4405 = vmatmul.bf16.gmra.mxu0 %v2007
    %v4406 = vpop.f32.mrf.mxu0
    %v4407 = vadd.f32 %v4378, %v4406
    %v4408 = vpop.f32.mrf.mxu0
    %v4409 = vadd.f32 %v4380, %v4408
    %4410 = vmatmul.bf16.gmra.mxu0 %v2009
    %v4411 = vpop.f32.mrf.mxu0
    %v4412 = vadd.f32 %v4383, %v4411
    %v4413 = vpop.f32.mrf.mxu0
    %v4414 = vadd.f32 %v4385, %v4413
    %4415 = vmatmul.bf16.gmra.mxu0 %v3866
    %v4416 = vpop.f32.mrf.mxu0
    %v4417 = vadd.f32 %v4388, %v4416
    %v4418 = vpop.f32.mrf.mxu0
    %v4419 = vadd.f32 %v4390, %v4418
    %4420 = vdwg.mxu0
    %v4421 = vadd.f32 %v3765, %v4228
    %v4422 = vadd.f32 %v3766, %v4286
    %v4423 = vadd.f32 %v3767, %v4344
    %v4424 = vadd.f32 %v3768, %v4402
    %v4425 = vadd.f32 %v3769, %v4230
    %v4426 = vadd.f32 %v3770, %v4288
    %v4427 = vadd.f32 %v3771, %v4346
    %v4428 = vadd.f32 %v3772, %v4404
    %v4429 = vadd.f32 %v3773, %v4233
    %v4430 = vadd.f32 %v3774, %v4291
    %v4431 = vadd.f32 %v3775, %v4349
    %v4432 = vadd.f32 %v3776, %v4407
    %v4433 = vadd.f32 %v3777, %v4235
    %v4434 = vadd.f32 %v3778, %v4293
    %v4435 = vadd.f32 %v3779, %v4351
    %v4436 = vadd.f32 %v3780, %v4409
    %v4437 = vadd.f32 %v3781, %v4238
    %v4438 = vadd.f32 %v3782, %v4296
    %v4439 = vadd.f32 %v3783, %v4354
    %v4440 = vadd.f32 %v3784, %v4412
    %v4441 = vadd.f32 %v3785, %v4240
    %v4442 = vadd.f32 %v3786, %v4298
    %v4443 = vadd.f32 %v3787, %v4356
    %v4444 = vadd.f32 %v3788, %v4414
    %v4445 = vadd.f32 %v3789, %v4243
    %v4446 = vadd.f32 %v3790, %v4301
    %v4447 = vadd.f32 %v3791, %v4359
    %v4448 = vadd.f32 %v3792, %v4417
    %v4449 = vadd.f32 %v3793, %v4245
    %v4450 = vadd.f32 %v3794, %v4303
    %v4451 = vadd.f32 %v3795, %v4361
    %v4452 = vadd.f32 %v3796, %v4419
    %s4453 = scalar_lea.vmem [#allocation7], 2048
    %v4454 = vld [vmem:[%s4453] sm:$0xff]
    %v4455 = vld [vmem:[%s4453 + $0x8] sm:$0xff]
    %v4456 = vld [vmem:[%s4453 + $0x10] sm:$0xff]
    %v4457 = vld [vmem:[%s4453 + $0x18] sm:$0xff]
    %v4458 = vld [vmem:[%s4453 + $0x20] sm:$0xff]
    %v4459 = vld [vmem:[%s4453 + $0x28] sm:$0xff]
    %v4460 = vld [vmem:[%s4453 + $0x30] sm:$0xff]
    %v4461 = vld [vmem:[%s4453 + $0x38] sm:$0xff]
    %v4462 = vld [vmem:[%s4453 + $0x40] sm:$0xff]
    %v4463 = vld [vmem:[%s4453 + $0x48] sm:$0xff]
    %v4464 = vld [vmem:[%s4453 + $0x50] sm:$0xff]
    %v4465 = vld [vmem:[%s4453 + $0x58] sm:$0xff]
    %v4466 = vld [vmem:[%s4453 + $0x60] sm:$0xff]
    %v4467 = vld [vmem:[%s4453 + $0x68] sm:$0xff]
    %v4468 = vld [vmem:[%s4453 + $0x70] sm:$0xff]
    %v4469 = vld [vmem:[%s4453 + $0x78] sm:$0xff]
    %v4470 = vld [vmem:[%s4453 + $0x80] sm:$0xff]
    %v4471 = vld [vmem:[%s4453 + $0x88] sm:$0xff]
    %v4472 = vld [vmem:[%s4453 + $0x90] sm:$0xff]
    %v4473 = vld [vmem:[%s4453 + $0x98] sm:$0xff]
    %v4474 = vld [vmem:[%s4453 + $0xa0] sm:$0xff]
    %v4475 = vld [vmem:[%s4453 + $0xa8] sm:$0xff]
    %v4476 = vld [vmem:[%s4453 + $0xb0] sm:$0xff]
    %v4477 = vld [vmem:[%s4453 + $0xb8] sm:$0xff]
    %v4478 = vld [vmem:[%s4453 + $0xc0] sm:$0xff]
    %v4479 = vld [vmem:[%s4453 + $0xc8] sm:$0xff]
    %v4480 = vld [vmem:[%s4453 + $0xd0] sm:$0xff]
    %v4481 = vld [vmem:[%s4453 + $0xd8] sm:$0xff]
    %v4482 = vld [vmem:[%s4453 + $0xe0] sm:$0xff]
    %v4483 = vld [vmem:[%s4453 + $0xe8] sm:$0xff]
    %v4484 = vld [vmem:[%s4453 + $0xf0] sm:$0xff]
    %v4485 = vld [vmem:[%s4453 + $0xf8] sm:$0xff]
    %v4486 = vld [vmem:[%s4453 + $0x100] sm:$0xff]
    %v4487 = vld [vmem:[%s4453 + $0x108] sm:$0xff]
    %v4488 = vld [vmem:[%s4453 + $0x110] sm:$0xff]
    %v4489 = vld [vmem:[%s4453 + $0x118] sm:$0xff]
    %v4490 = vld [vmem:[%s4453 + $0x120] sm:$0xff]
    %v4491 = vld [vmem:[%s4453 + $0x128] sm:$0xff]
    %v4492 = vld [vmem:[%s4453 + $0x130] sm:$0xff]
    %v4493 = vld [vmem:[%s4453 + $0x138] sm:$0xff]
    %v4494 = vld [vmem:[%s4453 + $0x140] sm:$0xff]
    %v4495 = vld [vmem:[%s4453 + $0x148] sm:$0xff]
    %v4496 = vld [vmem:[%s4453 + $0x150] sm:$0xff]
    %v4497 = vld [vmem:[%s4453 + $0x158] sm:$0xff]
    %v4498 = vld [vmem:[%s4453 + $0x160] sm:$0xff]
    %v4499 = vld [vmem:[%s4453 + $0x168] sm:$0xff]
    %v4500 = vld [vmem:[%s4453 + $0x170] sm:$0xff]
    %v4501 = vld [vmem:[%s4453 + $0x178] sm:$0xff]
    %v4502 = vld [vmem:[%s4453 + $0x180] sm:$0xff]
    %v4503 = vld [vmem:[%s4453 + $0x188] sm:$0xff]
    %v4504 = vld [vmem:[%s4453 + $0x190] sm:$0xff]
    %v4505 = vld [vmem:[%s4453 + $0x198] sm:$0xff]
    %v4506 = vld [vmem:[%s4453 + $0x1a0] sm:$0xff]
    %v4507 = vld [vmem:[%s4453 + $0x1a8] sm:$0xff]
    %v4508 = vld [vmem:[%s4453 + $0x1b0] sm:$0xff]
    %v4509 = vld [vmem:[%s4453 + $0x1b8] sm:$0xff]
    %v4510 = vld [vmem:[%s4453 + $0x1c0] sm:$0xff]
    %v4511 = vld [vmem:[%s4453 + $0x1c8] sm:$0xff]
    %v4512 = vld [vmem:[%s4453 + $0x1d0] sm:$0xff]
    %v4513 = vld [vmem:[%s4453 + $0x1d8] sm:$0xff]
    %v4514 = vld [vmem:[%s4453 + $0x1e0] sm:$0xff]
    %v4515 = vld [vmem:[%s4453 + $0x1e8] sm:$0xff]
    %v4516 = vld [vmem:[%s4453 + $0x1f0] sm:$0xff]
    %v4517 = vld [vmem:[%s4453 + $0x1f8] sm:$0xff]
    %v4519 = vunpack.c.l.b16 %v1848
    %v4520 = vunpack.c.h.b16 %v1848
    %v4521 = vpack.c.b16 %v4519, %v3863
    %v4522 = vpack.c.b16 %v4520, %v3864
    %v4589 = vunpack.c.l.b16 %v4454
    %v4590 = vunpack.c.h.b16 %v4454
    %v4591 = vunpack.c.l.b16 %v4455
    %v4592 = vunpack.c.h.b16 %v4455
    %v4593 = vunpack.c.l.b16 %v4456
    %v4594 = vunpack.c.h.b16 %v4456
    %v4595 = vunpack.c.l.b16 %v4457
    %v4596 = vunpack.c.h.b16 %v4457
    %v4597 = vunpack.c.l.b16 %v4458
    %v4598 = vunpack.c.h.b16 %v4458
    %v4599 = vunpack.c.l.b16 %v4459
    %v4600 = vunpack.c.h.b16 %v4459
    %v4601 = vunpack.c.l.b16 %v4460
    %v4602 = vunpack.c.h.b16 %v4460
    %v4603 = vunpack.c.l.b16 %v4461
    %v4604 = vunpack.c.h.b16 %v4461
    %v4605 = vunpack.c.l.b16 %v4462
    %v4606 = vunpack.c.h.b16 %v4462
    %v4607 = vunpack.c.l.b16 %v4463
    %v4608 = vunpack.c.h.b16 %v4463
    %v4609 = vunpack.c.l.b16 %v4464
    %v4610 = vunpack.c.h.b16 %v4464
    %v4611 = vunpack.c.l.b16 %v4465
    %v4612 = vunpack.c.h.b16 %v4465
    %v4613 = vunpack.c.l.b16 %v4466
    %v4614 = vunpack.c.h.b16 %v4466
    %v4615 = vunpack.c.l.b16 %v4467
    %v4616 = vunpack.c.h.b16 %v4467
    %v4617 = vunpack.c.l.b16 %v4468
    %v4618 = vunpack.c.h.b16 %v4468
    %v4619 = vunpack.c.l.b16 %v4469
    %v4620 = vunpack.c.h.b16 %v4469
    %v4621 = vunpack.c.l.b16 %v4470
    %v4622 = vunpack.c.h.b16 %v4470
    %v4623 = vunpack.c.l.b16 %v4471
    %v4624 = vunpack.c.h.b16 %v4471
    %v4625 = vunpack.c.l.b16 %v4472
    %v4626 = vunpack.c.h.b16 %v4472
    %v4627 = vunpack.c.l.b16 %v4473
    %v4628 = vunpack.c.h.b16 %v4473
    %v4629 = vunpack.c.l.b16 %v4474
    %v4630 = vunpack.c.h.b16 %v4474
    %v4631 = vunpack.c.l.b16 %v4475
    %v4632 = vunpack.c.h.b16 %v4475
    %v4633 = vunpack.c.l.b16 %v4476
    %v4634 = vunpack.c.h.b16 %v4476
    %v4635 = vunpack.c.l.b16 %v4477
    %v4636 = vunpack.c.h.b16 %v4477
    %v4637 = vunpack.c.l.b16 %v4478
    %v4638 = vunpack.c.h.b16 %v4478
    %v4639 = vunpack.c.l.b16 %v4479
    %v4640 = vunpack.c.h.b16 %v4479
    %v4641 = vunpack.c.l.b16 %v4480
    %v4642 = vunpack.c.h.b16 %v4480
    %v4643 = vunpack.c.l.b16 %v4481
    %v4644 = vunpack.c.h.b16 %v4481
    %v4645 = vunpack.c.l.b16 %v4482
    %v4646 = vunpack.c.h.b16 %v4482
    %v4647 = vunpack.c.l.b16 %v4483
    %v4648 = vunpack.c.h.b16 %v4483
    %v4649 = vunpack.c.l.b16 %v4484
    %v4650 = vunpack.c.h.b16 %v4484
    %v4651 = vunpack.c.l.b16 %v4485
    %v4652 = vunpack.c.h.b16 %v4485
    %v4653 = vunpack.c.l.b16 %v4486
    %v4654 = vunpack.c.h.b16 %v4486
    %v4655 = vunpack.c.l.b16 %v4487
    %v4656 = vunpack.c.h.b16 %v4487
    %v4657 = vunpack.c.l.b16 %v4488
    %v4658 = vunpack.c.h.b16 %v4488
    %v4659 = vunpack.c.l.b16 %v4489
    %v4660 = vunpack.c.h.b16 %v4489
    %v4661 = vunpack.c.l.b16 %v4490
    %v4662 = vunpack.c.h.b16 %v4490
    %v4663 = vunpack.c.l.b16 %v4491
    %v4664 = vunpack.c.h.b16 %v4491
    %v4665 = vunpack.c.l.b16 %v4492
    %v4666 = vunpack.c.h.b16 %v4492
    %v4667 = vunpack.c.l.b16 %v4493
    %v4668 = vunpack.c.h.b16 %v4493
    %v4669 = vunpack.c.l.b16 %v4494
    %v4670 = vunpack.c.h.b16 %v4494
    %v4671 = vunpack.c.l.b16 %v4495
    %v4672 = vunpack.c.h.b16 %v4495
    %v4673 = vunpack.c.l.b16 %v4496
    %v4674 = vunpack.c.h.b16 %v4496
    %v4675 = vunpack.c.l.b16 %v4497
    %v4676 = vunpack.c.h.b16 %v4497
    %v4677 = vunpack.c.l.b16 %v4498
    %v4678 = vunpack.c.h.b16 %v4498
    %v4679 = vunpack.c.l.b16 %v4499
    %v4680 = vunpack.c.h.b16 %v4499
    %v4681 = vunpack.c.l.b16 %v4500
    %v4682 = vunpack.c.h.b16 %v4500
    %v4683 = vunpack.c.l.b16 %v4501
    %v4684 = vunpack.c.h.b16 %v4501
    %v4685 = vunpack.c.l.b16 %v4502
    %v4686 = vunpack.c.h.b16 %v4502
    %v4687 = vunpack.c.l.b16 %v4503
    %v4688 = vunpack.c.h.b16 %v4503
    %v4689 = vunpack.c.l.b16 %v4504
    %v4690 = vunpack.c.h.b16 %v4504
    %v4691 = vunpack.c.l.b16 %v4505
    %v4692 = vunpack.c.h.b16 %v4505
    %v4693 = vunpack.c.l.b16 %v4506
    %v4694 = vunpack.c.h.b16 %v4506
    %v4695 = vunpack.c.l.b16 %v4507
    %v4696 = vunpack.c.h.b16 %v4507
    %v4697 = vunpack.c.l.b16 %v4508
    %v4698 = vunpack.c.h.b16 %v4508
    %v4699 = vunpack.c.l.b16 %v4509
    %v4700 = vunpack.c.h.b16 %v4509
    %v4701 = vunpack.c.l.b16 %v4510
    %v4702 = vunpack.c.h.b16 %v4510
    %v4703 = vunpack.c.l.b16 %v4511
    %v4704 = vunpack.c.h.b16 %v4511
    %v4705 = vunpack.c.l.b16 %v4512
    %v4706 = vunpack.c.h.b16 %v4512
    %v4707 = vunpack.c.l.b16 %v4513
    %v4708 = vunpack.c.h.b16 %v4513
    %v4709 = vunpack.c.l.b16 %v4514
    %v4710 = vunpack.c.h.b16 %v4514
    %v4711 = vunpack.c.l.b16 %v4515
    %v4712 = vunpack.c.h.b16 %v4515
    %v4713 = vunpack.c.l.b16 %v4516
    %v4714 = vunpack.c.h.b16 %v4516
    %v4715 = vunpack.c.l.b16 %v4517
    %v4716 = vunpack.c.h.b16 %v4517
    %v4717 = vpack.c.b16 %v4593, %v4589
    %v4718 = vpack.c.b16 %v4594, %v4590
    %v4719 = vpack.c.b16 %v4595, %v4591
    %v4720 = vpack.c.b16 %v4596, %v4592
    %v4721 = vpack.c.b16 %v4601, %v4597
    %v4722 = vpack.c.b16 %v4602, %v4598
    %v4723 = vpack.c.b16 %v4603, %v4599
    %v4724 = vpack.c.b16 %v4604, %v4600
    %v4725 = vpack.c.b16 %v4609, %v4605
    %v4726 = vpack.c.b16 %v4610, %v4606
    %v4727 = vpack.c.b16 %v4611, %v4607
    %v4728 = vpack.c.b16 %v4612, %v4608
    %v4729 = vpack.c.b16 %v4617, %v4613
    %v4730 = vpack.c.b16 %v4618, %v4614
    %v4731 = vpack.c.b16 %v4619, %v4615
    %v4732 = vpack.c.b16 %v4620, %v4616
    %v4733 = vpack.c.b16 %v4625, %v4621
    %v4734 = vpack.c.b16 %v4626, %v4622
    %v4735 = vpack.c.b16 %v4627, %v4623
    %v4736 = vpack.c.b16 %v4628, %v4624
    %v4737 = vpack.c.b16 %v4633, %v4629
    %v4738 = vpack.c.b16 %v4634, %v4630
    %v4739 = vpack.c.b16 %v4635, %v4631
    %v4740 = vpack.c.b16 %v4636, %v4632
    %v4741 = vpack.c.b16 %v4641, %v4637
    %v4742 = vpack.c.b16 %v4642, %v4638
    %v4743 = vpack.c.b16 %v4643, %v4639
    %v4744 = vpack.c.b16 %v4644, %v4640
    %v4745 = vpack.c.b16 %v4649, %v4645
    %v4746 = vpack.c.b16 %v4650, %v4646
    %v4747 = vpack.c.b16 %v4651, %v4647
    %v4748 = vpack.c.b16 %v4652, %v4648
    %v4749 = vpack.c.b16 %v4657, %v4653
    %v4750 = vpack.c.b16 %v4658, %v4654
    %v4751 = vpack.c.b16 %v4659, %v4655
    %v4752 = vpack.c.b16 %v4660, %v4656
    %v4753 = vpack.c.b16 %v4665, %v4661
    %v4754 = vpack.c.b16 %v4666, %v4662
    %v4755 = vpack.c.b16 %v4667, %v4663
    %v4756 = vpack.c.b16 %v4668, %v4664
    %v4757 = vpack.c.b16 %v4673, %v4669
    %v4758 = vpack.c.b16 %v4674, %v4670
    %v4759 = vpack.c.b16 %v4675, %v4671
    %v4760 = vpack.c.b16 %v4676, %v4672
    %v4761 = vpack.c.b16 %v4681, %v4677
    %v4762 = vpack.c.b16 %v4682, %v4678
    %v4763 = vpack.c.b16 %v4683, %v4679
    %v4764 = vpack.c.b16 %v4684, %v4680
    %v4765 = vpack.c.b16 %v4689, %v4685
    %v4766 = vpack.c.b16 %v4690, %v4686
    %v4767 = vpack.c.b16 %v4691, %v4687
    %v4768 = vpack.c.b16 %v4692, %v4688
    %v4769 = vpack.c.b16 %v4697, %v4693
    %v4770 = vpack.c.b16 %v4698, %v4694
    %v4771 = vpack.c.b16 %v4699, %v4695
    %v4772 = vpack.c.b16 %v4700, %v4696
    %v4773 = vpack.c.b16 %v4705, %v4701
    %v4774 = vpack.c.b16 %v4706, %v4702
    %v4775 = vpack.c.b16 %v4707, %v4703
    %v4776 = vpack.c.b16 %v4708, %v4704
    %v4777 = vpack.c.b16 %v4713, %v4709
    %v4778 = vpack.c.b16 %v4714, %v4710
    %v4779 = vpack.c.b16 %v4715, %v4711
    %v4780 = vpack.c.b16 %v4716, %v4712
    %4845 = vmatpush.bf16.msra.mxu0 %v4745
    %4846 = vmatpush.bf16.msra.mxu0 %v4741
    %4847 = vmatpush.bf16.msra.mxu0 %v4737
    %4848 = vmatpush.bf16.msra.mxu0 %v4733
    %4849 = vmatpush.bf16.msra.mxu0 %v4729
    %4850 = vmatpush.bf16.msra.mxu0 %v4725
    %4851 = vmatpush.bf16.msra.mxu0 %v4721
    %4852 = vmatpush.bf16.msra.mxu0 %v4717
    %4853 = vmatmul.bf16.gmra.mxu0 %v2577
    %v4854 = vpop.f32.mrf.mxu0
    %v4855 = vadd.f32 0.0, %v4854
    %v4856 = vpop.f32.mrf.mxu0
    %v4857 = vadd.f32 0.0, %v4856
    %4858 = vmatmul.bf16.gmra.mxu0 %v2579
    %v4859 = vpop.f32.mrf.mxu0
    %v4860 = vadd.f32 0.0, %v4859
    %v4861 = vpop.f32.mrf.mxu0
    %v4862 = vadd.f32 0.0, %v4861
    %4863 = vmatmul.bf16.gmra.mxu0 %v3209
    %v4864 = vpop.f32.mrf.mxu0
    %v4865 = vadd.f32 0.0, %v4864
    %v4866 = vpop.f32.mrf.mxu0
    %v4867 = vadd.f32 0.0, %v4866
    %4868 = vmatmul.bf16.gmra.mxu0 %v4521
    %v4869 = vpop.f32.mrf.mxu0
    %v4870 = vadd.f32 0.0, %v4869
    %v4871 = vpop.f32.mrf.mxu0
    %v4872 = vadd.f32 0.0, %v4871
    %4873 = vdwg.mxu0
    %4874 = vmatpush.bf16.msra.mxu0 %v4777
    %4875 = vmatpush.bf16.msra.mxu0 %v4773
    %4876 = vmatpush.bf16.msra.mxu0 %v4769
    %4877 = vmatpush.bf16.msra.mxu0 %v4765
    %4878 = vmatpush.bf16.msra.mxu0 %v4761
    %4879 = vmatpush.bf16.msra.mxu0 %v4757
    %4880 = vmatpush.bf16.msra.mxu0 %v4753
    %4881 = vmatpush.bf16.msra.mxu0 %v4749
    %4882 = vmatmul.bf16.gmra.mxu0 %v2578
    %v4883 = vpop.f32.mrf.mxu0
    %v4884 = vadd.f32 %v4855, %v4883
    %v4885 = vpop.f32.mrf.mxu0
    %v4886 = vadd.f32 %v4857, %v4885
    %4887 = vmatmul.bf16.gmra.mxu0 %v2580
    %v4888 = vpop.f32.mrf.mxu0
    %v4889 = vadd.f32 %v4860, %v4888
    %v4890 = vpop.f32.mrf.mxu0
    %v4891 = vadd.f32 %v4862, %v4890
    %4892 = vmatmul.bf16.gmra.mxu0 %v3210
    %v4893 = vpop.f32.mrf.mxu0
    %v4894 = vadd.f32 %v4865, %v4893
    %v4895 = vpop.f32.mrf.mxu0
    %v4896 = vadd.f32 %v4867, %v4895
    %4897 = vmatmul.bf16.gmra.mxu0 %v4522
    %v4898 = vpop.f32.mrf.mxu0
    %v4899 = vadd.f32 %v4870, %v4898
    %v4900 = vpop.f32.mrf.mxu0
    %v4901 = vadd.f32 %v4872, %v4900
    %4902 = vdwg.mxu0
    %4903 = vmatpush.bf16.msra.mxu0 %v4746
    %4904 = vmatpush.bf16.msra.mxu0 %v4742
    %4905 = vmatpush.bf16.msra.mxu0 %v4738
    %4906 = vmatpush.bf16.msra.mxu0 %v4734
    %4907 = vmatpush.bf16.msra.mxu0 %v4730
    %4908 = vmatpush.bf16.msra.mxu0 %v4726
    %4909 = vmatpush.bf16.msra.mxu0 %v4722
    %4910 = vmatpush.bf16.msra.mxu0 %v4718
    %4911 = vmatmul.bf16.gmra.mxu0 %v2577
    %v4912 = vpop.f32.mrf.mxu0
    %v4913 = vadd.f32 0.0, %v4912
    %v4914 = vpop.f32.mrf.mxu0
    %v4915 = vadd.f32 0.0, %v4914
    %4916 = vmatmul.bf16.gmra.mxu0 %v2579
    %v4917 = vpop.f32.mrf.mxu0
    %v4918 = vadd.f32 0.0, %v4917
    %v4919 = vpop.f32.mrf.mxu0
    %v4920 = vadd.f32 0.0, %v4919
    %4921 = vmatmul.bf16.gmra.mxu0 %v3209
    %v4922 = vpop.f32.mrf.mxu0
    %v4923 = vadd.f32 0.0, %v4922
    %v4924 = vpop.f32.mrf.mxu0
    %v4925 = vadd.f32 0.0, %v4924
    %4926 = vmatmul.bf16.gmra.mxu0 %v4521
    %v4927 = vpop.f32.mrf.mxu0
    %v4928 = vadd.f32 0.0, %v4927
    %v4929 = vpop.f32.mrf.mxu0
    %v4930 = vadd.f32 0.0, %v4929
    %4931 = vdwg.mxu0
    %4932 = vmatpush.bf16.msra.mxu0 %v4778
    %4933 = vmatpush.bf16.msra.mxu0 %v4774
    %4934 = vmatpush.bf16.msra.mxu0 %v4770
    %4935 = vmatpush.bf16.msra.mxu0 %v4766
    %4936 = vmatpush.bf16.msra.mxu0 %v4762
    %4937 = vmatpush.bf16.msra.mxu0 %v4758
    %4938 = vmatpush.bf16.msra.mxu0 %v4754
    %4939 = vmatpush.bf16.msra.mxu0 %v4750
    %4940 = vmatmul.bf16.gmra.mxu0 %v2578
    %v4941 = vpop.f32.mrf.mxu0
    %v4942 = vadd.f32 %v4913, %v4941
    %v4943 = vpop.f32.mrf.mxu0
    %v4944 = vadd.f32 %v4915, %v4943
    %4945 = vmatmul.bf16.gmra.mxu0 %v2580
    %v4946 = vpop.f32.mrf.mxu0
    %v4947 = vadd.f32 %v4918, %v4946
    %v4948 = vpop.f32.mrf.mxu0
    %v4949 = vadd.f32 %v4920, %v4948
    %4950 = vmatmul.bf16.gmra.mxu0 %v3210
    %v4951 = vpop.f32.mrf.mxu0
    %v4952 = vadd.f32 %v4923, %v4951
    %v4953 = vpop.f32.mrf.mxu0
    %v4954 = vadd.f32 %v4925, %v4953
    %4955 = vmatmul.bf16.gmra.mxu0 %v4522
    %v4956 = vpop.f32.mrf.mxu0
    %v4957 = vadd.f32 %v4928, %v4956
    %v4958 = vpop.f32.mrf.mxu0
    %v4959 = vadd.f32 %v4930, %v4958
    %4960 = vdwg.mxu0
    %4961 = vmatpush.bf16.msra.mxu0 %v4747
    %4962 = vmatpush.bf16.msra.mxu0 %v4743
    %4963 = vmatpush.bf16.msra.mxu0 %v4739
    %4964 = vmatpush.bf16.msra.mxu0 %v4735
    %4965 = vmatpush.bf16.msra.mxu0 %v4731
    %4966 = vmatpush.bf16.msra.mxu0 %v4727
    %4967 = vmatpush.bf16.msra.mxu0 %v4723
    %4968 = vmatpush.bf16.msra.mxu0 %v4719
    %4969 = vmatmul.bf16.gmra.mxu0 %v2577
    %v4970 = vpop.f32.mrf.mxu0
    %v4971 = vadd.f32 0.0, %v4970
    %v4972 = vpop.f32.mrf.mxu0
    %v4973 = vadd.f32 0.0, %v4972
    %4974 = vmatmul.bf16.gmra.mxu0 %v2579
    %v4975 = vpop.f32.mrf.mxu0
    %v4976 = vadd.f32 0.0, %v4975
    %v4977 = vpop.f32.mrf.mxu0
    %v4978 = vadd.f32 0.0, %v4977
    %4979 = vmatmul.bf16.gmra.mxu0 %v3209
    %v4980 = vpop.f32.mrf.mxu0
    %v4981 = vadd.f32 0.0, %v4980
    %v4982 = vpop.f32.mrf.mxu0
    %v4983 = vadd.f32 0.0, %v4982
    %4984 = vmatmul.bf16.gmra.mxu0 %v4521
    %v4985 = vpop.f32.mrf.mxu0
    %v4986 = vadd.f32 0.0, %v4985
    %v4987 = vpop.f32.mrf.mxu0
    %v4988 = vadd.f32 0.0, %v4987
    %4989 = vdwg.mxu0
    %4990 = vmatpush.bf16.msra.mxu0 %v4779
    %4991 = vmatpush.bf16.msra.mxu0 %v4775
    %4992 = vmatpush.bf16.msra.mxu0 %v4771
    %4993 = vmatpush.bf16.msra.mxu0 %v4767
    %4994 = vmatpush.bf16.msra.mxu0 %v4763
    %4995 = vmatpush.bf16.msra.mxu0 %v4759
    %4996 = vmatpush.bf16.msra.mxu0 %v4755
    %4997 = vmatpush.bf16.msra.mxu0 %v4751
    %4998 = vmatmul.bf16.gmra.mxu0 %v2578
    %v4999 = vpop.f32.mrf.mxu0
    %v5000 = vadd.f32 %v4971, %v4999
    %v5001 = vpop.f32.mrf.mxu0
    %v5002 = vadd.f32 %v4973, %v5001
    %5003 = vmatmul.bf16.gmra.mxu0 %v2580
    %v5004 = vpop.f32.mrf.mxu0
    %v5005 = vadd.f32 %v4976, %v5004
    %v5006 = vpop.f32.mrf.mxu0
    %v5007 = vadd.f32 %v4978, %v5006
    %5008 = vmatmul.bf16.gmra.mxu0 %v3210
    %v5009 = vpop.f32.mrf.mxu0
    %v5010 = vadd.f32 %v4981, %v5009
    %v5011 = vpop.f32.mrf.mxu0
    %v5012 = vadd.f32 %v4983, %v5011
    %5013 = vmatmul.bf16.gmra.mxu0 %v4522
    %v5014 = vpop.f32.mrf.mxu0
    %v5015 = vadd.f32 %v4986, %v5014
    %v5016 = vpop.f32.mrf.mxu0
    %v5017 = vadd.f32 %v4988, %v5016
    %5018 = vdwg.mxu0
    %5019 = vmatpush.bf16.msra.mxu0 %v4748
    %5020 = vmatpush.bf16.msra.mxu0 %v4744
    %5021 = vmatpush.bf16.msra.mxu0 %v4740
    %5022 = vmatpush.bf16.msra.mxu0 %v4736
    %5023 = vmatpush.bf16.msra.mxu0 %v4732
    %5024 = vmatpush.bf16.msra.mxu0 %v4728
    %5025 = vmatpush.bf16.msra.mxu0 %v4724
    %5026 = vmatpush.bf16.msra.mxu0 %v4720
    %5027 = vmatmul.bf16.gmra.mxu0 %v2577
    %v5028 = vpop.f32.mrf.mxu0
    %v5029 = vadd.f32 0.0, %v5028
    %v5030 = vpop.f32.mrf.mxu0
    %v5031 = vadd.f32 0.0, %v5030
    %5032 = vmatmul.bf16.gmra.mxu0 %v2579
    %v5033 = vpop.f32.mrf.mxu0
    %v5034 = vadd.f32 0.0, %v5033
    %v5035 = vpop.f32.mrf.mxu0
    %v5036 = vadd.f32 0.0, %v5035
    %5037 = vmatmul.bf16.gmra.mxu0 %v3209
    %v5038 = vpop.f32.mrf.mxu0
    %v5039 = vadd.f32 0.0, %v5038
    %v5040 = vpop.f32.mrf.mxu0
    %v5041 = vadd.f32 0.0, %v5040
    %5042 = vmatmul.bf16.gmra.mxu0 %v4521
    %v5043 = vpop.f32.mrf.mxu0
    %v5044 = vadd.f32 0.0, %v5043
    %v5045 = vpop.f32.mrf.mxu0
    %v5046 = vadd.f32 0.0, %v5045
    %5047 = vdwg.mxu0
    %5048 = vmatpush.bf16.msra.mxu0 %v4780
    %5049 = vmatpush.bf16.msra.mxu0 %v4776
    %5050 = vmatpush.bf16.msra.mxu0 %v4772
    %5051 = vmatpush.bf16.msra.mxu0 %v4768
    %5052 = vmatpush.bf16.msra.mxu0 %v4764
    %5053 = vmatpush.bf16.msra.mxu0 %v4760
    %5054 = vmatpush.bf16.msra.mxu0 %v4756
    %5055 = vmatpush.bf16.msra.mxu0 %v4752
    %5056 = vmatmul.bf16.gmra.mxu0 %v2578
    %v5057 = vpop.f32.mrf.mxu0
    %v5058 = vadd.f32 %v5029, %v5057
    %v5059 = vpop.f32.mrf.mxu0
    %v5060 = vadd.f32 %v5031, %v5059
    %5061 = vmatmul.bf16.gmra.mxu0 %v2580
    %v5062 = vpop.f32.mrf.mxu0
    %v5063 = vadd.f32 %v5034, %v5062
    %v5064 = vpop.f32.mrf.mxu0
    %v5065 = vadd.f32 %v5036, %v5064
    %5066 = vmatmul.bf16.gmra.mxu0 %v3210
    %v5067 = vpop.f32.mrf.mxu0
    %v5068 = vadd.f32 %v5039, %v5067
    %v5069 = vpop.f32.mrf.mxu0
    %v5070 = vadd.f32 %v5041, %v5069
    %5071 = vmatmul.bf16.gmra.mxu0 %v4522
    %v5072 = vpop.f32.mrf.mxu0
    %v5073 = vadd.f32 %v5044, %v5072
    %v5074 = vpop.f32.mrf.mxu0
    %v5075 = vadd.f32 %v5046, %v5074
    %5076 = vdwg.mxu0
    %v5077 = vadd.f32 %v4421, %v4884
    %v5078 = vadd.f32 %v4422, %v4942
    %v5079 = vadd.f32 %v4423, %v5000
    %v5080 = vadd.f32 %v4424, %v5058
    %v5081 = vadd.f32 %v4425, %v4886
    %v5082 = vadd.f32 %v4426, %v4944
    %v5083 = vadd.f32 %v4427, %v5002
    %v5084 = vadd.f32 %v4428, %v5060
    %v5085 = vadd.f32 %v4429, %v4889
    %v5086 = vadd.f32 %v4430, %v4947
    %v5087 = vadd.f32 %v4431, %v5005
    %v5088 = vadd.f32 %v4432, %v5063
    %v5089 = vadd.f32 %v4433, %v4891
    %v5090 = vadd.f32 %v4434, %v4949
    %v5091 = vadd.f32 %v4435, %v5007
    %v5092 = vadd.f32 %v4436, %v5065
    %v5093 = vadd.f32 %v4437, %v4894
    %v5094 = vadd.f32 %v4438, %v4952
    %v5095 = vadd.f32 %v4439, %v5010
    %v5096 = vadd.f32 %v4440, %v5068
    %v5097 = vadd.f32 %v4441, %v4896
    %v5098 = vadd.f32 %v4442, %v4954
    %v5099 = vadd.f32 %v4443, %v5012
    %v5100 = vadd.f32 %v4444, %v5070
    %v5101 = vadd.f32 %v4445, %v4899
    %v5102 = vadd.f32 %v4446, %v4957
    %v5103 = vadd.f32 %v4447, %v5015
    %v5104 = vadd.f32 %v4448, %v5073
    %v5105 = vadd.f32 %v4449, %v4901
    %v5106 = vadd.f32 %v4450, %v4959
    %v5107 = vadd.f32 %v4451, %v5017
    %v5108 = vadd.f32 %v4452, %v5075
    %v5109 = vmax.f32 %v5077, %v5079
    %v5110 = vmax.f32 %v5078, %v5080
    %v5111 = vmax.f32 %v5081, %v5083
    %v5112 = vmax.f32 %v5082, %v5084
    %v5113 = vmax.f32 %v5085, %v5087
    %v5114 = vmax.f32 %v5086, %v5088
    %v5115 = vmax.f32 %v5089, %v5091
    %v5116 = vmax.f32 %v5090, %v5092
    %v5117 = vmax.f32 %v5093, %v5095
    %v5118 = vmax.f32 %v5094, %v5096
    %v5119 = vmax.f32 %v5097, %v5099
    %v5120 = vmax.f32 %v5098, %v5100
    %v5121 = vmax.f32 %v5101, %v5103
    %v5122 = vmax.f32 %v5102, %v5104
    %v5123 = vmax.f32 %v5105, %v5107
    %v5124 = vmax.f32 %v5106, %v5108
    %v5125 = vld [vmem:[#allocation9] sm:$0x3]
    %v5127 = vperm.slane %v5125, 0
    %v5128 = vperm.slane %v5125, 1
    %v5131 = vadd.f32 %v5109, %v5127
    %v5132 = vadd.f32 %v5110, %v5128
    %v5133 = vadd.f32 %v5111, %v5127
    %v5134 = vadd.f32 %v5112, %v5128
    %v5135 = vadd.f32 %v5113, %v5127
    %v5136 = vadd.f32 %v5114, %v5128
    %v5137 = vadd.f32 %v5115, %v5127
    %v5138 = vadd.f32 %v5116, %v5128
    %v5139 = vadd.f32 %v5117, %v5127
    %v5140 = vadd.f32 %v5118, %v5128
    %v5141 = vadd.f32 %v5119, %v5127
    %v5142 = vadd.f32 %v5120, %v5128
    %v5143 = vadd.f32 %v5121, %v5127
    %v5144 = vadd.f32 %v5122, %v5128
    %v5145 = vadd.f32 %v5123, %v5127
    %v5146 = vadd.f32 %v5124, %v5128
    %v5147 = vpack.c.bf16 %v5132, %v5131
    %v5148 = vpack.c.bf16 %v5134, %v5133
    %v5149 = vpack.c.bf16 %v5136, %v5135
    %v5150 = vpack.c.bf16 %v5138, %v5137
    %v5151 = vpack.c.bf16 %v5140, %v5139
    %v5152 = vpack.c.bf16 %v5142, %v5141
    %v5153 = vpack.c.bf16 %v5144, %v5143
    %v5154 = vpack.c.bf16 %v5146, %v5145
    %v5155 = vunpack.c.l.bf16 %v5147
    %v5156 = vunpack.c.h.bf16 %v5147
    %v5157 = vunpack.c.l.bf16 %v5148
    %v5158 = vunpack.c.h.bf16 %v5148
    %v5159 = vmax.f32 %v5155, %v5157
    %v5160 = vmax.f32 %v5156, %v5158
    %v5161 = vpack.c.bf16 %v5159, %v5159
    %v5162 = vpack.c.bf16 %v5160, %v5160
    %v5163 = vld [vmem:[#allocation10] sm:$0xff]
    %v5164 = vld [vmem:[#allocation10 + $0x8] sm:$0xff]
    %v5165 = vld [vmem:[#allocation10 + $0x10] sm:$0xff]
    %v5166 = vld [vmem:[#allocation10 + $0x18] sm:$0xff]
    %v5167 = vld [vmem:[#allocation10 + $0x20] sm:$0xff]
    %v5168 = vld [vmem:[#allocation10 + $0x28] sm:$0xff]
    %v5169 = vld [vmem:[#allocation10 + $0x30] sm:$0xff]
    %v5170 = vld [vmem:[#allocation10 + $0x38] sm:$0xff]
    %v5171 = vld [vmem:[#allocation10 + $0x40] sm:$0xff]
    %v5172 = vld [vmem:[#allocation10 + $0x48] sm:$0xff]
    %v5173 = vld [vmem:[#allocation10 + $0x50] sm:$0xff]
    %v5174 = vld [vmem:[#allocation10 + $0x58] sm:$0xff]
    %v5175 = vld [vmem:[#allocation10 + $0x60] sm:$0xff]
    %v5176 = vld [vmem:[#allocation10 + $0x68] sm:$0xff]
    %v5177 = vld [vmem:[#allocation10 + $0x70] sm:$0xff]
    %v5178 = vld [vmem:[#allocation10 + $0x78] sm:$0xff]
    %v5179 = vld [vmem:[#allocation10 + $0x80] sm:$0xff]
    %v5180 = vld [vmem:[#allocation10 + $0x88] sm:$0xff]
    %v5181 = vld [vmem:[#allocation10 + $0x90] sm:$0xff]
    %v5182 = vld [vmem:[#allocation10 + $0x98] sm:$0xff]
    %v5183 = vld [vmem:[#allocation10 + $0xa0] sm:$0xff]
    %v5184 = vld [vmem:[#allocation10 + $0xa8] sm:$0xff]
    %v5185 = vld [vmem:[#allocation10 + $0xb0] sm:$0xff]
    %v5186 = vld [vmem:[#allocation10 + $0xb8] sm:$0xff]
    %v5187 = vld [vmem:[#allocation10 + $0xc0] sm:$0xff]
    %v5188 = vld [vmem:[#allocation10 + $0xc8] sm:$0xff]
    %v5189 = vld [vmem:[#allocation10 + $0xd0] sm:$0xff]
    %v5190 = vld [vmem:[#allocation10 + $0xd8] sm:$0xff]
    %v5191 = vld [vmem:[#allocation10 + $0xe0] sm:$0xff]
    %v5192 = vld [vmem:[#allocation10 + $0xe8] sm:$0xff]
    %v5193 = vld [vmem:[#allocation10 + $0xf0] sm:$0xff]
    %v5194 = vld [vmem:[#allocation10 + $0xf8] sm:$0xff]
    %v5195 = vld [vmem:[#allocation10 + $0x100] sm:$0xff]
    %v5196 = vld [vmem:[#allocation10 + $0x108] sm:$0xff]
    %v5197 = vld [vmem:[#allocation10 + $0x110] sm:$0xff]
    %v5198 = vld [vmem:[#allocation10 + $0x118] sm:$0xff]
    %v5199 = vld [vmem:[#allocation10 + $0x120] sm:$0xff]
    %v5200 = vld [vmem:[#allocation10 + $0x128] sm:$0xff]
    %v5201 = vld [vmem:[#allocation10 + $0x130] sm:$0xff]
    %v5202 = vld [vmem:[#allocation10 + $0x138] sm:$0xff]
    %v5203 = vld [vmem:[#allocation10 + $0x140] sm:$0xff]
    %v5204 = vld [vmem:[#allocation10 + $0x148] sm:$0xff]
    %v5205 = vld [vmem:[#allocation10 + $0x150] sm:$0xff]
    %v5206 = vld [vmem:[#allocation10 + $0x158] sm:$0xff]
    %v5207 = vld [vmem:[#allocation10 + $0x160] sm:$0xff]
    %v5208 = vld [vmem:[#allocation10 + $0x168] sm:$0xff]
    %v5209 = vld [vmem:[#allocation10 + $0x170] sm:$0xff]
    %v5210 = vld [vmem:[#allocation10 + $0x178] sm:$0xff]
    %v5211 = vld [vmem:[#allocation10 + $0x180] sm:$0xff]
    %v5212 = vld [vmem:[#allocation10 + $0x188] sm:$0xff]
    %v5213 = vld [vmem:[#allocation10 + $0x190] sm:$0xff]
    %v5214 = vld [vmem:[#allocation10 + $0x198] sm:$0xff]
    %v5215 = vld [vmem:[#allocation10 + $0x1a0] sm:$0xff]
    %v5216 = vld [vmem:[#allocation10 + $0x1a8] sm:$0xff]
    %v5217 = vld [vmem:[#allocation10 + $0x1b0] sm:$0xff]
    %v5218 = vld [vmem:[#allocation10 + $0x1b8] sm:$0xff]
    %v5219 = vld [vmem:[#allocation10 + $0x1c0] sm:$0xff]
    %v5220 = vld [vmem:[#allocation10 + $0x1c8] sm:$0xff]
    %v5221 = vld [vmem:[#allocation10 + $0x1d0] sm:$0xff]
    %v5222 = vld [vmem:[#allocation10 + $0x1d8] sm:$0xff]
    %v5223 = vld [vmem:[#allocation10 + $0x1e0] sm:$0xff]
    %v5224 = vld [vmem:[#allocation10 + $0x1e8] sm:$0xff]
    %v5225 = vld [vmem:[#allocation10 + $0x1f0] sm:$0xff]
    %v5226 = vld [vmem:[#allocation10 + $0x1f8] sm:$0xff]
    %v5227 = vunpack.c.l.bf16 %v5149
    %v5228 = vunpack.c.h.bf16 %v5149
    %v5229 = vunpack.c.l.bf16 %v5150
    %v5230 = vunpack.c.h.bf16 %v5150
    %v5231 = vmax.f32 %v5227, %v5229
    %v5232 = vmax.f32 %v5228, %v5230
    %v5233 = vpack.c.bf16 %v5231, %v5231
    %v5234 = vpack.c.bf16 %v5232, %v5232
    %s5235 = scalar_lea.vmem [#allocation10], 512
    %v5236 = vld [vmem:[%s5235] sm:$0xff]
    %v5237 = vld [vmem:[%s5235 + $0x8] sm:$0xff]
    %v5238 = vld [vmem:[%s5235 + $0x10] sm:$0xff]
    %v5239 = vld [vmem:[%s5235 + $0x18] sm:$0xff]
    %v5240 = vld [vmem:[%s5235 + $0x20] sm:$0xff]
    %v5241 = vld [vmem:[%s5235 + $0x28] sm:$0xff]
    %v5242 = vld [vmem:[%s5235 + $0x30] sm:$0xff]
    %v5243 = vld [vmem:[%s5235 + $0x38] sm:$0xff]
    %v5244 = vld [vmem:[%s5235 + $0x40] sm:$0xff]
    %v5245 = vld [vmem:[%s5235 + $0x48] sm:$0xff]
    %v5246 = vld [vmem:[%s5235 + $0x50] sm:$0xff]
    %v5247 = vld [vmem:[%s5235 + $0x58] sm:$0xff]
    %v5248 = vld [vmem:[%s5235 + $0x60] sm:$0xff]
    %v5249 = vld [vmem:[%s5235 + $0x68] sm:$0xff]
    %v5250 = vld [vmem:[%s5235 + $0x70] sm:$0xff]
    %v5251 = vld [vmem:[%s5235 + $0x78] sm:$0xff]
    %v5252 = vld [vmem:[%s5235 + $0x80] sm:$0xff]
    %v5253 = vld [vmem:[%s5235 + $0x88] sm:$0xff]
    %v5254 = vld [vmem:[%s5235 + $0x90] sm:$0xff]
    %v5255 = vld [vmem:[%s5235 + $0x98] sm:$0xff]
    %v5256 = vld [vmem:[%s5235 + $0xa0] sm:$0xff]
    %v5257 = vld [vmem:[%s5235 + $0xa8] sm:$0xff]
    %v5258 = vld [vmem:[%s5235 + $0xb0] sm:$0xff]
    %v5259 = vld [vmem:[%s5235 + $0xb8] sm:$0xff]
    %v5260 = vld [vmem:[%s5235 + $0xc0] sm:$0xff]
    %v5261 = vld [vmem:[%s5235 + $0xc8] sm:$0xff]
    %v5262 = vld [vmem:[%s5235 + $0xd0] sm:$0xff]
    %v5263 = vld [vmem:[%s5235 + $0xd8] sm:$0xff]
    %v5264 = vld [vmem:[%s5235 + $0xe0] sm:$0xff]
    %v5265 = vld [vmem:[%s5235 + $0xe8] sm:$0xff]
    %v5266 = vld [vmem:[%s5235 + $0xf0] sm:$0xff]
    %v5267 = vld [vmem:[%s5235 + $0xf8] sm:$0xff]
    %v5268 = vld [vmem:[%s5235 + $0x100] sm:$0xff]
    %v5269 = vld [vmem:[%s5235 + $0x108] sm:$0xff]
    %v5270 = vld [vmem:[%s5235 + $0x110] sm:$0xff]
    %v5271 = vld [vmem:[%s5235 + $0x118] sm:$0xff]
    %v5272 = vld [vmem:[%s5235 + $0x120] sm:$0xff]
    %v5273 = vld [vmem:[%s5235 + $0x128] sm:$0xff]
    %v5274 = vld [vmem:[%s5235 + $0x130] sm:$0xff]
    %v5275 = vld [vmem:[%s5235 + $0x138] sm:$0xff]
    %v5276 = vld [vmem:[%s5235 + $0x140] sm:$0xff]
    %v5277 = vld [vmem:[%s5235 + $0x148] sm:$0xff]
    %v5278 = vld [vmem:[%s5235 + $0x150] sm:$0xff]
    %v5279 = vld [vmem:[%s5235 + $0x158] sm:$0xff]
    %v5280 = vld [vmem:[%s5235 + $0x160] sm:$0xff]
    %v5281 = vld [vmem:[%s5235 + $0x168] sm:$0xff]
    %v5282 = vld [vmem:[%s5235 + $0x170] sm:$0xff]
    %v5283 = vld [vmem:[%s5235 + $0x178] sm:$0xff]
    %v5284 = vld [vmem:[%s5235 + $0x180] sm:$0xff]
    %v5285 = vld [vmem:[%s5235 + $0x188] sm:$0xff]
    %v5286 = vld [vmem:[%s5235 + $0x190] sm:$0xff]
    %v5287 = vld [vmem:[%s5235 + $0x198] sm:$0xff]
    %v5288 = vld [vmem:[%s5235 + $0x1a0] sm:$0xff]
    %v5289 = vld [vmem:[%s5235 + $0x1a8] sm:$0xff]
    %v5290 = vld [vmem:[%s5235 + $0x1b0] sm:$0xff]
    %v5291 = vld [vmem:[%s5235 + $0x1b8] sm:$0xff]
    %v5292 = vld [vmem:[%s5235 + $0x1c0] sm:$0xff]
    %v5293 = vld [vmem:[%s5235 + $0x1c8] sm:$0xff]
    %v5294 = vld [vmem:[%s5235 + $0x1d0] sm:$0xff]
    %v5295 = vld [vmem:[%s5235 + $0x1d8] sm:$0xff]
    %v5296 = vld [vmem:[%s5235 + $0x1e0] sm:$0xff]
    %v5297 = vld [vmem:[%s5235 + $0x1e8] sm:$0xff]
    %v5298 = vld [vmem:[%s5235 + $0x1f0] sm:$0xff]
    %v5299 = vld [vmem:[%s5235 + $0x1f8] sm:$0xff]
    %v5364 = vunpack.c.l.b16 %v5236
    %v5365 = vunpack.c.h.b16 %v5236
    %v5366 = vunpack.c.l.b16 %v5237
    %v5367 = vunpack.c.h.b16 %v5237
    %v5368 = vunpack.c.l.b16 %v5238
    %v5369 = vunpack.c.h.b16 %v5238
    %v5370 = vunpack.c.l.b16 %v5239
    %v5371 = vunpack.c.h.b16 %v5239
    %v5372 = vunpack.c.l.b16 %v5240
    %v5373 = vunpack.c.h.b16 %v5240
    %v5374 = vunpack.c.l.b16 %v5241
    %v5375 = vunpack.c.h.b16 %v5241
    %v5376 = vunpack.c.l.b16 %v5242
    %v5377 = vunpack.c.h.b16 %v5242
    %v5378 = vunpack.c.l.b16 %v5243
    %v5379 = vunpack.c.h.b16 %v5243
    %v5380 = vunpack.c.l.b16 %v5244
    %v5381 = vunpack.c.h.b16 %v5244
    %v5382 = vunpack.c.l.b16 %v5245
    %v5383 = vunpack.c.h.b16 %v5245
    %v5384 = vunpack.c.l.b16 %v5246
    %v5385 = vunpack.c.h.b16 %v5246
    %v5386 = vunpack.c.l.b16 %v5247
    %v5387 = vunpack.c.h.b16 %v5247
    %v5388 = vunpack.c.l.b16 %v5248
    %v5389 = vunpack.c.h.b16 %v5248
    %v5390 = vunpack.c.l.b16 %v5249
    %v5391 = vunpack.c.h.b16 %v5249
    %v5392 = vunpack.c.l.b16 %v5250
    %v5393 = vunpack.c.h.b16 %v5250
    %v5394 = vunpack.c.l.b16 %v5251
    %v5395 = vunpack.c.h.b16 %v5251
    %v5396 = vunpack.c.l.b16 %v5252
    %v5397 = vunpack.c.h.b16 %v5252
    %v5398 = vunpack.c.l.b16 %v5253
    %v5399 = vunpack.c.h.b16 %v5253
    %v5400 = vunpack.c.l.b16 %v5254
    %v5401 = vunpack.c.h.b16 %v5254
    %v5402 = vunpack.c.l.b16 %v5255
    %v5403 = vunpack.c.h.b16 %v5255
    %v5404 = vunpack.c.l.b16 %v5256
    %v5405 = vunpack.c.h.b16 %v5256
    %v5406 = vunpack.c.l.b16 %v5257
    %v5407 = vunpack.c.h.b16 %v5257
    %v5408 = vunpack.c.l.b16 %v5258
    %v5409 = vunpack.c.h.b16 %v5258
    %v5410 = vunpack.c.l.b16 %v5259
    %v5411 = vunpack.c.h.b16 %v5259
    %v5412 = vunpack.c.l.b16 %v5260
    %v5413 = vunpack.c.h.b16 %v5260
    %v5414 = vunpack.c.l.b16 %v5261
    %v5415 = vunpack.c.h.b16 %v5261
    %v5416 = vunpack.c.l.b16 %v5262
    %v5417 = vunpack.c.h.b16 %v5262
    %v5418 = vunpack.c.l.b16 %v5263
    %v5419 = vunpack.c.h.b16 %v5263
    %v5420 = vunpack.c.l.b16 %v5264
    %v5421 = vunpack.c.h.b16 %v5264
    %v5422 = vunpack.c.l.b16 %v5265
    %v5423 = vunpack.c.h.b16 %v5265
    %v5424 = vunpack.c.l.b16 %v5266
    %v5425 = vunpack.c.h.b16 %v5266
    %v5426 = vunpack.c.l.b16 %v5267
    %v5427 = vunpack.c.h.b16 %v5267
    %v5428 = vunpack.c.l.b16 %v5268
    %v5429 = vunpack.c.h.b16 %v5268
    %v5430 = vunpack.c.l.b16 %v5269
    %v5431 = vunpack.c.h.b16 %v5269
    %v5432 = vunpack.c.l.b16 %v5270
    %v5433 = vunpack.c.h.b16 %v5270
    %v5434 = vunpack.c.l.b16 %v5271
    %v5435 = vunpack.c.h.b16 %v5271
    %v5436 = vunpack.c.l.b16 %v5272
    %v5437 = vunpack.c.h.b16 %v5272
    %v5438 = vunpack.c.l.b16 %v5273
    %v5439 = vunpack.c.h.b16 %v5273
    %v5440 = vunpack.c.l.b16 %v5274
    %v5441 = vunpack.c.h.b16 %v5274
    %v5442 = vunpack.c.l.b16 %v5275
    %v5443 = vunpack.c.h.b16 %v5275
    %v5444 = vunpack.c.l.b16 %v5276
    %v5445 = vunpack.c.h.b16 %v5276
    %v5446 = vunpack.c.l.b16 %v5277
    %v5447 = vunpack.c.h.b16 %v5277
    %v5448 = vunpack.c.l.b16 %v5278
    %v5449 = vunpack.c.h.b16 %v5278
    %v5450 = vunpack.c.l.b16 %v5279
    %v5451 = vunpack.c.h.b16 %v5279
    %v5452 = vunpack.c.l.b16 %v5280
    %v5453 = vunpack.c.h.b16 %v5280
    %v5454 = vunpack.c.l.b16 %v5281
    %v5455 = vunpack.c.h.b16 %v5281
    %v5456 = vunpack.c.l.b16 %v5282
    %v5457 = vunpack.c.h.b16 %v5282
    %v5458 = vunpack.c.l.b16 %v5283
    %v5459 = vunpack.c.h.b16 %v5283
    %v5460 = vunpack.c.l.b16 %v5284
    %v5461 = vunpack.c.h.b16 %v5284
    %v5462 = vunpack.c.l.b16 %v5285
    %v5463 = vunpack.c.h.b16 %v5285
    %v5464 = vunpack.c.l.b16 %v5286
    %v5465 = vunpack.c.h.b16 %v5286
    %v5466 = vunpack.c.l.b16 %v5287
    %v5467 = vunpack.c.h.b16 %v5287
    %v5468 = vunpack.c.l.b16 %v5288
    %v5469 = vunpack.c.h.b16 %v5288
    %v5470 = vunpack.c.l.b16 %v5289
    %v5471 = vunpack.c.h.b16 %v5289
    %v5472 = vunpack.c.l.b16 %v5290
    %v5473 = vunpack.c.h.b16 %v5290
    %v5474 = vunpack.c.l.b16 %v5291
    %v5475 = vunpack.c.h.b16 %v5291
    %v5476 = vunpack.c.l.b16 %v5292
    %v5477 = vunpack.c.h.b16 %v5292
    %v5478 = vunpack.c.l.b16 %v5293
    %v5479 = vunpack.c.h.b16 %v5293
    %v5480 = vunpack.c.l.b16 %v5294
    %v5481 = vunpack.c.h.b16 %v5294
    %v5482 = vunpack.c.l.b16 %v5295
    %v5483 = vunpack.c.h.b16 %v5295
    %v5484 = vunpack.c.l.b16 %v5296
    %v5485 = vunpack.c.h.b16 %v5296
    %v5486 = vunpack.c.l.b16 %v5297
    %v5487 = vunpack.c.h.b16 %v5297
    %v5488 = vunpack.c.l.b16 %v5298
    %v5489 = vunpack.c.h.b16 %v5298
    %v5490 = vunpack.c.l.b16 %v5299
    %v5491 = vunpack.c.h.b16 %v5299
    %v5492 = vpack.c.b16 %v5368, %v5364
    %v5493 = vpack.c.b16 %v5369, %v5365
    %v5494 = vpack.c.b16 %v5370, %v5366
    %v5495 = vpack.c.b16 %v5371, %v5367
    %v5496 = vpack.c.b16 %v5376, %v5372
    %v5497 = vpack.c.b16 %v5377, %v5373
    %v5498 = vpack.c.b16 %v5378, %v5374
    %v5499 = vpack.c.b16 %v5379, %v5375
    %v5500 = vpack.c.b16 %v5384, %v5380
    %v5501 = vpack.c.b16 %v5385, %v5381
    %v5502 = vpack.c.b16 %v5386, %v5382
    %v5503 = vpack.c.b16 %v5387, %v5383
    %v5504 = vpack.c.b16 %v5392, %v5388
    %v5505 = vpack.c.b16 %v5393, %v5389
    %v5506 = vpack.c.b16 %v5394, %v5390
    %v5507 = vpack.c.b16 %v5395, %v5391
    %v5508 = vpack.c.b16 %v5400, %v5396
    %v5509 = vpack.c.b16 %v5401, %v5397
    %v5510 = vpack.c.b16 %v5402, %v5398
    %v5511 = vpack.c.b16 %v5403, %v5399
    %v5512 = vpack.c.b16 %v5408, %v5404
    %v5513 = vpack.c.b16 %v5409, %v5405
    %v5514 = vpack.c.b16 %v5410, %v5406
    %v5515 = vpack.c.b16 %v5411, %v5407
    %v5516 = vpack.c.b16 %v5416, %v5412
    %v5517 = vpack.c.b16 %v5417, %v5413
    %v5518 = vpack.c.b16 %v5418, %v5414
    %v5519 = vpack.c.b16 %v5419, %v5415
    %v5520 = vpack.c.b16 %v5424, %v5420
    %v5521 = vpack.c.b16 %v5425, %v5421
    %v5522 = vpack.c.b16 %v5426, %v5422
    %v5523 = vpack.c.b16 %v5427, %v5423
    %v5524 = vpack.c.b16 %v5432, %v5428
    %v5525 = vpack.c.b16 %v5433, %v5429
    %v5526 = vpack.c.b16 %v5434, %v5430
    %v5527 = vpack.c.b16 %v5435, %v5431
    %v5528 = vpack.c.b16 %v5440, %v5436
    %v5529 = vpack.c.b16 %v5441, %v5437
    %v5530 = vpack.c.b16 %v5442, %v5438
    %v5531 = vpack.c.b16 %v5443, %v5439
    %v5532 = vpack.c.b16 %v5448, %v5444
    %v5533 = vpack.c.b16 %v5449, %v5445
    %v5534 = vpack.c.b16 %v5450, %v5446
    %v5535 = vpack.c.b16 %v5451, %v5447
    %v5536 = vpack.c.b16 %v5456, %v5452
    %v5537 = vpack.c.b16 %v5457, %v5453
    %v5538 = vpack.c.b16 %v5458, %v5454
    %v5539 = vpack.c.b16 %v5459, %v5455
    %v5540 = vpack.c.b16 %v5464, %v5460
    %v5541 = vpack.c.b16 %v5465, %v5461
    %v5542 = vpack.c.b16 %v5466, %v5462
    %v5543 = vpack.c.b16 %v5467, %v5463
    %v5544 = vpack.c.b16 %v5472, %v5468
    %v5545 = vpack.c.b16 %v5473, %v5469
    %v5546 = vpack.c.b16 %v5474, %v5470
    %v5547 = vpack.c.b16 %v5475, %v5471
    %v5548 = vpack.c.b16 %v5480, %v5476
    %v5549 = vpack.c.b16 %v5481, %v5477
    %v5550 = vpack.c.b16 %v5482, %v5478
    %v5551 = vpack.c.b16 %v5483, %v5479
    %v5552 = vpack.c.b16 %v5488, %v5484
    %v5553 = vpack.c.b16 %v5489, %v5485
    %v5554 = vpack.c.b16 %v5490, %v5486
    %v5555 = vpack.c.b16 %v5491, %v5487
    %5620 = vmatpush.bf16.msra.mxu0 %v5520
    %5621 = vmatpush.bf16.msra.mxu0 %v5516
    %5622 = vmatpush.bf16.msra.mxu0 %v5512
    %5623 = vmatpush.bf16.msra.mxu0 %v5508
    %5624 = vmatpush.bf16.msra.mxu0 %v5504
    %5625 = vmatpush.bf16.msra.mxu0 %v5500
    %5626 = vmatpush.bf16.msra.mxu0 %v5496
    %5627 = vmatpush.bf16.msra.mxu0 %v5492
    %5628 = vmatmul.bf16.gmra.mxu0 %v5233
    %v5629 = vpop.f32.mrf.mxu0
    %v5630 = vadd.f32 0.0, %v5629
    %v5631 = vpop.f32.mrf.mxu0
    %5632 = vdwg.mxu0
    %5633 = vmatpush.bf16.msra.mxu0 %v5552
    %5634 = vmatpush.bf16.msra.mxu0 %v5548
    %5635 = vmatpush.bf16.msra.mxu0 %v5544
    %5636 = vmatpush.bf16.msra.mxu0 %v5540
    %5637 = vmatpush.bf16.msra.mxu0 %v5536
    %5638 = vmatpush.bf16.msra.mxu0 %v5532
    %5639 = vmatpush.bf16.msra.mxu0 %v5528
    %5640 = vmatpush.bf16.msra.mxu0 %v5524
    %5641 = vmatmul.bf16.gmra.mxu0 %v5234
    %v5642 = vpop.f32.mrf.mxu0
    %v5643 = vadd.f32 %v5630, %v5642
    %v5644 = vpop.f32.mrf.mxu0
    %5645 = vdwg.mxu0
    %5646 = vmatpush.bf16.msra.mxu0 %v5521
    %5647 = vmatpush.bf16.msra.mxu0 %v5517
    %5648 = vmatpush.bf16.msra.mxu0 %v5513
    %5649 = vmatpush.bf16.msra.mxu0 %v5509
    %5650 = vmatpush.bf16.msra.mxu0 %v5505
    %5651 = vmatpush.bf16.msra.mxu0 %v5501
    %5652 = vmatpush.bf16.msra.mxu0 %v5497
    %5653 = vmatpush.bf16.msra.mxu0 %v5493
    %5654 = vmatmul.bf16.gmra.mxu0 %v5233
    %v5655 = vpop.f32.mrf.mxu0
    %v5656 = vadd.f32 0.0, %v5655
    %v5657 = vpop.f32.mrf.mxu0
    %5658 = vdwg.mxu0
    %5659 = vmatpush.bf16.msra.mxu0 %v5553
    %5660 = vmatpush.bf16.msra.mxu0 %v5549
    %5661 = vmatpush.bf16.msra.mxu0 %v5545
    %5662 = vmatpush.bf16.msra.mxu0 %v5541
    %5663 = vmatpush.bf16.msra.mxu0 %v5537
    %5664 = vmatpush.bf16.msra.mxu0 %v5533
    %5665 = vmatpush.bf16.msra.mxu0 %v5529
    %5666 = vmatpush.bf16.msra.mxu0 %v5525
    %5667 = vmatmul.bf16.gmra.mxu0 %v5234
    %v5668 = vpop.f32.mrf.mxu0
    %v5669 = vadd.f32 %v5656, %v5668
    %v5670 = vpop.f32.mrf.mxu0
    %5671 = vdwg.mxu0
    %5672 = vmatpush.bf16.msra.mxu0 %v5522
    %5673 = vmatpush.bf16.msra.mxu0 %v5518
    %5674 = vmatpush.bf16.msra.mxu0 %v5514
    %5675 = vmatpush.bf16.msra.mxu0 %v5510
    %5676 = vmatpush.bf16.msra.mxu0 %v5506
    %5677 = vmatpush.bf16.msra.mxu0 %v5502
    %5678 = vmatpush.bf16.msra.mxu0 %v5498
    %5679 = vmatpush.bf16.msra.mxu0 %v5494
    %5680 = vmatmul.bf16.gmra.mxu0 %v5233
    %v5681 = vpop.f32.mrf.mxu0
    %v5682 = vadd.f32 0.0, %v5681
    %v5683 = vpop.f32.mrf.mxu0
    %5684 = vdwg.mxu0
    %5685 = vmatpush.bf16.msra.mxu0 %v5554
    %5686 = vmatpush.bf16.msra.mxu0 %v5550
    %5687 = vmatpush.bf16.msra.mxu0 %v5546
    %5688 = vmatpush.bf16.msra.mxu0 %v5542
    %5689 = vmatpush.bf16.msra.mxu0 %v5538
    %5690 = vmatpush.bf16.msra.mxu0 %v5534
    %5691 = vmatpush.bf16.msra.mxu0 %v5530
    %5692 = vmatpush.bf16.msra.mxu0 %v5526
    %5693 = vmatmul.bf16.gmra.mxu0 %v5234
    %v5694 = vpop.f32.mrf.mxu0
    %v5695 = vadd.f32 %v5682, %v5694
    %v5696 = vpop.f32.mrf.mxu0
    %5697 = vdwg.mxu0
    %5698 = vmatpush.bf16.msra.mxu0 %v5523
    %5699 = vmatpush.bf16.msra.mxu0 %v5519
    %5700 = vmatpush.bf16.msra.mxu0 %v5515
    %5701 = vmatpush.bf16.msra.mxu0 %v5511
    %5702 = vmatpush.bf16.msra.mxu0 %v5507
    %5703 = vmatpush.bf16.msra.mxu0 %v5503
    %5704 = vmatpush.bf16.msra.mxu0 %v5499
    %5705 = vmatpush.bf16.msra.mxu0 %v5495
    %5706 = vmatmul.bf16.gmra.mxu0 %v5233
    %v5707 = vpop.f32.mrf.mxu0
    %v5708 = vadd.f32 0.0, %v5707
    %v5709 = vpop.f32.mrf.mxu0
    %5710 = vdwg.mxu0
    %5711 = vmatpush.bf16.msra.mxu0 %v5555
    %5712 = vmatpush.bf16.msra.mxu0 %v5551
    %5713 = vmatpush.bf16.msra.mxu0 %v5547
    %5714 = vmatpush.bf16.msra.mxu0 %v5543
    %5715 = vmatpush.bf16.msra.mxu0 %v5539
    %5716 = vmatpush.bf16.msra.mxu0 %v5535
    %5717 = vmatpush.bf16.msra.mxu0 %v5531
    %5718 = vmatpush.bf16.msra.mxu0 %v5527
    %5719 = vmatmul.bf16.gmra.mxu0 %v5234
    %v5720 = vpop.f32.mrf.mxu0
    %v5721 = vadd.f32 %v5708, %v5720
    %v5722 = vpop.f32.mrf.mxu0
    %5723 = vdwg.mxu0
    %v5788 = vunpack.c.l.b16 %v5163
    %v5789 = vunpack.c.h.b16 %v5163
    %v5790 = vunpack.c.l.b16 %v5164
    %v5791 = vunpack.c.h.b16 %v5164
    %v5792 = vunpack.c.l.b16 %v5165
    %v5793 = vunpack.c.h.b16 %v5165
    %v5794 = vunpack.c.l.b16 %v5166
    %v5795 = vunpack.c.h.b16 %v5166
    %v5796 = vunpack.c.l.b16 %v5167
    %v5797 = vunpack.c.h.b16 %v5167
    %v5798 = vunpack.c.l.b16 %v5168
    %v5799 = vunpack.c.h.b16 %v5168
    %v5800 = vunpack.c.l.b16 %v5169
    %v5801 = vunpack.c.h.b16 %v5169
    %v5802 = vunpack.c.l.b16 %v5170
    %v5803 = vunpack.c.h.b16 %v5170
    %v5804 = vunpack.c.l.b16 %v5171
    %v5805 = vunpack.c.h.b16 %v5171
    %v5806 = vunpack.c.l.b16 %v5172
    %v5807 = vunpack.c.h.b16 %v5172
    %v5808 = vunpack.c.l.b16 %v5173
    %v5809 = vunpack.c.h.b16 %v5173
    %v5810 = vunpack.c.l.b16 %v5174
    %v5811 = vunpack.c.h.b16 %v5174
    %v5812 = vunpack.c.l.b16 %v5175
    %v5813 = vunpack.c.h.b16 %v5175
    %v5814 = vunpack.c.l.b16 %v5176
    %v5815 = vunpack.c.h.b16 %v5176
    %v5816 = vunpack.c.l.b16 %v5177
    %v5817 = vunpack.c.h.b16 %v5177
    %v5818 = vunpack.c.l.b16 %v5178
    %v5819 = vunpack.c.h.b16 %v5178
    %v5820 = vunpack.c.l.b16 %v5179
    %v5821 = vunpack.c.h.b16 %v5179
    %v5822 = vunpack.c.l.b16 %v5180
    %v5823 = vunpack.c.h.b16 %v5180
    %v5824 = vunpack.c.l.b16 %v5181
    %v5825 = vunpack.c.h.b16 %v5181
    %v5826 = vunpack.c.l.b16 %v5182
    %v5827 = vunpack.c.h.b16 %v5182
    %v5828 = vunpack.c.l.b16 %v5183
    %v5829 = vunpack.c.h.b16 %v5183
    %v5830 = vunpack.c.l.b16 %v5184
    %v5831 = vunpack.c.h.b16 %v5184
    %v5832 = vunpack.c.l.b16 %v5185
    %v5833 = vunpack.c.h.b16 %v5185
    %v5834 = vunpack.c.l.b16 %v5186
    %v5835 = vunpack.c.h.b16 %v5186
    %v5836 = vunpack.c.l.b16 %v5187
    %v5837 = vunpack.c.h.b16 %v5187
    %v5838 = vunpack.c.l.b16 %v5188
    %v5839 = vunpack.c.h.b16 %v5188
    %v5840 = vunpack.c.l.b16 %v5189
    %v5841 = vunpack.c.h.b16 %v5189
    %v5842 = vunpack.c.l.b16 %v5190
    %v5843 = vunpack.c.h.b16 %v5190
    %v5844 = vunpack.c.l.b16 %v5191
    %v5845 = vunpack.c.h.b16 %v5191
    %v5846 = vunpack.c.l.b16 %v5192
    %v5847 = vunpack.c.h.b16 %v5192
    %v5848 = vunpack.c.l.b16 %v5193
    %v5849 = vunpack.c.h.b16 %v5193
    %v5850 = vunpack.c.l.b16 %v5194
    %v5851 = vunpack.c.h.b16 %v5194
    %v5852 = vunpack.c.l.b16 %v5195
    %v5853 = vunpack.c.h.b16 %v5195
    %v5854 = vunpack.c.l.b16 %v5196
    %v5855 = vunpack.c.h.b16 %v5196
    %v5856 = vunpack.c.l.b16 %v5197
    %v5857 = vunpack.c.h.b16 %v5197
    %v5858 = vunpack.c.l.b16 %v5198
    %v5859 = vunpack.c.h.b16 %v5198
    %v5860 = vunpack.c.l.b16 %v5199
    %v5861 = vunpack.c.h.b16 %v5199
    %v5862 = vunpack.c.l.b16 %v5200
    %v5863 = vunpack.c.h.b16 %v5200
    %v5864 = vunpack.c.l.b16 %v5201
    %v5865 = vunpack.c.h.b16 %v5201
    %v5866 = vunpack.c.l.b16 %v5202
    %v5867 = vunpack.c.h.b16 %v5202
    %v5868 = vunpack.c.l.b16 %v5203
    %v5869 = vunpack.c.h.b16 %v5203
    %v5870 = vunpack.c.l.b16 %v5204
    %v5871 = vunpack.c.h.b16 %v5204
    %v5872 = vunpack.c.l.b16 %v5205
    %v5873 = vunpack.c.h.b16 %v5205
    %v5874 = vunpack.c.l.b16 %v5206
    %v5875 = vunpack.c.h.b16 %v5206
    %v5876 = vunpack.c.l.b16 %v5207
    %v5877 = vunpack.c.h.b16 %v5207
    %v5878 = vunpack.c.l.b16 %v5208
    %v5879 = vunpack.c.h.b16 %v5208
    %v5880 = vunpack.c.l.b16 %v5209
    %v5881 = vunpack.c.h.b16 %v5209
    %v5882 = vunpack.c.l.b16 %v5210
    %v5883 = vunpack.c.h.b16 %v5210
    %v5884 = vunpack.c.l.b16 %v5211
    %v5885 = vunpack.c.h.b16 %v5211
    %v5886 = vunpack.c.l.b16 %v5212
    %v5887 = vunpack.c.h.b16 %v5212
    %v5888 = vunpack.c.l.b16 %v5213
    %v5889 = vunpack.c.h.b16 %v5213
    %v5890 = vunpack.c.l.b16 %v5214
    %v5891 = vunpack.c.h.b16 %v5214
    %v5892 = vunpack.c.l.b16 %v5215
    %v5893 = vunpack.c.h.b16 %v5215
    %v5894 = vunpack.c.l.b16 %v5216
    %v5895 = vunpack.c.h.b16 %v5216
    %v5896 = vunpack.c.l.b16 %v5217
    %v5897 = vunpack.c.h.b16 %v5217
    %v5898 = vunpack.c.l.b16 %v5218
    %v5899 = vunpack.c.h.b16 %v5218
    %v5900 = vunpack.c.l.b16 %v5219
    %v5901 = vunpack.c.h.b16 %v5219
    %v5902 = vunpack.c.l.b16 %v5220
    %v5903 = vunpack.c.h.b16 %v5220
    %v5904 = vunpack.c.l.b16 %v5221
    %v5905 = vunpack.c.h.b16 %v5221
    %v5906 = vunpack.c.l.b16 %v5222
    %v5907 = vunpack.c.h.b16 %v5222
    %v5908 = vunpack.c.l.b16 %v5223
    %v5909 = vunpack.c.h.b16 %v5223
    %v5910 = vunpack.c.l.b16 %v5224
    %v5911 = vunpack.c.h.b16 %v5224
    %v5912 = vunpack.c.l.b16 %v5225
    %v5913 = vunpack.c.h.b16 %v5225
    %v5914 = vunpack.c.l.b16 %v5226
    %v5915 = vunpack.c.h.b16 %v5226
    %v5916 = vpack.c.b16 %v5792, %v5788
    %v5917 = vpack.c.b16 %v5793, %v5789
    %v5918 = vpack.c.b16 %v5794, %v5790
    %v5919 = vpack.c.b16 %v5795, %v5791
    %v5920 = vpack.c.b16 %v5800, %v5796
    %v5921 = vpack.c.b16 %v5801, %v5797
    %v5922 = vpack.c.b16 %v5802, %v5798
    %v5923 = vpack.c.b16 %v5803, %v5799
    %v5924 = vpack.c.b16 %v5808, %v5804
    %v5925 = vpack.c.b16 %v5809, %v5805
    %v5926 = vpack.c.b16 %v5810, %v5806
    %v5927 = vpack.c.b16 %v5811, %v5807
    %v5928 = vpack.c.b16 %v5816, %v5812
    %v5929 = vpack.c.b16 %v5817, %v5813
    %v5930 = vpack.c.b16 %v5818, %v5814
    %v5931 = vpack.c.b16 %v5819, %v5815
    %v5932 = vpack.c.b16 %v5824, %v5820
    %v5933 = vpack.c.b16 %v5825, %v5821
    %v5934 = vpack.c.b16 %v5826, %v5822
    %v5935 = vpack.c.b16 %v5827, %v5823
    %v5936 = vpack.c.b16 %v5832, %v5828
    %v5937 = vpack.c.b16 %v5833, %v5829
    %v5938 = vpack.c.b16 %v5834, %v5830
    %v5939 = vpack.c.b16 %v5835, %v5831
    %v5940 = vpack.c.b16 %v5840, %v5836
    %v5941 = vpack.c.b16 %v5841, %v5837
    %v5942 = vpack.c.b16 %v5842, %v5838
    %v5943 = vpack.c.b16 %v5843, %v5839
    %v5944 = vpack.c.b16 %v5848, %v5844
    %v5945 = vpack.c.b16 %v5849, %v5845
    %v5946 = vpack.c.b16 %v5850, %v5846
    %v5947 = vpack.c.b16 %v5851, %v5847
    %v5948 = vpack.c.b16 %v5856, %v5852
    %v5949 = vpack.c.b16 %v5857, %v5853
    %v5950 = vpack.c.b16 %v5858, %v5854
    %v5951 = vpack.c.b16 %v5859, %v5855
    %v5952 = vpack.c.b16 %v5864, %v5860
    %v5953 = vpack.c.b16 %v5865, %v5861
    %v5954 = vpack.c.b16 %v5866, %v5862
    %v5955 = vpack.c.b16 %v5867, %v5863
    %v5956 = vpack.c.b16 %v5872, %v5868
    %v5957 = vpack.c.b16 %v5873, %v5869
    %v5958 = vpack.c.b16 %v5874, %v5870
    %v5959 = vpack.c.b16 %v5875, %v5871
    %v5960 = vpack.c.b16 %v5880, %v5876
    %v5961 = vpack.c.b16 %v5881, %v5877
    %v5962 = vpack.c.b16 %v5882, %v5878
    %v5963 = vpack.c.b16 %v5883, %v5879
    %v5964 = vpack.c.b16 %v5888, %v5884
    %v5965 = vpack.c.b16 %v5889, %v5885
    %v5966 = vpack.c.b16 %v5890, %v5886
    %v5967 = vpack.c.b16 %v5891, %v5887
    %v5968 = vpack.c.b16 %v5896, %v5892
    %v5969 = vpack.c.b16 %v5897, %v5893
    %v5970 = vpack.c.b16 %v5898, %v5894
    %v5971 = vpack.c.b16 %v5899, %v5895
    %v5972 = vpack.c.b16 %v5904, %v5900
    %v5973 = vpack.c.b16 %v5905, %v5901
    %v5974 = vpack.c.b16 %v5906, %v5902
    %v5975 = vpack.c.b16 %v5907, %v5903
    %v5976 = vpack.c.b16 %v5912, %v5908
    %v5977 = vpack.c.b16 %v5913, %v5909
    %v5978 = vpack.c.b16 %v5914, %v5910
    %v5979 = vpack.c.b16 %v5915, %v5911
    %6044 = vmatpush.bf16.msra.mxu0 %v5944
    %6045 = vmatpush.bf16.msra.mxu0 %v5940
    %6046 = vmatpush.bf16.msra.mxu0 %v5936
    %6047 = vmatpush.bf16.msra.mxu0 %v5932
    %6048 = vmatpush.bf16.msra.mxu0 %v5928
    %6049 = vmatpush.bf16.msra.mxu0 %v5924
    %6050 = vmatpush.bf16.msra.mxu0 %v5920
    %6051 = vmatpush.bf16.msra.mxu0 %v5916
    %6052 = vmatmul.bf16.gmra.mxu0 %v5161
    %v6053 = vpop.f32.mrf.mxu0
    %v6054 = vadd.f32 %v5643, %v6053
    %v6055 = vpop.f32.mrf.mxu0
    %6056 = vdwg.mxu0
    %6057 = vmatpush.bf16.msra.mxu0 %v5976
    %6058 = vmatpush.bf16.msra.mxu0 %v5972
    %6059 = vmatpush.bf16.msra.mxu0 %v5968
    %6060 = vmatpush.bf16.msra.mxu0 %v5964
    %6061 = vmatpush.bf16.msra.mxu0 %v5960
    %6062 = vmatpush.bf16.msra.mxu0 %v5956
    %6063 = vmatpush.bf16.msra.mxu0 %v5952
    %6064 = vmatpush.bf16.msra.mxu0 %v5948
    %6065 = vmatmul.bf16.gmra.mxu0 %v5162
    %v6066 = vpop.f32.mrf.mxu0
    %v6067 = vadd.f32 %v6054, %v6066
    %v6068 = vpop.f32.mrf.mxu0
    %6069 = vdwg.mxu0
    %6070 = vmatpush.bf16.msra.mxu0 %v5945
    %6071 = vmatpush.bf16.msra.mxu0 %v5941
    %6072 = vmatpush.bf16.msra.mxu0 %v5937
    %6073 = vmatpush.bf16.msra.mxu0 %v5933
    %6074 = vmatpush.bf16.msra.mxu0 %v5929
    %6075 = vmatpush.bf16.msra.mxu0 %v5925
    %6076 = vmatpush.bf16.msra.mxu0 %v5921
    %6077 = vmatpush.bf16.msra.mxu0 %v5917
    %6078 = vmatmul.bf16.gmra.mxu0 %v5161
    %v6079 = vpop.f32.mrf.mxu0
    %v6080 = vadd.f32 %v5669, %v6079
    %v6081 = vpop.f32.mrf.mxu0
    %6082 = vdwg.mxu0
    %6083 = vmatpush.bf16.msra.mxu0 %v5977
    %6084 = vmatpush.bf16.msra.mxu0 %v5973
    %6085 = vmatpush.bf16.msra.mxu0 %v5969
    %6086 = vmatpush.bf16.msra.mxu0 %v5965
    %6087 = vmatpush.bf16.msra.mxu0 %v5961
    %6088 = vmatpush.bf16.msra.mxu0 %v5957
    %6089 = vmatpush.bf16.msra.mxu0 %v5953
    %6090 = vmatpush.bf16.msra.mxu0 %v5949
    %6091 = vmatmul.bf16.gmra.mxu0 %v5162
    %v6092 = vpop.f32.mrf.mxu0
    %v6093 = vadd.f32 %v6080, %v6092
    %v6094 = vpop.f32.mrf.mxu0
    %6095 = vdwg.mxu0
    %6096 = vmatpush.bf16.msra.mxu0 %v5946
    %6097 = vmatpush.bf16.msra.mxu0 %v5942
    %6098 = vmatpush.bf16.msra.mxu0 %v5938
    %6099 = vmatpush.bf16.msra.mxu0 %v5934
    %6100 = vmatpush.bf16.msra.mxu0 %v5930
    %6101 = vmatpush.bf16.msra.mxu0 %v5926
    %6102 = vmatpush.bf16.msra.mxu0 %v5922
    %6103 = vmatpush.bf16.msra.mxu0 %v5918
    %6104 = vmatmul.bf16.gmra.mxu0 %v5161
    %v6105 = vpop.f32.mrf.mxu0
    %v6106 = vadd.f32 %v5695, %v6105
    %v6107 = vpop.f32.mrf.mxu0
    %6108 = vdwg.mxu0
    %6109 = vmatpush.bf16.msra.mxu0 %v5978
    %6110 = vmatpush.bf16.msra.mxu0 %v5974
    %6111 = vmatpush.bf16.msra.mxu0 %v5970
    %6112 = vmatpush.bf16.msra.mxu0 %v5966
    %6113 = vmatpush.bf16.msra.mxu0 %v5962
    %6114 = vmatpush.bf16.msra.mxu0 %v5958
    %6115 = vmatpush.bf16.msra.mxu0 %v5954
    %6116 = vmatpush.bf16.msra.mxu0 %v5950
    %6117 = vmatmul.bf16.gmra.mxu0 %v5162
    %v6118 = vpop.f32.mrf.mxu0
    %v6119 = vadd.f32 %v6106, %v6118
    %v6120 = vpop.f32.mrf.mxu0
    %6121 = vdwg.mxu0
    %6122 = vmatpush.bf16.msra.mxu0 %v5947
    %6123 = vmatpush.bf16.msra.mxu0 %v5943
    %6124 = vmatpush.bf16.msra.mxu0 %v5939
    %6125 = vmatpush.bf16.msra.mxu0 %v5935
    %6126 = vmatpush.bf16.msra.mxu0 %v5931
    %6127 = vmatpush.bf16.msra.mxu0 %v5927
    %6128 = vmatpush.bf16.msra.mxu0 %v5923
    %6129 = vmatpush.bf16.msra.mxu0 %v5919
    %6130 = vmatmul.bf16.gmra.mxu0 %v5161
    %v6131 = vpop.f32.mrf.mxu0
    %v6132 = vadd.f32 %v5721, %v6131
    %v6133 = vpop.f32.mrf.mxu0
    %6134 = vdwg.mxu0
    %6135 = vmatpush.bf16.msra.mxu0 %v5979
    %6136 = vmatpush.bf16.msra.mxu0 %v5975
    %6137 = vmatpush.bf16.msra.mxu0 %v5971
    %6138 = vmatpush.bf16.msra.mxu0 %v5967
    %6139 = vmatpush.bf16.msra.mxu0 %v5963
    %6140 = vmatpush.bf16.msra.mxu0 %v5959
    %6141 = vmatpush.bf16.msra.mxu0 %v5955
    %6142 = vmatpush.bf16.msra.mxu0 %v5951
    %6143 = vmatmul.bf16.gmra.mxu0 %v5162
    %v6144 = vpop.f32.mrf.mxu0
    %v6145 = vadd.f32 %v6132, %v6144
    %v6146 = vpop.f32.mrf.mxu0
    %6147 = vdwg.mxu0
    %v6148 = vunpack.c.l.bf16 %v5151
    %v6149 = vunpack.c.h.bf16 %v5151
    %v6150 = vunpack.c.l.bf16 %v5152
    %v6151 = vunpack.c.h.bf16 %v5152
    %v6152 = vmax.f32 %v6148, %v6150
    %v6153 = vmax.f32 %v6149, %v6151
    %v6154 = vpack.c.bf16 %v6152, %v6152
    %v6155 = vpack.c.bf16 %v6153, %v6153
    %s6156 = scalar_lea.vmem [#allocation10], 1024
    %v6157 = vld [vmem:[%s6156] sm:$0xff]
    %v6158 = vld [vmem:[%s6156 + $0x8] sm:$0xff]
    %v6159 = vld [vmem:[%s6156 + $0x10] sm:$0xff]
    %v6160 = vld [vmem:[%s6156 + $0x18] sm:$0xff]
    %v6161 = vld [vmem:[%s6156 + $0x20] sm:$0xff]
    %v6162 = vld [vmem:[%s6156 + $0x28] sm:$0xff]
    %v6163 = vld [vmem:[%s6156 + $0x30] sm:$0xff]
    %v6164 = vld [vmem:[%s6156 + $0x38] sm:$0xff]
    %v6165 = vld [vmem:[%s6156 + $0x40] sm:$0xff]
    %v6166 = vld [vmem:[%s6156 + $0x48] sm:$0xff]
    %v6167 = vld [vmem:[%s6156 + $0x50] sm:$0xff]
    %v6168 = vld [vmem:[%s6156 + $0x58] sm:$0xff]
    %v6169 = vld [vmem:[%s6156 + $0x60] sm:$0xff]
    %v6170 = vld [vmem:[%s6156 + $0x68] sm:$0xff]
    %v6171 = vld [vmem:[%s6156 + $0x70] sm:$0xff]
    %v6172 = vld [vmem:[%s6156 + $0x78] sm:$0xff]
    %v6173 = vld [vmem:[%s6156 + $0x80] sm:$0xff]
    %v6174 = vld [vmem:[%s6156 + $0x88] sm:$0xff]
    %v6175 = vld [vmem:[%s6156 + $0x90] sm:$0xff]
    %v6176 = vld [vmem:[%s6156 + $0x98] sm:$0xff]
    %v6177 = vld [vmem:[%s6156 + $0xa0] sm:$0xff]
    %v6178 = vld [vmem:[%s6156 + $0xa8] sm:$0xff]
    %v6179 = vld [vmem:[%s6156 + $0xb0] sm:$0xff]
    %v6180 = vld [vmem:[%s6156 + $0xb8] sm:$0xff]
    %v6181 = vld [vmem:[%s6156 + $0xc0] sm:$0xff]
    %v6182 = vld [vmem:[%s6156 + $0xc8] sm:$0xff]
    %v6183 = vld [vmem:[%s6156 + $0xd0] sm:$0xff]
    %v6184 = vld [vmem:[%s6156 + $0xd8] sm:$0xff]
    %v6185 = vld [vmem:[%s6156 + $0xe0] sm:$0xff]
    %v6186 = vld [vmem:[%s6156 + $0xe8] sm:$0xff]
    %v6187 = vld [vmem:[%s6156 + $0xf0] sm:$0xff]
    %v6188 = vld [vmem:[%s6156 + $0xf8] sm:$0xff]
    %v6189 = vld [vmem:[%s6156 + $0x100] sm:$0xff]
    %v6190 = vld [vmem:[%s6156 + $0x108] sm:$0xff]
    %v6191 = vld [vmem:[%s6156 + $0x110] sm:$0xff]
    %v6192 = vld [vmem:[%s6156 + $0x118] sm:$0xff]
    %v6193 = vld [vmem:[%s6156 + $0x120] sm:$0xff]
    %v6194 = vld [vmem:[%s6156 + $0x128] sm:$0xff]
    %v6195 = vld [vmem:[%s6156 + $0x130] sm:$0xff]
    %v6196 = vld [vmem:[%s6156 + $0x138] sm:$0xff]
    %v6197 = vld [vmem:[%s6156 + $0x140] sm:$0xff]
    %v6198 = vld [vmem:[%s6156 + $0x148] sm:$0xff]
    %v6199 = vld [vmem:[%s6156 + $0x150] sm:$0xff]
    %v6200 = vld [vmem:[%s6156 + $0x158] sm:$0xff]
    %v6201 = vld [vmem:[%s6156 + $0x160] sm:$0xff]
    %v6202 = vld [vmem:[%s6156 + $0x168] sm:$0xff]
    %v6203 = vld [vmem:[%s6156 + $0x170] sm:$0xff]
    %v6204 = vld [vmem:[%s6156 + $0x178] sm:$0xff]
    %v6205 = vld [vmem:[%s6156 + $0x180] sm:$0xff]
    %v6206 = vld [vmem:[%s6156 + $0x188] sm:$0xff]
    %v6207 = vld [vmem:[%s6156 + $0x190] sm:$0xff]
    %v6208 = vld [vmem:[%s6156 + $0x198] sm:$0xff]
    %v6209 = vld [vmem:[%s6156 + $0x1a0] sm:$0xff]
    %v6210 = vld [vmem:[%s6156 + $0x1a8] sm:$0xff]
    %v6211 = vld [vmem:[%s6156 + $0x1b0] sm:$0xff]
    %v6212 = vld [vmem:[%s6156 + $0x1b8] sm:$0xff]
    %v6213 = vld [vmem:[%s6156 + $0x1c0] sm:$0xff]
    %v6214 = vld [vmem:[%s6156 + $0x1c8] sm:$0xff]
    %v6215 = vld [vmem:[%s6156 + $0x1d0] sm:$0xff]
    %v6216 = vld [vmem:[%s6156 + $0x1d8] sm:$0xff]
    %v6217 = vld [vmem:[%s6156 + $0x1e0] sm:$0xff]
    %v6218 = vld [vmem:[%s6156 + $0x1e8] sm:$0xff]
    %v6219 = vld [vmem:[%s6156 + $0x1f0] sm:$0xff]
    %v6220 = vld [vmem:[%s6156 + $0x1f8] sm:$0xff]
    %v6285 = vunpack.c.l.b16 %v6157
    %v6286 = vunpack.c.h.b16 %v6157
    %v6287 = vunpack.c.l.b16 %v6158
    %v6288 = vunpack.c.h.b16 %v6158
    %v6289 = vunpack.c.l.b16 %v6159
    %v6290 = vunpack.c.h.b16 %v6159
    %v6291 = vunpack.c.l.b16 %v6160
    %v6292 = vunpack.c.h.b16 %v6160
    %v6293 = vunpack.c.l.b16 %v6161
    %v6294 = vunpack.c.h.b16 %v6161
    %v6295 = vunpack.c.l.b16 %v6162
    %v6296 = vunpack.c.h.b16 %v6162
    %v6297 = vunpack.c.l.b16 %v6163
    %v6298 = vunpack.c.h.b16 %v6163
    %v6299 = vunpack.c.l.b16 %v6164
    %v6300 = vunpack.c.h.b16 %v6164
    %v6301 = vunpack.c.l.b16 %v6165
    %v6302 = vunpack.c.h.b16 %v6165
    %v6303 = vunpack.c.l.b16 %v6166
    %v6304 = vunpack.c.h.b16 %v6166
    %v6305 = vunpack.c.l.b16 %v6167
    %v6306 = vunpack.c.h.b16 %v6167
    %v6307 = vunpack.c.l.b16 %v6168
    %v6308 = vunpack.c.h.b16 %v6168
    %v6309 = vunpack.c.l.b16 %v6169
    %v6310 = vunpack.c.h.b16 %v6169
    %v6311 = vunpack.c.l.b16 %v6170
    %v6312 = vunpack.c.h.b16 %v6170
    %v6313 = vunpack.c.l.b16 %v6171
    %v6314 = vunpack.c.h.b16 %v6171
    %v6315 = vunpack.c.l.b16 %v6172
    %v6316 = vunpack.c.h.b16 %v6172
    %v6317 = vunpack.c.l.b16 %v6173
    %v6318 = vunpack.c.h.b16 %v6173
    %v6319 = vunpack.c.l.b16 %v6174
    %v6320 = vunpack.c.h.b16 %v6174
    %v6321 = vunpack.c.l.b16 %v6175
    %v6322 = vunpack.c.h.b16 %v6175
    %v6323 = vunpack.c.l.b16 %v6176
    %v6324 = vunpack.c.h.b16 %v6176
    %v6325 = vunpack.c.l.b16 %v6177
    %v6326 = vunpack.c.h.b16 %v6177
    %v6327 = vunpack.c.l.b16 %v6178
    %v6328 = vunpack.c.h.b16 %v6178
    %v6329 = vunpack.c.l.b16 %v6179
    %v6330 = vunpack.c.h.b16 %v6179
    %v6331 = vunpack.c.l.b16 %v6180
    %v6332 = vunpack.c.h.b16 %v6180
    %v6333 = vunpack.c.l.b16 %v6181
    %v6334 = vunpack.c.h.b16 %v6181
    %v6335 = vunpack.c.l.b16 %v6182
    %v6336 = vunpack.c.h.b16 %v6182
    %v6337 = vunpack.c.l.b16 %v6183
    %v6338 = vunpack.c.h.b16 %v6183
    %v6339 = vunpack.c.l.b16 %v6184
    %v6340 = vunpack.c.h.b16 %v6184
    %v6341 = vunpack.c.l.b16 %v6185
    %v6342 = vunpack.c.h.b16 %v6185
    %v6343 = vunpack.c.l.b16 %v6186
    %v6344 = vunpack.c.h.b16 %v6186
    %v6345 = vunpack.c.l.b16 %v6187
    %v6346 = vunpack.c.h.b16 %v6187
    %v6347 = vunpack.c.l.b16 %v6188
    %v6348 = vunpack.c.h.b16 %v6188
    %v6349 = vunpack.c.l.b16 %v6189
    %v6350 = vunpack.c.h.b16 %v6189
    %v6351 = vunpack.c.l.b16 %v6190
    %v6352 = vunpack.c.h.b16 %v6190
    %v6353 = vunpack.c.l.b16 %v6191
    %v6354 = vunpack.c.h.b16 %v6191
    %v6355 = vunpack.c.l.b16 %v6192
    %v6356 = vunpack.c.h.b16 %v6192
    %v6357 = vunpack.c.l.b16 %v6193
    %v6358 = vunpack.c.h.b16 %v6193
    %v6359 = vunpack.c.l.b16 %v6194
    %v6360 = vunpack.c.h.b16 %v6194
    %v6361 = vunpack.c.l.b16 %v6195
    %v6362 = vunpack.c.h.b16 %v6195
    %v6363 = vunpack.c.l.b16 %v6196
    %v6364 = vunpack.c.h.b16 %v6196
    %v6365 = vunpack.c.l.b16 %v6197
    %v6366 = vunpack.c.h.b16 %v6197
    %v6367 = vunpack.c.l.b16 %v6198
    %v6368 = vunpack.c.h.b16 %v6198
    %v6369 = vunpack.c.l.b16 %v6199
    %v6370 = vunpack.c.h.b16 %v6199
    %v6371 = vunpack.c.l.b16 %v6200
    %v6372 = vunpack.c.h.b16 %v6200
    %v6373 = vunpack.c.l.b16 %v6201
    %v6374 = vunpack.c.h.b16 %v6201
    %v6375 = vunpack.c.l.b16 %v6202
    %v6376 = vunpack.c.h.b16 %v6202
    %v6377 = vunpack.c.l.b16 %v6203
    %v6378 = vunpack.c.h.b16 %v6203
    %v6379 = vunpack.c.l.b16 %v6204
    %v6380 = vunpack.c.h.b16 %v6204
    %v6381 = vunpack.c.l.b16 %v6205
    %v6382 = vunpack.c.h.b16 %v6205
    %v6383 = vunpack.c.l.b16 %v6206
    %v6384 = vunpack.c.h.b16 %v6206
    %v6385 = vunpack.c.l.b16 %v6207
    %v6386 = vunpack.c.h.b16 %v6207
    %v6387 = vunpack.c.l.b16 %v6208
    %v6388 = vunpack.c.h.b16 %v6208
    %v6389 = vunpack.c.l.b16 %v6209
    %v6390 = vunpack.c.h.b16 %v6209
    %v6391 = vunpack.c.l.b16 %v6210
    %v6392 = vunpack.c.h.b16 %v6210
    %v6393 = vunpack.c.l.b16 %v6211
    %v6394 = vunpack.c.h.b16 %v6211
    %v6395 = vunpack.c.l.b16 %v6212
    %v6396 = vunpack.c.h.b16 %v6212
    %v6397 = vunpack.c.l.b16 %v6213
    %v6398 = vunpack.c.h.b16 %v6213
    %v6399 = vunpack.c.l.b16 %v6214
    %v6400 = vunpack.c.h.b16 %v6214
    %v6401 = vunpack.c.l.b16 %v6215
    %v6402 = vunpack.c.h.b16 %v6215
    %v6403 = vunpack.c.l.b16 %v6216
    %v6404 = vunpack.c.h.b16 %v6216
    %v6405 = vunpack.c.l.b16 %v6217
    %v6406 = vunpack.c.h.b16 %v6217
    %v6407 = vunpack.c.l.b16 %v6218
    %v6408 = vunpack.c.h.b16 %v6218
    %v6409 = vunpack.c.l.b16 %v6219
    %v6410 = vunpack.c.h.b16 %v6219
    %v6411 = vunpack.c.l.b16 %v6220
    %v6412 = vunpack.c.h.b16 %v6220
    %v6413 = vpack.c.b16 %v6289, %v6285
    %v6414 = vpack.c.b16 %v6290, %v6286
    %v6415 = vpack.c.b16 %v6291, %v6287
    %v6416 = vpack.c.b16 %v6292, %v6288
    %v6417 = vpack.c.b16 %v6297, %v6293
    %v6418 = vpack.c.b16 %v6298, %v6294
    %v6419 = vpack.c.b16 %v6299, %v6295
    %v6420 = vpack.c.b16 %v6300, %v6296
    %v6421 = vpack.c.b16 %v6305, %v6301
    %v6422 = vpack.c.b16 %v6306, %v6302
    %v6423 = vpack.c.b16 %v6307, %v6303
    %v6424 = vpack.c.b16 %v6308, %v6304
    %v6425 = vpack.c.b16 %v6313, %v6309
    %v6426 = vpack.c.b16 %v6314, %v6310
    %v6427 = vpack.c.b16 %v6315, %v6311
    %v6428 = vpack.c.b16 %v6316, %v6312
    %v6429 = vpack.c.b16 %v6321, %v6317
    %v6430 = vpack.c.b16 %v6322, %v6318
    %v6431 = vpack.c.b16 %v6323, %v6319
    %v6432 = vpack.c.b16 %v6324, %v6320
    %v6433 = vpack.c.b16 %v6329, %v6325
    %v6434 = vpack.c.b16 %v6330, %v6326
    %v6435 = vpack.c.b16 %v6331, %v6327
    %v6436 = vpack.c.b16 %v6332, %v6328
    %v6437 = vpack.c.b16 %v6337, %v6333
    %v6438 = vpack.c.b16 %v6338, %v6334
    %v6439 = vpack.c.b16 %v6339, %v6335
    %v6440 = vpack.c.b16 %v6340, %v6336
    %v6441 = vpack.c.b16 %v6345, %v6341
    %v6442 = vpack.c.b16 %v6346, %v6342
    %v6443 = vpack.c.b16 %v6347, %v6343
    %v6444 = vpack.c.b16 %v6348, %v6344
    %v6445 = vpack.c.b16 %v6353, %v6349
    %v6446 = vpack.c.b16 %v6354, %v6350
    %v6447 = vpack.c.b16 %v6355, %v6351
    %v6448 = vpack.c.b16 %v6356, %v6352
    %v6449 = vpack.c.b16 %v6361, %v6357
    %v6450 = vpack.c.b16 %v6362, %v6358
    %v6451 = vpack.c.b16 %v6363, %v6359
    %v6452 = vpack.c.b16 %v6364, %v6360
    %v6453 = vpack.c.b16 %v6369, %v6365
    %v6454 = vpack.c.b16 %v6370, %v6366
    %v6455 = vpack.c.b16 %v6371, %v6367
    %v6456 = vpack.c.b16 %v6372, %v6368
    %v6457 = vpack.c.b16 %v6377, %v6373
    %v6458 = vpack.c.b16 %v6378, %v6374
    %v6459 = vpack.c.b16 %v6379, %v6375
    %v6460 = vpack.c.b16 %v6380, %v6376
    %v6461 = vpack.c.b16 %v6385, %v6381
    %v6462 = vpack.c.b16 %v6386, %v6382
    %v6463 = vpack.c.b16 %v6387, %v6383
    %v6464 = vpack.c.b16 %v6388, %v6384
    %v6465 = vpack.c.b16 %v6393, %v6389
    %v6466 = vpack.c.b16 %v6394, %v6390
    %v6467 = vpack.c.b16 %v6395, %v6391
    %v6468 = vpack.c.b16 %v6396, %v6392
    %v6469 = vpack.c.b16 %v6401, %v6397
    %v6470 = vpack.c.b16 %v6402, %v6398
    %v6471 = vpack.c.b16 %v6403, %v6399
    %v6472 = vpack.c.b16 %v6404, %v6400
    %v6473 = vpack.c.b16 %v6409, %v6405
    %v6474 = vpack.c.b16 %v6410, %v6406
    %v6475 = vpack.c.b16 %v6411, %v6407
    %v6476 = vpack.c.b16 %v6412, %v6408
    %6541 = vmatpush.bf16.msra.mxu0 %v6441
    %6542 = vmatpush.bf16.msra.mxu0 %v6437
    %6543 = vmatpush.bf16.msra.mxu0 %v6433
    %6544 = vmatpush.bf16.msra.mxu0 %v6429
    %6545 = vmatpush.bf16.msra.mxu0 %v6425
    %6546 = vmatpush.bf16.msra.mxu0 %v6421
    %6547 = vmatpush.bf16.msra.mxu0 %v6417
    %6548 = vmatpush.bf16.msra.mxu0 %v6413
    %6549 = vmatmul.bf16.gmra.mxu0 %v6154
    %v6550 = vpop.f32.mrf.mxu0
    %v6551 = vadd.f32 0.0, %v6550
    %v6552 = vpop.f32.mrf.mxu0
    %6553 = vdwg.mxu0
    %6554 = vmatpush.bf16.msra.mxu0 %v6473
    %6555 = vmatpush.bf16.msra.mxu0 %v6469
    %6556 = vmatpush.bf16.msra.mxu0 %v6465
    %6557 = vmatpush.bf16.msra.mxu0 %v6461
    %6558 = vmatpush.bf16.msra.mxu0 %v6457
    %6559 = vmatpush.bf16.msra.mxu0 %v6453
    %6560 = vmatpush.bf16.msra.mxu0 %v6449
    %6561 = vmatpush.bf16.msra.mxu0 %v6445
    %6562 = vmatmul.bf16.gmra.mxu0 %v6155
    %v6563 = vpop.f32.mrf.mxu0
    %v6564 = vadd.f32 %v6551, %v6563
    %v6565 = vpop.f32.mrf.mxu0
    %6566 = vdwg.mxu0
    %6567 = vmatpush.bf16.msra.mxu0 %v6442
    %6568 = vmatpush.bf16.msra.mxu0 %v6438
    %6569 = vmatpush.bf16.msra.mxu0 %v6434
    %6570 = vmatpush.bf16.msra.mxu0 %v6430
    %6571 = vmatpush.bf16.msra.mxu0 %v6426
    %6572 = vmatpush.bf16.msra.mxu0 %v6422
    %6573 = vmatpush.bf16.msra.mxu0 %v6418
    %6574 = vmatpush.bf16.msra.mxu0 %v6414
    %6575 = vmatmul.bf16.gmra.mxu0 %v6154
    %v6576 = vpop.f32.mrf.mxu0
    %v6577 = vadd.f32 0.0, %v6576
    %v6578 = vpop.f32.mrf.mxu0
    %6579 = vdwg.mxu0
    %6580 = vmatpush.bf16.msra.mxu0 %v6474
    %6581 = vmatpush.bf16.msra.mxu0 %v6470
    %6582 = vmatpush.bf16.msra.mxu0 %v6466
    %6583 = vmatpush.bf16.msra.mxu0 %v6462
    %6584 = vmatpush.bf16.msra.mxu0 %v6458
    %6585 = vmatpush.bf16.msra.mxu0 %v6454
    %6586 = vmatpush.bf16.msra.mxu0 %v6450
    %6587 = vmatpush.bf16.msra.mxu0 %v6446
    %6588 = vmatmul.bf16.gmra.mxu0 %v6155
    %v6589 = vpop.f32.mrf.mxu0
    %v6590 = vadd.f32 %v6577, %v6589
    %v6591 = vpop.f32.mrf.mxu0
    %6592 = vdwg.mxu0
    %6593 = vmatpush.bf16.msra.mxu0 %v6443
    %6594 = vmatpush.bf16.msra.mxu0 %v6439
    %6595 = vmatpush.bf16.msra.mxu0 %v6435
    %6596 = vmatpush.bf16.msra.mxu0 %v6431
    %6597 = vmatpush.bf16.msra.mxu0 %v6427
    %6598 = vmatpush.bf16.msra.mxu0 %v6423
    %6599 = vmatpush.bf16.msra.mxu0 %v6419
    %6600 = vmatpush.bf16.msra.mxu0 %v6415
    %6601 = vmatmul.bf16.gmra.mxu0 %v6154
    %v6602 = vpop.f32.mrf.mxu0
    %v6603 = vadd.f32 0.0, %v6602
    %v6604 = vpop.f32.mrf.mxu0
    %6605 = vdwg.mxu0
    %6606 = vmatpush.bf16.msra.mxu0 %v6475
    %6607 = vmatpush.bf16.msra.mxu0 %v6471
    %6608 = vmatpush.bf16.msra.mxu0 %v6467
    %6609 = vmatpush.bf16.msra.mxu0 %v6463
    %6610 = vmatpush.bf16.msra.mxu0 %v6459
    %6611 = vmatpush.bf16.msra.mxu0 %v6455
    %6612 = vmatpush.bf16.msra.mxu0 %v6451
    %6613 = vmatpush.bf16.msra.mxu0 %v6447
    %6614 = vmatmul.bf16.gmra.mxu0 %v6155
    %v6615 = vpop.f32.mrf.mxu0
    %v6616 = vadd.f32 %v6603, %v6615
    %v6617 = vpop.f32.mrf.mxu0
    %6618 = vdwg.mxu0
    %6619 = vmatpush.bf16.msra.mxu0 %v6444
    %6620 = vmatpush.bf16.msra.mxu0 %v6440
    %6621 = vmatpush.bf16.msra.mxu0 %v6436
    %6622 = vmatpush.bf16.msra.mxu0 %v6432
    %6623 = vmatpush.bf16.msra.mxu0 %v6428
    %6624 = vmatpush.bf16.msra.mxu0 %v6424
    %6625 = vmatpush.bf16.msra.mxu0 %v6420
    %6626 = vmatpush.bf16.msra.mxu0 %v6416
    %6627 = vmatmul.bf16.gmra.mxu0 %v6154
    %v6628 = vpop.f32.mrf.mxu0
    %v6629 = vadd.f32 0.0, %v6628
    %v6630 = vpop.f32.mrf.mxu0
    %6631 = vdwg.mxu0
    %6632 = vmatpush.bf16.msra.mxu0 %v6476
    %6633 = vmatpush.bf16.msra.mxu0 %v6472
    %6634 = vmatpush.bf16.msra.mxu0 %v6468
    %6635 = vmatpush.bf16.msra.mxu0 %v6464
    %6636 = vmatpush.bf16.msra.mxu0 %v6460
    %6637 = vmatpush.bf16.msra.mxu0 %v6456
    %6638 = vmatpush.bf16.msra.mxu0 %v6452
    %6639 = vmatpush.bf16.msra.mxu0 %v6448
    %6640 = vmatmul.bf16.gmra.mxu0 %v6155
    %v6641 = vpop.f32.mrf.mxu0
    %v6642 = vadd.f32 %v6629, %v6641
    %v6643 = vpop.f32.mrf.mxu0
    %6644 = vdwg.mxu0
    %v6645 = vadd.f32 %v6067, %v6564
    %v6646 = vadd.f32 %v6093, %v6590
    %v6647 = vadd.f32 %v6119, %v6616
    %v6648 = vadd.f32 %v6145, %v6642
    %v6649 = vunpack.c.l.bf16 %v5153
    %v6650 = vunpack.c.h.bf16 %v5153
    %v6651 = vunpack.c.l.bf16 %v5154
    %v6652 = vunpack.c.h.bf16 %v5154
    %v6653 = vmax.f32 %v6649, %v6651
    %v6654 = vmax.f32 %v6650, %v6652
    %v6655 = vpack.c.bf16 %v6653, %v6653
    %v6656 = vpack.c.bf16 %v6654, %v6654
    %s6657 = scalar_lea.vmem [#allocation10], 1536
    %v6658 = vld [vmem:[%s6657] sm:$0xff]
    %v6659 = vld [vmem:[%s6657 + $0x8] sm:$0xff]
    %v6660 = vld [vmem:[%s6657 + $0x10] sm:$0xff]
    %v6661 = vld [vmem:[%s6657 + $0x18] sm:$0xff]
    %v6662 = vld [vmem:[%s6657 + $0x20] sm:$0xff]
    %v6663 = vld [vmem:[%s6657 + $0x28] sm:$0xff]
    %v6664 = vld [vmem:[%s6657 + $0x30] sm:$0xff]
    %v6665 = vld [vmem:[%s6657 + $0x38] sm:$0xff]
    %v6666 = vld [vmem:[%s6657 + $0x40] sm:$0xff]
    %v6667 = vld [vmem:[%s6657 + $0x48] sm:$0xff]
    %v6668 = vld [vmem:[%s6657 + $0x50] sm:$0xff]
    %v6669 = vld [vmem:[%s6657 + $0x58] sm:$0xff]
    %v6670 = vld [vmem:[%s6657 + $0x60] sm:$0xff]
    %v6671 = vld [vmem:[%s6657 + $0x68] sm:$0xff]
    %v6672 = vld [vmem:[%s6657 + $0x70] sm:$0xff]
    %v6673 = vld [vmem:[%s6657 + $0x78] sm:$0xff]
    %v6674 = vld [vmem:[%s6657 + $0x80] sm:$0xff]
    %v6675 = vld [vmem:[%s6657 + $0x88] sm:$0xff]
    %v6676 = vld [vmem:[%s6657 + $0x90] sm:$0xff]
    %v6677 = vld [vmem:[%s6657 + $0x98] sm:$0xff]
    %v6678 = vld [vmem:[%s6657 + $0xa0] sm:$0xff]
    %v6679 = vld [vmem:[%s6657 + $0xa8] sm:$0xff]
    %v6680 = vld [vmem:[%s6657 + $0xb0] sm:$0xff]
    %v6681 = vld [vmem:[%s6657 + $0xb8] sm:$0xff]
    %v6682 = vld [vmem:[%s6657 + $0xc0] sm:$0xff]
    %v6683 = vld [vmem:[%s6657 + $0xc8] sm:$0xff]
    %v6684 = vld [vmem:[%s6657 + $0xd0] sm:$0xff]
    %v6685 = vld [vmem:[%s6657 + $0xd8] sm:$0xff]
    %v6686 = vld [vmem:[%s6657 + $0xe0] sm:$0xff]
    %v6687 = vld [vmem:[%s6657 + $0xe8] sm:$0xff]
    %v6688 = vld [vmem:[%s6657 + $0xf0] sm:$0xff]
    %v6689 = vld [vmem:[%s6657 + $0xf8] sm:$0xff]
    %v6690 = vld [vmem:[%s6657 + $0x100] sm:$0xff]
    %v6691 = vld [vmem:[%s6657 + $0x108] sm:$0xff]
    %v6692 = vld [vmem:[%s6657 + $0x110] sm:$0xff]
    %v6693 = vld [vmem:[%s6657 + $0x118] sm:$0xff]
    %v6694 = vld [vmem:[%s6657 + $0x120] sm:$0xff]
    %v6695 = vld [vmem:[%s6657 + $0x128] sm:$0xff]
    %v6696 = vld [vmem:[%s6657 + $0x130] sm:$0xff]
    %v6697 = vld [vmem:[%s6657 + $0x138] sm:$0xff]
    %v6698 = vld [vmem:[%s6657 + $0x140] sm:$0xff]
    %v6699 = vld [vmem:[%s6657 + $0x148] sm:$0xff]
    %v6700 = vld [vmem:[%s6657 + $0x150] sm:$0xff]
    %v6701 = vld [vmem:[%s6657 + $0x158] sm:$0xff]
    %v6702 = vld [vmem:[%s6657 + $0x160] sm:$0xff]
    %v6703 = vld [vmem:[%s6657 + $0x168] sm:$0xff]
    %v6704 = vld [vmem:[%s6657 + $0x170] sm:$0xff]
    %v6705 = vld [vmem:[%s6657 + $0x178] sm:$0xff]
    %v6706 = vld [vmem:[%s6657 + $0x180] sm:$0xff]
    %v6707 = vld [vmem:[%s6657 + $0x188] sm:$0xff]
    %v6708 = vld [vmem:[%s6657 + $0x190] sm:$0xff]
    %v6709 = vld [vmem:[%s6657 + $0x198] sm:$0xff]
    %v6710 = vld [vmem:[%s6657 + $0x1a0] sm:$0xff]
    %v6711 = vld [vmem:[%s6657 + $0x1a8] sm:$0xff]
    %v6712 = vld [vmem:[%s6657 + $0x1b0] sm:$0xff]
    %v6713 = vld [vmem:[%s6657 + $0x1b8] sm:$0xff]
    %v6714 = vld [vmem:[%s6657 + $0x1c0] sm:$0xff]
    %v6715 = vld [vmem:[%s6657 + $0x1c8] sm:$0xff]
    %v6716 = vld [vmem:[%s6657 + $0x1d0] sm:$0xff]
    %v6717 = vld [vmem:[%s6657 + $0x1d8] sm:$0xff]
    %v6718 = vld [vmem:[%s6657 + $0x1e0] sm:$0xff]
    %v6719 = vld [vmem:[%s6657 + $0x1e8] sm:$0xff]
    %v6720 = vld [vmem:[%s6657 + $0x1f0] sm:$0xff]
    %v6721 = vld [vmem:[%s6657 + $0x1f8] sm:$0xff]
    %v6786 = vunpack.c.l.b16 %v6658
    %v6787 = vunpack.c.h.b16 %v6658
    %v6788 = vunpack.c.l.b16 %v6659
    %v6789 = vunpack.c.h.b16 %v6659
    %v6790 = vunpack.c.l.b16 %v6660
    %v6791 = vunpack.c.h.b16 %v6660
    %v6792 = vunpack.c.l.b16 %v6661
    %v6793 = vunpack.c.h.b16 %v6661
    %v6794 = vunpack.c.l.b16 %v6662
    %v6795 = vunpack.c.h.b16 %v6662
    %v6796 = vunpack.c.l.b16 %v6663
    %v6797 = vunpack.c.h.b16 %v6663
    %v6798 = vunpack.c.l.b16 %v6664
    %v6799 = vunpack.c.h.b16 %v6664
    %v6800 = vunpack.c.l.b16 %v6665
    %v6801 = vunpack.c.h.b16 %v6665
    %v6802 = vunpack.c.l.b16 %v6666
    %v6803 = vunpack.c.h.b16 %v6666
    %v6804 = vunpack.c.l.b16 %v6667
    %v6805 = vunpack.c.h.b16 %v6667
    %v6806 = vunpack.c.l.b16 %v6668
    %v6807 = vunpack.c.h.b16 %v6668
    %v6808 = vunpack.c.l.b16 %v6669
    %v6809 = vunpack.c.h.b16 %v6669
    %v6810 = vunpack.c.l.b16 %v6670
    %v6811 = vunpack.c.h.b16 %v6670
    %v6812 = vunpack.c.l.b16 %v6671
    %v6813 = vunpack.c.h.b16 %v6671
    %v6814 = vunpack.c.l.b16 %v6672
    %v6815 = vunpack.c.h.b16 %v6672
    %v6816 = vunpack.c.l.b16 %v6673
    %v6817 = vunpack.c.h.b16 %v6673
    %v6818 = vunpack.c.l.b16 %v6674
    %v6819 = vunpack.c.h.b16 %v6674
    %v6820 = vunpack.c.l.b16 %v6675
    %v6821 = vunpack.c.h.b16 %v6675
    %v6822 = vunpack.c.l.b16 %v6676
    %v6823 = vunpack.c.h.b16 %v6676
    %v6824 = vunpack.c.l.b16 %v6677
    %v6825 = vunpack.c.h.b16 %v6677
    %v6826 = vunpack.c.l.b16 %v6678
    %v6827 = vunpack.c.h.b16 %v6678
    %v6828 = vunpack.c.l.b16 %v6679
    %v6829 = vunpack.c.h.b16 %v6679
    %v6830 = vunpack.c.l.b16 %v6680
    %v6831 = vunpack.c.h.b16 %v6680
    %v6832 = vunpack.c.l.b16 %v6681
    %v6833 = vunpack.c.h.b16 %v6681
    %v6834 = vunpack.c.l.b16 %v6682
    %v6835 = vunpack.c.h.b16 %v6682
    %v6836 = vunpack.c.l.b16 %v6683
    %v6837 = vunpack.c.h.b16 %v6683
    %v6838 = vunpack.c.l.b16 %v6684
    %v6839 = vunpack.c.h.b16 %v6684
    %v6840 = vunpack.c.l.b16 %v6685
    %v6841 = vunpack.c.h.b16 %v6685
    %v6842 = vunpack.c.l.b16 %v6686
    %v6843 = vunpack.c.h.b16 %v6686
    %v6844 = vunpack.c.l.b16 %v6687
    %v6845 = vunpack.c.h.b16 %v6687
    %v6846 = vunpack.c.l.b16 %v6688
    %v6847 = vunpack.c.h.b16 %v6688
    %v6848 = vunpack.c.l.b16 %v6689
    %v6849 = vunpack.c.h.b16 %v6689
    %v6850 = vunpack.c.l.b16 %v6690
    %v6851 = vunpack.c.h.b16 %v6690
    %v6852 = vunpack.c.l.b16 %v6691
    %v6853 = vunpack.c.h.b16 %v6691
    %v6854 = vunpack.c.l.b16 %v6692
    %v6855 = vunpack.c.h.b16 %v6692
    %v6856 = vunpack.c.l.b16 %v6693
    %v6857 = vunpack.c.h.b16 %v6693
    %v6858 = vunpack.c.l.b16 %v6694
    %v6859 = vunpack.c.h.b16 %v6694
    %v6860 = vunpack.c.l.b16 %v6695
    %v6861 = vunpack.c.h.b16 %v6695
    %v6862 = vunpack.c.l.b16 %v6696
    %v6863 = vunpack.c.h.b16 %v6696
    %v6864 = vunpack.c.l.b16 %v6697
    %v6865 = vunpack.c.h.b16 %v6697
    %v6866 = vunpack.c.l.b16 %v6698
    %v6867 = vunpack.c.h.b16 %v6698
    %v6868 = vunpack.c.l.b16 %v6699
    %v6869 = vunpack.c.h.b16 %v6699
    %v6870 = vunpack.c.l.b16 %v6700
    %v6871 = vunpack.c.h.b16 %v6700
    %v6872 = vunpack.c.l.b16 %v6701
    %v6873 = vunpack.c.h.b16 %v6701
    %v6874 = vunpack.c.l.b16 %v6702
    %v6875 = vunpack.c.h.b16 %v6702
    %v6876 = vunpack.c.l.b16 %v6703
    %v6877 = vunpack.c.h.b16 %v6703
    %v6878 = vunpack.c.l.b16 %v6704
    %v6879 = vunpack.c.h.b16 %v6704
    %v6880 = vunpack.c.l.b16 %v6705
    %v6881 = vunpack.c.h.b16 %v6705
    %v6882 = vunpack.c.l.b16 %v6706
    %v6883 = vunpack.c.h.b16 %v6706
    %v6884 = vunpack.c.l.b16 %v6707
    %v6885 = vunpack.c.h.b16 %v6707
    %v6886 = vunpack.c.l.b16 %v6708
    %v6887 = vunpack.c.h.b16 %v6708
    %v6888 = vunpack.c.l.b16 %v6709
    %v6889 = vunpack.c.h.b16 %v6709
    %v6890 = vunpack.c.l.b16 %v6710
    %v6891 = vunpack.c.h.b16 %v6710
    %v6892 = vunpack.c.l.b16 %v6711
    %v6893 = vunpack.c.h.b16 %v6711
    %v6894 = vunpack.c.l.b16 %v6712
    %v6895 = vunpack.c.h.b16 %v6712
    %v6896 = vunpack.c.l.b16 %v6713
    %v6897 = vunpack.c.h.b16 %v6713
    %v6898 = vunpack.c.l.b16 %v6714
    %v6899 = vunpack.c.h.b16 %v6714
    %v6900 = vunpack.c.l.b16 %v6715
    %v6901 = vunpack.c.h.b16 %v6715
    %v6902 = vunpack.c.l.b16 %v6716
    %v6903 = vunpack.c.h.b16 %v6716
    %v6904 = vunpack.c.l.b16 %v6717
    %v6905 = vunpack.c.h.b16 %v6717
    %v6906 = vunpack.c.l.b16 %v6718
    %v6907 = vunpack.c.h.b16 %v6718
    %v6908 = vunpack.c.l.b16 %v6719
    %v6909 = vunpack.c.h.b16 %v6719
    %v6910 = vunpack.c.l.b16 %v6720
    %v6911 = vunpack.c.h.b16 %v6720
    %v6912 = vunpack.c.l.b16 %v6721
    %v6913 = vunpack.c.h.b16 %v6721
    %v6914 = vpack.c.b16 %v6790, %v6786
    %v6915 = vpack.c.b16 %v6791, %v6787
    %v6916 = vpack.c.b16 %v6792, %v6788
    %v6917 = vpack.c.b16 %v6793, %v6789
    %v6918 = vpack.c.b16 %v6798, %v6794
    %v6919 = vpack.c.b16 %v6799, %v6795
    %v6920 = vpack.c.b16 %v6800, %v6796
    %v6921 = vpack.c.b16 %v6801, %v6797
    %v6922 = vpack.c.b16 %v6806, %v6802
    %v6923 = vpack.c.b16 %v6807, %v6803
    %v6924 = vpack.c.b16 %v6808, %v6804
    %v6925 = vpack.c.b16 %v6809, %v6805
    %v6926 = vpack.c.b16 %v6814, %v6810
    %v6927 = vpack.c.b16 %v6815, %v6811
    %v6928 = vpack.c.b16 %v6816, %v6812
    %v6929 = vpack.c.b16 %v6817, %v6813
    %v6930 = vpack.c.b16 %v6822, %v6818
    %v6931 = vpack.c.b16 %v6823, %v6819
    %v6932 = vpack.c.b16 %v6824, %v6820
    %v6933 = vpack.c.b16 %v6825, %v6821
    %v6934 = vpack.c.b16 %v6830, %v6826
    %v6935 = vpack.c.b16 %v6831, %v6827
    %v6936 = vpack.c.b16 %v6832, %v6828
    %v6937 = vpack.c.b16 %v6833, %v6829
    %v6938 = vpack.c.b16 %v6838, %v6834
    %v6939 = vpack.c.b16 %v6839, %v6835
    %v6940 = vpack.c.b16 %v6840, %v6836
    %v6941 = vpack.c.b16 %v6841, %v6837
    %v6942 = vpack.c.b16 %v6846, %v6842
    %v6943 = vpack.c.b16 %v6847, %v6843
    %v6944 = vpack.c.b16 %v6848, %v6844
    %v6945 = vpack.c.b16 %v6849, %v6845
    %v6946 = vpack.c.b16 %v6854, %v6850
    %v6947 = vpack.c.b16 %v6855, %v6851
    %v6948 = vpack.c.b16 %v6856, %v6852
    %v6949 = vpack.c.b16 %v6857, %v6853
    %v6950 = vpack.c.b16 %v6862, %v6858
    %v6951 = vpack.c.b16 %v6863, %v6859
    %v6952 = vpack.c.b16 %v6864, %v6860
    %v6953 = vpack.c.b16 %v6865, %v6861
    %v6954 = vpack.c.b16 %v6870, %v6866
    %v6955 = vpack.c.b16 %v6871, %v6867
    %v6956 = vpack.c.b16 %v6872, %v6868
    %v6957 = vpack.c.b16 %v6873, %v6869
    %v6958 = vpack.c.b16 %v6878, %v6874
    %v6959 = vpack.c.b16 %v6879, %v6875
    %v6960 = vpack.c.b16 %v6880, %v6876
    %v6961 = vpack.c.b16 %v6881, %v6877
    %v6962 = vpack.c.b16 %v6886, %v6882
    %v6963 = vpack.c.b16 %v6887, %v6883
    %v6964 = vpack.c.b16 %v6888, %v6884
    %v6965 = vpack.c.b16 %v6889, %v6885
    %v6966 = vpack.c.b16 %v6894, %v6890
    %v6967 = vpack.c.b16 %v6895, %v6891
    %v6968 = vpack.c.b16 %v6896, %v6892
    %v6969 = vpack.c.b16 %v6897, %v6893
    %v6970 = vpack.c.b16 %v6902, %v6898
    %v6971 = vpack.c.b16 %v6903, %v6899
    %v6972 = vpack.c.b16 %v6904, %v6900
    %v6973 = vpack.c.b16 %v6905, %v6901
    %v6974 = vpack.c.b16 %v6910, %v6906
    %v6975 = vpack.c.b16 %v6911, %v6907
    %v6976 = vpack.c.b16 %v6912, %v6908
    %v6977 = vpack.c.b16 %v6913, %v6909
    %7042 = vmatpush.bf16.msra.mxu0 %v6942
    %7043 = vmatpush.bf16.msra.mxu0 %v6938
    %7044 = vmatpush.bf16.msra.mxu0 %v6934
    %7045 = vmatpush.bf16.msra.mxu0 %v6930
    %7046 = vmatpush.bf16.msra.mxu0 %v6926
    %7047 = vmatpush.bf16.msra.mxu0 %v6922
    %7048 = vmatpush.bf16.msra.mxu0 %v6918
    %7049 = vmatpush.bf16.msra.mxu0 %v6914
    %7050 = vmatmul.bf16.gmra.mxu0 %v6655
    %v7051 = vpop.f32.mrf.mxu0
    %v7052 = vadd.f32 0.0, %v7051
    %v7053 = vpop.f32.mrf.mxu0
    %7054 = vdwg.mxu0
    %7055 = vmatpush.bf16.msra.mxu0 %v6974
    %7056 = vmatpush.bf16.msra.mxu0 %v6970
    %7057 = vmatpush.bf16.msra.mxu0 %v6966
    %7058 = vmatpush.bf16.msra.mxu0 %v6962
    %7059 = vmatpush.bf16.msra.mxu0 %v6958
    %7060 = vmatpush.bf16.msra.mxu0 %v6954
    %7061 = vmatpush.bf16.msra.mxu0 %v6950
    %7062 = vmatpush.bf16.msra.mxu0 %v6946
    %7063 = vmatmul.bf16.gmra.mxu0 %v6656
    %v7064 = vpop.f32.mrf.mxu0
    %v7065 = vadd.f32 %v7052, %v7064
    %v7066 = vpop.f32.mrf.mxu0
    %7067 = vdwg.mxu0
    %7068 = vmatpush.bf16.msra.mxu0 %v6943
    %7069 = vmatpush.bf16.msra.mxu0 %v6939
    %7070 = vmatpush.bf16.msra.mxu0 %v6935
    %7071 = vmatpush.bf16.msra.mxu0 %v6931
    %7072 = vmatpush.bf16.msra.mxu0 %v6927
    %7073 = vmatpush.bf16.msra.mxu0 %v6923
    %7074 = vmatpush.bf16.msra.mxu0 %v6919
    %7075 = vmatpush.bf16.msra.mxu0 %v6915
    %7076 = vmatmul.bf16.gmra.mxu0 %v6655
    %v7077 = vpop.f32.mrf.mxu0
    %v7078 = vadd.f32 0.0, %v7077
    %v7079 = vpop.f32.mrf.mxu0
    %7080 = vdwg.mxu0
    %7081 = vmatpush.bf16.msra.mxu0 %v6975
    %7082 = vmatpush.bf16.msra.mxu0 %v6971
    %7083 = vmatpush.bf16.msra.mxu0 %v6967
    %7084 = vmatpush.bf16.msra.mxu0 %v6963
    %7085 = vmatpush.bf16.msra.mxu0 %v6959
    %7086 = vmatpush.bf16.msra.mxu0 %v6955
    %7087 = vmatpush.bf16.msra.mxu0 %v6951
    %7088 = vmatpush.bf16.msra.mxu0 %v6947
    %7089 = vmatmul.bf16.gmra.mxu0 %v6656
    %v7090 = vpop.f32.mrf.mxu0
    %v7091 = vadd.f32 %v7078, %v7090
    %v7092 = vpop.f32.mrf.mxu0
    %7093 = vdwg.mxu0
    %7094 = vmatpush.bf16.msra.mxu0 %v6944
    %7095 = vmatpush.bf16.msra.mxu0 %v6940
    %7096 = vmatpush.bf16.msra.mxu0 %v6936
    %7097 = vmatpush.bf16.msra.mxu0 %v6932
    %7098 = vmatpush.bf16.msra.mxu0 %v6928
    %7099 = vmatpush.bf16.msra.mxu0 %v6924
    %7100 = vmatpush.bf16.msra.mxu0 %v6920
    %7101 = vmatpush.bf16.msra.mxu0 %v6916
    %7102 = vmatmul.bf16.gmra.mxu0 %v6655
    %v7103 = vpop.f32.mrf.mxu0
    %v7104 = vadd.f32 0.0, %v7103
    %v7105 = vpop.f32.mrf.mxu0
    %7106 = vdwg.mxu0
    %7107 = vmatpush.bf16.msra.mxu0 %v6976
    %7108 = vmatpush.bf16.msra.mxu0 %v6972
    %7109 = vmatpush.bf16.msra.mxu0 %v6968
    %7110 = vmatpush.bf16.msra.mxu0 %v6964
    %7111 = vmatpush.bf16.msra.mxu0 %v6960
    %7112 = vmatpush.bf16.msra.mxu0 %v6956
    %7113 = vmatpush.bf16.msra.mxu0 %v6952
    %7114 = vmatpush.bf16.msra.mxu0 %v6948
    %7115 = vmatmul.bf16.gmra.mxu0 %v6656
    %v7116 = vpop.f32.mrf.mxu0
    %v7117 = vadd.f32 %v7104, %v7116
    %v7118 = vpop.f32.mrf.mxu0
    %7119 = vdwg.mxu0
    %7120 = vmatpush.bf16.msra.mxu0 %v6945
    %7121 = vmatpush.bf16.msra.mxu0 %v6941
    %7122 = vmatpush.bf16.msra.mxu0 %v6937
    %7123 = vmatpush.bf16.msra.mxu0 %v6933
    %7124 = vmatpush.bf16.msra.mxu0 %v6929
    %7125 = vmatpush.bf16.msra.mxu0 %v6925
    %7126 = vmatpush.bf16.msra.mxu0 %v6921
    %7127 = vmatpush.bf16.msra.mxu0 %v6917
    %7128 = vmatmul.bf16.gmra.mxu0 %v6655
    %v7129 = vpop.f32.mrf.mxu0
    %v7130 = vadd.f32 0.0, %v7129
    %v7131 = vpop.f32.mrf.mxu0
    %7132 = vdwg.mxu0
    %7133 = vmatpush.bf16.msra.mxu0 %v6977
    %7134 = vmatpush.bf16.msra.mxu0 %v6973
    %7135 = vmatpush.bf16.msra.mxu0 %v6969
    %7136 = vmatpush.bf16.msra.mxu0 %v6965
    %7137 = vmatpush.bf16.msra.mxu0 %v6961
    %7138 = vmatpush.bf16.msra.mxu0 %v6957
    %7139 = vmatpush.bf16.msra.mxu0 %v6953
    %7140 = vmatpush.bf16.msra.mxu0 %v6949
    %7141 = vmatmul.bf16.gmra.mxu0 %v6656
    %v7142 = vpop.f32.mrf.mxu0
    %v7143 = vadd.f32 %v7130, %v7142
    %v7144 = vpop.f32.mrf.mxu0
    %7145 = vdwg.mxu0
    %v7146 = vadd.f32 %v6645, %v7065
    %v7147 = vadd.f32 %v6646, %v7091
    %v7148 = vadd.f32 %v6647, %v7117
    %v7149 = vadd.f32 %v6648, %v7143
    %v7150 = vld [vmem:[#allocation12] sm:$0xf]
    %v7152 = vperm.slane %v7150, 0
    %v7153 = vperm.slane %v7150, 1
    %v7154 = vperm.slane %v7150, 2
    %v7155 = vperm.slane %v7150, 3
    %v7160 = vadd.f32 %v7146, %v7152
    %v7161 = vadd.f32 %v7147, %v7153
    %v7162 = vadd.f32 %v7148, %v7154
    %v7163 = vadd.f32 %v7149, %v7155
    %v7164 = vmax.f32 %v7160, 0.0
    %v7165 = vmax.f32 %v7161, 0.0
    %v7166 = vmax.f32 %v7162, 0.0
    %v7167 = vmax.f32 %v7163, 0.0
    %v7168 = vpack.c.bf16 %v7164, %v7164
    %v7169 = vpack.c.bf16 %v7165, %v7165
    %v7170 = vpack.c.bf16 %v7166, %v7166
    %v7171 = vpack.c.bf16 %v7167, %v7167
    %v7172 = vld [vmem:[#allocation13] sm:$0xf]
    %v7173 = vld [vmem:[#allocation13 + $0x4] sm:$0xf]
    %v7174 = vld [vmem:[#allocation13 + $0x8] sm:$0xf]
    %v7175 = vld [vmem:[#allocation13 + $0xc] sm:$0xf]
    %v7176 = vld [vmem:[#allocation13 + $0x10] sm:$0xf]
    %v7177 = vld [vmem:[#allocation13 + $0x14] sm:$0xf]
    %v7178 = vld [vmem:[#allocation13 + $0x18] sm:$0xf]
    %v7179 = vld [vmem:[#allocation13 + $0x1c] sm:$0xf]
    %v7180 = vld [vmem:[#allocation13 + $0x20] sm:$0xf]
    %v7181 = vld [vmem:[#allocation13 + $0x24] sm:$0xf]
    %v7182 = vld [vmem:[#allocation13 + $0x28] sm:$0xf]
    %v7183 = vld [vmem:[#allocation13 + $0x2c] sm:$0xf]
    %v7184 = vld [vmem:[#allocation13 + $0x30] sm:$0xf]
    %v7185 = vld [vmem:[#allocation13 + $0x34] sm:$0xf]
    %v7186 = vld [vmem:[#allocation13 + $0x38] sm:$0xf]
    %v7187 = vld [vmem:[#allocation13 + $0x3c] sm:$0xf]
    %v7188 = vld [vmem:[#allocation13 + $0x40] sm:$0xf]
    %v7189 = vld [vmem:[#allocation13 + $0x44] sm:$0xf]
    %v7190 = vld [vmem:[#allocation13 + $0x48] sm:$0xf]
    %v7191 = vld [vmem:[#allocation13 + $0x4c] sm:$0xf]
    %v7192 = vld [vmem:[#allocation13 + $0x50] sm:$0xf]
    %v7193 = vld [vmem:[#allocation13 + $0x54] sm:$0xf]
    %v7194 = vld [vmem:[#allocation13 + $0x58] sm:$0xf]
    %v7195 = vld [vmem:[#allocation13 + $0x5c] sm:$0xf]
    %v7196 = vld [vmem:[#allocation13 + $0x60] sm:$0xf]
    %v7197 = vld [vmem:[#allocation13 + $0x64] sm:$0xf]
    %v7198 = vld [vmem:[#allocation13 + $0x68] sm:$0xf]
    %v7199 = vld [vmem:[#allocation13 + $0x6c] sm:$0xf]
    %v7200 = vld [vmem:[#allocation13 + $0x70] sm:$0xf]
    %v7201 = vld [vmem:[#allocation13 + $0x74] sm:$0xf]
    %v7202 = vld [vmem:[#allocation13 + $0x78] sm:$0xf]
    %v7203 = vld [vmem:[#allocation13 + $0x7c] sm:$0xf]
    %v7204 = vld [vmem:[#allocation13 + $0x80] sm:$0xf]
    %v7205 = vld [vmem:[#allocation13 + $0x84] sm:$0xf]
    %v7206 = vld [vmem:[#allocation13 + $0x88] sm:$0xf]
    %v7207 = vld [vmem:[#allocation13 + $0x8c] sm:$0xf]
    %v7208 = vld [vmem:[#allocation13 + $0x90] sm:$0xf]
    %v7209 = vld [vmem:[#allocation13 + $0x94] sm:$0xf]
    %v7210 = vld [vmem:[#allocation13 + $0x98] sm:$0xf]
    %v7211 = vld [vmem:[#allocation13 + $0x9c] sm:$0xf]
    %v7212 = vld [vmem:[#allocation13 + $0xa0] sm:$0xf]
    %v7213 = vld [vmem:[#allocation13 + $0xa4] sm:$0xf]
    %v7214 = vld [vmem:[#allocation13 + $0xa8] sm:$0xf]
    %v7215 = vld [vmem:[#allocation13 + $0xac] sm:$0xf]
    %v7216 = vld [vmem:[#allocation13 + $0xb0] sm:$0xf]
    %v7217 = vld [vmem:[#allocation13 + $0xb4] sm:$0xf]
    %v7218 = vld [vmem:[#allocation13 + $0xb8] sm:$0xf]
    %v7219 = vld [vmem:[#allocation13 + $0xbc] sm:$0xf]
    %v7220 = vld [vmem:[#allocation13 + $0xc0] sm:$0xf]
    %v7221 = vld [vmem:[#allocation13 + $0xc4] sm:$0xf]
    %v7222 = vld [vmem:[#allocation13 + $0xc8] sm:$0xf]
    %v7223 = vld [vmem:[#allocation13 + $0xcc] sm:$0xf]
    %v7224 = vld [vmem:[#allocation13 + $0xd0] sm:$0xf]
    %v7225 = vld [vmem:[#allocation13 + $0xd4] sm:$0xf]
    %v7226 = vld [vmem:[#allocation13 + $0xd8] sm:$0xf]
    %v7227 = vld [vmem:[#allocation13 + $0xdc] sm:$0xf]
    %v7228 = vld [vmem:[#allocation13 + $0xe0] sm:$0xf]
    %v7229 = vld [vmem:[#allocation13 + $0xe4] sm:$0xf]
    %v7230 = vld [vmem:[#allocation13 + $0xe8] sm:$0xf]
    %v7231 = vld [vmem:[#allocation13 + $0xec] sm:$0xf]
    %v7232 = vld [vmem:[#allocation13 + $0xf0] sm:$0xf]
    %v7233 = vld [vmem:[#allocation13 + $0xf4] sm:$0xf]
    %v7234 = vld [vmem:[#allocation13 + $0xf8] sm:$0xf]
    %v7235 = vld [vmem:[#allocation13 + $0xfc] sm:$0xf]
    %v7236 = vld [vmem:[#allocation15] sm:$0x1]
    %v7238 = vperm.slane %v7236, 0
    %v7304 = vunpack.c.l.b16 %v7172
    %v7305 = vunpack.c.l.b16 %v7173
    %v7306 = vunpack.c.l.b16 %v7174
    %v7307 = vunpack.c.l.b16 %v7175
    %v7308 = vunpack.c.l.b16 %v7176
    %v7309 = vunpack.c.l.b16 %v7177
    %v7310 = vunpack.c.l.b16 %v7178
    %v7311 = vunpack.c.l.b16 %v7179
    %v7312 = vunpack.c.l.b16 %v7180
    %v7313 = vunpack.c.l.b16 %v7181
    %v7314 = vunpack.c.l.b16 %v7182
    %v7315 = vunpack.c.l.b16 %v7183
    %v7316 = vunpack.c.l.b16 %v7184
    %v7317 = vunpack.c.l.b16 %v7185
    %v7318 = vunpack.c.l.b16 %v7186
    %v7319 = vunpack.c.l.b16 %v7187
    %v7320 = vunpack.c.l.b16 %v7188
    %v7321 = vunpack.c.l.b16 %v7189
    %v7322 = vunpack.c.l.b16 %v7190
    %v7323 = vunpack.c.l.b16 %v7191
    %v7324 = vunpack.c.l.b16 %v7192
    %v7325 = vunpack.c.l.b16 %v7193
    %v7326 = vunpack.c.l.b16 %v7194
    %v7327 = vunpack.c.l.b16 %v7195
    %v7328 = vunpack.c.l.b16 %v7196
    %v7329 = vunpack.c.l.b16 %v7197
    %v7330 = vunpack.c.l.b16 %v7198
    %v7331 = vunpack.c.l.b16 %v7199
    %v7332 = vunpack.c.l.b16 %v7200
    %v7333 = vunpack.c.l.b16 %v7201
    %v7334 = vunpack.c.l.b16 %v7202
    %v7335 = vunpack.c.l.b16 %v7203
    %v7336 = vunpack.c.l.b16 %v7204
    %v7337 = vunpack.c.l.b16 %v7205
    %v7338 = vunpack.c.l.b16 %v7206
    %v7339 = vunpack.c.l.b16 %v7207
    %v7340 = vunpack.c.l.b16 %v7208
    %v7341 = vunpack.c.l.b16 %v7209
    %v7342 = vunpack.c.l.b16 %v7210
    %v7343 = vunpack.c.l.b16 %v7211
    %v7344 = vunpack.c.l.b16 %v7212
    %v7345 = vunpack.c.l.b16 %v7213
    %v7346 = vunpack.c.l.b16 %v7214
    %v7347 = vunpack.c.l.b16 %v7215
    %v7348 = vunpack.c.l.b16 %v7216
    %v7349 = vunpack.c.l.b16 %v7217
    %v7350 = vunpack.c.l.b16 %v7218
    %v7351 = vunpack.c.l.b16 %v7219
    %v7352 = vunpack.c.l.b16 %v7220
    %v7353 = vunpack.c.l.b16 %v7221
    %v7354 = vunpack.c.l.b16 %v7222
    %v7355 = vunpack.c.l.b16 %v7223
    %v7356 = vunpack.c.l.b16 %v7224
    %v7357 = vunpack.c.l.b16 %v7225
    %v7358 = vunpack.c.l.b16 %v7226
    %v7359 = vunpack.c.l.b16 %v7227
    %v7360 = vunpack.c.l.b16 %v7228
    %v7361 = vunpack.c.l.b16 %v7229
    %v7362 = vunpack.c.l.b16 %v7230
    %v7363 = vunpack.c.l.b16 %v7231
    %v7364 = vunpack.c.l.b16 %v7232
    %v7365 = vunpack.c.l.b16 %v7233
    %v7366 = vunpack.c.l.b16 %v7234
    %v7367 = vunpack.c.l.b16 %v7235
    %v7368 = vpack.c.b16 %v7305, %v7304
    %v7369 = vpack.c.b16 %v7307, %v7306
    %v7370 = vpack.c.b16 %v7309, %v7308
    %v7371 = vpack.c.b16 %v7311, %v7310
    %v7372 = vpack.c.b16 %v7313, %v7312
    %v7373 = vpack.c.b16 %v7315, %v7314
    %v7374 = vpack.c.b16 %v7317, %v7316
    %v7375 = vpack.c.b16 %v7319, %v7318
    %v7376 = vpack.c.b16 %v7321, %v7320
    %v7377 = vpack.c.b16 %v7323, %v7322
    %v7378 = vpack.c.b16 %v7325, %v7324
    %v7379 = vpack.c.b16 %v7327, %v7326
    %v7380 = vpack.c.b16 %v7329, %v7328
    %v7381 = vpack.c.b16 %v7331, %v7330
    %v7382 = vpack.c.b16 %v7333, %v7332
    %v7383 = vpack.c.b16 %v7335, %v7334
    %v7384 = vpack.c.b16 %v7337, %v7336
    %v7385 = vpack.c.b16 %v7339, %v7338
    %v7386 = vpack.c.b16 %v7341, %v7340
    %v7387 = vpack.c.b16 %v7343, %v7342
    %v7388 = vpack.c.b16 %v7345, %v7344
    %v7389 = vpack.c.b16 %v7347, %v7346
    %v7390 = vpack.c.b16 %v7349, %v7348
    %v7391 = vpack.c.b16 %v7351, %v7350
    %v7392 = vpack.c.b16 %v7353, %v7352
    %v7393 = vpack.c.b16 %v7355, %v7354
    %v7394 = vpack.c.b16 %v7357, %v7356
    %v7395 = vpack.c.b16 %v7359, %v7358
    %v7396 = vpack.c.b16 %v7361, %v7360
    %v7397 = vpack.c.b16 %v7363, %v7362
    %v7398 = vpack.c.b16 %v7365, %v7364
    %v7399 = vpack.c.b16 %v7367, %v7366
    %7432 = vmatpush.bf16.msra.mxu0 %v7375
    %7433 = vmatpush.bf16.msra.mxu0 %v7374
    %7434 = vmatpush.bf16.msra.mxu0 %v7373
    %7435 = vmatpush.bf16.msra.mxu0 %v7372
    %7436 = vmatpush.bf16.msra.mxu0 %v7371
    %7437 = vmatpush.bf16.msra.mxu0 %v7370
    %7438 = vmatpush.bf16.msra.mxu0 %v7369
    %7439 = vmatpush.bf16.msra.mxu0 %v7368
    %7440 = vmatmul.bf16.gmra.mxu0 %v7168
    %v7441 = vpop.f32.mrf.mxu0
    %v7442 = vadd.f32 %v7238, %v7441
    %v7443 = vpop.f32.mrf.mxu0
    %7444 = vdwg.mxu0
    %7445 = vmatpush.bf16.msra.mxu0 %v7383
    %7446 = vmatpush.bf16.msra.mxu0 %v7382
    %7447 = vmatpush.bf16.msra.mxu0 %v7381
    %7448 = vmatpush.bf16.msra.mxu0 %v7380
    %7449 = vmatpush.bf16.msra.mxu0 %v7379
    %7450 = vmatpush.bf16.msra.mxu0 %v7378
    %7451 = vmatpush.bf16.msra.mxu0 %v7377
    %7452 = vmatpush.bf16.msra.mxu0 %v7376
    %7453 = vmatmul.bf16.gmra.mxu0 %v7169
    %v7454 = vpop.f32.mrf.mxu0
    %v7455 = vadd.f32 %v7442, %v7454
    %v7456 = vpop.f32.mrf.mxu0
    %7457 = vdwg.mxu0
    %7458 = vmatpush.bf16.msra.mxu0 %v7391
    %7459 = vmatpush.bf16.msra.mxu0 %v7390
    %7460 = vmatpush.bf16.msra.mxu0 %v7389
    %7461 = vmatpush.bf16.msra.mxu0 %v7388
    %7462 = vmatpush.bf16.msra.mxu0 %v7387
    %7463 = vmatpush.bf16.msra.mxu0 %v7386
    %7464 = vmatpush.bf16.msra.mxu0 %v7385
    %7465 = vmatpush.bf16.msra.mxu0 %v7384
    %7466 = vmatmul.bf16.gmra.mxu0 %v7170
    %v7467 = vpop.f32.mrf.mxu0
    %v7468 = vadd.f32 %v7455, %v7467
    %v7469 = vpop.f32.mrf.mxu0
    %7470 = vdwg.mxu0
    %7471 = vmatpush.bf16.msra.mxu0 %v7399
    %7472 = vmatpush.bf16.msra.mxu0 %v7398
    %7473 = vmatpush.bf16.msra.mxu0 %v7397
    %7474 = vmatpush.bf16.msra.mxu0 %v7396
    %7475 = vmatpush.bf16.msra.mxu0 %v7395
    %7476 = vmatpush.bf16.msra.mxu0 %v7394
    %7477 = vmatpush.bf16.msra.mxu0 %v7393
    %7478 = vmatpush.bf16.msra.mxu0 %v7392
    %7479 = vmatmul.bf16.gmra.mxu0 %v7171
    %v7480 = vpop.f32.mrf.mxu0
    %v7481 = vadd.f32 %v7468, %v7480
    %v7482 = vpop.f32.mrf.mxu0
    %7483 = vdwg.mxu0
    %7484 = vst [vmem:[%s10] sm:$0xff] %v7481
    // Predicated region
    $region78: #{caffelenet_forward.1} parent=1 // pred_check
      _
    $region79: #{caffelenet_forward.1} parent=1 // pred_check_branch
      %7486 = sbr.rel (0) target = $region81
    $region80: #{caffelenet_forward.1} parent=1 // pred_region
      _
    $region81: #{caffelenet_forward.1} parent=1 // pred_fallthru
      _
    // Predicated region
    $region82: #{caffelenet_forward.1} parent=1 // pred_check
      _
    $region83: #{caffelenet_forward.1} parent=1 // pred_check_branch
      %7488 = sbr.rel (0) target = $region85
    $region84: #{caffelenet_forward.1} parent=1 // pred_region
      _
    $region85: #{caffelenet_forward.1} parent=1 // pred_fallthru
      _
    %7489 = vsyncpa [#allocation3], 1
    %7490 = vsyncpa [#allocation5], 1
    %7491 = vsyncpa [#allocation8], 1
    %7492 = vsyncpa [#allocation11], 1
    %7493 = vsyncpa [#allocation14], 1

</llo_original>
